<compile_context>
chip_gen: v7x
topology: tpu7x:2x2x1
jax: 0.10.0
libtpu: 0.0.40
codegen_flags: <defaults>
</compile_context>

<pallas_src>
import functools

import jax
import jax.numpy as jnp
from jax.experimental import pallas as pl
from jax.experimental.pallas import tpu as pltpu

LANES = 128

# Architecture constants from the PyTorch module: (kernel, stride) per layer.
_P1 = ((19, 10), (19, 10))        # path 1: Ci->48, 48->48, 'valid'
_P2 = ((9, 5), (9, 5), (7, 4))    # path 2: Ci->32, 32->32, 32->32, 'valid'
_C1, _C2 = 48, 32                 # branch channel widths


def _out_len(l, k, s):
    return (l - k) // s + 1


def _tap_order(k, s):
    """Tap order used by the in-kernel im2col: taps t and t+s are paired so
    each stride-residue needs a single strided read.  Requires s < k <= 2*s
    (true for all three interior layers)."""
    assert s < k <= 2 * s, (k, s)
    order = []
    for t in range(s):
        if t + s < k:
            order += [t, t + s]
        else:
            order.append(t)
    assert len(order) == k
    return order


# --------------------------------------------------------------------------
# In-kernel building blocks.
# --------------------------------------------------------------------------
def _layer0_matmul(p_ref, w_ref, shift):
    """First conv layer of a branch: im2col patches were built in the wrapper,
    so the whole layer is ONE wide-K matmul (K = k*Ci)."""
    b, n_out, kp = p_ref.shape
    lhs = p_ref[...].reshape(b * n_out, kp)                     # bf16
    acc = jnp.dot(lhs, w_ref[...], preferred_element_type=jnp.float32)
    return jnp.maximum(acc + shift, 0.0)                        # (B*n_out, 128) f32


def _conv_matmul(in_ref, w_ref, shift, n_out, k, s):
    """Interior conv layer: assemble the (B*n_out, k*128) im2col patch with
    only ceil(k/s)=2 taps per strided read, then do ONE wide-K matmul."""
    b = in_ref.shape[0]
    pieces = []
    for t in range(s):
        if t + s < k:        # taps t and t+s share one strided read
            win = in_ref[:, pl.ds(t, n_out + 1, stride=s), :].astype(jnp.bfloat16)
            pieces.append(win[:, :n_out, :])                    # tap t
            pieces.append(win[:, 1:, :])                        # tap t+s
        else:                # lone tap t
            pieces.append(
                in_ref[:, pl.ds(t, n_out, stride=s), :].astype(jnp.bfloat16))
    patch = jnp.concatenate(pieces, axis=-1)                    # (B, n_out, k*128)
    lhs = patch.reshape(b * n_out, k * LANES)
    acc = jnp.dot(lhs, w_ref[...], preferred_element_type=jnp.float32)
    return jnp.maximum(acc + shift, 0.0)                        # (B*n_out, 128) f32


def _multipath_kernel(p1_ref, p2_ref, w10_ref, w20_ref, w11_ref, w21_ref,
                      w22_ref, w3a_ref, w3b_ref, sh_ref, o_ref,
                      a_ref, c_ref, d_ref):
    sh = sh_ref[...]                        # (8, 128) f32, one row per layer
    lout = o_ref.shape[1]
    l2b = d_ref.shape[1]

    # ---- path 1: Ci -> 48 (k19 s10), 48 -> 48 (k19 s10) ----
    a = _layer0_matmul(p1_ref, w10_ref, sh[0:1])
    a_ref[...] = a.reshape(a_ref.shape)
    y1 = _conv_matmul(a_ref, w11_ref, sh[1:2], lout, *_P1[1])

    # ---- path 2: Ci -> 32 (k9 s5), 32 -> 32 (k9 s5), 32 -> 32 (k7 s4) ----
    c = _layer0_matmul(p2_ref, w20_ref, sh[2:3])
    c_ref[...] = c.reshape(c_ref.shape)
    d = _conv_matmul(c_ref, w21_ref, sh[3:4], l2b, *_P2[1])
    d_ref[...] = d.reshape(d_ref.shape)
    y2 = _conv_matmul(d_ref, w22_ref, sh[4:5], lout, *_P2[2])

    # ---- concat + final 1x1 conv, fused as two partial matmuls ----
    acc = jnp.dot(y1.astype(jnp.bfloat16), w3a_ref[...],
                  preferred_element_type=jnp.float32)
    acc = acc + jnp.dot(y2.astype(jnp.bfloat16), w3b_ref[...],
                        preferred_element_type=jnp.float32)
    o_ref[...] = jnp.maximum(acc + sh[5:6], 0.0).reshape(o_ref.shape)


# --------------------------------------------------------------------------
# Parameter packing: fold BN scale into weights, pad output channels to 128
# lanes, flatten to the matmul layouts the kernel expects, cast to bf16.
# --------------------------------------------------------------------------
def pack_params(params):
    def fold(w, scale):
        # (Co, Ci, k) PyTorch conv1d layout -> (k, Ci, Co) with BN scale folded.
        return jnp.transpose(w, (2, 1, 0)) * scale[None, None, :]

    def pack_layer0(w, scale):
        wt = fold(w, scale)                              # (k, Ci, Co)
        k, ci, co = wt.shape
        wt = jnp.pad(wt, ((0, 0), (0, 0), (0, LANES - co)))
        return wt.reshape(k * ci, LANES).astype(jnp.bfloat16)   # (k*Ci, 128)

    def pack_interior(w, scale, stride):
        wt = fold(w, scale)                              # (k, Ci, Co)
        k, ci, co = wt.shape
        wt = jnp.pad(wt, ((0, 0), (0, LANES - ci), (0, LANES - co)))
        wt = wt[jnp.asarray(_tap_order(k, stride))]      # match kernel tap order
        return wt.reshape(k * LANES, LANES).astype(jnp.bfloat16)

    w10 = pack_layer0(*params["l1_0"][:2])               # (19*Ci, 128)
    w20 = pack_layer0(*params["l2_0"][:2])               # ( 9*Ci, 128)
    w11 = pack_interior(*params["l1_1"][:2], _P1[1][1])  # (19*128, 128)
    w21 = pack_interior(*params["l2_1"][:2], _P2[1][1])  # ( 9*128, 128)
    w22 = pack_interior(*params["l2_2"][:2], _P2[2][1])  # ( 7*128, 128)

    # Final 1x1 conv over the (48 + 32)-channel concat: split into two partial
    # weight matrices so the concat never has to be materialized.
    w3, s3, b3 = params["l3"]
    w3m = w3[:, :, 0].T * s3[None, :]                    # (80, Co), scale folded
    co = w3m.shape[1]
    w3a = jnp.pad(w3m[:_C1], ((0, LANES - _C1), (0, LANES - co))).astype(jnp.bfloat16)
    w3b = jnp.pad(w3m[_C1:], ((0, LANES - _C2), (0, LANES - co))).astype(jnp.bfloat16)

    def pad_shift(s_):
        return jnp.pad(s_, (0, LANES - s_.shape[0]))

    shifts = jnp.stack(
        [pad_shift(params["l1_0"][2]), pad_shift(params["l1_1"][2]),
         pad_shift(params["l2_0"][2]), pad_shift(params["l2_1"][2]),
         pad_shift(params["l2_2"][2]), pad_shift(b3),
         jnp.zeros((LANES,), jnp.float32), jnp.zeros((LANES,), jnp.float32)],
        axis=0).astype(jnp.float32)                      # (8, 128)

    return dict(w10=w10, w20=w20, w11=w11, w21=w21, w22=w22,
                w3a=w3a, w3b=w3b, shifts=shifts)


# --------------------------------------------------------------------------
# Forward wrapper: layer-0 im2col + one batch-blocked pallas_call.
# --------------------------------------------------------------------------
def _im2col(x_ncl, k, s, n_out):
    """Layer-0 im2col in plain JAX: (N, Ci, L) -> (N, n_out, k*Ci) with patch
    flat index t*Ci + c (matches pack_layer0's weight flattening)."""
    n, ci, _ = x_ncl.shape
    idx = jnp.arange(n_out)[:, None] * s + jnp.arange(k)[None, :]   # (n_out, k)
    p = x_ncl[:, :, idx]                         # (N, Ci, n_out, k)
    p = jnp.transpose(p, (0, 2, 3, 1))           # (N, n_out, k, Ci)
    return p.reshape(n, n_out, k * ci)


def multipath_forward(x_ncl, ops, co, batch_block=16):
    """Fused MultiPath forward.  x_ncl: (N, Ci, L) as in the PyTorch module."""
    n, ci, l = x_ncl.shape
    l1a = _out_len(l, *_P1[0])
    lout = _out_len(l1a, *_P1[1])
    l2a = _out_len(l, *_P2[0])
    l2b = _out_len(l2a, *_P2[1])
    l2c = _out_len(l2b, *_P2[2])
    assert lout == l2c, "branch output lengths must match for the concat"

    bb = int(min(batch_block, n))                # batch elements per grid step
    npad = -(-n // bb) * bb

    # Layer-0 im2col in the wrapper (x is tiny) -> one wide-K matmul per
    # branch layer 0 inside the kernel instead of k small K=Ci dots.
    p1 = _im2col(x_ncl, *_P1[0], l1a).astype(jnp.bfloat16)   # (N, l1a, 19*Ci)
    p2 = _im2col(x_ncl, *_P2[0], l2a).astype(jnp.bfloat16)   # (N, l2a,  9*Ci)
    if npad != n:
        pad = ((0, npad - n), (0, 0), (0, 0))
        p1 = jnp.pad(p1, pad)
        p2 = jnp.pad(p2, pad)

    flops = 2 * npad * (l1a * 19 * ci * _C1 + lout * 19 * _C1 * _C1 +
                        l2a * 9 * ci * _C2 + l2b * 9 * _C2 * _C2 +
                        lout * 7 * _C2 * _C2 + lout * (_C1 + _C2) * co)
    bytes_accessed = (p1.size + p2.size) * 2 + npad * lout * LANES * 4
    bytes_accessed += sum(int(ops[name].size) * ops[name].dtype.itemsize
                          for name in ("w10", "w20", "w11", "w21", "w22",
                                       "w3a", "w3b", "shifts"))

    out = pl.pallas_call(
        _multipath_kernel,
        out_shape=jax.ShapeDtypeStruct((npad, lout, LANES), jnp.float32),
        grid=(npad // bb,),
        in_specs=[
            pl.BlockSpec((bb, l1a, p1.shape[-1]), lambda b: (b, 0, 0)),   # p1
            pl.BlockSpec((bb, l2a, p2.shape[-1]), lambda b: (b, 0, 0)),   # p2
            pl.BlockSpec(ops["w10"].shape, lambda b: (0, 0)),
            pl.BlockSpec(ops["w20"].shape, lambda b: (0, 0)),
            pl.BlockSpec(ops["w11"].shape, lambda b: (0, 0)),
            pl.BlockSpec(ops["w21"].shape, lambda b: (0, 0)),
            pl.BlockSpec(ops["w22"].shape, lambda b: (0, 0)),
            pl.BlockSpec((LANES, LANES), lambda b: (0, 0)),               # w3a
            pl.BlockSpec((LANES, LANES), lambda b: (0, 0)),               # w3b
            pl.BlockSpec((8, LANES), lambda b: (0, 0)),                   # shifts
        ],
        out_specs=pl.BlockSpec((bb, lout, LANES), lambda b: (b, 0, 0)),
        scratch_shapes=[
            pltpu.VMEM((bb, l1a, LANES), jnp.float32),   # path-1 layer-0 acts
            pltpu.VMEM((bb, l2a, LANES), jnp.float32),   # path-2 layer-0 acts
            pltpu.VMEM((bb, l2b, LANES), jnp.float32),   # path-2 layer-1 acts
        ],
        compiler_params=pltpu.CompilerParams(
            dimension_semantics=("parallel",)),          # batch blocks shard on v7x
        cost_estimate=pl.CostEstimate(flops=int(flops), transcendentals=0,
                                      bytes_accessed=int(bytes_accessed)),
    )(p1, p2, ops["w10"], ops["w20"], ops["w11"], ops["w21"], ops["w22"],
      ops["w3a"], ops["w3b"], ops["shifts"])

    # Strip batch/lane padding and return in the module's NCL convention.
    return jnp.transpose(out[:n, :, :co], (0, 2, 1))


# --------------------------------------------------------------------------
# Deterministic parameter init (inference-form BN folded to scale/shift).
# --------------------------------------------------------------------------
def init_conv_bn(key, Ci, Co, kernel_size):
    k1, k2, k3, k4, k5 = jax.random.split(key, 5)
    fan_in = Ci * kernel_size
    w = jax.random.normal(k1, (Co, Ci, kernel_size), jnp.float32) / jnp.sqrt(fan_in)
    gamma = 1.0 + 0.1 * jax.random.normal(k2, (Co,), jnp.float32)
    beta = 0.1 * jax.random.normal(k3, (Co,), jnp.float32)
    run_mean = 0.1 * jax.random.normal(k4, (Co,), jnp.float32)
    run_var = jax.random.uniform(k5, (Co,), jnp.float32, minval=0.5, maxval=1.5)
    eps = 1e-5
    scale = gamma / jnp.sqrt(run_var + eps)
    shift = beta - run_mean * scale
    return (w, scale, shift)


def init_multipath_params(key, Ci, Co):
    keys = jax.random.split(key, 6)
    return {
        "l1_0": init_conv_bn(keys[0], Ci, 48, 19),
        "l1_1": init_conv_bn(keys[1], 48, 48, 19),
        "l2_0": init_conv_bn(keys[2], Ci, 32, 9),
        "l2_1": init_conv_bn(keys[3], 32, 32, 9),
        "l2_2": init_conv_bn(keys[4], 32, 32, 7),
        "l3": init_conv_bn(keys[5], 80, Co, 1),
    }


# --------------------------------------------------------------------------
# Plain-JAX f32 reference (mirrors the PyTorch module with folded BN).
# --------------------------------------------------------------------------
def _ref_conv_bn_relu(x_ncl, w, scale, shift, k, s):
    n, ci, l = x_ncl.shape
    co = w.shape[0]
    lout = (l - k) // s + 1
    idx = jnp.arange(lout)[:, None] * s + jnp.arange(k)[None, :]
    patches = x_ncl[:, :, idx]                                   # (N, Ci, Lout, k)
    patches = jnp.transpose(patches, (0, 2, 1, 3)).reshape(n * lout, ci * k)
    w_mat = w.reshape(co, ci * k).T
    out = jnp.maximum(patches @ w_mat * scale[None, :] + shift[None, :], 0.0)
    return out.reshape(n, lout, co).transpose(0, 2, 1)


def _ref_multipath(x_ncl, params):
    y1 = _ref_conv_bn_relu(x_ncl, *params["l1_0"], 19, 10)
    y1 = _ref_conv_bn_relu(y1, *params["l1_1"], 19, 10)
    y2 = _ref_conv_bn_relu(x_ncl, *params["l2_0"], 9, 5)
    y2 = _ref_conv_bn_relu(y2, *params["l2_1"], 9, 5)
    y2 = _ref_conv_bn_relu(y2, *params["l2_2"], 7, 4)
    y = jnp.concatenate([y1, y2], axis=1)
    return _ref_conv_bn_relu(y, *params["l3"], 1, 1)


if __name__ == "__main__":
    key = jax.random.PRNGKey(0)
    k_x, k_p = jax.random.split(key)

    # L=400 makes both branches produce length 3, so the channel concat is valid.
    N, Ci, Co, L = 2, 4, 16, 400
    x = jax.random.normal(k_x, (N, Ci, L), jnp.float32)   # NCL, like PyTorch

    params = init_multipath_params(k_p, Ci, Co)
    ops = pack_params(params)                             # fold + pad once

    fwd = jax.jit(functools.partial(multipath_forward, co=Co))
    y = jax.block_until_ready(fwd(x, ops))

    assert y.shape == (N, Co, 3), y.shape
    assert bool(jnp.all(jnp.isfinite(y)))
    assert bool(jnp.all(y >= 0.0))                        # final ReLU

    # Numerical check vs a plain-JAX f32 reference (kernel uses bf16 matmuls).
    y_ref = _ref_multipath(x, params)
    err = float(jnp.max(jnp.abs(y - y_ref)))
    assert err < 0.25, f"max abs err vs reference: {err}"

    print("KERNEL_OK")
</pallas_src>

<mosaic_0001>
module attributes {stable_mosaic.version = 11 : i64} {
  func.func @_multipath_kernel(%arg0: i32, %arg1: memref<2x39x76xbf16, #tpu.memory_space<vmem>>, %arg2: memref<2x79x36xbf16, #tpu.memory_space<vmem>>, %arg3: memref<76x128xbf16, #tpu.memory_space<vmem>>, %arg4: memref<36x128xbf16, #tpu.memory_space<vmem>>, %arg5: memref<2432x128xbf16, #tpu.memory_space<vmem>>, %arg6: memref<1152x128xbf16, #tpu.memory_space<vmem>>, %arg7: memref<896x128xbf16, #tpu.memory_space<vmem>>, %arg8: memref<128x128xbf16, #tpu.memory_space<vmem>>, %arg9: memref<128x128xbf16, #tpu.memory_space<vmem>>, %arg10: memref<8x128xf32, #tpu.memory_space<vmem>>, %arg11: memref<2x3x128xf32, #tpu.memory_space<vmem>>, %arg12: memref<2x39x128xf32, #tpu.memory_space<vmem>>, %arg13: memref<2x79x128xf32, #tpu.memory_space<vmem>>, %arg14: memref<2x15x128xf32, #tpu.memory_space<vmem>>) attributes {dimension_semantics = [#tpu.dimension_semantics<parallel>], iteration_bounds = array<i64: 1>, scalar_prefetch = 0 : i64, scratch_operands = 3 : i64, tpu.core_type = #tpu.core_type<tc>, window_params = [{transform_indices = @transform_0, window_bounds = array<i64: 2, 39, 76>}, {transform_indices = @transform_1, window_bounds = array<i64: 2, 79, 36>}, {pipeline_mode = #tpu.pipeline_mode<synchronous>, transform_indices = @transform_2, window_bounds = array<i64: 76, 128>}, {pipeline_mode = #tpu.pipeline_mode<synchronous>, transform_indices = @transform_3, window_bounds = array<i64: 36, 128>}, {pipeline_mode = #tpu.pipeline_mode<synchronous>, transform_indices = @transform_4, window_bounds = array<i64: 2432, 128>}, {pipeline_mode = #tpu.pipeline_mode<synchronous>, transform_indices = @transform_5, window_bounds = array<i64: 1152, 128>}, {pipeline_mode = #tpu.pipeline_mode<synchronous>, transform_indices = @transform_6, window_bounds = array<i64: 896, 128>}, {pipeline_mode = #tpu.pipeline_mode<synchronous>, transform_indices = @transform_7, window_bounds = array<i64: 128, 128>}, {pipeline_mode = #tpu.pipeline_mode<synchronous>, transform_indices = @transform_8, window_bounds = array<i64: 128, 128>}, {pipeline_mode = #tpu.pipeline_mode<synchronous>, transform_indices = @transform_9, window_bounds = array<i64: 8, 128>}, {transform_indices = @transform_10, window_bounds = array<i64: 2, 3, 128>}]} {
    %c0 = arith.constant 0 : index
    %c0_0 = arith.constant 0 : index
    %0 = vector.load %arg10[%c0, %c0_0] : memref<8x128xf32, #tpu.memory_space<vmem>>, vector<8x128xf32>
    %1 = vector.extract_strided_slice %0 {offsets = [0, 0], sizes = [1, 128], strides = [1, 1]} : vector<8x128xf32> to vector<1x128xf32>
    %c0_1 = arith.constant 0 : index
    %c0_2 = arith.constant 0 : index
    %c0_3 = arith.constant 0 : index
    %2 = vector.load %arg1[%c0_1, %c0_2, %c0_3] : memref<2x39x76xbf16, #tpu.memory_space<vmem>>, vector<2x39x76xbf16>
    %3 = vector.shape_cast %2 : vector<2x39x76xbf16> to vector<78x76xbf16>
    %c0_4 = arith.constant 0 : index
    %c0_5 = arith.constant 0 : index
    %4 = vector.load %arg3[%c0_4, %c0_5] : memref<76x128xbf16, #tpu.memory_space<vmem>>, vector<76x128xbf16>
    %cst = arith.constant dense<0.000000e+00> : vector<78x128xf32>
    %5 = tpu.matmul %3, %4, %cst {dimension_numbers = #tpu.dot_dimension_numbers<[1], [0], [0], [1], [0, 0, 1, 1], [], []>} : vector<78x76xbf16>, vector<76x128xbf16>, vector<78x128xf32> -> vector<78x128xf32>
    %6 = vector.broadcast %1 : vector<1x128xf32> to vector<78x128xf32>
    %7 = arith.addf %5, %6 : vector<78x128xf32>
    %cst_6 = arith.constant 0.000000e+00 : f32
    %8 = vector.broadcast %cst_6 : f32 to vector<78x128xf32>
    %9 = arith.maximumf %7, %8 : vector<78x128xf32>
    %10 = vector.shape_cast %9 : vector<78x128xf32> to vector<2x39x128xf32>
    %c0_7 = arith.constant 0 : index
    %c0_8 = arith.constant 0 : index
    %c0_9 = arith.constant 0 : index
    %11 = vector.load %arg12[%c0_7, %c0_8, %c0_9] : memref<2x39x128xf32, #tpu.memory_space<vmem>>, vector<2x39x128xf32>
    tpu.vector_store %arg12[%c0_7, %c0_8, %c0_9], %10 {strides = array<i32>} : memref<2x39x128xf32, #tpu.memory_space<vmem>>, vector<2x39x128xf32>,
    %12 = vector.extract_strided_slice %0 {offsets = [1, 0], sizes = [1, 128], strides = [1, 1]} : vector<8x128xf32> to vector<1x128xf32>
    %c0_10 = arith.constant 0 : index
    %c0_11 = arith.constant 0 : index
    %c0_12 = arith.constant 0 : index
    %13 = tpu.strided_load %arg12[%c0_10, %c0_11, %c0_12] {strides = array<i32: 1, 10, 1>} : memref<2x39x128xf32, #tpu.memory_space<vmem>>, vector<2x4x128xf32>
    %14 = arith.truncf %13 : vector<2x4x128xf32> to vector<2x4x128xbf16>
    %15 = vector.extract_strided_slice %14 {offsets = [0, 0, 0], sizes = [2, 3, 128], strides = [1, 1, 1]} : vector<2x4x128xbf16> to vector<2x3x128xbf16>
    %16 = vector.extract_strided_slice %14 {offsets = [0, 1, 0], sizes = [2, 3, 128], strides = [1, 1, 1]} : vector<2x4x128xbf16> to vector<2x3x128xbf16>
    %c0_13 = arith.constant 0 : index
    %c1 = arith.constant 1 : index
    %c0_14 = arith.constant 0 : index
    %17 = tpu.strided_load %arg12[%c0_13, %c1, %c0_14] {strides = array<i32: 1, 10, 1>} : memref<2x39x128xf32, #tpu.memory_space<vmem>>, vector<2x4x128xf32>
    %18 = arith.truncf %17 : vector<2x4x128xf32> to vector<2x4x128xbf16>
    %19 = vector.extract_strided_slice %18 {offsets = [0, 0, 0], sizes = [2, 3, 128], strides = [1, 1, 1]} : vector<2x4x128xbf16> to vector<2x3x128xbf16>
    %20 = vector.extract_strided_slice %18 {offsets = [0, 1, 0], sizes = [2, 3, 128], strides = [1, 1, 1]} : vector<2x4x128xbf16> to vector<2x3x128xbf16>
    %c0_15 = arith.constant 0 : index
    %c2 = arith.constant 2 : index
    %c0_16 = arith.constant 0 : index
    %21 = tpu.strided_load %arg12[%c0_15, %c2, %c0_16] {strides = array<i32: 1, 10, 1>} : memref<2x39x128xf32, #tpu.memory_space<vmem>>, vector<2x4x128xf32>
    %22 = arith.truncf %21 : vector<2x4x128xf32> to vector<2x4x128xbf16>
    %23 = vector.extract_strided_slice %22 {offsets = [0, 0, 0], sizes = [2, 3, 128], strides = [1, 1, 1]} : vector<2x4x128xbf16> to vector<2x3x128xbf16>
    %24 = vector.extract_strided_slice %22 {offsets = [0, 1, 0], sizes = [2, 3, 128], strides = [1, 1, 1]} : vector<2x4x128xbf16> to vector<2x3x128xbf16>
    %c0_17 = arith.constant 0 : index
    %c3 = arith.constant 3 : index
    %c0_18 = arith.constant 0 : index
    %25 = tpu.strided_load %arg12[%c0_17, %c3, %c0_18] {strides = array<i32: 1, 10, 1>} : memref<2x39x128xf32, #tpu.memory_space<vmem>>, vector<2x4x128xf32>
    %26 = arith.truncf %25 : vector<2x4x128xf32> to vector<2x4x128xbf16>
    %27 = vector.extract_strided_slice %26 {offsets = [0, 0, 0], sizes = [2, 3, 128], strides = [1, 1, 1]} : vector<2x4x128xbf16> to vector<2x3x128xbf16>
    %28 = vector.extract_strided_slice %26 {offsets = [0, 1, 0], sizes = [2, 3, 128], strides = [1, 1, 1]} : vector<2x4x128xbf16> to vector<2x3x128xbf16>
    %c0_19 = arith.constant 0 : index
    %c4 = arith.constant 4 : index
    %c0_20 = arith.constant 0 : index
    %29 = tpu.strided_load %arg12[%c0_19, %c4, %c0_20] {strides = array<i32: 1, 10, 1>} : memref<2x39x128xf32, #tpu.memory_space<vmem>>, vector<2x4x128xf32>
    %30 = arith.truncf %29 : vector<2x4x128xf32> to vector<2x4x128xbf16>
    %31 = vector.extract_strided_slice %30 {offsets = [0, 0, 0], sizes = [2, 3, 128], strides = [1, 1, 1]} : vector<2x4x128xbf16> to vector<2x3x128xbf16>
    %32 = vector.extract_strided_slice %30 {offsets = [0, 1, 0], sizes = [2, 3, 128], strides = [1, 1, 1]} : vector<2x4x128xbf16> to vector<2x3x128xbf16>
    %c0_21 = arith.constant 0 : index
    %c5 = arith.constant 5 : index
    %c0_22 = arith.constant 0 : index
    %33 = tpu.strided_load %arg12[%c0_21, %c5, %c0_22] {strides = array<i32: 1, 10, 1>} : memref<2x39x128xf32, #tpu.memory_space<vmem>>, vector<2x4x128xf32>
    %34 = arith.truncf %33 : vector<2x4x128xf32> to vector<2x4x128xbf16>
    %35 = vector.extract_strided_slice %34 {offsets = [0, 0, 0], sizes = [2, 3, 128], strides = [1, 1, 1]} : vector<2x4x128xbf16> to vector<2x3x128xbf16>
    %36 = vector.extract_strided_slice %34 {offsets = [0, 1, 0], sizes = [2, 3, 128], strides = [1, 1, 1]} : vector<2x4x128xbf16> to vector<2x3x128xbf16>
    %c0_23 = arith.constant 0 : index
    %c6 = arith.constant 6 : index
    %c0_24 = arith.constant 0 : index
    %37 = tpu.strided_load %arg12[%c0_23, %c6, %c0_24] {strides = array<i32: 1, 10, 1>} : memref<2x39x128xf32, #tpu.memory_space<vmem>>, vector<2x4x128xf32>
    %38 = arith.truncf %37 : vector<2x4x128xf32> to vector<2x4x128xbf16>
    %39 = vector.extract_strided_slice %38 {offsets = [0, 0, 0], sizes = [2, 3, 128], strides = [1, 1, 1]} : vector<2x4x128xbf16> to vector<2x3x128xbf16>
    %40 = vector.extract_strided_slice %38 {offsets = [0, 1, 0], sizes = [2, 3, 128], strides = [1, 1, 1]} : vector<2x4x128xbf16> to vector<2x3x128xbf16>
    %c0_25 = arith.constant 0 : index
    %c7 = arith.constant 7 : index
    %c0_26 = arith.constant 0 : index
    %41 = tpu.strided_load %arg12[%c0_25, %c7, %c0_26] {strides = array<i32: 1, 10, 1>} : memref<2x39x128xf32, #tpu.memory_space<vmem>>, vector<2x4x128xf32>
    %42 = arith.truncf %41 : vector<2x4x128xf32> to vector<2x4x128xbf16>
    %43 = vector.extract_strided_slice %42 {offsets = [0, 0, 0], sizes = [2, 3, 128], strides = [1, 1, 1]} : vector<2x4x128xbf16> to vector<2x3x128xbf16>
    %44 = vector.extract_strided_slice %42 {offsets = [0, 1, 0], sizes = [2, 3, 128], strides = [1, 1, 1]} : vector<2x4x128xbf16> to vector<2x3x128xbf16>
    %c0_27 = arith.constant 0 : index
    %c8 = arith.constant 8 : index
    %c0_28 = arith.constant 0 : index
    %45 = tpu.strided_load %arg12[%c0_27, %c8, %c0_28] {strides = array<i32: 1, 10, 1>} : memref<2x39x128xf32, #tpu.memory_space<vmem>>, vector<2x4x128xf32>
    %46 = arith.truncf %45 : vector<2x4x128xf32> to vector<2x4x128xbf16>
    %47 = vector.extract_strided_slice %46 {offsets = [0, 0, 0], sizes = [2, 3, 128], strides = [1, 1, 1]} : vector<2x4x128xbf16> to vector<2x3x128xbf16>
    %48 = vector.extract_strided_slice %46 {offsets = [0, 1, 0], sizes = [2, 3, 128], strides = [1, 1, 1]} : vector<2x4x128xbf16> to vector<2x3x128xbf16>
    %c0_29 = arith.constant 0 : index
    %c9 = arith.constant 9 : index
    %c0_30 = arith.constant 0 : index
    %49 = tpu.strided_load %arg12[%c0_29, %c9, %c0_30] {strides = array<i32: 1, 10, 1>} : memref<2x39x128xf32, #tpu.memory_space<vmem>>, vector<2x3x128xf32>
    %50 = arith.truncf %49 : vector<2x3x128xf32> to vector<2x3x128xbf16>
    %51 = tpu.concatenate %15, %16, %19, %20, %23, %24, %27, %28, %31, %32, %35, %36, %39, %40, %43, %44 in 2 : vector<2x3x128xbf16>, vector<2x3x128xbf16>, vector<2x3x128xbf16>, vector<2x3x128xbf16>, vector<2x3x128xbf16>, vector<2x3x128xbf16>, vector<2x3x128xbf16>, vector<2x3x128xbf16>, vector<2x3x128xbf16>, vector<2x3x128xbf16>, vector<2x3x128xbf16>, vector<2x3x128xbf16>, vector<2x3x128xbf16>, vector<2x3x128xbf16>, vector<2x3x128xbf16>, vector<2x3x128xbf16> -> vector<2x3x2048xbf16>
    %52 = tpu.concatenate %47, %48, %50 in 2 : vector<2x3x128xbf16>, vector<2x3x128xbf16>, vector<2x3x128xbf16> -> vector<2x3x384xbf16>
    %53 = tpu.concatenate %51, %52 in 2 : vector<2x3x2048xbf16>, vector<2x3x384xbf16> -> vector<2x3x2432xbf16>
    %54 = vector.shape_cast %53 : vector<2x3x2432xbf16> to vector<6x2432xbf16>
    %c0_31 = arith.constant 0 : index
    %c0_32 = arith.constant 0 : index
    %55 = vector.load %arg5[%c0_31, %c0_32] : memref<2432x128xbf16, #tpu.memory_space<vmem>>, vector<2432x128xbf16>
    %cst_33 = arith.constant dense<0.000000e+00> : vector<6x128xf32>
    %56 = tpu.matmul %54, %55, %cst_33 {dimension_numbers = #tpu.dot_dimension_numbers<[1], [0], [0], [1], [0, 0, 1, 1], [], []>} : vector<6x2432xbf16>, vector<2432x128xbf16>, vector<6x128xf32> -> vector<6x128xf32>
    %57 = vector.broadcast %12 : vector<1x128xf32> to vector<6x128xf32>
    %58 = arith.addf %56, %57 : vector<6x128xf32>
    %cst_34 = arith.constant 0.000000e+00 : f32
    %59 = vector.broadcast %cst_34 : f32 to vector<6x128xf32>
    %60 = arith.maximumf %58, %59 : vector<6x128xf32>
    %61 = vector.extract_strided_slice %0 {offsets = [2, 0], sizes = [1, 128], strides = [1, 1]} : vector<8x128xf32> to vector<1x128xf32>
    %c0_35 = arith.constant 0 : index
    %c0_36 = arith.constant 0 : index
    %c0_37 = arith.constant 0 : index
    %62 = vector.load %arg2[%c0_35, %c0_36, %c0_37] : memref<2x79x36xbf16, #tpu.memory_space<vmem>>, vector<2x79x36xbf16>
    %63 = vector.shape_cast %62 : vector<2x79x36xbf16> to vector<158x36xbf16>
    %c0_38 = arith.constant 0 : index
    %c0_39 = arith.constant 0 : index
    %64 = vector.load %arg4[%c0_38, %c0_39] : memref<36x128xbf16, #tpu.memory_space<vmem>>, vector<36x128xbf16>
    %cst_40 = arith.constant dense<0.000000e+00> : vector<158x128xf32>
    %65 = tpu.matmul %63, %64, %cst_40 {dimension_numbers = #tpu.dot_dimension_numbers<[1], [0], [0], [1], [0, 0, 1, 1], [], []>} : vector<158x36xbf16>, vector<36x128xbf16>, vector<158x128xf32> -> vector<158x128xf32>
    %66 = vector.broadcast %61 : vector<1x128xf32> to vector<158x128xf32>
    %67 = arith.addf %65, %66 : vector<158x128xf32>
    %cst_41 = arith.constant 0.000000e+00 : f32
    %68 = vector.broadcast %cst_41 : f32 to vector<158x128xf32>
    %69 = arith.maximumf %67, %68 : vector<158x128xf32>
    %70 = vector.shape_cast %69 : vector<158x128xf32> to vector<2x79x128xf32>
    %c0_42 = arith.constant 0 : index
    %c0_43 = arith.constant 0 : index
    %c0_44 = arith.constant 0 : index
    %71 = vector.load %arg13[%c0_42, %c0_43, %c0_44] : memref<2x79x128xf32, #tpu.memory_space<vmem>>, vector<2x79x128xf32>
    tpu.vector_store %arg13[%c0_42, %c0_43, %c0_44], %70 {strides = array<i32>} : memref<2x79x128xf32, #tpu.memory_space<vmem>>, vector<2x79x128xf32>,
    %72 = vector.extract_strided_slice %0 {offsets = [3, 0], sizes = [1, 128], strides = [1, 1]} : vector<8x128xf32> to vector<1x128xf32>
    %c0_45 = arith.constant 0 : index
    %c0_46 = arith.constant 0 : index
    %c0_47 = arith.constant 0 : index
    %73 = tpu.strided_load %arg13[%c0_45, %c0_46, %c0_47] {strides = array<i32: 1, 5, 1>} : memref<2x79x128xf32, #tpu.memory_space<vmem>>, vector<2x16x128xf32>
    %74 = arith.truncf %73 : vector<2x16x128xf32> to vector<2x16x128xbf16>
    %75 = vector.extract_strided_slice %74 {offsets = [0, 0, 0], sizes = [2, 15, 128], strides = [1, 1, 1]} : vector<2x16x128xbf16> to vector<2x15x128xbf16>
    %76 = vector.extract_strided_slice %74 {offsets = [0, 1, 0], sizes = [2, 15, 128], strides = [1, 1, 1]} : vector<2x16x128xbf16> to vector<2x15x128xbf16>
    %c0_48 = arith.constant 0 : index
    %c1_49 = arith.constant 1 : index
    %c0_50 = arith.constant 0 : index
    %77 = tpu.strided_load %arg13[%c0_48, %c1_49, %c0_50] {strides = array<i32: 1, 5, 1>} : memref<2x79x128xf32, #tpu.memory_space<vmem>>, vector<2x16x128xf32>
    %78 = arith.truncf %77 : vector<2x16x128xf32> to vector<2x16x128xbf16>
    %79 = vector.extract_strided_slice %78 {offsets = [0, 0, 0], sizes = [2, 15, 128], strides = [1, 1, 1]} : vector<2x16x128xbf16> to vector<2x15x128xbf16>
    %80 = vector.extract_strided_slice %78 {offsets = [0, 1, 0], sizes = [2, 15, 128], strides = [1, 1, 1]} : vector<2x16x128xbf16> to vector<2x15x128xbf16>
    %c0_51 = arith.constant 0 : index
    %c2_52 = arith.constant 2 : index
    %c0_53 = arith.constant 0 : index
    %81 = tpu.strided_load %arg13[%c0_51, %c2_52, %c0_53] {strides = array<i32: 1, 5, 1>} : memref<2x79x128xf32, #tpu.memory_space<vmem>>, vector<2x16x128xf32>
    %82 = arith.truncf %81 : vector<2x16x128xf32> to vector<2x16x128xbf16>
    %83 = vector.extract_strided_slice %82 {offsets = [0, 0, 0], sizes = [2, 15, 128], strides = [1, 1, 1]} : vector<2x16x128xbf16> to vector<2x15x128xbf16>
    %84 = vector.extract_strided_slice %82 {offsets = [0, 1, 0], sizes = [2, 15, 128], strides = [1, 1, 1]} : vector<2x16x128xbf16> to vector<2x15x128xbf16>
    %c0_54 = arith.constant 0 : index
    %c3_55 = arith.constant 3 : index
    %c0_56 = arith.constant 0 : index
    %85 = tpu.strided_load %arg13[%c0_54, %c3_55, %c0_56] {strides = array<i32: 1, 5, 1>} : memref<2x79x128xf32, #tpu.memory_space<vmem>>, vector<2x16x128xf32>
    %86 = arith.truncf %85 : vector<2x16x128xf32> to vector<2x16x128xbf16>
    %87 = vector.extract_strided_slice %86 {offsets = [0, 0, 0], sizes = [2, 15, 128], strides = [1, 1, 1]} : vector<2x16x128xbf16> to vector<2x15x128xbf16>
    %88 = vector.extract_strided_slice %86 {offsets = [0, 1, 0], sizes = [2, 15, 128], strides = [1, 1, 1]} : vector<2x16x128xbf16> to vector<2x15x128xbf16>
    %c0_57 = arith.constant 0 : index
    %c4_58 = arith.constant 4 : index
    %c0_59 = arith.constant 0 : index
    %89 = tpu.strided_load %arg13[%c0_57, %c4_58, %c0_59] {strides = array<i32: 1, 5, 1>} : memref<2x79x128xf32, #tpu.memory_space<vmem>>, vector<2x15x128xf32>
    %90 = arith.truncf %89 : vector<2x15x128xf32> to vector<2x15x128xbf16>
    %91 = tpu.concatenate %75, %76, %79, %80, %83, %84, %87, %88, %90 in 2 : vector<2x15x128xbf16>, vector<2x15x128xbf16>, vector<2x15x128xbf16>, vector<2x15x128xbf16>, vector<2x15x128xbf16>, vector<2x15x128xbf16>, vector<2x15x128xbf16>, vector<2x15x128xbf16>, vector<2x15x128xbf16> -> vector<2x15x1152xbf16>
    %92 = vector.shape_cast %91 : vector<2x15x1152xbf16> to vector<30x1152xbf16>
    %c0_60 = arith.constant 0 : index
    %c0_61 = arith.constant 0 : index
    %93 = vector.load %arg6[%c0_60, %c0_61] : memref<1152x128xbf16, #tpu.memory_space<vmem>>, vector<1152x128xbf16>
    %cst_62 = arith.constant dense<0.000000e+00> : vector<30x128xf32>
    %94 = tpu.matmul %92, %93, %cst_62 {dimension_numbers = #tpu.dot_dimension_numbers<[1], [0], [0], [1], [0, 0, 1, 1], [], []>} : vector<30x1152xbf16>, vector<1152x128xbf16>, vector<30x128xf32> -> vector<30x128xf32>
    %95 = vector.broadcast %72 : vector<1x128xf32> to vector<30x128xf32>
    %96 = arith.addf %94, %95 : vector<30x128xf32>
    %cst_63 = arith.constant 0.000000e+00 : f32
    %97 = vector.broadcast %cst_63 : f32 to vector<30x128xf32>
    %98 = arith.maximumf %96, %97 : vector<30x128xf32>
    %99 = vector.shape_cast %98 : vector<30x128xf32> to vector<2x15x128xf32>
    %c0_64 = arith.constant 0 : index
    %c0_65 = arith.constant 0 : index
    %c0_66 = arith.constant 0 : index
    %100 = vector.load %arg14[%c0_64, %c0_65, %c0_66] : memref<2x15x128xf32, #tpu.memory_space<vmem>>, vector<2x15x128xf32>
    tpu.vector_store %arg14[%c0_64, %c0_65, %c0_66], %99 {strides = array<i32>} : memref<2x15x128xf32, #tpu.memory_space<vmem>>, vector<2x15x128xf32>,
    %101 = vector.extract_strided_slice %0 {offsets = [4, 0], sizes = [1, 128], strides = [1, 1]} : vector<8x128xf32> to vector<1x128xf32>
    %c0_67 = arith.constant 0 : index
    %c0_68 = arith.constant 0 : index
    %c0_69 = arith.constant 0 : index
    %102 = tpu.strided_load %arg14[%c0_67, %c0_68, %c0_69] {strides = array<i32: 1, 4, 1>} : memref<2x15x128xf32, #tpu.memory_space<vmem>>, vector<2x4x128xf32>
    %103 = arith.truncf %102 : vector<2x4x128xf32> to vector<2x4x128xbf16>
    %104 = vector.extract_strided_slice %103 {offsets = [0, 0, 0], sizes = [2, 3, 128], strides = [1, 1, 1]} : vector<2x4x128xbf16> to vector<2x3x128xbf16>
    %105 = vector.extract_strided_slice %103 {offsets = [0, 1, 0], sizes = [2, 3, 128], strides = [1, 1, 1]} : vector<2x4x128xbf16> to vector<2x3x128xbf16>
    %c0_70 = arith.constant 0 : index
    %c1_71 = arith.constant 1 : index
    %c0_72 = arith.constant 0 : index
    %106 = tpu.strided_load %arg14[%c0_70, %c1_71, %c0_72] {strides = array<i32: 1, 4, 1>} : memref<2x15x128xf32, #tpu.memory_space<vmem>>, vector<2x4x128xf32>
    %107 = arith.truncf %106 : vector<2x4x128xf32> to vector<2x4x128xbf16>
    %108 = vector.extract_strided_slice %107 {offsets = [0, 0, 0], sizes = [2, 3, 128], strides = [1, 1, 1]} : vector<2x4x128xbf16> to vector<2x3x128xbf16>
    %109 = vector.extract_strided_slice %107 {offsets = [0, 1, 0], sizes = [2, 3, 128], strides = [1, 1, 1]} : vector<2x4x128xbf16> to vector<2x3x128xbf16>
    %c0_73 = arith.constant 0 : index
    %c2_74 = arith.constant 2 : index
    %c0_75 = arith.constant 0 : index
    %110 = tpu.strided_load %arg14[%c0_73, %c2_74, %c0_75] {strides = array<i32: 1, 4, 1>} : memref<2x15x128xf32, #tpu.memory_space<vmem>>, vector<2x4x128xf32>
    %111 = arith.truncf %110 : vector<2x4x128xf32> to vector<2x4x128xbf16>
    %112 = vector.extract_strided_slice %111 {offsets = [0, 0, 0], sizes = [2, 3, 128], strides = [1, 1, 1]} : vector<2x4x128xbf16> to vector<2x3x128xbf16>
    %113 = vector.extract_strided_slice %111 {offsets = [0, 1, 0], sizes = [2, 3, 128], strides = [1, 1, 1]} : vector<2x4x128xbf16> to vector<2x3x128xbf16>
    %c0_76 = arith.constant 0 : index
    %c3_77 = arith.constant 3 : index
    %c0_78 = arith.constant 0 : index
    %114 = tpu.strided_load %arg14[%c0_76, %c3_77, %c0_78] {strides = array<i32: 1, 4, 1>} : memref<2x15x128xf32, #tpu.memory_space<vmem>>, vector<2x3x128xf32>
    %115 = arith.truncf %114 : vector<2x3x128xf32> to vector<2x3x128xbf16>
    %116 = tpu.concatenate %104, %105, %108, %109, %112, %113, %115 in 2 : vector<2x3x128xbf16>, vector<2x3x128xbf16>, vector<2x3x128xbf16>, vector<2x3x128xbf16>, vector<2x3x128xbf16>, vector<2x3x128xbf16>, vector<2x3x128xbf16> -> vector<2x3x896xbf16>
    %117 = vector.shape_cast %116 : vector<2x3x896xbf16> to vector<6x896xbf16>
    %c0_79 = arith.constant 0 : index
    %c0_80 = arith.constant 0 : index
    %118 = vector.load %arg7[%c0_79, %c0_80] : memref<896x128xbf16, #tpu.memory_space<vmem>>, vector<896x128xbf16>
    %cst_81 = arith.constant dense<0.000000e+00> : vector<6x128xf32>
    %119 = tpu.matmul %117, %118, %cst_81 {dimension_numbers = #tpu.dot_dimension_numbers<[1], [0], [0], [1], [0, 0, 1, 1], [], []>} : vector<6x896xbf16>, vector<896x128xbf16>, vector<6x128xf32> -> vector<6x128xf32>
    %120 = vector.broadcast %101 : vector<1x128xf32> to vector<6x128xf32>
    %121 = arith.addf %119, %120 : vector<6x128xf32>
    %cst_82 = arith.constant 0.000000e+00 : f32
    %122 = vector.broadcast %cst_82 : f32 to vector<6x128xf32>
    %123 = arith.maximumf %121, %122 : vector<6x128xf32>
    %124 = arith.truncf %60 : vector<6x128xf32> to vector<6x128xbf16>
    %c0_83 = arith.constant 0 : index
    %c0_84 = arith.constant 0 : index
    %125 = vector.load %arg8[%c0_83, %c0_84] : memref<128x128xbf16, #tpu.memory_space<vmem>>, vector<128x128xbf16>
    %cst_85 = arith.constant dense<0.000000e+00> : vector<6x128xf32>
    %126 = tpu.matmul %124, %125, %cst_85 {dimension_numbers = #tpu.dot_dimension_numbers<[1], [0], [0], [1], [0, 0, 1, 1], [], []>} : vector<6x128xbf16>, vector<128x128xbf16>, vector<6x128xf32> -> vector<6x128xf32>
    %127 = arith.truncf %123 : vector<6x128xf32> to vector<6x128xbf16>
    %c0_86 = arith.constant 0 : index
    %c0_87 = arith.constant 0 : index
    %128 = vector.load %arg9[%c0_86, %c0_87] : memref<128x128xbf16, #tpu.memory_space<vmem>>, vector<128x128xbf16>
    %cst_88 = arith.constant dense<0.000000e+00> : vector<6x128xf32>
    %129 = tpu.matmul %127, %128, %cst_88 {dimension_numbers = #tpu.dot_dimension_numbers<[1], [0], [0], [1], [0, 0, 1, 1], [], []>} : vector<6x128xbf16>, vector<128x128xbf16>, vector<6x128xf32> -> vector<6x128xf32>
    %130 = arith.addf %126, %129 : vector<6x128xf32>
    %131 = vector.extract_strided_slice %0 {offsets = [5, 0], sizes = [1, 128], strides = [1, 1]} : vector<8x128xf32> to vector<1x128xf32>
    %132 = vector.broadcast %131 : vector<1x128xf32> to vector<6x128xf32>
    %133 = arith.addf %130, %132 : vector<6x128xf32>
    %cst_89 = arith.constant 0.000000e+00 : f32
    %134 = vector.broadcast %cst_89 : f32 to vector<6x128xf32>
    %135 = arith.maximumf %133, %134 : vector<6x128xf32>
    %136 = vector.shape_cast %135 : vector<6x128xf32> to vector<2x3x128xf32>
    %c0_90 = arith.constant 0 : index
    %c0_91 = arith.constant 0 : index
    %c0_92 = arith.constant 0 : index
    %137 = vector.load %arg11[%c0_90, %c0_91, %c0_92] : memref<2x3x128xf32, #tpu.memory_space<vmem>>, vector<2x3x128xf32>
    tpu.vector_store %arg11[%c0_90, %c0_91, %c0_92], %136 {strides = array<i32>} : memref<2x3x128xf32, #tpu.memory_space<vmem>>, vector<2x3x128xf32>,
    return
  }
  func.func @transform_0(%arg0: i32) -> (i32, i32, i32) {
    %c0_i32 = arith.constant 0 : i32
    %c0_i32_0 = arith.constant 0 : i32
    %c0_i32_1 = arith.constant 0 : i32
    return %arg0, %c0_i32, %c0_i32_0 : i32, i32, i32
  }
  func.func @transform_1(%arg0: i32) -> (i32, i32, i32) {
    %c0_i32 = arith.constant 0 : i32
    %c0_i32_0 = arith.constant 0 : i32
    %c0_i32_1 = arith.constant 0 : i32
    return %arg0, %c0_i32, %c0_i32_0 : i32, i32, i32
  }
  func.func @transform_2(%arg0: i32) -> (i32, i32) {
    %c0_i32 = arith.constant 0 : i32
    %c0_i32_0 = arith.constant 0 : i32
    %c0_i32_1 = arith.constant 0 : i32
    return %c0_i32, %c0_i32_0 : i32, i32
  }
  func.func @transform_3(%arg0: i32) -> (i32, i32) {
    %c0_i32 = arith.constant 0 : i32
    %c0_i32_0 = arith.constant 0 : i32
    %c0_i32_1 = arith.constant 0 : i32
    return %c0_i32, %c0_i32_0 : i32, i32
  }
  func.func @transform_4(%arg0: i32) -> (i32, i32) {
    %c0_i32 = arith.constant 0 : i32
    %c0_i32_0 = arith.constant 0 : i32
    %c0_i32_1 = arith.constant 0 : i32
    return %c0_i32, %c0_i32_0 : i32, i32
  }
  func.func @transform_5(%arg0: i32) -> (i32, i32) {
    %c0_i32 = arith.constant 0 : i32
    %c0_i32_0 = arith.constant 0 : i32
    %c0_i32_1 = arith.constant 0 : i32
    return %c0_i32, %c0_i32_0 : i32, i32
  }
  func.func @transform_6(%arg0: i32) -> (i32, i32) {
    %c0_i32 = arith.constant 0 : i32
    %c0_i32_0 = arith.constant 0 : i32
    %c0_i32_1 = arith.constant 0 : i32
    return %c0_i32, %c0_i32_0 : i32, i32
  }
  func.func @transform_7(%arg0: i32) -> (i32, i32) {
    %c0_i32 = arith.constant 0 : i32
    %c0_i32_0 = arith.constant 0 : i32
    %c0_i32_1 = arith.constant 0 : i32
    return %c0_i32, %c0_i32_0 : i32, i32
  }
  func.func @transform_8(%arg0: i32) -> (i32, i32) {
    %c0_i32 = arith.constant 0 : i32
    %c0_i32_0 = arith.constant 0 : i32
    %c0_i32_1 = arith.constant 0 : i32
    return %c0_i32, %c0_i32_0 : i32, i32
  }
  func.func @transform_9(%arg0: i32) -> (i32, i32) {
    %c0_i32 = arith.constant 0 : i32
    %c0_i32_0 = arith.constant 0 : i32
    %c0_i32_1 = arith.constant 0 : i32
    return %c0_i32, %c0_i32_0 : i32, i32
  }
  func.func @transform_10(%arg0: i32) -> (i32, i32, i32) {
    %c0_i32 = arith.constant 0 : i32
    %c0_i32_0 = arith.constant 0 : i32
    %c0_i32_1 = arith.constant 0 : i32
    return %arg0, %c0_i32, %c0_i32_0 : i32, i32, i32
  }
}

</mosaic_0001>

<llo_original>
// kernel: multipath_forward.1
$region0: #{multipath_forward.1}
  #allocation0 [shape = 'u32[]', space=smem, size = 0x4, offset = 0x4, fixed_abs, tag = 'smem constant byte address 0x4 - core index']
  #allocation1 [shape = 'u32[144,128]{1,0:T(1,128)}', space=vmem, size = 0x12000, scoped, tag = 'internal scratch']
  #allocation2 [shape = 'f32[2,39,128]{2,1,0:T(8,128)}', space=vmem, size = 0xa000, scoped, tag = 'scratch operand']
  #allocation3 [shape = 'f32[2,79,128]{2,1,0:T(8,128)}', space=vmem, size = 0x14000, scoped, tag = 'scratch operand']
  #allocation4 [shape = 'f32[2,15,128]{2,1,0:T(8,128)}', space=vmem, size = 0x4000, scoped, tag = 'scratch operand']
  %s0 = inlined_call_operand.vmem [shape: bf16[2,39,76], index: 0, kind: input, shape index: {}]
  %s1 = inlined_call_operand.vmem [shape: bf16[2,79,36], index: 1, kind: input, shape index: {}]
  %s2 = inlined_call_operand.vmem [shape: bf16[76,128], index: 2, kind: input, shape index: {}]
  %s3 = inlined_call_operand.vmem [shape: bf16[36,128], index: 3, kind: input, shape index: {}]
  %s4 = inlined_call_operand.vmem [shape: bf16[2432,128], index: 4, kind: input, shape index: {}]
  %s5 = inlined_call_operand.vmem [shape: bf16[1152,128], index: 5, kind: input, shape index: {}]
  %s6 = inlined_call_operand.vmem [shape: bf16[896,128], index: 6, kind: input, shape index: {}]
  %s7 = inlined_call_operand.vmem [shape: bf16[128,128], index: 7, kind: input, shape index: {}]
  %s8 = inlined_call_operand.vmem [shape: bf16[128,128], index: 8, kind: input, shape index: {}]
  %s9 = inlined_call_operand.vmem [shape: f32[8,128], index: 9, kind: input, shape index: {}]
  %s10 = inlined_call_operand.vmem [shape: f32[2,3,128], index: 10, kind: output, shape index: {}]
  %s11 = sld [smem:[#allocation0]]
  $region50: #{multipath_forward.1} parent=0
    _
  %s13 = ssub.s32 1, %s11
  %s14 = scalar_select 0, %s13, %s11
  // Predicated region
  $region2: #{multipath_forward.1} parent=0 // pred_check
    _
  $region3: #{multipath_forward.1} parent=0 // pred_check_branch
    %16 = sbr.rel (0) target = $region5
  $region4: #{multipath_forward.1} parent=0 // pred_region
    _
  $region5: #{multipath_forward.1} parent=0 // pred_fallthru
    _
  // Predicated region
  $region6: #{multipath_forward.1} parent=0 // pred_check
    _
  $region7: #{multipath_forward.1} parent=0 // pred_check_branch
    %18 = sbr.rel (0) target = $region9
  $region8: #{multipath_forward.1} parent=0 // pred_region
    _
  $region9: #{multipath_forward.1} parent=0 // pred_fallthru
    _
  // Predicated region
  $region10: #{multipath_forward.1} parent=0 // pred_check
    _
  $region11: #{multipath_forward.1} parent=0 // pred_check_branch
    %20 = sbr.rel (0) target = $region13
  $region12: #{multipath_forward.1} parent=0 // pred_region
    _
  $region13: #{multipath_forward.1} parent=0 // pred_fallthru
    _
  // Predicated region
  $region14: #{multipath_forward.1} parent=0 // pred_check
    _
  $region15: #{multipath_forward.1} parent=0 // pred_check_branch
    %22 = sbr.rel (0) target = $region17
  $region16: #{multipath_forward.1} parent=0 // pred_region
    _
  $region17: #{multipath_forward.1} parent=0 // pred_fallthru
    _
  // Predicated region
  $region18: #{multipath_forward.1} parent=0 // pred_check
    _
  $region19: #{multipath_forward.1} parent=0 // pred_check_branch
    %24 = sbr.rel (0) target = $region21
  $region20: #{multipath_forward.1} parent=0 // pred_region
    _
  $region21: #{multipath_forward.1} parent=0 // pred_fallthru
    _
  // Predicated region
  $region22: #{multipath_forward.1} parent=0 // pred_check
    _
  $region23: #{multipath_forward.1} parent=0 // pred_check_branch
    %26 = sbr.rel (0) target = $region25
  $region24: #{multipath_forward.1} parent=0 // pred_region
    _
  $region25: #{multipath_forward.1} parent=0 // pred_fallthru
    _
  // Predicated region
  $region26: #{multipath_forward.1} parent=0 // pred_check
    _
  $region27: #{multipath_forward.1} parent=0 // pred_check_branch
    %28 = sbr.rel (0) target = $region29
  $region28: #{multipath_forward.1} parent=0 // pred_region
    _
  $region29: #{multipath_forward.1} parent=0 // pred_fallthru
    _
  // Predicated region
  $region30: #{multipath_forward.1} parent=0 // pred_check
    _
  $region31: #{multipath_forward.1} parent=0 // pred_check_branch
    %30 = sbr.rel (0) target = $region33
  $region32: #{multipath_forward.1} parent=0 // pred_region
    _
  $region33: #{multipath_forward.1} parent=0 // pred_fallthru
    _
  // Predicated region
  $region34: #{multipath_forward.1} parent=0 // pred_check
    _
  $region35: #{multipath_forward.1} parent=0 // pred_check_branch
    %32 = sbr.rel (0) target = $region37
  $region36: #{multipath_forward.1} parent=0 // pred_region
    _
  $region37: #{multipath_forward.1} parent=0 // pred_fallthru
    _
  // Predicated region
  $region38: #{multipath_forward.1} parent=0 // pred_check
    _
  $region39: #{multipath_forward.1} parent=0 // pred_check_branch
    %34 = sbr.rel (0) target = $region41
  $region40: #{multipath_forward.1} parent=0 // pred_region
    _
  $region41: #{multipath_forward.1} parent=0 // pred_fallthru
    _
  %v36 = vld [vmem:[%s9] sm:$0xff]
  %v37 = vld [vmem:[%s0] sm:$0xf]
  %v38 = vld [vmem:[%s0 + $0x4] sm:$0xf]
  %v39 = vld [vmem:[%s0 + $0x8] sm:$0xf]
  %v40 = vld [vmem:[%s0 + $0xc] sm:$0xf]
  %v41 = vld [vmem:[%s0 + $0x10] sm:$0xf]
  %v42 = vld [vmem:[%s0 + $0x14] sm:$0xf]
  %v43 = vld [vmem:[%s0 + $0x18] sm:$0xf]
  %v44 = vld [vmem:[%s0 + $0x1c] sm:$0xf]
  %v45 = vld [vmem:[%s0 + $0x20] sm:$0xf]
  %v46 = vld [vmem:[%s0 + $0x24] sm:$0xf]
  %v58 = vunpack.c.l.s4 1966171168
  %v59 = vunpack.c.0.s8 %v58
  %v60 = vlaneseq
  %v61 = vshrl.u32 %v60, 7
  %v62 = vsub.s32 %v59, %v61
  %v63 = vrot.slane %v37, %v62
  %v64 = vcombine.high %v63, %v63
  %v66 = vunpack.c.l.s4 1966171168
  %v67 = vunpack.c.0.s8 %v66
  %v68 = vlaneseq
  %v69 = vshrl.u32 %v68, 7
  %v70 = vsub.s32 %v67, %v69
  %v71 = vrot.slane %v63, %v70
  %v73 = vunpack.c.l.s4 1966171168
  %v74 = vunpack.c.0.s8 %v73
  %v75 = vlaneseq
  %v76 = vshrl.u32 %v75, 7
  %v77 = vsub.s32 %v74, %v76
  %v78 = vrot.slane %v64, %v77
  %v79 = vcombine.high %v71, %v71
  %v80 = vcombine.high %v78, %v78
  %v82 = vunpack.c.l.s4 1966171168
  %v83 = vunpack.c.0.s8 %v82
  %v84 = vlaneseq
  %v85 = vshrl.u32 %v84, 7
  %v86 = vsub.s32 %v83, %v85
  %v87 = vrot.slane %v38, %v86
  %v88 = vcombine.high %v87, %v87
  %v90 = vunpack.c.l.s4 1966171168
  %v91 = vunpack.c.0.s8 %v90
  %v92 = vlaneseq
  %v93 = vshrl.u32 %v92, 7
  %v94 = vsub.s32 %v91, %v93
  %v95 = vrot.slane %v87, %v94
  %v97 = vunpack.c.l.s4 1966171168
  %v98 = vunpack.c.0.s8 %v97
  %v99 = vlaneseq
  %v100 = vshrl.u32 %v99, 7
  %v101 = vsub.s32 %v98, %v100
  %v102 = vrot.slane %v88, %v101
  %v103 = vcombine.high %v95, %v95
  %v104 = vcombine.high %v102, %v102
  %v106 = vunpack.c.l.s4 1966171168
  %v107 = vunpack.c.0.s8 %v106
  %v108 = vlaneseq
  %v109 = vshrl.u32 %v108, 7
  %v110 = vsub.s32 %v107, %v109
  %v111 = vrot.slane %v39, %v110
  %v112 = vcombine.high %v111, %v111
  %v114 = vunpack.c.l.s4 1966171168
  %v115 = vunpack.c.0.s8 %v114
  %v116 = vlaneseq
  %v117 = vshrl.u32 %v116, 7
  %v118 = vsub.s32 %v115, %v117
  %v119 = vrot.slane %v111, %v118
  %v121 = vunpack.c.l.s4 1966171168
  %v122 = vunpack.c.0.s8 %v121
  %v123 = vlaneseq
  %v124 = vshrl.u32 %v123, 7
  %v125 = vsub.s32 %v122, %v124
  %v126 = vrot.slane %v112, %v125
  %v127 = vcombine.high %v119, %v119
  %v128 = vcombine.high %v126, %v126
  %v130 = vunpack.c.l.s4 1966171168
  %v131 = vunpack.c.0.s8 %v130
  %v132 = vlaneseq
  %v133 = vshrl.u32 %v132, 7
  %v134 = vsub.s32 %v131, %v133
  %v135 = vrot.slane %v40, %v134
  %v136 = vcombine.high %v135, %v135
  %v138 = vunpack.c.l.s4 1966171168
  %v139 = vunpack.c.0.s8 %v138
  %v140 = vlaneseq
  %v141 = vshrl.u32 %v140, 7
  %v142 = vsub.s32 %v139, %v141
  %v143 = vrot.slane %v135, %v142
  %v145 = vunpack.c.l.s4 1966171168
  %v146 = vunpack.c.0.s8 %v145
  %v147 = vlaneseq
  %v148 = vshrl.u32 %v147, 7
  %v149 = vsub.s32 %v146, %v148
  %v150 = vrot.slane %v136, %v149
  %v151 = vcombine.high %v143, %v143
  %v152 = vcombine.high %v150, %v150
  %v154 = vunpack.c.l.s4 1966171168
  %v155 = vunpack.c.0.s8 %v154
  %v156 = vlaneseq
  %v157 = vshrl.u32 %v156, 7
  %v158 = vsub.s32 %v155, %v157
  %v159 = vrot.slane %v41, %v158
  %v160 = vcombine.high %v159, %v159
  %v162 = vunpack.c.l.s4 1966171168
  %v163 = vunpack.c.0.s8 %v162
  %v164 = vlaneseq
  %v165 = vshrl.u32 %v164, 7
  %v166 = vsub.s32 %v163, %v165
  %v167 = vrot.slane %v159, %v166
  %v169 = vunpack.c.l.s4 1966171168
  %v170 = vunpack.c.0.s8 %v169
  %v171 = vlaneseq
  %v172 = vshrl.u32 %v171, 7
  %v173 = vsub.s32 %v170, %v172
  %v174 = vrot.slane %v160, %v173
  %v175 = vcombine.high %v167, %v167
  %v176 = vcombine.high %v174, %v174
  %v178 = vunpack.c.l.s4 1966171168
  %v179 = vunpack.c.0.s8 %v178
  %v180 = vlaneseq
  %v181 = vshrl.u32 %v180, 7
  %v182 = vsub.s32 %v179, %v181
  %v183 = vrot.slane %v42, %v182
  %v184 = vcombine.high %v183, %v183
  %v186 = vunpack.c.l.s4 1966171168
  %v187 = vunpack.c.0.s8 %v186
  %v188 = vlaneseq
  %v189 = vshrl.u32 %v188, 7
  %v190 = vsub.s32 %v187, %v189
  %v191 = vrot.slane %v183, %v190
  %v193 = vunpack.c.l.s4 1966171168
  %v194 = vunpack.c.0.s8 %v193
  %v195 = vlaneseq
  %v196 = vshrl.u32 %v195, 7
  %v197 = vsub.s32 %v194, %v196
  %v198 = vrot.slane %v184, %v197
  %v199 = vcombine.high %v191, %v191
  %v200 = vcombine.high %v198, %v198
  %v202 = vunpack.c.l.s4 1966171168
  %v203 = vunpack.c.0.s8 %v202
  %v204 = vlaneseq
  %v205 = vshrl.u32 %v204, 7
  %v206 = vsub.s32 %v203, %v205
  %v207 = vrot.slane %v43, %v206
  %v208 = vcombine.high %v207, %v207
  %v210 = vunpack.c.l.s4 1966171168
  %v211 = vunpack.c.0.s8 %v210
  %v212 = vlaneseq
  %v213 = vshrl.u32 %v212, 7
  %v214 = vsub.s32 %v211, %v213
  %v215 = vrot.slane %v207, %v214
  %v217 = vunpack.c.l.s4 1966171168
  %v218 = vunpack.c.0.s8 %v217
  %v219 = vlaneseq
  %v220 = vshrl.u32 %v219, 7
  %v221 = vsub.s32 %v218, %v220
  %v222 = vrot.slane %v208, %v221
  %v223 = vcombine.high %v215, %v215
  %v224 = vcombine.high %v222, %v222
  %v226 = vunpack.c.l.s4 1966171168
  %v227 = vunpack.c.0.s8 %v226
  %v228 = vlaneseq
  %v229 = vshrl.u32 %v228, 7
  %v230 = vsub.s32 %v227, %v229
  %v231 = vrot.slane %v44, %v230
  %v232 = vcombine.high %v231, %v231
  %v234 = vunpack.c.l.s4 1966171168
  %v235 = vunpack.c.0.s8 %v234
  %v236 = vlaneseq
  %v237 = vshrl.u32 %v236, 7
  %v238 = vsub.s32 %v235, %v237
  %v239 = vrot.slane %v231, %v238
  %v241 = vunpack.c.l.s4 1966171168
  %v242 = vunpack.c.0.s8 %v241
  %v243 = vlaneseq
  %v244 = vshrl.u32 %v243, 7
  %v245 = vsub.s32 %v242, %v244
  %v246 = vrot.slane %v232, %v245
  %v247 = vcombine.high %v239, %v239
  %v248 = vcombine.high %v246, %v246
  %v250 = vunpack.c.l.s4 1966171168
  %v251 = vunpack.c.0.s8 %v250
  %v252 = vlaneseq
  %v253 = vshrl.u32 %v252, 7
  %v254 = vsub.s32 %v251, %v253
  %v255 = vrot.slane %v45, %v254
  %v256 = vcombine.high %v255, %v255
  %v258 = vunpack.c.l.s4 1966171168
  %v259 = vunpack.c.0.s8 %v258
  %v260 = vlaneseq
  %v261 = vshrl.u32 %v260, 7
  %v262 = vsub.s32 %v259, %v261
  %v263 = vrot.slane %v255, %v262
  %v265 = vunpack.c.l.s4 1966171168
  %v266 = vunpack.c.0.s8 %v265
  %v267 = vlaneseq
  %v268 = vshrl.u32 %v267, 7
  %v269 = vsub.s32 %v266, %v268
  %v270 = vrot.slane %v256, %v269
  %v271 = vcombine.high %v263, %v263
  %v272 = vcombine.high %v270, %v270
  %v274 = vunpack.c.l.s4 1966171168
  %v275 = vunpack.c.0.s8 %v274
  %v276 = vlaneseq
  %v277 = vshrl.u32 %v276, 7
  %v278 = vsub.s32 %v275, %v277
  %v279 = vrot.slane %v46, %v278
  %v280 = vcombine.high %v279, %v279
  %v282 = vunpack.c.l.s4 1966171168
  %v283 = vunpack.c.0.s8 %v282
  %v284 = vlaneseq
  %v285 = vshrl.u32 %v284, 7
  %v286 = vsub.s32 %v283, %v285
  %v287 = vrot.slane %v279, %v286
  %v289 = vunpack.c.l.s4 1966171168
  %v290 = vunpack.c.0.s8 %v289
  %v291 = vlaneseq
  %v292 = vshrl.u32 %v291, 7
  %v293 = vsub.s32 %v290, %v292
  %v294 = vrot.slane %v280, %v293
  %v295 = vcombine.high %v287, %v287
  %v296 = vcombine.high %v294, %v294
  %v297 = vunpack.i.l.s16 %v71
  %v298 = vunpack.i.h.s16 %v71
  %v299 = vunpack.i.l.s16 %v78
  %v300 = vunpack.i.h.s16 %v78
  %v301 = vunpack.i.l.s16 %v79
  %v302 = vunpack.i.h.s16 %v79
  %v303 = vunpack.i.l.s16 %v80
  %v304 = vunpack.i.h.s16 %v80
  %v305 = vunpack.i.l.s16 %v95
  %v306 = vunpack.i.h.s16 %v95
  %v307 = vunpack.i.l.s16 %v102
  %v308 = vunpack.i.h.s16 %v102
  %v309 = vunpack.i.l.s16 %v103
  %v310 = vunpack.i.h.s16 %v103
  %v311 = vunpack.i.l.s16 %v104
  %v312 = vunpack.i.h.s16 %v104
  %v313 = vunpack.i.l.s16 %v119
  %v314 = vunpack.i.h.s16 %v119
  %v315 = vunpack.i.l.s16 %v126
  %v316 = vunpack.i.h.s16 %v126
  %v317 = vunpack.i.l.s16 %v127
  %v318 = vunpack.i.h.s16 %v127
  %v319 = vunpack.i.l.s16 %v128
  %v320 = vunpack.i.h.s16 %v128
  %v321 = vunpack.i.l.s16 %v143
  %v322 = vunpack.i.h.s16 %v143
  %v323 = vunpack.i.l.s16 %v150
  %v324 = vunpack.i.h.s16 %v150
  %v325 = vunpack.i.l.s16 %v151
  %v326 = vunpack.i.h.s16 %v151
  %v327 = vunpack.i.l.s16 %v152
  %v328 = vunpack.i.h.s16 %v152
  %v329 = vunpack.i.l.s16 %v167
  %v330 = vunpack.i.h.s16 %v167
  %v331 = vunpack.i.l.s16 %v174
  %v332 = vunpack.i.h.s16 %v174
  %v333 = vunpack.i.l.s16 %v175
  %v334 = vunpack.i.h.s16 %v175
  %v335 = vunpack.i.l.s16 %v176
  %v336 = vunpack.i.l.s16 %v191
  %v337 = vunpack.i.h.s16 %v191
  %v338 = vunpack.i.l.s16 %v198
  %v339 = vunpack.i.h.s16 %v198
  %v340 = vunpack.i.l.s16 %v199
  %v341 = vunpack.i.h.s16 %v199
  %v342 = vunpack.i.l.s16 %v200
  %v343 = vunpack.i.h.s16 %v200
  %v344 = vunpack.i.l.s16 %v215
  %v345 = vunpack.i.h.s16 %v215
  %v346 = vunpack.i.l.s16 %v222
  %v347 = vunpack.i.h.s16 %v222
  %v348 = vunpack.i.l.s16 %v223
  %v349 = vunpack.i.h.s16 %v223
  %v350 = vunpack.i.l.s16 %v224
  %v351 = vunpack.i.h.s16 %v224
  %v352 = vunpack.i.l.s16 %v239
  %v353 = vunpack.i.h.s16 %v239
  %v354 = vunpack.i.l.s16 %v246
  %v355 = vunpack.i.h.s16 %v246
  %v356 = vunpack.i.l.s16 %v247
  %v357 = vunpack.i.h.s16 %v247
  %v358 = vunpack.i.l.s16 %v248
  %v359 = vunpack.i.h.s16 %v248
  %v360 = vunpack.i.l.s16 %v263
  %v361 = vunpack.i.h.s16 %v263
  %v362 = vunpack.i.l.s16 %v270
  %v363 = vunpack.i.h.s16 %v270
  %v364 = vunpack.i.l.s16 %v271
  %v365 = vunpack.i.h.s16 %v271
  %v366 = vunpack.i.l.s16 %v272
  %v367 = vunpack.i.h.s16 %v272
  %v368 = vunpack.i.l.s16 %v287
  %v369 = vunpack.i.h.s16 %v287
  %v370 = vunpack.i.l.s16 %v294
  %v371 = vunpack.i.h.s16 %v294
  %v372 = vunpack.i.l.s16 %v295
  %v373 = vunpack.i.h.s16 %v295
  %v374 = vunpack.i.l.s16 %v296
  %v375 = vld [vmem:[%s2] sm:$0xf]
  %v376 = vld [vmem:[%s2 + $0x4] sm:$0xf]
  %v377 = vld [vmem:[%s2 + $0x8] sm:$0xf]
  %v378 = vld [vmem:[%s2 + $0xc] sm:$0xf]
  %v379 = vld [vmem:[%s2 + $0x10] sm:$0xf]
  %v380 = vld [vmem:[%s2 + $0x14] sm:$0xf]
  %v381 = vld [vmem:[%s2 + $0x18] sm:$0xf]
  %v382 = vld [vmem:[%s2 + $0x1c] sm:$0xf]
  %v383 = vld [vmem:[%s2 + $0x20] sm:$0xf]
  %v384 = vld [vmem:[%s2 + $0x24] sm:$0x3]
  %v385 = vlaneseq
  %v386 = vshrl.u32 %v385, 7
  %v387 = vsub.s32 0, %v386
  %v388 = vrot.slane %v36, %v387
  %v389 = vpack.i.b16 %v298, %v297
  %v390 = vpack.i.b16 %v300, %v299
  %v391 = vpack.i.b16 %v302, %v301
  %v392 = vpack.i.b16 %v304, %v303
  %v393 = vpack.i.b16 %v306, %v305
  %v394 = vpack.i.b16 %v308, %v307
  %v395 = vpack.i.b16 %v310, %v309
  %v396 = vpack.i.b16 %v312, %v311
  %v397 = vpack.i.b16 %v314, %v313
  %v398 = vpack.i.b16 %v316, %v315
  %v399 = vpack.i.b16 %v318, %v317
  %v400 = vpack.i.b16 %v320, %v319
  %v401 = vpack.i.b16 %v322, %v321
  %v402 = vpack.i.b16 %v324, %v323
  %v403 = vpack.i.b16 %v326, %v325
  %v404 = vpack.i.b16 %v328, %v327
  %v405 = vpack.i.b16 %v330, %v329
  %v406 = vpack.i.b16 %v332, %v331
  %v407 = vpack.i.b16 %v334, %v333
  %v408 = vpack.i.b16 %v336, %v335
  %v409 = vpack.i.b16 %v338, %v337
  %v410 = vpack.i.b16 %v340, %v339
  %v411 = vpack.i.b16 %v342, %v341
  %v412 = vpack.i.b16 %v344, %v343
  %v413 = vpack.i.b16 %v346, %v345
  %v414 = vpack.i.b16 %v348, %v347
  %v415 = vpack.i.b16 %v350, %v349
  %v416 = vpack.i.b16 %v352, %v351
  %v417 = vpack.i.b16 %v354, %v353
  %v418 = vpack.i.b16 %v356, %v355
  %v419 = vpack.i.b16 %v358, %v357
  %v420 = vpack.i.b16 %v360, %v359
  %v421 = vpack.i.b16 %v362, %v361
  %v422 = vpack.i.b16 %v364, %v363
  %v423 = vpack.i.b16 %v366, %v365
  %v424 = vpack.i.b16 %v368, %v367
  %v425 = vpack.i.b16 %v370, %v369
  %v426 = vpack.i.b16 %v372, %v371
  %v427 = vpack.i.b16 %v374, %v373
  %v428 = vcombine.low %v389, %v390
  %v429 = vcombine.low %v391, %v392
  %v430 = vcombine.low %v393, %v394
  %v431 = vcombine.low %v395, %v396
  %v433 = vunpack.c.l.s4 1966171168
  %v434 = vunpack.c.0.s8 %v433
  %v435 = vlaneseq
  %v436 = vshrl.u32 %v435, 7
  %v437 = vsub.s32 %v434, %v436
  %v438 = vrot.slane %v428, %v437
  %v440 = vunpack.c.l.s4 1966171168
  %v441 = vunpack.c.0.s8 %v440
  %v442 = vlaneseq
  %v443 = vshrl.u32 %v442, 7
  %v444 = vsub.s32 %v441, %v443
  %v445 = vrot.slane %v429, %v444
  %v447 = vunpack.c.l.s4 1966171168
  %v448 = vunpack.c.0.s8 %v447
  %v449 = vlaneseq
  %v450 = vshrl.u32 %v449, 7
  %v451 = vsub.s32 %v448, %v450
  %v452 = vrot.slane %v430, %v451
  %v454 = vunpack.c.l.s4 1966171168
  %v455 = vunpack.c.0.s8 %v454
  %v456 = vlaneseq
  %v457 = vshrl.u32 %v456, 7
  %v458 = vsub.s32 %v455, %v457
  %v459 = vrot.slane %v431, %v458
  %v460 = vcombine.low %v438, %v445
  %v461 = vcombine.low %v452, %v459
  %v463 = vunpack.c.l.s4 1966171168
  %v464 = vunpack.c.0.s8 %v463
  %v465 = vlaneseq
  %v466 = vshrl.u32 %v465, 7
  %v467 = vsub.s32 %v464, %v466
  %v468 = vrot.slane %v460, %v467
  %v470 = vunpack.c.l.s4 1966171168
  %v471 = vunpack.c.0.s8 %v470
  %v472 = vlaneseq
  %v473 = vshrl.u32 %v472, 7
  %v474 = vsub.s32 %v471, %v473
  %v475 = vrot.slane %v461, %v474
  %v476 = vcombine.low %v468, %v475
  %v477 = vcombine.low %v397, %v398
  %v478 = vcombine.low %v399, %v400
  %v479 = vcombine.low %v401, %v402
  %v480 = vcombine.low %v403, %v404
  %v482 = vunpack.c.l.s4 1966171168
  %v483 = vunpack.c.0.s8 %v482
  %v484 = vlaneseq
  %v485 = vshrl.u32 %v484, 7
  %v486 = vsub.s32 %v483, %v485
  %v487 = vrot.slane %v477, %v486
  %v489 = vunpack.c.l.s4 1966171168
  %v490 = vunpack.c.0.s8 %v489
  %v491 = vlaneseq
  %v492 = vshrl.u32 %v491, 7
  %v493 = vsub.s32 %v490, %v492
  %v494 = vrot.slane %v478, %v493
  %v496 = vunpack.c.l.s4 1966171168
  %v497 = vunpack.c.0.s8 %v496
  %v498 = vlaneseq
  %v499 = vshrl.u32 %v498, 7
  %v500 = vsub.s32 %v497, %v499
  %v501 = vrot.slane %v479, %v500
  %v503 = vunpack.c.l.s4 1966171168
  %v504 = vunpack.c.0.s8 %v503
  %v505 = vlaneseq
  %v506 = vshrl.u32 %v505, 7
  %v507 = vsub.s32 %v504, %v506
  %v508 = vrot.slane %v480, %v507
  %v509 = vcombine.low %v487, %v494
  %v510 = vcombine.low %v501, %v508
  %v512 = vunpack.c.l.s4 1966171168
  %v513 = vunpack.c.0.s8 %v512
  %v514 = vlaneseq
  %v515 = vshrl.u32 %v514, 7
  %v516 = vsub.s32 %v513, %v515
  %v517 = vrot.slane %v509, %v516
  %v519 = vunpack.c.l.s4 1966171168
  %v520 = vunpack.c.0.s8 %v519
  %v521 = vlaneseq
  %v522 = vshrl.u32 %v521, 7
  %v523 = vsub.s32 %v520, %v522
  %v524 = vrot.slane %v510, %v523
  %v525 = vcombine.low %v517, %v524
  %v526 = vcombine.low %v405, %v406
  %v527 = vcombine.low %v407, %v408
  %v528 = vcombine.low %v409, %v410
  %v529 = vcombine.low %v411, %v412
  %v531 = vunpack.c.l.s4 1966171168
  %v532 = vunpack.c.0.s8 %v531
  %v533 = vlaneseq
  %v534 = vshrl.u32 %v533, 7
  %v535 = vsub.s32 %v532, %v534
  %v536 = vrot.slane %v526, %v535
  %v538 = vunpack.c.l.s4 1966171168
  %v539 = vunpack.c.0.s8 %v538
  %v540 = vlaneseq
  %v541 = vshrl.u32 %v540, 7
  %v542 = vsub.s32 %v539, %v541
  %v543 = vrot.slane %v527, %v542
  %v545 = vunpack.c.l.s4 1966171168
  %v546 = vunpack.c.0.s8 %v545
  %v547 = vlaneseq
  %v548 = vshrl.u32 %v547, 7
  %v549 = vsub.s32 %v546, %v548
  %v550 = vrot.slane %v528, %v549
  %v552 = vunpack.c.l.s4 1966171168
  %v553 = vunpack.c.0.s8 %v552
  %v554 = vlaneseq
  %v555 = vshrl.u32 %v554, 7
  %v556 = vsub.s32 %v553, %v555
  %v557 = vrot.slane %v529, %v556
  %v558 = vcombine.low %v536, %v543
  %v559 = vcombine.low %v550, %v557
  %v561 = vunpack.c.l.s4 1966171168
  %v562 = vunpack.c.0.s8 %v561
  %v563 = vlaneseq
  %v564 = vshrl.u32 %v563, 7
  %v565 = vsub.s32 %v562, %v564
  %v566 = vrot.slane %v558, %v565
  %v568 = vunpack.c.l.s4 1966171168
  %v569 = vunpack.c.0.s8 %v568
  %v570 = vlaneseq
  %v571 = vshrl.u32 %v570, 7
  %v572 = vsub.s32 %v569, %v571
  %v573 = vrot.slane %v559, %v572
  %v574 = vcombine.low %v566, %v573
  %v575 = vcombine.low %v413, %v414
  %v576 = vcombine.low %v415, %v416
  %v577 = vcombine.low %v417, %v418
  %v578 = vcombine.low %v419, %v420
  %v580 = vunpack.c.l.s4 1966171168
  %v581 = vunpack.c.0.s8 %v580
  %v582 = vlaneseq
  %v583 = vshrl.u32 %v582, 7
  %v584 = vsub.s32 %v581, %v583
  %v585 = vrot.slane %v575, %v584
  %v587 = vunpack.c.l.s4 1966171168
  %v588 = vunpack.c.0.s8 %v587
  %v589 = vlaneseq
  %v590 = vshrl.u32 %v589, 7
  %v591 = vsub.s32 %v588, %v590
  %v592 = vrot.slane %v576, %v591
  %v594 = vunpack.c.l.s4 1966171168
  %v595 = vunpack.c.0.s8 %v594
  %v596 = vlaneseq
  %v597 = vshrl.u32 %v596, 7
  %v598 = vsub.s32 %v595, %v597
  %v599 = vrot.slane %v577, %v598
  %v601 = vunpack.c.l.s4 1966171168
  %v602 = vunpack.c.0.s8 %v601
  %v603 = vlaneseq
  %v604 = vshrl.u32 %v603, 7
  %v605 = vsub.s32 %v602, %v604
  %v606 = vrot.slane %v578, %v605
  %v607 = vcombine.low %v585, %v592
  %v608 = vcombine.low %v599, %v606
  %v610 = vunpack.c.l.s4 1966171168
  %v611 = vunpack.c.0.s8 %v610
  %v612 = vlaneseq
  %v613 = vshrl.u32 %v612, 7
  %v614 = vsub.s32 %v611, %v613
  %v615 = vrot.slane %v607, %v614
  %v617 = vunpack.c.l.s4 1966171168
  %v618 = vunpack.c.0.s8 %v617
  %v619 = vlaneseq
  %v620 = vshrl.u32 %v619, 7
  %v621 = vsub.s32 %v618, %v620
  %v622 = vrot.slane %v608, %v621
  %v623 = vcombine.low %v615, %v622
  %v624 = vcombine.low %v421, %v422
  %v625 = vcombine.low %v423, %v424
  %v626 = vcombine.low %v425, %v426
  %v628 = vunpack.c.l.s4 1966171168
  %v629 = vunpack.c.0.s8 %v628
  %v630 = vlaneseq
  %v631 = vshrl.u32 %v630, 7
  %v632 = vsub.s32 %v629, %v631
  %v633 = vrot.slane %v624, %v632
  %v635 = vunpack.c.l.s4 1966171168
  %v636 = vunpack.c.0.s8 %v635
  %v637 = vlaneseq
  %v638 = vshrl.u32 %v637, 7
  %v639 = vsub.s32 %v636, %v638
  %v640 = vrot.slane %v625, %v639
  %v642 = vunpack.c.l.s4 1966171168
  %v643 = vunpack.c.0.s8 %v642
  %v644 = vlaneseq
  %v645 = vshrl.u32 %v644, 7
  %v646 = vsub.s32 %v643, %v645
  %v647 = vrot.slane %v626, %v646
  %v649 = vunpack.c.l.s4 1966171168
  %v650 = vunpack.c.0.s8 %v649
  %v651 = vlaneseq
  %v652 = vshrl.u32 %v651, 7
  %v653 = vsub.s32 %v650, %v652
  %v654 = vrot.slane %v427, %v653
  %v655 = vcombine.low %v633, %v640
  %v656 = vcombine.low %v647, %v654
  %v658 = vunpack.c.l.s4 1966171168
  %v659 = vunpack.c.0.s8 %v658
  %v660 = vlaneseq
  %v661 = vshrl.u32 %v660, 7
  %v662 = vsub.s32 %v659, %v661
  %v663 = vrot.slane %v655, %v662
  %v665 = vunpack.c.l.s4 1966171168
  %v666 = vunpack.c.0.s8 %v665
  %v667 = vlaneseq
  %v668 = vshrl.u32 %v667, 7
  %v669 = vsub.s32 %v666, %v668
  %v670 = vrot.slane %v656, %v669
  %v671 = vcombine.low %v663, %v670
  %v682 = vunpack.c.l.b16 %v375
  %v683 = vunpack.c.l.b16 %v376
  %v684 = vunpack.c.l.b16 %v377
  %v685 = vunpack.c.l.b16 %v378
  %v686 = vunpack.c.l.b16 %v379
  %v687 = vunpack.c.l.b16 %v380
  %v688 = vunpack.c.l.b16 %v381
  %v689 = vunpack.c.l.b16 %v382
  %v690 = vunpack.c.l.b16 %v383
  %v691 = vunpack.c.l.b16 %v384
  %v692 = vpack.c.b16 %v683, %v682
  %v693 = vpack.c.b16 %v685, %v684
  %v694 = vpack.c.b16 %v687, %v686
  %v695 = vpack.c.b16 %v689, %v688
  %v696 = vpack.c.b16 %v691, %v690
  %vm701 = vcmask 621568
  %v703 = vsel %vm701, %v476, 0
  %v706 = vsel %vm701, %v525, 0
  %v709 = vsel %vm701, %v574, 0
  %v712 = vsel %vm701, %v623, 0
  %v715 = vsel %vm701, %v671, 0
  %vm717 = vcmask 1045504
  %v719 = vsel %vm717, %v696, 0
  %721 = vmatprep.subr.bf16.mxu0 0
  %722 = vmatpush1.bf16.msra.mxu0 %v692
  %723 = vmatprep.subr.bf16.mxu0 0
  %724 = vmatpush1.bf16.msra.mxu0 %v693
  %725 = vmatprep.subr.bf16.mxu0 0
  %726 = vmatpush1.bf16.msra.mxu0 %v694
  %727 = vmatprep.subr.bf16.mxu0 0
  %728 = vmatpush1.bf16.msra.mxu0 %v695
  %729 = vmatprep.subr.bf16.mxu0 0
  %730 = vmatpush1.bf16.msra.mxu0 %v719
  %731 = vmatprep.subr.bf16.mxu0 0
  %732 = vmatpush1.bf16.msra.mxu0 0
  %733 = vmatprep.subr.bf16.mxu0 0
  %734 = vmatpush1.bf16.msra.mxu0 0
  %735 = vmatprep.subr.bf16.mxu0 0
  %736 = vmatpush1.bf16.msra.mxu0 0
  %737 = vmatprep.subr.bf16.mxu0 0
  %738 = vmatpush1.bf16.msra.mxu0 0
  %739 = vmatprep.subr.bf16.mxu0 0
  %740 = vmatpush1.bf16.msra.mxu0 0
  %741 = vmatprep.subr.bf16.mxu0 0
  %742 = vmatpush1.bf16.msra.mxu0 0
  %743 = vmatprep.subr.bf16.mxu0 0
  %744 = vmatpush1.bf16.msra.mxu0 0
  %745 = vmatprep.subr.bf16.mxu0 0
  %746 = vmatpush1.bf16.msra.mxu0 0
  %747 = vmatprep.subr.bf16.mxu0 0
  %748 = vmatpush1.bf16.msra.mxu0 0
  %749 = vmatprep.subr.bf16.mxu0 0
  %750 = vmatpush1.bf16.msra.mxu0 0
  %751 = vmatprep.subr.bf16.mxu0 0
  %752 = vmatpush1.bf16.msra.mxu0 0
  %753 = vmatprep.mubr.bf16.mxu0 0
  %754 = vmatmul.mubr.bf16.gmra.mrb[0].mxu0 %v703
  %v755 = vpop.f32.mrb[0].mxu0
  %v756 = vadd.f32 %v388, %v755
  %v757 = vpop.f32.mrb[0].mxu0
  %v758 = vpop.f32.mrb[0].mxu0
  %v759 = vadd.f32 %v388, %v758
  %v760 = vpop.f32.mrb[0].mxu0
  %761 = vmatprep.mubr.bf16.mxu0 0
  %762 = vmatmul.mubr.bf16.gmra.mrb[0].mxu0 %v706
  %v763 = vpop.f32.mrb[0].mxu0
  %v764 = vadd.f32 %v388, %v763
  %v765 = vpop.f32.mrb[0].mxu0
  %v766 = vpop.f32.mrb[0].mxu0
  %v767 = vadd.f32 %v388, %v766
  %v768 = vpop.f32.mrb[0].mxu0
  %769 = vmatprep.mubr.bf16.mxu0 0
  %770 = vmatmul.mubr.bf16.gmra.mrb[0].mxu0 %v709
  %v771 = vpop.f32.mrb[0].mxu0
  %v772 = vadd.f32 %v388, %v771
  %v773 = vpop.f32.mrb[0].mxu0
  %v774 = vpop.f32.mrb[0].mxu0
  %v775 = vadd.f32 %v388, %v774
  %v776 = vpop.f32.mrb[0].mxu0
  %777 = vmatprep.mubr.bf16.mxu0 0
  %778 = vmatmul.mubr.bf16.gmra.mrb[0].mxu0 %v712
  %v779 = vpop.f32.mrb[0].mxu0
  %v780 = vadd.f32 %v388, %v779
  %v781 = vpop.f32.mrb[0].mxu0
  %v782 = vpop.f32.mrb[0].mxu0
  %v783 = vadd.f32 %v388, %v782
  %v784 = vpop.f32.mrb[0].mxu0
  %785 = vmatprep.mubr.bf16.mxu0 0
  %786 = vmatmul.mubr.bf16.gmra.mrb[0].mxu0 %v715
  %v787 = vpop.f32.mrb[0].mxu0
  %v788 = vadd.f32 %v388, %v787
  %v789 = vpop.f32.mrb[0].mxu0
  %v790 = vpop.f32.mrb[0].mxu0
  %v791 = vadd.f32 %v388, %v790
  %v792 = vpop.f32.mrb[0].mxu0
  %793 = vdwg.mxu0
  %v794 = vmax.f32 %v756, 0.0
  %v795 = vmax.f32 %v759, 0.0
  %v796 = vmax.f32 %v764, 0.0
  %v797 = vmax.f32 %v767, 0.0
  %v798 = vmax.f32 %v772, 0.0
  %v799 = vmax.f32 %v775, 0.0
  %v800 = vmax.f32 %v780, 0.0
  %v801 = vmax.f32 %v783, 0.0
  %v802 = vmax.f32 %v788, 0.0
  %v803 = vmax.f32 %v791, 0.0
  %v814 = vcombine.high %v794, %v794
  %v816 = vunpack.c.l.s4 1966171168
  %v817 = vunpack.c.0.s8 %v816
  %v818 = vlaneseq
  %v819 = vshrl.u32 %v818, 7
  %v820 = vsub.s32 %v817, %v819
  %v821 = vrot.slane %v794, %v820
  %v823 = vunpack.c.l.s4 1966171168
  %v824 = vunpack.c.0.s8 %v823
  %v825 = vlaneseq
  %v826 = vshrl.u32 %v825, 7
  %v827 = vsub.s32 %v824, %v826
  %v828 = vrot.slane %v814, %v827
  %v829 = vcombine.high %v821, %v821
  %v830 = vcombine.high %v828, %v828
  %v832 = vunpack.c.l.s4 1966171168
  %v833 = vunpack.c.0.s8 %v832
  %v834 = vlaneseq
  %v835 = vshrl.u32 %v834, 7
  %v836 = vsub.s32 %v833, %v835
  %v837 = vrot.slane %v821, %v836
  %v839 = vunpack.c.l.s4 1966171168
  %v840 = vunpack.c.0.s8 %v839
  %v841 = vlaneseq
  %v842 = vshrl.u32 %v841, 7
  %v843 = vsub.s32 %v840, %v842
  %v844 = vrot.slane %v828, %v843
  %v846 = vunpack.c.l.s4 1966171168
  %v847 = vunpack.c.0.s8 %v846
  %v848 = vlaneseq
  %v849 = vshrl.u32 %v848, 7
  %v850 = vsub.s32 %v847, %v849
  %v851 = vrot.slane %v829, %v850
  %v853 = vunpack.c.l.s4 1966171168
  %v854 = vunpack.c.0.s8 %v853
  %v855 = vlaneseq
  %v856 = vshrl.u32 %v855, 7
  %v857 = vsub.s32 %v854, %v856
  %v858 = vrot.slane %v830, %v857
  %v859 = vcombine.high %v837, %v837
  %v860 = vcombine.high %v844, %v844
  %v861 = vcombine.high %v851, %v851
  %v862 = vcombine.high %v858, %v858
  %v863 = vcombine.high %v795, %v795
  %v865 = vunpack.c.l.s4 1966171168
  %v866 = vunpack.c.0.s8 %v865
  %v867 = vlaneseq
  %v868 = vshrl.u32 %v867, 7
  %v869 = vsub.s32 %v866, %v868
  %v870 = vrot.slane %v795, %v869
  %v872 = vunpack.c.l.s4 1966171168
  %v873 = vunpack.c.0.s8 %v872
  %v874 = vlaneseq
  %v875 = vshrl.u32 %v874, 7
  %v876 = vsub.s32 %v873, %v875
  %v877 = vrot.slane %v863, %v876
  %v878 = vcombine.high %v870, %v870
  %v879 = vcombine.high %v877, %v877
  %v881 = vunpack.c.l.s4 1966171168
  %v882 = vunpack.c.0.s8 %v881
  %v883 = vlaneseq
  %v884 = vshrl.u32 %v883, 7
  %v885 = vsub.s32 %v882, %v884
  %v886 = vrot.slane %v870, %v885
  %v888 = vunpack.c.l.s4 1966171168
  %v889 = vunpack.c.0.s8 %v888
  %v890 = vlaneseq
  %v891 = vshrl.u32 %v890, 7
  %v892 = vsub.s32 %v889, %v891
  %v893 = vrot.slane %v877, %v892
  %v895 = vunpack.c.l.s4 1966171168
  %v896 = vunpack.c.0.s8 %v895
  %v897 = vlaneseq
  %v898 = vshrl.u32 %v897, 7
  %v899 = vsub.s32 %v896, %v898
  %v900 = vrot.slane %v878, %v899
  %v902 = vunpack.c.l.s4 1966171168
  %v903 = vunpack.c.0.s8 %v902
  %v904 = vlaneseq
  %v905 = vshrl.u32 %v904, 7
  %v906 = vsub.s32 %v903, %v905
  %v907 = vrot.slane %v879, %v906
  %v908 = vcombine.high %v886, %v886
  %v909 = vcombine.high %v893, %v893
  %v910 = vcombine.high %v900, %v900
  %v911 = vcombine.high %v907, %v907
  %v912 = vcombine.high %v796, %v796
  %v914 = vunpack.c.l.s4 1966171168
  %v915 = vunpack.c.0.s8 %v914
  %v916 = vlaneseq
  %v917 = vshrl.u32 %v916, 7
  %v918 = vsub.s32 %v915, %v917
  %v919 = vrot.slane %v796, %v918
  %v921 = vunpack.c.l.s4 1966171168
  %v922 = vunpack.c.0.s8 %v921
  %v923 = vlaneseq
  %v924 = vshrl.u32 %v923, 7
  %v925 = vsub.s32 %v922, %v924
  %v926 = vrot.slane %v912, %v925
  %v927 = vcombine.high %v919, %v919
  %v928 = vcombine.high %v926, %v926
  %v930 = vunpack.c.l.s4 1966171168
  %v931 = vunpack.c.0.s8 %v930
  %v932 = vlaneseq
  %v933 = vshrl.u32 %v932, 7
  %v934 = vsub.s32 %v931, %v933
  %v935 = vrot.slane %v919, %v934
  %v937 = vunpack.c.l.s4 1966171168
  %v938 = vunpack.c.0.s8 %v937
  %v939 = vlaneseq
  %v940 = vshrl.u32 %v939, 7
  %v941 = vsub.s32 %v938, %v940
  %v942 = vrot.slane %v926, %v941
  %v944 = vunpack.c.l.s4 1966171168
  %v945 = vunpack.c.0.s8 %v944
  %v946 = vlaneseq
  %v947 = vshrl.u32 %v946, 7
  %v948 = vsub.s32 %v945, %v947
  %v949 = vrot.slane %v927, %v948
  %v951 = vunpack.c.l.s4 1966171168
  %v952 = vunpack.c.0.s8 %v951
  %v953 = vlaneseq
  %v954 = vshrl.u32 %v953, 7
  %v955 = vsub.s32 %v952, %v954
  %v956 = vrot.slane %v928, %v955
  %v957 = vcombine.high %v935, %v935
  %v958 = vcombine.high %v942, %v942
  %v959 = vcombine.high %v949, %v949
  %v960 = vcombine.high %v956, %v956
  %v961 = vcombine.high %v797, %v797
  %v963 = vunpack.c.l.s4 1966171168
  %v964 = vunpack.c.0.s8 %v963
  %v965 = vlaneseq
  %v966 = vshrl.u32 %v965, 7
  %v967 = vsub.s32 %v964, %v966
  %v968 = vrot.slane %v797, %v967
  %v970 = vunpack.c.l.s4 1966171168
  %v971 = vunpack.c.0.s8 %v970
  %v972 = vlaneseq
  %v973 = vshrl.u32 %v972, 7
  %v974 = vsub.s32 %v971, %v973
  %v975 = vrot.slane %v961, %v974
  %v976 = vcombine.high %v968, %v968
  %v977 = vcombine.high %v975, %v975
  %v979 = vunpack.c.l.s4 1966171168
  %v980 = vunpack.c.0.s8 %v979
  %v981 = vlaneseq
  %v982 = vshrl.u32 %v981, 7
  %v983 = vsub.s32 %v980, %v982
  %v984 = vrot.slane %v968, %v983
  %v986 = vunpack.c.l.s4 1966171168
  %v987 = vunpack.c.0.s8 %v986
  %v988 = vlaneseq
  %v989 = vshrl.u32 %v988, 7
  %v990 = vsub.s32 %v987, %v989
  %v991 = vrot.slane %v975, %v990
  %v993 = vunpack.c.l.s4 1966171168
  %v994 = vunpack.c.0.s8 %v993
  %v995 = vlaneseq
  %v996 = vshrl.u32 %v995, 7
  %v997 = vsub.s32 %v994, %v996
  %v998 = vrot.slane %v976, %v997
  %v1000 = vunpack.c.l.s4 1966171168
  %v1001 = vunpack.c.0.s8 %v1000
  %v1002 = vlaneseq
  %v1003 = vshrl.u32 %v1002, 7
  %v1004 = vsub.s32 %v1001, %v1003
  %v1005 = vrot.slane %v977, %v1004
  %v1006 = vcombine.high %v984, %v984
  %v1007 = vcombine.high %v991, %v991
  %v1008 = vcombine.high %v998, %v998
  %v1009 = vcombine.high %v1005, %v1005
  %v1010 = vcombine.high %v798, %v798
  %v1012 = vunpack.c.l.s4 1966171168
  %v1013 = vunpack.c.0.s8 %v1012
  %v1014 = vlaneseq
  %v1015 = vshrl.u32 %v1014, 7
  %v1016 = vsub.s32 %v1013, %v1015
  %v1017 = vrot.slane %v798, %v1016
  %v1019 = vunpack.c.l.s4 1966171168
  %v1020 = vunpack.c.0.s8 %v1019
  %v1021 = vlaneseq
  %v1022 = vshrl.u32 %v1021, 7
  %v1023 = vsub.s32 %v1020, %v1022
  %v1024 = vrot.slane %v1010, %v1023
  %v1025 = vcombine.high %v1017, %v1017
  %v1026 = vcombine.high %v1024, %v1024
  %v1028 = vunpack.c.l.s4 1966171168
  %v1029 = vunpack.c.0.s8 %v1028
  %v1030 = vlaneseq
  %v1031 = vshrl.u32 %v1030, 7
  %v1032 = vsub.s32 %v1029, %v1031
  %v1033 = vrot.slane %v1017, %v1032
  %v1035 = vunpack.c.l.s4 1966171168
  %v1036 = vunpack.c.0.s8 %v1035
  %v1037 = vlaneseq
  %v1038 = vshrl.u32 %v1037, 7
  %v1039 = vsub.s32 %v1036, %v1038
  %v1040 = vrot.slane %v1024, %v1039
  %v1042 = vunpack.c.l.s4 1966171168
  %v1043 = vunpack.c.0.s8 %v1042
  %v1044 = vlaneseq
  %v1045 = vshrl.u32 %v1044, 7
  %v1046 = vsub.s32 %v1043, %v1045
  %v1047 = vrot.slane %v1025, %v1046
  %v1049 = vunpack.c.l.s4 1966171168
  %v1050 = vunpack.c.0.s8 %v1049
  %v1051 = vlaneseq
  %v1052 = vshrl.u32 %v1051, 7
  %v1053 = vsub.s32 %v1050, %v1052
  %v1054 = vrot.slane %v1026, %v1053
  %v1055 = vcombine.high %v1033, %v1033
  %v1056 = vcombine.high %v1040, %v1040
  %v1057 = vcombine.high %v1047, %v1047
  %v1058 = vcombine.high %v1054, %v1054
  %v1059 = vcombine.high %v799, %v799
  %v1061 = vunpack.c.l.s4 1966171168
  %v1062 = vunpack.c.0.s8 %v1061
  %v1063 = vlaneseq
  %v1064 = vshrl.u32 %v1063, 7
  %v1065 = vsub.s32 %v1062, %v1064
  %v1066 = vrot.slane %v799, %v1065
  %v1068 = vunpack.c.l.s4 1966171168
  %v1069 = vunpack.c.0.s8 %v1068
  %v1070 = vlaneseq
  %v1071 = vshrl.u32 %v1070, 7
  %v1072 = vsub.s32 %v1069, %v1071
  %v1073 = vrot.slane %v1059, %v1072
  %v1074 = vcombine.high %v1066, %v1066
  %v1075 = vcombine.high %v1073, %v1073
  %v1077 = vunpack.c.l.s4 1966171168
  %v1078 = vunpack.c.0.s8 %v1077
  %v1079 = vlaneseq
  %v1080 = vshrl.u32 %v1079, 7
  %v1081 = vsub.s32 %v1078, %v1080
  %v1082 = vrot.slane %v1066, %v1081
  %v1084 = vunpack.c.l.s4 1966171168
  %v1085 = vunpack.c.0.s8 %v1084
  %v1086 = vlaneseq
  %v1087 = vshrl.u32 %v1086, 7
  %v1088 = vsub.s32 %v1085, %v1087
  %v1089 = vrot.slane %v1073, %v1088
  %v1091 = vunpack.c.l.s4 1966171168
  %v1092 = vunpack.c.0.s8 %v1091
  %v1093 = vlaneseq
  %v1094 = vshrl.u32 %v1093, 7
  %v1095 = vsub.s32 %v1092, %v1094
  %v1096 = vrot.slane %v1074, %v1095
  %v1098 = vunpack.c.l.s4 1966171168
  %v1099 = vunpack.c.0.s8 %v1098
  %v1100 = vlaneseq
  %v1101 = vshrl.u32 %v1100, 7
  %v1102 = vsub.s32 %v1099, %v1101
  %v1103 = vrot.slane %v1075, %v1102
  %v1104 = vcombine.high %v1082, %v1082
  %v1105 = vcombine.high %v1089, %v1089
  %v1106 = vcombine.high %v1096, %v1096
  %v1107 = vcombine.high %v1103, %v1103
  %v1108 = vcombine.high %v800, %v800
  %v1110 = vunpack.c.l.s4 1966171168
  %v1111 = vunpack.c.0.s8 %v1110
  %v1112 = vlaneseq
  %v1113 = vshrl.u32 %v1112, 7
  %v1114 = vsub.s32 %v1111, %v1113
  %v1115 = vrot.slane %v800, %v1114
  %v1117 = vunpack.c.l.s4 1966171168
  %v1118 = vunpack.c.0.s8 %v1117
  %v1119 = vlaneseq
  %v1120 = vshrl.u32 %v1119, 7
  %v1121 = vsub.s32 %v1118, %v1120
  %v1122 = vrot.slane %v1108, %v1121
  %v1123 = vcombine.high %v1115, %v1115
  %v1124 = vcombine.high %v1122, %v1122
  %v1126 = vunpack.c.l.s4 1966171168
  %v1127 = vunpack.c.0.s8 %v1126
  %v1128 = vlaneseq
  %v1129 = vshrl.u32 %v1128, 7
  %v1130 = vsub.s32 %v1127, %v1129
  %v1131 = vrot.slane %v1115, %v1130
  %v1133 = vunpack.c.l.s4 1966171168
  %v1134 = vunpack.c.0.s8 %v1133
  %v1135 = vlaneseq
  %v1136 = vshrl.u32 %v1135, 7
  %v1137 = vsub.s32 %v1134, %v1136
  %v1138 = vrot.slane %v1122, %v1137
  %v1140 = vunpack.c.l.s4 1966171168
  %v1141 = vunpack.c.0.s8 %v1140
  %v1142 = vlaneseq
  %v1143 = vshrl.u32 %v1142, 7
  %v1144 = vsub.s32 %v1141, %v1143
  %v1145 = vrot.slane %v1123, %v1144
  %v1147 = vunpack.c.l.s4 1966171168
  %v1148 = vunpack.c.0.s8 %v1147
  %v1149 = vlaneseq
  %v1150 = vshrl.u32 %v1149, 7
  %v1151 = vsub.s32 %v1148, %v1150
  %v1152 = vrot.slane %v1124, %v1151
  %v1153 = vcombine.high %v1131, %v1131
  %v1154 = vcombine.high %v1138, %v1138
  %v1155 = vcombine.high %v1145, %v1145
  %v1156 = vcombine.high %v1152, %v1152
  %v1157 = vcombine.high %v801, %v801
  %v1159 = vunpack.c.l.s4 1966171168
  %v1160 = vunpack.c.0.s8 %v1159
  %v1161 = vlaneseq
  %v1162 = vshrl.u32 %v1161, 7
  %v1163 = vsub.s32 %v1160, %v1162
  %v1164 = vrot.slane %v801, %v1163
  %v1166 = vunpack.c.l.s4 1966171168
  %v1167 = vunpack.c.0.s8 %v1166
  %v1168 = vlaneseq
  %v1169 = vshrl.u32 %v1168, 7
  %v1170 = vsub.s32 %v1167, %v1169
  %v1171 = vrot.slane %v1157, %v1170
  %v1172 = vcombine.high %v1164, %v1164
  %v1173 = vcombine.high %v1171, %v1171
  %v1175 = vunpack.c.l.s4 1966171168
  %v1176 = vunpack.c.0.s8 %v1175
  %v1177 = vlaneseq
  %v1178 = vshrl.u32 %v1177, 7
  %v1179 = vsub.s32 %v1176, %v1178
  %v1180 = vrot.slane %v1164, %v1179
  %v1182 = vunpack.c.l.s4 1966171168
  %v1183 = vunpack.c.0.s8 %v1182
  %v1184 = vlaneseq
  %v1185 = vshrl.u32 %v1184, 7
  %v1186 = vsub.s32 %v1183, %v1185
  %v1187 = vrot.slane %v1171, %v1186
  %v1189 = vunpack.c.l.s4 1966171168
  %v1190 = vunpack.c.0.s8 %v1189
  %v1191 = vlaneseq
  %v1192 = vshrl.u32 %v1191, 7
  %v1193 = vsub.s32 %v1190, %v1192
  %v1194 = vrot.slane %v1172, %v1193
  %v1196 = vunpack.c.l.s4 1966171168
  %v1197 = vunpack.c.0.s8 %v1196
  %v1198 = vlaneseq
  %v1199 = vshrl.u32 %v1198, 7
  %v1200 = vsub.s32 %v1197, %v1199
  %v1201 = vrot.slane %v1173, %v1200
  %v1202 = vcombine.high %v1180, %v1180
  %v1203 = vcombine.high %v1187, %v1187
  %v1204 = vcombine.high %v1194, %v1194
  %v1205 = vcombine.high %v1201, %v1201
  %v1206 = vcombine.high %v802, %v802
  %v1208 = vunpack.c.l.s4 1966171168
  %v1209 = vunpack.c.0.s8 %v1208
  %v1210 = vlaneseq
  %v1211 = vshrl.u32 %v1210, 7
  %v1212 = vsub.s32 %v1209, %v1211
  %v1213 = vrot.slane %v802, %v1212
  %v1215 = vunpack.c.l.s4 1966171168
  %v1216 = vunpack.c.0.s8 %v1215
  %v1217 = vlaneseq
  %v1218 = vshrl.u32 %v1217, 7
  %v1219 = vsub.s32 %v1216, %v1218
  %v1220 = vrot.slane %v1206, %v1219
  %v1221 = vcombine.high %v1213, %v1213
  %v1222 = vcombine.high %v1220, %v1220
  %v1224 = vunpack.c.l.s4 1966171168
  %v1225 = vunpack.c.0.s8 %v1224
  %v1226 = vlaneseq
  %v1227 = vshrl.u32 %v1226, 7
  %v1228 = vsub.s32 %v1225, %v1227
  %v1229 = vrot.slane %v1213, %v1228
  %v1231 = vunpack.c.l.s4 1966171168
  %v1232 = vunpack.c.0.s8 %v1231
  %v1233 = vlaneseq
  %v1234 = vshrl.u32 %v1233, 7
  %v1235 = vsub.s32 %v1232, %v1234
  %v1236 = vrot.slane %v1220, %v1235
  %v1238 = vunpack.c.l.s4 1966171168
  %v1239 = vunpack.c.0.s8 %v1238
  %v1240 = vlaneseq
  %v1241 = vshrl.u32 %v1240, 7
  %v1242 = vsub.s32 %v1239, %v1241
  %v1243 = vrot.slane %v1221, %v1242
  %v1245 = vunpack.c.l.s4 1966171168
  %v1246 = vunpack.c.0.s8 %v1245
  %v1247 = vlaneseq
  %v1248 = vshrl.u32 %v1247, 7
  %v1249 = vsub.s32 %v1246, %v1248
  %v1250 = vrot.slane %v1222, %v1249
  %v1251 = vcombine.high %v1229, %v1229
  %v1252 = vcombine.high %v1236, %v1236
  %v1253 = vcombine.high %v1243, %v1243
  %v1254 = vcombine.high %v1250, %v1250
  %v1255 = vcombine.high %v803, %v803
  %v1257 = vunpack.c.l.s4 1966171168
  %v1258 = vunpack.c.0.s8 %v1257
  %v1259 = vlaneseq
  %v1260 = vshrl.u32 %v1259, 7
  %v1261 = vsub.s32 %v1258, %v1260
  %v1262 = vrot.slane %v803, %v1261
  %v1264 = vunpack.c.l.s4 1966171168
  %v1265 = vunpack.c.0.s8 %v1264
  %v1266 = vlaneseq
  %v1267 = vshrl.u32 %v1266, 7
  %v1268 = vsub.s32 %v1265, %v1267
  %v1269 = vrot.slane %v1255, %v1268
  %v1270 = vcombine.high %v1262, %v1262
  %v1271 = vcombine.high %v1269, %v1269
  %v1273 = vunpack.c.l.s4 1966171168
  %v1274 = vunpack.c.0.s8 %v1273
  %v1275 = vlaneseq
  %v1276 = vshrl.u32 %v1275, 7
  %v1277 = vsub.s32 %v1274, %v1276
  %v1278 = vrot.slane %v1262, %v1277
  %v1280 = vunpack.c.l.s4 1966171168
  %v1281 = vunpack.c.0.s8 %v1280
  %v1282 = vlaneseq
  %v1283 = vshrl.u32 %v1282, 7
  %v1284 = vsub.s32 %v1281, %v1283
  %v1285 = vrot.slane %v1269, %v1284
  %v1287 = vunpack.c.l.s4 1966171168
  %v1288 = vunpack.c.0.s8 %v1287
  %v1289 = vlaneseq
  %v1290 = vshrl.u32 %v1289, 7
  %v1291 = vsub.s32 %v1288, %v1290
  %v1292 = vrot.slane %v1270, %v1291
  %v1294 = vunpack.c.l.s4 1966171168
  %v1295 = vunpack.c.0.s8 %v1294
  %v1296 = vlaneseq
  %v1297 = vshrl.u32 %v1296, 7
  %v1298 = vsub.s32 %v1295, %v1297
  %v1299 = vrot.slane %v1271, %v1298
  %v1300 = vcombine.high %v1278, %v1278
  %v1301 = vcombine.high %v1292, %v1292
  %v1302 = vcombine.low %v837, %v851
  %v1303 = vcombine.low %v859, %v861
  %v1304 = vcombine.low %v844, %v858
  %v1305 = vcombine.low %v860, %v862
  %v1307 = vunpack.c.l.s4 1966171168
  %v1308 = vunpack.c.0.s8 %v1307
  %v1309 = vlaneseq
  %v1310 = vshrl.u32 %v1309, 7
  %v1311 = vsub.s32 %v1308, %v1310
  %v1312 = vrot.slane %v1302, %v1311
  %v1314 = vunpack.c.l.s4 1966171168
  %v1315 = vunpack.c.0.s8 %v1314
  %v1316 = vlaneseq
  %v1317 = vshrl.u32 %v1316, 7
  %v1318 = vsub.s32 %v1315, %v1317
  %v1319 = vrot.slane %v1303, %v1318
  %v1321 = vunpack.c.l.s4 1966171168
  %v1322 = vunpack.c.0.s8 %v1321
  %v1323 = vlaneseq
  %v1324 = vshrl.u32 %v1323, 7
  %v1325 = vsub.s32 %v1322, %v1324
  %v1326 = vrot.slane %v1304, %v1325
  %v1328 = vunpack.c.l.s4 1966171168
  %v1329 = vunpack.c.0.s8 %v1328
  %v1330 = vlaneseq
  %v1331 = vshrl.u32 %v1330, 7
  %v1332 = vsub.s32 %v1329, %v1331
  %v1333 = vrot.slane %v1305, %v1332
  %v1334 = vcombine.low %v1312, %v1319
  %v1335 = vcombine.low %v1326, %v1333
  %v1337 = vunpack.c.l.s4 1966171168
  %v1338 = vunpack.c.0.s8 %v1337
  %v1339 = vlaneseq
  %v1340 = vshrl.u32 %v1339, 7
  %v1341 = vsub.s32 %v1338, %v1340
  %v1342 = vrot.slane %v1334, %v1341
  %v1344 = vunpack.c.l.s4 1966171168
  %v1345 = vunpack.c.0.s8 %v1344
  %v1346 = vlaneseq
  %v1347 = vshrl.u32 %v1346, 7
  %v1348 = vsub.s32 %v1345, %v1347
  %v1349 = vrot.slane %v1335, %v1348
  %v1350 = vcombine.low %v1342, %v1349
  %v1351 = vcombine.low %v886, %v900
  %v1352 = vcombine.low %v908, %v910
  %v1353 = vcombine.low %v893, %v907
  %v1354 = vcombine.low %v909, %v911
  %v1356 = vunpack.c.l.s4 1966171168
  %v1357 = vunpack.c.0.s8 %v1356
  %v1358 = vlaneseq
  %v1359 = vshrl.u32 %v1358, 7
  %v1360 = vsub.s32 %v1357, %v1359
  %v1361 = vrot.slane %v1351, %v1360
  %v1363 = vunpack.c.l.s4 1966171168
  %v1364 = vunpack.c.0.s8 %v1363
  %v1365 = vlaneseq
  %v1366 = vshrl.u32 %v1365, 7
  %v1367 = vsub.s32 %v1364, %v1366
  %v1368 = vrot.slane %v1352, %v1367
  %v1370 = vunpack.c.l.s4 1966171168
  %v1371 = vunpack.c.0.s8 %v1370
  %v1372 = vlaneseq
  %v1373 = vshrl.u32 %v1372, 7
  %v1374 = vsub.s32 %v1371, %v1373
  %v1375 = vrot.slane %v1353, %v1374
  %v1377 = vunpack.c.l.s4 1966171168
  %v1378 = vunpack.c.0.s8 %v1377
  %v1379 = vlaneseq
  %v1380 = vshrl.u32 %v1379, 7
  %v1381 = vsub.s32 %v1378, %v1380
  %v1382 = vrot.slane %v1354, %v1381
  %v1383 = vcombine.low %v1361, %v1368
  %v1384 = vcombine.low %v1375, %v1382
  %v1386 = vunpack.c.l.s4 1966171168
  %v1387 = vunpack.c.0.s8 %v1386
  %v1388 = vlaneseq
  %v1389 = vshrl.u32 %v1388, 7
  %v1390 = vsub.s32 %v1387, %v1389
  %v1391 = vrot.slane %v1383, %v1390
  %v1393 = vunpack.c.l.s4 1966171168
  %v1394 = vunpack.c.0.s8 %v1393
  %v1395 = vlaneseq
  %v1396 = vshrl.u32 %v1395, 7
  %v1397 = vsub.s32 %v1394, %v1396
  %v1398 = vrot.slane %v1384, %v1397
  %v1399 = vcombine.low %v1391, %v1398
  %v1400 = vcombine.low %v935, %v949
  %v1401 = vcombine.low %v957, %v959
  %v1402 = vcombine.low %v942, %v956
  %v1403 = vcombine.low %v958, %v960
  %v1405 = vunpack.c.l.s4 1966171168
  %v1406 = vunpack.c.0.s8 %v1405
  %v1407 = vlaneseq
  %v1408 = vshrl.u32 %v1407, 7
  %v1409 = vsub.s32 %v1406, %v1408
  %v1410 = vrot.slane %v1400, %v1409
  %v1412 = vunpack.c.l.s4 1966171168
  %v1413 = vunpack.c.0.s8 %v1412
  %v1414 = vlaneseq
  %v1415 = vshrl.u32 %v1414, 7
  %v1416 = vsub.s32 %v1413, %v1415
  %v1417 = vrot.slane %v1401, %v1416
  %v1419 = vunpack.c.l.s4 1966171168
  %v1420 = vunpack.c.0.s8 %v1419
  %v1421 = vlaneseq
  %v1422 = vshrl.u32 %v1421, 7
  %v1423 = vsub.s32 %v1420, %v1422
  %v1424 = vrot.slane %v1402, %v1423
  %v1426 = vunpack.c.l.s4 1966171168
  %v1427 = vunpack.c.0.s8 %v1426
  %v1428 = vlaneseq
  %v1429 = vshrl.u32 %v1428, 7
  %v1430 = vsub.s32 %v1427, %v1429
  %v1431 = vrot.slane %v1403, %v1430
  %v1432 = vcombine.low %v1410, %v1417
  %v1433 = vcombine.low %v1424, %v1431
  %v1435 = vunpack.c.l.s4 1966171168
  %v1436 = vunpack.c.0.s8 %v1435
  %v1437 = vlaneseq
  %v1438 = vshrl.u32 %v1437, 7
  %v1439 = vsub.s32 %v1436, %v1438
  %v1440 = vrot.slane %v1432, %v1439
  %v1442 = vunpack.c.l.s4 1966171168
  %v1443 = vunpack.c.0.s8 %v1442
  %v1444 = vlaneseq
  %v1445 = vshrl.u32 %v1444, 7
  %v1446 = vsub.s32 %v1443, %v1445
  %v1447 = vrot.slane %v1433, %v1446
  %v1448 = vcombine.low %v1440, %v1447
  %v1449 = vcombine.low %v984, %v998
  %v1450 = vcombine.low %v1006, %v1008
  %v1451 = vcombine.low %v991, %v1005
  %v1452 = vcombine.low %v1007, %v1009
  %v1454 = vunpack.c.l.s4 1966171168
  %v1455 = vunpack.c.0.s8 %v1454
  %v1456 = vlaneseq
  %v1457 = vshrl.u32 %v1456, 7
  %v1458 = vsub.s32 %v1455, %v1457
  %v1459 = vrot.slane %v1449, %v1458
  %v1461 = vunpack.c.l.s4 1966171168
  %v1462 = vunpack.c.0.s8 %v1461
  %v1463 = vlaneseq
  %v1464 = vshrl.u32 %v1463, 7
  %v1465 = vsub.s32 %v1462, %v1464
  %v1466 = vrot.slane %v1450, %v1465
  %v1468 = vunpack.c.l.s4 1966171168
  %v1469 = vunpack.c.0.s8 %v1468
  %v1470 = vlaneseq
  %v1471 = vshrl.u32 %v1470, 7
  %v1472 = vsub.s32 %v1469, %v1471
  %v1473 = vrot.slane %v1451, %v1472
  %v1475 = vunpack.c.l.s4 1966171168
  %v1476 = vunpack.c.0.s8 %v1475
  %v1477 = vlaneseq
  %v1478 = vshrl.u32 %v1477, 7
  %v1479 = vsub.s32 %v1476, %v1478
  %v1480 = vrot.slane %v1452, %v1479
  %v1481 = vcombine.low %v1459, %v1466
  %v1482 = vcombine.low %v1473, %v1480
  %v1484 = vunpack.c.l.s4 1966171168
  %v1485 = vunpack.c.0.s8 %v1484
  %v1486 = vlaneseq
  %v1487 = vshrl.u32 %v1486, 7
  %v1488 = vsub.s32 %v1485, %v1487
  %v1489 = vrot.slane %v1481, %v1488
  %v1491 = vunpack.c.l.s4 1966171168
  %v1492 = vunpack.c.0.s8 %v1491
  %v1493 = vlaneseq
  %v1494 = vshrl.u32 %v1493, 7
  %v1495 = vsub.s32 %v1492, %v1494
  %v1496 = vrot.slane %v1482, %v1495
  %v1497 = vcombine.low %v1489, %v1496
  %v1498 = vcombine.low %v1033, %v1047
  %v1499 = vcombine.low %v1055, %v1057
  %v1500 = vcombine.low %v1040, %v1054
  %v1502 = vunpack.c.l.s4 1966171168
  %v1503 = vunpack.c.0.s8 %v1502
  %v1504 = vlaneseq
  %v1505 = vshrl.u32 %v1504, 7
  %v1506 = vsub.s32 %v1503, %v1505
  %v1507 = vrot.slane %v1498, %v1506
  %v1509 = vunpack.c.l.s4 1966171168
  %v1510 = vunpack.c.0.s8 %v1509
  %v1511 = vlaneseq
  %v1512 = vshrl.u32 %v1511, 7
  %v1513 = vsub.s32 %v1510, %v1512
  %v1514 = vrot.slane %v1499, %v1513
  %v1516 = vunpack.c.l.s4 1966171168
  %v1517 = vunpack.c.0.s8 %v1516
  %v1518 = vlaneseq
  %v1519 = vshrl.u32 %v1518, 7
  %v1520 = vsub.s32 %v1517, %v1519
  %v1521 = vrot.slane %v1500, %v1520
  %v1523 = vunpack.c.l.s4 1966171168
  %v1524 = vunpack.c.0.s8 %v1523
  %v1525 = vlaneseq
  %v1526 = vshrl.u32 %v1525, 7
  %v1527 = vsub.s32 %v1524, %v1526
  %v1528 = vrot.slane %v1056, %v1527
  %v1529 = vcombine.low %v1507, %v1514
  %v1530 = vcombine.low %v1521, %v1528
  %v1532 = vunpack.c.l.s4 1966171168
  %v1533 = vunpack.c.0.s8 %v1532
  %v1534 = vlaneseq
  %v1535 = vshrl.u32 %v1534, 7
  %v1536 = vsub.s32 %v1533, %v1535
  %v1537 = vrot.slane %v1529, %v1536
  %v1539 = vunpack.c.l.s4 1966171168
  %v1540 = vunpack.c.0.s8 %v1539
  %v1541 = vlaneseq
  %v1542 = vshrl.u32 %v1541, 7
  %v1543 = vsub.s32 %v1540, %v1542
  %v1544 = vrot.slane %v1530, %v1543
  %v1545 = vcombine.low %v1537, %v1544
  %v1546 = vcombine.low %v1058, %v1082
  %v1547 = vcombine.low %v1096, %v1104
  %v1548 = vcombine.low %v1106, %v1089
  %v1549 = vcombine.low %v1103, %v1105
  %v1551 = vunpack.c.l.s4 1966171168
  %v1552 = vunpack.c.0.s8 %v1551
  %v1553 = vlaneseq
  %v1554 = vshrl.u32 %v1553, 7
  %v1555 = vsub.s32 %v1552, %v1554
  %v1556 = vrot.slane %v1546, %v1555
  %v1558 = vunpack.c.l.s4 1966171168
  %v1559 = vunpack.c.0.s8 %v1558
  %v1560 = vlaneseq
  %v1561 = vshrl.u32 %v1560, 7
  %v1562 = vsub.s32 %v1559, %v1561
  %v1563 = vrot.slane %v1547, %v1562
  %v1565 = vunpack.c.l.s4 1966171168
  %v1566 = vunpack.c.0.s8 %v1565
  %v1567 = vlaneseq
  %v1568 = vshrl.u32 %v1567, 7
  %v1569 = vsub.s32 %v1566, %v1568
  %v1570 = vrot.slane %v1548, %v1569
  %v1572 = vunpack.c.l.s4 1966171168
  %v1573 = vunpack.c.0.s8 %v1572
  %v1574 = vlaneseq
  %v1575 = vshrl.u32 %v1574, 7
  %v1576 = vsub.s32 %v1573, %v1575
  %v1577 = vrot.slane %v1549, %v1576
  %v1578 = vcombine.low %v1556, %v1563
  %v1579 = vcombine.low %v1570, %v1577
  %v1581 = vunpack.c.l.s4 1966171168
  %v1582 = vunpack.c.0.s8 %v1581
  %v1583 = vlaneseq
  %v1584 = vshrl.u32 %v1583, 7
  %v1585 = vsub.s32 %v1582, %v1584
  %v1586 = vrot.slane %v1578, %v1585
  %v1588 = vunpack.c.l.s4 1966171168
  %v1589 = vunpack.c.0.s8 %v1588
  %v1590 = vlaneseq
  %v1591 = vshrl.u32 %v1590, 7
  %v1592 = vsub.s32 %v1589, %v1591
  %v1593 = vrot.slane %v1579, %v1592
  %v1594 = vcombine.low %v1586, %v1593
  %v1595 = vcombine.low %v1107, %v1131
  %v1596 = vcombine.low %v1145, %v1153
  %v1597 = vcombine.low %v1155, %v1138
  %v1598 = vcombine.low %v1152, %v1154
  %v1600 = vunpack.c.l.s4 1966171168
  %v1601 = vunpack.c.0.s8 %v1600
  %v1602 = vlaneseq
  %v1603 = vshrl.u32 %v1602, 7
  %v1604 = vsub.s32 %v1601, %v1603
  %v1605 = vrot.slane %v1595, %v1604
  %v1607 = vunpack.c.l.s4 1966171168
  %v1608 = vunpack.c.0.s8 %v1607
  %v1609 = vlaneseq
  %v1610 = vshrl.u32 %v1609, 7
  %v1611 = vsub.s32 %v1608, %v1610
  %v1612 = vrot.slane %v1596, %v1611
  %v1614 = vunpack.c.l.s4 1966171168
  %v1615 = vunpack.c.0.s8 %v1614
  %v1616 = vlaneseq
  %v1617 = vshrl.u32 %v1616, 7
  %v1618 = vsub.s32 %v1615, %v1617
  %v1619 = vrot.slane %v1597, %v1618
  %v1621 = vunpack.c.l.s4 1966171168
  %v1622 = vunpack.c.0.s8 %v1621
  %v1623 = vlaneseq
  %v1624 = vshrl.u32 %v1623, 7
  %v1625 = vsub.s32 %v1622, %v1624
  %v1626 = vrot.slane %v1598, %v1625
  %v1627 = vcombine.low %v1605, %v1612
  %v1628 = vcombine.low %v1619, %v1626
  %v1630 = vunpack.c.l.s4 1966171168
  %v1631 = vunpack.c.0.s8 %v1630
  %v1632 = vlaneseq
  %v1633 = vshrl.u32 %v1632, 7
  %v1634 = vsub.s32 %v1631, %v1633
  %v1635 = vrot.slane %v1627, %v1634
  %v1637 = vunpack.c.l.s4 1966171168
  %v1638 = vunpack.c.0.s8 %v1637
  %v1639 = vlaneseq
  %v1640 = vshrl.u32 %v1639, 7
  %v1641 = vsub.s32 %v1638, %v1640
  %v1642 = vrot.slane %v1628, %v1641
  %v1643 = vcombine.low %v1635, %v1642
  %v1644 = vcombine.low %v1156, %v1180
  %v1645 = vcombine.low %v1194, %v1202
  %v1646 = vcombine.low %v1204, %v1187
  %v1647 = vcombine.low %v1201, %v1203
  %v1649 = vunpack.c.l.s4 1966171168
  %v1650 = vunpack.c.0.s8 %v1649
  %v1651 = vlaneseq
  %v1652 = vshrl.u32 %v1651, 7
  %v1653 = vsub.s32 %v1650, %v1652
  %v1654 = vrot.slane %v1644, %v1653
  %v1656 = vunpack.c.l.s4 1966171168
  %v1657 = vunpack.c.0.s8 %v1656
  %v1658 = vlaneseq
  %v1659 = vshrl.u32 %v1658, 7
  %v1660 = vsub.s32 %v1657, %v1659
  %v1661 = vrot.slane %v1645, %v1660
  %v1663 = vunpack.c.l.s4 1966171168
  %v1664 = vunpack.c.0.s8 %v1663
  %v1665 = vlaneseq
  %v1666 = vshrl.u32 %v1665, 7
  %v1667 = vsub.s32 %v1664, %v1666
  %v1668 = vrot.slane %v1646, %v1667
  %v1670 = vunpack.c.l.s4 1966171168
  %v1671 = vunpack.c.0.s8 %v1670
  %v1672 = vlaneseq
  %v1673 = vshrl.u32 %v1672, 7
  %v1674 = vsub.s32 %v1671, %v1673
  %v1675 = vrot.slane %v1647, %v1674
  %v1676 = vcombine.low %v1654, %v1661
  %v1677 = vcombine.low %v1668, %v1675
  %v1679 = vunpack.c.l.s4 1966171168
  %v1680 = vunpack.c.0.s8 %v1679
  %v1681 = vlaneseq
  %v1682 = vshrl.u32 %v1681, 7
  %v1683 = vsub.s32 %v1680, %v1682
  %v1684 = vrot.slane %v1676, %v1683
  %v1686 = vunpack.c.l.s4 1966171168
  %v1687 = vunpack.c.0.s8 %v1686
  %v1688 = vlaneseq
  %v1689 = vshrl.u32 %v1688, 7
  %v1690 = vsub.s32 %v1687, %v1689
  %v1691 = vrot.slane %v1677, %v1690
  %v1692 = vcombine.low %v1684, %v1691
  %v1693 = vcombine.low %v1205, %v1229
  %v1694 = vcombine.low %v1243, %v1251
  %v1695 = vcombine.low %v1253, %v1236
  %v1696 = vcombine.low %v1250, %v1252
  %v1698 = vunpack.c.l.s4 1966171168
  %v1699 = vunpack.c.0.s8 %v1698
  %v1700 = vlaneseq
  %v1701 = vshrl.u32 %v1700, 7
  %v1702 = vsub.s32 %v1699, %v1701
  %v1703 = vrot.slane %v1693, %v1702
  %v1705 = vunpack.c.l.s4 1966171168
  %v1706 = vunpack.c.0.s8 %v1705
  %v1707 = vlaneseq
  %v1708 = vshrl.u32 %v1707, 7
  %v1709 = vsub.s32 %v1706, %v1708
  %v1710 = vrot.slane %v1694, %v1709
  %v1712 = vunpack.c.l.s4 1966171168
  %v1713 = vunpack.c.0.s8 %v1712
  %v1714 = vlaneseq
  %v1715 = vshrl.u32 %v1714, 7
  %v1716 = vsub.s32 %v1713, %v1715
  %v1717 = vrot.slane %v1695, %v1716
  %v1719 = vunpack.c.l.s4 1966171168
  %v1720 = vunpack.c.0.s8 %v1719
  %v1721 = vlaneseq
  %v1722 = vshrl.u32 %v1721, 7
  %v1723 = vsub.s32 %v1720, %v1722
  %v1724 = vrot.slane %v1696, %v1723
  %v1725 = vcombine.low %v1703, %v1710
  %v1726 = vcombine.low %v1717, %v1724
  %v1728 = vunpack.c.l.s4 1966171168
  %v1729 = vunpack.c.0.s8 %v1728
  %v1730 = vlaneseq
  %v1731 = vshrl.u32 %v1730, 7
  %v1732 = vsub.s32 %v1729, %v1731
  %v1733 = vrot.slane %v1725, %v1732
  %v1735 = vunpack.c.l.s4 1966171168
  %v1736 = vunpack.c.0.s8 %v1735
  %v1737 = vlaneseq
  %v1738 = vshrl.u32 %v1737, 7
  %v1739 = vsub.s32 %v1736, %v1738
  %v1740 = vrot.slane %v1726, %v1739
  %v1741 = vcombine.low %v1733, %v1740
  %v1742 = vcombine.low %v1254, %v1278
  %v1743 = vcombine.low %v1292, %v1300
  %v1744 = vcombine.low %v1301, %v1285
  %v1746 = vunpack.c.l.s4 1966171168
  %v1747 = vunpack.c.0.s8 %v1746
  %v1748 = vlaneseq
  %v1749 = vshrl.u32 %v1748, 7
  %v1750 = vsub.s32 %v1747, %v1749
  %v1751 = vrot.slane %v1742, %v1750
  %v1753 = vunpack.c.l.s4 1966171168
  %v1754 = vunpack.c.0.s8 %v1753
  %v1755 = vlaneseq
  %v1756 = vshrl.u32 %v1755, 7
  %v1757 = vsub.s32 %v1754, %v1756
  %v1758 = vrot.slane %v1743, %v1757
  %v1760 = vunpack.c.l.s4 1966171168
  %v1761 = vunpack.c.0.s8 %v1760
  %v1762 = vlaneseq
  %v1763 = vshrl.u32 %v1762, 7
  %v1764 = vsub.s32 %v1761, %v1763
  %v1765 = vrot.slane %v1744, %v1764
  %v1767 = vunpack.c.l.s4 1966171168
  %v1768 = vunpack.c.0.s8 %v1767
  %v1769 = vlaneseq
  %v1770 = vshrl.u32 %v1769, 7
  %v1771 = vsub.s32 %v1768, %v1770
  %v1772 = vrot.slane %v1299, %v1771
  %v1773 = vcombine.low %v1751, %v1758
  %v1774 = vcombine.low %v1765, %v1772
  %v1776 = vunpack.c.l.s4 1966171168
  %v1777 = vunpack.c.0.s8 %v1776
  %v1778 = vlaneseq
  %v1779 = vshrl.u32 %v1778, 7
  %v1780 = vsub.s32 %v1777, %v1779
  %v1781 = vrot.slane %v1773, %v1780
  %v1783 = vunpack.c.l.s4 1966171168
  %v1784 = vunpack.c.0.s8 %v1783
  %v1785 = vlaneseq
  %v1786 = vshrl.u32 %v1785, 7
  %v1787 = vsub.s32 %v1784, %v1786
  %v1788 = vrot.slane %v1774, %v1787
  %v1789 = vcombine.low %v1781, %v1788
  %1800 = vst [vmem:[#allocation2] sm:$0xff] %v1350
  %1801 = vst [vmem:[#allocation2 + $0x8] sm:$0xff] %v1399
  %1802 = vst [vmem:[#allocation2 + $0x10] sm:$0xff] %v1448
  %1803 = vst [vmem:[#allocation2 + $0x18] sm:$0xff] %v1497
  %1804 = vst [vmem:[#allocation2 + $0x20] sm:$0x7f] %v1545
  %1805 = vst [vmem:[#allocation2 + $0x28] sm:$0xff] %v1594
  %1806 = vst [vmem:[#allocation2 + $0x30] sm:$0xff] %v1643
  %1807 = vst [vmem:[#allocation2 + $0x38] sm:$0xff] %v1692
  %1808 = vst [vmem:[#allocation2 + $0x40] sm:$0xff] %v1741
  %1809 = vst [vmem:[#allocation2 + $0x48] sm:$0x7f] %v1789
  %v1810 = vld [vmem:[#allocation2] ss:$10 sm:$0xf]
  %s1811 = scalar_lea.vmem [#allocation2], 40
  %v1812 = vld [vmem:[%s1811] ss:$10 sm:$0xf]
  %v1813 = vpack.c.bf16 %v1810, %v1810
  %v1814 = vpack.c.bf16 %v1812, %v1812
  %s1815 = scalar_lea.vmem [#allocation2], 1
  %v1816 = vld [vmem:[%s1815] ss:$10 sm:$0xf]
  %s1817 = scalar_lea.vmem [#allocation2], 41
  %v1818 = vld [vmem:[%s1817] ss:$10 sm:$0xf]
  %v1819 = vpack.c.bf16 %v1816, %v1816
  %v1820 = vpack.c.bf16 %v1818, %v1818
  %s1821 = scalar_lea.vmem [#allocation2], 2
  %v1822 = vld [vmem:[%s1821] ss:$10 sm:$0xf]
  %s1823 = scalar_lea.vmem [#allocation2], 42
  %v1824 = vld [vmem:[%s1823] ss:$10 sm:$0xf]
  %v1825 = vpack.c.bf16 %v1822, %v1822
  %v1826 = vpack.c.bf16 %v1824, %v1824
  %s1827 = scalar_lea.vmem [#allocation2], 3
  %v1828 = vld [vmem:[%s1827] ss:$10 sm:$0xf]
  %s1829 = scalar_lea.vmem [#allocation2], 43
  %v1830 = vld [vmem:[%s1829] ss:$10 sm:$0xf]
  %v1831 = vpack.c.bf16 %v1828, %v1828
  %v1832 = vpack.c.bf16 %v1830, %v1830
  %s1833 = scalar_lea.vmem [#allocation2], 4
  %v1834 = vld [vmem:[%s1833] ss:$10 sm:$0xf]
  %s1835 = scalar_lea.vmem [#allocation2], 44
  %v1836 = vld [vmem:[%s1835] ss:$10 sm:$0xf]
  %v1837 = vpack.c.bf16 %v1834, %v1834
  %v1838 = vpack.c.bf16 %v1836, %v1836
  %s1839 = scalar_lea.vmem [#allocation2], 5
  %v1840 = vld [vmem:[%s1839] ss:$10 sm:$0xf]
  %s1841 = scalar_lea.vmem [#allocation2], 45
  %v1842 = vld [vmem:[%s1841] ss:$10 sm:$0xf]
  %v1843 = vpack.c.bf16 %v1840, %v1840
  %v1844 = vpack.c.bf16 %v1842, %v1842
  %s1845 = scalar_lea.vmem [#allocation2], 6
  %v1846 = vld [vmem:[%s1845] ss:$10 sm:$0xf]
  %s1847 = scalar_lea.vmem [#allocation2], 46
  %v1848 = vld [vmem:[%s1847] ss:$10 sm:$0xf]
  %v1849 = vpack.c.bf16 %v1846, %v1846
  %v1850 = vpack.c.bf16 %v1848, %v1848
  %s1851 = scalar_lea.vmem [#allocation2], 7
  %v1852 = vld [vmem:[%s1851] ss:$10 sm:$0xf]
  %s1853 = scalar_lea.vmem [#allocation2], 47
  %v1854 = vld [vmem:[%s1853] ss:$10 sm:$0xf]
  %v1855 = vpack.c.bf16 %v1852, %v1852
  %v1856 = vpack.c.bf16 %v1854, %v1854
  %s1857 = scalar_lea.vmem [#allocation2], 8
  %v1858 = vld [vmem:[%s1857] ss:$10 sm:$0xf]
  %s1859 = scalar_lea.vmem [#allocation2], 48
  %v1860 = vld [vmem:[%s1859] ss:$10 sm:$0xf]
  %v1861 = vpack.c.bf16 %v1858, %v1858
  %v1862 = vpack.c.bf16 %v1860, %v1860
  %s1863 = scalar_lea.vmem [#allocation2], 9
  %v1864 = vld [vmem:[%s1863] ss:$10 sm:$0x7]
  %s1865 = scalar_lea.vmem [#allocation2], 49
  %v1866 = vld [vmem:[%s1865] ss:$10 sm:$0x7]
  %v1867 = vpack.c.bf16 %v1864, %v1864
  %v1868 = vpack.c.bf16 %v1866, %v1866
  %v1870 = vshrl.u32 %v1813, 16
  %v1872 = vshll.u32 %v1813, 16
  %v1874 = vrot.slane %v1872, 1
  %v1875 = vor.u32 %v1870, %v1874
  %v1877 = vshrl.u32 %v1814, 16
  %v1879 = vshll.u32 %v1814, 16
  %v1881 = vrot.slane %v1879, 1
  %v1882 = vor.u32 %v1877, %v1881
  %v1884 = vshrl.u32 %v1819, 16
  %v1886 = vshll.u32 %v1819, 16
  %v1888 = vrot.slane %v1886, 1
  %v1889 = vor.u32 %v1884, %v1888
  %v1891 = vshrl.u32 %v1820, 16
  %v1893 = vshll.u32 %v1820, 16
  %v1895 = vrot.slane %v1893, 1
  %v1896 = vor.u32 %v1891, %v1895
  %v1898 = vshrl.u32 %v1825, 16
  %v1900 = vshll.u32 %v1825, 16
  %v1902 = vrot.slane %v1900, 1
  %v1903 = vor.u32 %v1898, %v1902
  %v1905 = vshrl.u32 %v1826, 16
  %v1907 = vshll.u32 %v1826, 16
  %v1909 = vrot.slane %v1907, 1
  %v1910 = vor.u32 %v1905, %v1909
  %v1912 = vshrl.u32 %v1831, 16
  %v1914 = vshll.u32 %v1831, 16
  %v1916 = vrot.slane %v1914, 1
  %v1917 = vor.u32 %v1912, %v1916
  %v1919 = vshrl.u32 %v1832, 16
  %v1921 = vshll.u32 %v1832, 16
  %v1923 = vrot.slane %v1921, 1
  %v1924 = vor.u32 %v1919, %v1923
  %v1926 = vshrl.u32 %v1837, 16
  %v1928 = vshll.u32 %v1837, 16
  %v1930 = vrot.slane %v1928, 1
  %v1931 = vor.u32 %v1926, %v1930
  %v1933 = vshrl.u32 %v1838, 16
  %v1935 = vshll.u32 %v1838, 16
  %v1937 = vrot.slane %v1935, 1
  %v1938 = vor.u32 %v1933, %v1937
  %v1940 = vshrl.u32 %v1843, 16
  %v1942 = vshll.u32 %v1843, 16
  %v1944 = vrot.slane %v1942, 1
  %v1945 = vor.u32 %v1940, %v1944
  %v1947 = vshrl.u32 %v1844, 16
  %v1949 = vshll.u32 %v1844, 16
  %v1951 = vrot.slane %v1949, 1
  %v1952 = vor.u32 %v1947, %v1951
  %v1954 = vshrl.u32 %v1849, 16
  %v1956 = vshll.u32 %v1849, 16
  %v1958 = vrot.slane %v1956, 1
  %v1959 = vor.u32 %v1954, %v1958
  %v1961 = vshrl.u32 %v1850, 16
  %v1963 = vshll.u32 %v1850, 16
  %v1965 = vrot.slane %v1963, 1
  %v1966 = vor.u32 %v1961, %v1965
  %v1968 = vshrl.u32 %v1855, 16
  %v1970 = vshll.u32 %v1855, 16
  %v1972 = vrot.slane %v1970, 1
  %v1973 = vor.u32 %v1968, %v1972
  %v1975 = vshrl.u32 %v1856, 16
  %v1977 = vshll.u32 %v1856, 16
  %v1979 = vrot.slane %v1977, 1
  %v1980 = vor.u32 %v1975, %v1979
  %v1982 = vshrl.u32 %v1861, 16
  %v1984 = vshll.u32 %v1861, 16
  %v1986 = vrot.slane %v1984, 1
  %v1987 = vor.u32 %v1982, %v1986
  %v1989 = vshrl.u32 %v1862, 16
  %v1991 = vshll.u32 %v1862, 16
  %v1993 = vrot.slane %v1991, 1
  %v1994 = vor.u32 %v1989, %v1993
  %v2015 = vcombine.low %v1813, %v1875
  %v2016 = vcombine.low %v1819, %v1889
  %v2017 = vcombine.low %v1825, %v1903
  %v2018 = vcombine.low %v1831, %v1917
  %v2020 = vunpack.c.l.s4 1966171168
  %v2021 = vunpack.c.0.s8 %v2020
  %v2022 = vlaneseq
  %v2023 = vshrl.u32 %v2022, 7
  %v2024 = vsub.s32 %v2021, %v2023
  %v2025 = vrot.slane %v2015, %v2024
  %v2027 = vunpack.c.l.s4 1966171168
  %v2028 = vunpack.c.0.s8 %v2027
  %v2029 = vlaneseq
  %v2030 = vshrl.u32 %v2029, 7
  %v2031 = vsub.s32 %v2028, %v2030
  %v2032 = vrot.slane %v2016, %v2031
  %v2034 = vunpack.c.l.s4 1966171168
  %v2035 = vunpack.c.0.s8 %v2034
  %v2036 = vlaneseq
  %v2037 = vshrl.u32 %v2036, 7
  %v2038 = vsub.s32 %v2035, %v2037
  %v2039 = vrot.slane %v2017, %v2038
  %v2041 = vunpack.c.l.s4 1966171168
  %v2042 = vunpack.c.0.s8 %v2041
  %v2043 = vlaneseq
  %v2044 = vshrl.u32 %v2043, 7
  %v2045 = vsub.s32 %v2042, %v2044
  %v2046 = vrot.slane %v2018, %v2045
  %v2047 = vcombine.low %v2025, %v2032
  %v2048 = vcombine.high %v2025, %v2032
  %v2049 = vcombine.low %v2039, %v2046
  %v2050 = vcombine.high %v2039, %v2046
  %v2052 = vunpack.c.l.s4 1966171168
  %v2053 = vunpack.c.0.s8 %v2052
  %v2054 = vlaneseq
  %v2055 = vshrl.u32 %v2054, 7
  %v2056 = vsub.s32 %v2053, %v2055
  %v2057 = vrot.slane %v2047, %v2056
  %v2059 = vunpack.c.l.s4 1966171168
  %v2060 = vunpack.c.0.s8 %v2059
  %v2061 = vlaneseq
  %v2062 = vshrl.u32 %v2061, 7
  %v2063 = vsub.s32 %v2060, %v2062
  %v2064 = vrot.slane %v2048, %v2063
  %v2066 = vunpack.c.l.s4 1966171168
  %v2067 = vunpack.c.0.s8 %v2066
  %v2068 = vlaneseq
  %v2069 = vshrl.u32 %v2068, 7
  %v2070 = vsub.s32 %v2067, %v2069
  %v2071 = vrot.slane %v2049, %v2070
  %v2073 = vunpack.c.l.s4 1966171168
  %v2074 = vunpack.c.0.s8 %v2073
  %v2075 = vlaneseq
  %v2076 = vshrl.u32 %v2075, 7
  %v2077 = vsub.s32 %v2074, %v2076
  %v2078 = vrot.slane %v2050, %v2077
  %v2079 = vcombine.low %v2057, %v2071
  %v2080 = vcombine.low %v2064, %v2078
  %v2081 = vcombine.low %v1837, %v1931
  %v2082 = vcombine.low %v1843, %v1945
  %v2083 = vcombine.low %v1849, %v1959
  %v2084 = vcombine.low %v1855, %v1973
  %v2086 = vunpack.c.l.s4 1966171168
  %v2087 = vunpack.c.0.s8 %v2086
  %v2088 = vlaneseq
  %v2089 = vshrl.u32 %v2088, 7
  %v2090 = vsub.s32 %v2087, %v2089
  %v2091 = vrot.slane %v2081, %v2090
  %v2093 = vunpack.c.l.s4 1966171168
  %v2094 = vunpack.c.0.s8 %v2093
  %v2095 = vlaneseq
  %v2096 = vshrl.u32 %v2095, 7
  %v2097 = vsub.s32 %v2094, %v2096
  %v2098 = vrot.slane %v2082, %v2097
  %v2100 = vunpack.c.l.s4 1966171168
  %v2101 = vunpack.c.0.s8 %v2100
  %v2102 = vlaneseq
  %v2103 = vshrl.u32 %v2102, 7
  %v2104 = vsub.s32 %v2101, %v2103
  %v2105 = vrot.slane %v2083, %v2104
  %v2107 = vunpack.c.l.s4 1966171168
  %v2108 = vunpack.c.0.s8 %v2107
  %v2109 = vlaneseq
  %v2110 = vshrl.u32 %v2109, 7
  %v2111 = vsub.s32 %v2108, %v2110
  %v2112 = vrot.slane %v2084, %v2111
  %v2113 = vcombine.low %v2091, %v2098
  %v2114 = vcombine.high %v2091, %v2098
  %v2115 = vcombine.low %v2105, %v2112
  %v2116 = vcombine.high %v2105, %v2112
  %v2118 = vunpack.c.l.s4 1966171168
  %v2119 = vunpack.c.0.s8 %v2118
  %v2120 = vlaneseq
  %v2121 = vshrl.u32 %v2120, 7
  %v2122 = vsub.s32 %v2119, %v2121
  %v2123 = vrot.slane %v2113, %v2122
  %v2125 = vunpack.c.l.s4 1966171168
  %v2126 = vunpack.c.0.s8 %v2125
  %v2127 = vlaneseq
  %v2128 = vshrl.u32 %v2127, 7
  %v2129 = vsub.s32 %v2126, %v2128
  %v2130 = vrot.slane %v2114, %v2129
  %v2132 = vunpack.c.l.s4 1966171168
  %v2133 = vunpack.c.0.s8 %v2132
  %v2134 = vlaneseq
  %v2135 = vshrl.u32 %v2134, 7
  %v2136 = vsub.s32 %v2133, %v2135
  %v2137 = vrot.slane %v2115, %v2136
  %v2139 = vunpack.c.l.s4 1966171168
  %v2140 = vunpack.c.0.s8 %v2139
  %v2141 = vlaneseq
  %v2142 = vshrl.u32 %v2141, 7
  %v2143 = vsub.s32 %v2140, %v2142
  %v2144 = vrot.slane %v2116, %v2143
  %v2145 = vcombine.low %v2123, %v2137
  %v2146 = vcombine.low %v2130, %v2144
  %v2147 = vcombine.low %v1861, %v1987
  %v2149 = vunpack.c.l.s4 1966171168
  %v2150 = vunpack.c.0.s8 %v2149
  %v2151 = vlaneseq
  %v2152 = vshrl.u32 %v2151, 7
  %v2153 = vsub.s32 %v2150, %v2152
  %v2154 = vrot.slane %v2147, %v2153
  %v2156 = vunpack.c.l.s4 1966171168
  %v2157 = vunpack.c.0.s8 %v2156
  %v2158 = vlaneseq
  %v2159 = vshrl.u32 %v2158, 7
  %v2160 = vsub.s32 %v2157, %v2159
  %v2161 = vrot.slane %v1867, %v2160
  %v2162 = vcombine.low %v2154, %v2161
  %v2163 = vcombine.high %v2154, %v2161
  %v2165 = vunpack.c.l.s4 1966171168
  %v2166 = vunpack.c.0.s8 %v2165
  %v2167 = vlaneseq
  %v2168 = vshrl.u32 %v2167, 7
  %v2169 = vsub.s32 %v2166, %v2168
  %v2170 = vrot.slane %v2162, %v2169
  %v2172 = vunpack.c.l.s4 1966171168
  %v2173 = vunpack.c.0.s8 %v2172
  %v2174 = vlaneseq
  %v2175 = vshrl.u32 %v2174, 7
  %v2176 = vsub.s32 %v2173, %v2175
  %v2177 = vrot.slane %v2163, %v2176
  %v2178 = vcombine.low %v1814, %v1882
  %v2179 = vcombine.low %v1820, %v1896
  %v2180 = vcombine.low %v1826, %v1910
  %v2181 = vcombine.low %v1832, %v1924
  %v2183 = vunpack.c.l.s4 1966171168
  %v2184 = vunpack.c.0.s8 %v2183
  %v2185 = vlaneseq
  %v2186 = vshrl.u32 %v2185, 7
  %v2187 = vsub.s32 %v2184, %v2186
  %v2188 = vrot.slane %v2178, %v2187
  %v2190 = vunpack.c.l.s4 1966171168
  %v2191 = vunpack.c.0.s8 %v2190
  %v2192 = vlaneseq
  %v2193 = vshrl.u32 %v2192, 7
  %v2194 = vsub.s32 %v2191, %v2193
  %v2195 = vrot.slane %v2179, %v2194
  %v2197 = vunpack.c.l.s4 1966171168
  %v2198 = vunpack.c.0.s8 %v2197
  %v2199 = vlaneseq
  %v2200 = vshrl.u32 %v2199, 7
  %v2201 = vsub.s32 %v2198, %v2200
  %v2202 = vrot.slane %v2180, %v2201
  %v2204 = vunpack.c.l.s4 1966171168
  %v2205 = vunpack.c.0.s8 %v2204
  %v2206 = vlaneseq
  %v2207 = vshrl.u32 %v2206, 7
  %v2208 = vsub.s32 %v2205, %v2207
  %v2209 = vrot.slane %v2181, %v2208
  %v2210 = vcombine.low %v2188, %v2195
  %v2211 = vcombine.high %v2188, %v2195
  %v2212 = vcombine.low %v2202, %v2209
  %v2213 = vcombine.high %v2202, %v2209
  %v2215 = vunpack.c.l.s4 1966171168
  %v2216 = vunpack.c.0.s8 %v2215
  %v2217 = vlaneseq
  %v2218 = vshrl.u32 %v2217, 7
  %v2219 = vsub.s32 %v2216, %v2218
  %v2220 = vrot.slane %v2210, %v2219
  %v2222 = vunpack.c.l.s4 1966171168
  %v2223 = vunpack.c.0.s8 %v2222
  %v2224 = vlaneseq
  %v2225 = vshrl.u32 %v2224, 7
  %v2226 = vsub.s32 %v2223, %v2225
  %v2227 = vrot.slane %v2211, %v2226
  %v2229 = vunpack.c.l.s4 1966171168
  %v2230 = vunpack.c.0.s8 %v2229
  %v2231 = vlaneseq
  %v2232 = vshrl.u32 %v2231, 7
  %v2233 = vsub.s32 %v2230, %v2232
  %v2234 = vrot.slane %v2212, %v2233
  %v2236 = vunpack.c.l.s4 1966171168
  %v2237 = vunpack.c.0.s8 %v2236
  %v2238 = vlaneseq
  %v2239 = vshrl.u32 %v2238, 7
  %v2240 = vsub.s32 %v2237, %v2239
  %v2241 = vrot.slane %v2213, %v2240
  %v2242 = vcombine.low %v2220, %v2234
  %v2243 = vcombine.low %v2227, %v2241
  %v2244 = vcombine.low %v1838, %v1938
  %v2245 = vcombine.low %v1844, %v1952
  %v2246 = vcombine.low %v1850, %v1966
  %v2247 = vcombine.low %v1856, %v1980
  %v2249 = vunpack.c.l.s4 1966171168
  %v2250 = vunpack.c.0.s8 %v2249
  %v2251 = vlaneseq
  %v2252 = vshrl.u32 %v2251, 7
  %v2253 = vsub.s32 %v2250, %v2252
  %v2254 = vrot.slane %v2244, %v2253
  %v2256 = vunpack.c.l.s4 1966171168
  %v2257 = vunpack.c.0.s8 %v2256
  %v2258 = vlaneseq
  %v2259 = vshrl.u32 %v2258, 7
  %v2260 = vsub.s32 %v2257, %v2259
  %v2261 = vrot.slane %v2245, %v2260
  %v2263 = vunpack.c.l.s4 1966171168
  %v2264 = vunpack.c.0.s8 %v2263
  %v2265 = vlaneseq
  %v2266 = vshrl.u32 %v2265, 7
  %v2267 = vsub.s32 %v2264, %v2266
  %v2268 = vrot.slane %v2246, %v2267
  %v2270 = vunpack.c.l.s4 1966171168
  %v2271 = vunpack.c.0.s8 %v2270
  %v2272 = vlaneseq
  %v2273 = vshrl.u32 %v2272, 7
  %v2274 = vsub.s32 %v2271, %v2273
  %v2275 = vrot.slane %v2247, %v2274
  %v2276 = vcombine.low %v2254, %v2261
  %v2277 = vcombine.high %v2254, %v2261
  %v2278 = vcombine.low %v2268, %v2275
  %v2279 = vcombine.high %v2268, %v2275
  %v2281 = vunpack.c.l.s4 1966171168
  %v2282 = vunpack.c.0.s8 %v2281
  %v2283 = vlaneseq
  %v2284 = vshrl.u32 %v2283, 7
  %v2285 = vsub.s32 %v2282, %v2284
  %v2286 = vrot.slane %v2276, %v2285
  %v2288 = vunpack.c.l.s4 1966171168
  %v2289 = vunpack.c.0.s8 %v2288
  %v2290 = vlaneseq
  %v2291 = vshrl.u32 %v2290, 7
  %v2292 = vsub.s32 %v2289, %v2291
  %v2293 = vrot.slane %v2277, %v2292
  %v2295 = vunpack.c.l.s4 1966171168
  %v2296 = vunpack.c.0.s8 %v2295
  %v2297 = vlaneseq
  %v2298 = vshrl.u32 %v2297, 7
  %v2299 = vsub.s32 %v2296, %v2298
  %v2300 = vrot.slane %v2278, %v2299
  %v2302 = vunpack.c.l.s4 1966171168
  %v2303 = vunpack.c.0.s8 %v2302
  %v2304 = vlaneseq
  %v2305 = vshrl.u32 %v2304, 7
  %v2306 = vsub.s32 %v2303, %v2305
  %v2307 = vrot.slane %v2279, %v2306
  %v2308 = vcombine.low %v2286, %v2300
  %v2309 = vcombine.low %v2293, %v2307
  %v2310 = vcombine.low %v1862, %v1994
  %v2312 = vunpack.c.l.s4 1966171168
  %v2313 = vunpack.c.0.s8 %v2312
  %v2314 = vlaneseq
  %v2315 = vshrl.u32 %v2314, 7
  %v2316 = vsub.s32 %v2313, %v2315
  %v2317 = vrot.slane %v2310, %v2316
  %v2319 = vunpack.c.l.s4 1966171168
  %v2320 = vunpack.c.0.s8 %v2319
  %v2321 = vlaneseq
  %v2322 = vshrl.u32 %v2321, 7
  %v2323 = vsub.s32 %v2320, %v2322
  %v2324 = vrot.slane %v1868, %v2323
  %v2325 = vcombine.low %v2317, %v2324
  %v2326 = vcombine.high %v2317, %v2324
  %v2328 = vunpack.c.l.s4 1966171168
  %v2329 = vunpack.c.0.s8 %v2328
  %v2330 = vlaneseq
  %v2331 = vshrl.u32 %v2330, 7
  %v2332 = vsub.s32 %v2329, %v2331
  %v2333 = vrot.slane %v2325, %v2332
  %v2335 = vunpack.c.l.s4 1966171168
  %v2336 = vunpack.c.0.s8 %v2335
  %v2337 = vlaneseq
  %v2338 = vshrl.u32 %v2337, 7
  %v2339 = vsub.s32 %v2336, %v2338
  %v2340 = vrot.slane %v2326, %v2339
  %v2341 = vunpack.i.l.s16 %v2079
  %v2342 = vunpack.i.l.s16 %v2145
  %v2343 = vunpack.i.l.s16 %v2170
  %v2344 = vunpack.i.h.s16 %v2079
  %v2345 = vunpack.i.h.s16 %v2145
  %v2346 = vunpack.i.h.s16 %v2170
  %v2347 = vunpack.i.l.s16 %v2080
  %v2348 = vunpack.i.l.s16 %v2146
  %v2349 = vunpack.i.l.s16 %v2177
  %v2350 = vunpack.i.l.s16 %v2242
  %v2351 = vunpack.i.l.s16 %v2308
  %v2352 = vunpack.i.l.s16 %v2333
  %v2353 = vunpack.i.h.s16 %v2242
  %v2354 = vunpack.i.h.s16 %v2308
  %v2355 = vunpack.i.h.s16 %v2333
  %v2356 = vunpack.i.l.s16 %v2243
  %v2357 = vunpack.i.l.s16 %v2309
  %v2358 = vunpack.i.l.s16 %v2340
  %v2359 = vld [vmem:[%s4] sm:$0xf]
  %v2360 = vld [vmem:[%s4 + $0x4] sm:$0xf]
  %v2361 = vld [vmem:[%s4 + $0x8] sm:$0xf]
  %v2362 = vld [vmem:[%s4 + $0xc] sm:$0xf]
  %v2363 = vld [vmem:[%s4 + $0x10] sm:$0xf]
  %v2364 = vld [vmem:[%s4 + $0x14] sm:$0xf]
  %v2365 = vld [vmem:[%s4 + $0x18] sm:$0xf]
  %v2366 = vld [vmem:[%s4 + $0x1c] sm:$0xf]
  %v2367 = vld [vmem:[%s4 + $0x20] sm:$0xf]
  %v2368 = vld [vmem:[%s4 + $0x24] sm:$0xf]
  %v2369 = vld [vmem:[%s4 + $0x28] sm:$0xf]
  %v2370 = vld [vmem:[%s4 + $0x2c] sm:$0xf]
  %v2371 = vld [vmem:[%s4 + $0x30] sm:$0xf]
  %v2372 = vld [vmem:[%s4 + $0x34] sm:$0xf]
  %v2373 = vld [vmem:[%s4 + $0x38] sm:$0xf]
  %v2374 = vld [vmem:[%s4 + $0x3c] sm:$0xf]
  %v2375 = vld [vmem:[%s4 + $0x40] sm:$0xf]
  %v2376 = vld [vmem:[%s4 + $0x44] sm:$0xf]
  %v2377 = vld [vmem:[%s4 + $0x48] sm:$0xf]
  %v2378 = vld [vmem:[%s4 + $0x4c] sm:$0xf]
  %v2379 = vld [vmem:[%s4 + $0x50] sm:$0xf]
  %v2380 = vld [vmem:[%s4 + $0x54] sm:$0xf]
  %v2381 = vld [vmem:[%s4 + $0x58] sm:$0xf]
  %v2382 = vld [vmem:[%s4 + $0x5c] sm:$0xf]
  %v2383 = vld [vmem:[%s4 + $0x60] sm:$0xf]
  %v2384 = vld [vmem:[%s4 + $0x64] sm:$0xf]
  %v2385 = vld [vmem:[%s4 + $0x68] sm:$0xf]
  %v2386 = vld [vmem:[%s4 + $0x6c] sm:$0xf]
  %v2387 = vld [vmem:[%s4 + $0x70] sm:$0xf]
  %v2388 = vld [vmem:[%s4 + $0x74] sm:$0xf]
  %v2389 = vld [vmem:[%s4 + $0x78] sm:$0xf]
  %v2390 = vld [vmem:[%s4 + $0x7c] sm:$0xf]
  %v2391 = vld [vmem:[%s4 + $0x80] sm:$0xf]
  %v2392 = vld [vmem:[%s4 + $0x84] sm:$0xf]
  %v2393 = vld [vmem:[%s4 + $0x88] sm:$0xf]
  %v2394 = vld [vmem:[%s4 + $0x8c] sm:$0xf]
  %v2395 = vld [vmem:[%s4 + $0x90] sm:$0xf]
  %v2396 = vld [vmem:[%s4 + $0x94] sm:$0xf]
  %v2397 = vld [vmem:[%s4 + $0x98] sm:$0xf]
  %v2398 = vld [vmem:[%s4 + $0x9c] sm:$0xf]
  %v2399 = vld [vmem:[%s4 + $0xa0] sm:$0xf]
  %v2400 = vld [vmem:[%s4 + $0xa4] sm:$0xf]
  %v2401 = vld [vmem:[%s4 + $0xa8] sm:$0xf]
  %v2402 = vld [vmem:[%s4 + $0xac] sm:$0xf]
  %v2403 = vld [vmem:[%s4 + $0xb0] sm:$0xf]
  %v2404 = vld [vmem:[%s4 + $0xb4] sm:$0xf]
  %v2405 = vld [vmem:[%s4 + $0xb8] sm:$0xf]
  %v2406 = vld [vmem:[%s4 + $0xbc] sm:$0xf]
  %v2407 = vld [vmem:[%s4 + $0xc0] sm:$0xf]
  %v2408 = vld [vmem:[%s4 + $0xc4] sm:$0xf]
  %v2409 = vld [vmem:[%s4 + $0xc8] sm:$0xf]
  %v2410 = vld [vmem:[%s4 + $0xcc] sm:$0xf]
  %v2411 = vld [vmem:[%s4 + $0xd0] sm:$0xf]
  %v2412 = vld [vmem:[%s4 + $0xd4] sm:$0xf]
  %v2413 = vld [vmem:[%s4 + $0xd8] sm:$0xf]
  %v2414 = vld [vmem:[%s4 + $0xdc] sm:$0xf]
  %v2415 = vld [vmem:[%s4 + $0xe0] sm:$0xf]
  %v2416 = vld [vmem:[%s4 + $0xe4] sm:$0xf]
  %v2417 = vld [vmem:[%s4 + $0xe8] sm:$0xf]
  %v2418 = vld [vmem:[%s4 + $0xec] sm:$0xf]
  %v2419 = vld [vmem:[%s4 + $0xf0] sm:$0xf]
  %v2420 = vld [vmem:[%s4 + $0xf4] sm:$0xf]
  %v2421 = vld [vmem:[%s4 + $0xf8] sm:$0xf]
  %v2422 = vld [vmem:[%s4 + $0xfc] sm:$0xf]
  %v2423 = vld [vmem:[%s4 + $0x100] sm:$0xf]
  %v2424 = vld [vmem:[%s4 + $0x104] sm:$0xf]
  %v2425 = vld [vmem:[%s4 + $0x108] sm:$0xf]
  %v2426 = vld [vmem:[%s4 + $0x10c] sm:$0xf]
  %v2427 = vld [vmem:[%s4 + $0x110] sm:$0xf]
  %v2428 = vld [vmem:[%s4 + $0x114] sm:$0xf]
  %v2429 = vld [vmem:[%s4 + $0x118] sm:$0xf]
  %v2430 = vld [vmem:[%s4 + $0x11c] sm:$0xf]
  %v2431 = vld [vmem:[%s4 + $0x120] sm:$0xf]
  %v2432 = vld [vmem:[%s4 + $0x124] sm:$0xf]
  %v2433 = vld [vmem:[%s4 + $0x128] sm:$0xf]
  %v2434 = vld [vmem:[%s4 + $0x12c] sm:$0xf]
  %v2435 = vld [vmem:[%s4 + $0x130] sm:$0xf]
  %v2436 = vld [vmem:[%s4 + $0x134] sm:$0xf]
  %v2437 = vld [vmem:[%s4 + $0x138] sm:$0xf]
  %v2438 = vld [vmem:[%s4 + $0x13c] sm:$0xf]
  %v2439 = vld [vmem:[%s4 + $0x140] sm:$0xf]
  %v2440 = vld [vmem:[%s4 + $0x144] sm:$0xf]
  %v2441 = vld [vmem:[%s4 + $0x148] sm:$0xf]
  %v2442 = vld [vmem:[%s4 + $0x14c] sm:$0xf]
  %v2443 = vld [vmem:[%s4 + $0x150] sm:$0xf]
  %v2444 = vld [vmem:[%s4 + $0x154] sm:$0xf]
  %v2445 = vld [vmem:[%s4 + $0x158] sm:$0xf]
  %v2446 = vld [vmem:[%s4 + $0x15c] sm:$0xf]
  %v2447 = vld [vmem:[%s4 + $0x160] sm:$0xf]
  %v2448 = vld [vmem:[%s4 + $0x164] sm:$0xf]
  %v2449 = vld [vmem:[%s4 + $0x168] sm:$0xf]
  %v2450 = vld [vmem:[%s4 + $0x16c] sm:$0xf]
  %v2451 = vld [vmem:[%s4 + $0x170] sm:$0xf]
  %v2452 = vld [vmem:[%s4 + $0x174] sm:$0xf]
  %v2453 = vld [vmem:[%s4 + $0x178] sm:$0xf]
  %v2454 = vld [vmem:[%s4 + $0x17c] sm:$0xf]
  %v2455 = vld [vmem:[%s4 + $0x180] sm:$0xf]
  %v2456 = vld [vmem:[%s4 + $0x184] sm:$0xf]
  %v2457 = vld [vmem:[%s4 + $0x188] sm:$0xf]
  %v2458 = vld [vmem:[%s4 + $0x18c] sm:$0xf]
  %v2459 = vld [vmem:[%s4 + $0x190] sm:$0xf]
  %v2460 = vld [vmem:[%s4 + $0x194] sm:$0xf]
  %v2461 = vld [vmem:[%s4 + $0x198] sm:$0xf]
  %v2462 = vld [vmem:[%s4 + $0x19c] sm:$0xf]
  %v2463 = vld [vmem:[%s4 + $0x1a0] sm:$0xf]
  %v2464 = vld [vmem:[%s4 + $0x1a4] sm:$0xf]
  %v2465 = vld [vmem:[%s4 + $0x1a8] sm:$0xf]
  %v2466 = vld [vmem:[%s4 + $0x1ac] sm:$0xf]
  %v2467 = vld [vmem:[%s4 + $0x1b0] sm:$0xf]
  %v2468 = vld [vmem:[%s4 + $0x1b4] sm:$0xf]
  %v2469 = vld [vmem:[%s4 + $0x1b8] sm:$0xf]
  %v2470 = vld [vmem:[%s4 + $0x1bc] sm:$0xf]
  %v2471 = vld [vmem:[%s4 + $0x1c0] sm:$0xf]
  %v2472 = vld [vmem:[%s4 + $0x1c4] sm:$0xf]
  %v2473 = vld [vmem:[%s4 + $0x1c8] sm:$0xf]
  %v2474 = vld [vmem:[%s4 + $0x1cc] sm:$0xf]
  %v2475 = vld [vmem:[%s4 + $0x1d0] sm:$0xf]
  %v2476 = vld [vmem:[%s4 + $0x1d4] sm:$0xf]
  %v2477 = vld [vmem:[%s4 + $0x1d8] sm:$0xf]
  %v2478 = vld [vmem:[%s4 + $0x1dc] sm:$0xf]
  %v2479 = vld [vmem:[%s4 + $0x1e0] sm:$0xf]
  %v2480 = vld [vmem:[%s4 + $0x1e4] sm:$0xf]
  %v2481 = vld [vmem:[%s4 + $0x1e8] sm:$0xf]
  %v2482 = vld [vmem:[%s4 + $0x1ec] sm:$0xf]
  %v2483 = vld [vmem:[%s4 + $0x1f0] sm:$0xf]
  %v2484 = vld [vmem:[%s4 + $0x1f4] sm:$0xf]
  %v2485 = vld [vmem:[%s4 + $0x1f8] sm:$0xf]
  %v2486 = vld [vmem:[%s4 + $0x1fc] sm:$0xf]
  %v2487 = vld [vmem:[%s4 + $0x200] sm:$0xf]
  %v2488 = vld [vmem:[%s4 + $0x204] sm:$0xf]
  %v2489 = vld [vmem:[%s4 + $0x208] sm:$0xf]
  %v2490 = vld [vmem:[%s4 + $0x20c] sm:$0xf]
  %v2491 = vld [vmem:[%s4 + $0x210] sm:$0xf]
  %v2492 = vld [vmem:[%s4 + $0x214] sm:$0xf]
  %v2493 = vld [vmem:[%s4 + $0x218] sm:$0xf]
  %v2494 = vld [vmem:[%s4 + $0x21c] sm:$0xf]
  %v2495 = vld [vmem:[%s4 + $0x220] sm:$0xf]
  %v2496 = vld [vmem:[%s4 + $0x224] sm:$0xf]
  %v2497 = vld [vmem:[%s4 + $0x228] sm:$0xf]
  %v2498 = vld [vmem:[%s4 + $0x22c] sm:$0xf]
  %v2499 = vld [vmem:[%s4 + $0x230] sm:$0xf]
  %v2500 = vld [vmem:[%s4 + $0x234] sm:$0xf]
  %v2501 = vld [vmem:[%s4 + $0x238] sm:$0xf]
  %v2502 = vld [vmem:[%s4 + $0x23c] sm:$0xf]
  %v2503 = vld [vmem:[%s4 + $0x240] sm:$0xf]
  %v2504 = vld [vmem:[%s4 + $0x244] sm:$0xf]
  %v2505 = vld [vmem:[%s4 + $0x248] sm:$0xf]
  %v2506 = vld [vmem:[%s4 + $0x24c] sm:$0xf]
  %v2507 = vld [vmem:[%s4 + $0x250] sm:$0xf]
  %v2508 = vld [vmem:[%s4 + $0x254] sm:$0xf]
  %v2509 = vld [vmem:[%s4 + $0x258] sm:$0xf]
  %v2510 = vld [vmem:[%s4 + $0x25c] sm:$0xf]
  %v2511 = vld [vmem:[%s4 + $0x260] sm:$0xf]
  %v2512 = vld [vmem:[%s4 + $0x264] sm:$0xf]
  %v2513 = vld [vmem:[%s4 + $0x268] sm:$0xf]
  %v2514 = vld [vmem:[%s4 + $0x26c] sm:$0xf]
  %v2515 = vld [vmem:[%s4 + $0x270] sm:$0xf]
  %v2516 = vld [vmem:[%s4 + $0x274] sm:$0xf]
  %v2517 = vld [vmem:[%s4 + $0x278] sm:$0xf]
  %v2518 = vld [vmem:[%s4 + $0x27c] sm:$0xf]
  %v2519 = vld [vmem:[%s4 + $0x280] sm:$0xf]
  %v2520 = vld [vmem:[%s4 + $0x284] sm:$0xf]
  %v2521 = vld [vmem:[%s4 + $0x288] sm:$0xf]
  %v2522 = vld [vmem:[%s4 + $0x28c] sm:$0xf]
  %v2523 = vld [vmem:[%s4 + $0x290] sm:$0xf]
  %v2524 = vld [vmem:[%s4 + $0x294] sm:$0xf]
  %v2525 = vld [vmem:[%s4 + $0x298] sm:$0xf]
  %v2526 = vld [vmem:[%s4 + $0x29c] sm:$0xf]
  %v2527 = vld [vmem:[%s4 + $0x2a0] sm:$0xf]
  %v2528 = vld [vmem:[%s4 + $0x2a4] sm:$0xf]
  %v2529 = vld [vmem:[%s4 + $0x2a8] sm:$0xf]
  %v2530 = vld [vmem:[%s4 + $0x2ac] sm:$0xf]
  %v2531 = vld [vmem:[%s4 + $0x2b0] sm:$0xf]
  %v2532 = vld [vmem:[%s4 + $0x2b4] sm:$0xf]
  %v2533 = vld [vmem:[%s4 + $0x2b8] sm:$0xf]
  %v2534 = vld [vmem:[%s4 + $0x2bc] sm:$0xf]
  %v2535 = vld [vmem:[%s4 + $0x2c0] sm:$0xf]
  %v2536 = vld [vmem:[%s4 + $0x2c4] sm:$0xf]
  %v2537 = vld [vmem:[%s4 + $0x2c8] sm:$0xf]
  %v2538 = vld [vmem:[%s4 + $0x2cc] sm:$0xf]
  %v2539 = vld [vmem:[%s4 + $0x2d0] sm:$0xf]
  %v2540 = vld [vmem:[%s4 + $0x2d4] sm:$0xf]
  %v2541 = vld [vmem:[%s4 + $0x2d8] sm:$0xf]
  %v2542 = vld [vmem:[%s4 + $0x2dc] sm:$0xf]
  %v2543 = vld [vmem:[%s4 + $0x2e0] sm:$0xf]
  %v2544 = vld [vmem:[%s4 + $0x2e4] sm:$0xf]
  %v2545 = vld [vmem:[%s4 + $0x2e8] sm:$0xf]
  %v2546 = vld [vmem:[%s4 + $0x2ec] sm:$0xf]
  %v2547 = vld [vmem:[%s4 + $0x2f0] sm:$0xf]
  %v2548 = vld [vmem:[%s4 + $0x2f4] sm:$0xf]
  %v2549 = vld [vmem:[%s4 + $0x2f8] sm:$0xf]
  %v2550 = vld [vmem:[%s4 + $0x2fc] sm:$0xf]
  %v2551 = vld [vmem:[%s4 + $0x300] sm:$0xf]
  %v2552 = vld [vmem:[%s4 + $0x304] sm:$0xf]
  %v2553 = vld [vmem:[%s4 + $0x308] sm:$0xf]
  %v2554 = vld [vmem:[%s4 + $0x30c] sm:$0xf]
  %v2555 = vld [vmem:[%s4 + $0x310] sm:$0xf]
  %v2556 = vld [vmem:[%s4 + $0x314] sm:$0xf]
  %v2557 = vld [vmem:[%s4 + $0x318] sm:$0xf]
  %v2558 = vld [vmem:[%s4 + $0x31c] sm:$0xf]
  %v2559 = vld [vmem:[%s4 + $0x320] sm:$0xf]
  %v2560 = vld [vmem:[%s4 + $0x324] sm:$0xf]
  %v2561 = vld [vmem:[%s4 + $0x328] sm:$0xf]
  %v2562 = vld [vmem:[%s4 + $0x32c] sm:$0xf]
  %v2563 = vld [vmem:[%s4 + $0x330] sm:$0xf]
  %v2564 = vld [vmem:[%s4 + $0x334] sm:$0xf]
  %v2565 = vld [vmem:[%s4 + $0x338] sm:$0xf]
  %v2566 = vld [vmem:[%s4 + $0x33c] sm:$0xf]
  %v2567 = vld [vmem:[%s4 + $0x340] sm:$0xf]
  %v2568 = vld [vmem:[%s4 + $0x344] sm:$0xf]
  %v2569 = vld [vmem:[%s4 + $0x348] sm:$0xf]
  %v2570 = vld [vmem:[%s4 + $0x34c] sm:$0xf]
  %v2571 = vld [vmem:[%s4 + $0x350] sm:$0xf]
  %v2572 = vld [vmem:[%s4 + $0x354] sm:$0xf]
  %v2573 = vld [vmem:[%s4 + $0x358] sm:$0xf]
  %v2574 = vld [vmem:[%s4 + $0x35c] sm:$0xf]
  %v2575 = vld [vmem:[%s4 + $0x360] sm:$0xf]
  %v2576 = vld [vmem:[%s4 + $0x364] sm:$0xf]
  %v2577 = vld [vmem:[%s4 + $0x368] sm:$0xf]
  %v2578 = vld [vmem:[%s4 + $0x36c] sm:$0xf]
  %v2579 = vld [vmem:[%s4 + $0x370] sm:$0xf]
  %v2580 = vld [vmem:[%s4 + $0x374] sm:$0xf]
  %v2581 = vld [vmem:[%s4 + $0x378] sm:$0xf]
  %v2582 = vld [vmem:[%s4 + $0x37c] sm:$0xf]
  %v2583 = vld [vmem:[%s4 + $0x380] sm:$0xf]
  %v2584 = vld [vmem:[%s4 + $0x384] sm:$0xf]
  %v2585 = vld [vmem:[%s4 + $0x388] sm:$0xf]
  %v2586 = vld [vmem:[%s4 + $0x38c] sm:$0xf]
  %v2587 = vld [vmem:[%s4 + $0x390] sm:$0xf]
  %v2588 = vld [vmem:[%s4 + $0x394] sm:$0xf]
  %v2589 = vld [vmem:[%s4 + $0x398] sm:$0xf]
  %v2590 = vld [vmem:[%s4 + $0x39c] sm:$0xf]
  %v2591 = vld [vmem:[%s4 + $0x3a0] sm:$0xf]
  %v2592 = vld [vmem:[%s4 + $0x3a4] sm:$0xf]
  %v2593 = vld [vmem:[%s4 + $0x3a8] sm:$0xf]
  %v2594 = vld [vmem:[%s4 + $0x3ac] sm:$0xf]
  %v2595 = vld [vmem:[%s4 + $0x3b0] sm:$0xf]
  %v2596 = vld [vmem:[%s4 + $0x3b4] sm:$0xf]
  %v2597 = vld [vmem:[%s4 + $0x3b8] sm:$0xf]
  %v2598 = vld [vmem:[%s4 + $0x3bc] sm:$0xf]
  %v2599 = vld [vmem:[%s4 + $0x3c0] sm:$0xf]
  %v2600 = vld [vmem:[%s4 + $0x3c4] sm:$0xf]
  %v2601 = vld [vmem:[%s4 + $0x3c8] sm:$0xf]
  %v2602 = vld [vmem:[%s4 + $0x3cc] sm:$0xf]
  %v2603 = vld [vmem:[%s4 + $0x3d0] sm:$0xf]
  %v2604 = vld [vmem:[%s4 + $0x3d4] sm:$0xf]
  %v2605 = vld [vmem:[%s4 + $0x3d8] sm:$0xf]
  %v2606 = vld [vmem:[%s4 + $0x3dc] sm:$0xf]
  %v2607 = vld [vmem:[%s4 + $0x3e0] sm:$0xf]
  %v2608 = vld [vmem:[%s4 + $0x3e4] sm:$0xf]
  %v2609 = vld [vmem:[%s4 + $0x3e8] sm:$0xf]
  %v2610 = vld [vmem:[%s4 + $0x3ec] sm:$0xf]
  %v2611 = vld [vmem:[%s4 + $0x3f0] sm:$0xf]
  %v2612 = vld [vmem:[%s4 + $0x3f4] sm:$0xf]
  %v2613 = vld [vmem:[%s4 + $0x3f8] sm:$0xf]
  %v2614 = vld [vmem:[%s4 + $0x3fc] sm:$0xf]
  %v2615 = vld [vmem:[%s4 + $0x400] sm:$0xf]
  %v2616 = vld [vmem:[%s4 + $0x404] sm:$0xf]
  %v2617 = vld [vmem:[%s4 + $0x408] sm:$0xf]
  %v2618 = vld [vmem:[%s4 + $0x40c] sm:$0xf]
  %v2619 = vld [vmem:[%s4 + $0x410] sm:$0xf]
  %v2620 = vld [vmem:[%s4 + $0x414] sm:$0xf]
  %v2621 = vld [vmem:[%s4 + $0x418] sm:$0xf]
  %v2622 = vld [vmem:[%s4 + $0x41c] sm:$0xf]
  %v2623 = vld [vmem:[%s4 + $0x420] sm:$0xf]
  %v2624 = vld [vmem:[%s4 + $0x424] sm:$0xf]
  %v2625 = vld [vmem:[%s4 + $0x428] sm:$0xf]
  %v2626 = vld [vmem:[%s4 + $0x42c] sm:$0xf]
  %v2627 = vld [vmem:[%s4 + $0x430] sm:$0xf]
  %v2628 = vld [vmem:[%s4 + $0x434] sm:$0xf]
  %v2629 = vld [vmem:[%s4 + $0x438] sm:$0xf]
  %v2630 = vld [vmem:[%s4 + $0x43c] sm:$0xf]
  %v2631 = vld [vmem:[%s4 + $0x440] sm:$0xf]
  %v2632 = vld [vmem:[%s4 + $0x444] sm:$0xf]
  %v2633 = vld [vmem:[%s4 + $0x448] sm:$0xf]
  %v2634 = vld [vmem:[%s4 + $0x44c] sm:$0xf]
  %v2635 = vld [vmem:[%s4 + $0x450] sm:$0xf]
  %v2636 = vld [vmem:[%s4 + $0x454] sm:$0xf]
  %v2637 = vld [vmem:[%s4 + $0x458] sm:$0xf]
  %v2638 = vld [vmem:[%s4 + $0x45c] sm:$0xf]
  %v2639 = vld [vmem:[%s4 + $0x460] sm:$0xf]
  %v2640 = vld [vmem:[%s4 + $0x464] sm:$0xf]
  %v2641 = vld [vmem:[%s4 + $0x468] sm:$0xf]
  %v2642 = vld [vmem:[%s4 + $0x46c] sm:$0xf]
  %v2643 = vld [vmem:[%s4 + $0x470] sm:$0xf]
  %v2644 = vld [vmem:[%s4 + $0x474] sm:$0xf]
  %v2645 = vld [vmem:[%s4 + $0x478] sm:$0xf]
  %v2646 = vld [vmem:[%s4 + $0x47c] sm:$0xf]
  %v2647 = vld [vmem:[%s4 + $0x480] sm:$0xf]
  %v2648 = vld [vmem:[%s4 + $0x484] sm:$0xf]
  %v2649 = vld [vmem:[%s4 + $0x488] sm:$0xf]
  %v2650 = vld [vmem:[%s4 + $0x48c] sm:$0xf]
  %v2651 = vld [vmem:[%s4 + $0x490] sm:$0xf]
  %v2652 = vld [vmem:[%s4 + $0x494] sm:$0xf]
  %v2653 = vld [vmem:[%s4 + $0x498] sm:$0xf]
  %v2654 = vld [vmem:[%s4 + $0x49c] sm:$0xf]
  %v2655 = vld [vmem:[%s4 + $0x4a0] sm:$0xf]
  %v2656 = vld [vmem:[%s4 + $0x4a4] sm:$0xf]
  %v2657 = vld [vmem:[%s4 + $0x4a8] sm:$0xf]
  %v2658 = vld [vmem:[%s4 + $0x4ac] sm:$0xf]
  %v2659 = vld [vmem:[%s4 + $0x4b0] sm:$0xf]
  %v2660 = vld [vmem:[%s4 + $0x4b4] sm:$0xf]
  %v2661 = vld [vmem:[%s4 + $0x4b8] sm:$0xf]
  %v2662 = vld [vmem:[%s4 + $0x4bc] sm:$0xf]
  %v2663 = vlaneseq
  %v2664 = vshrl.u32 %v2663, 7
  %v2665 = vsub.s32 1, %v2664
  %v2666 = vrot.slane %v36, %v2665
  %v2667 = vpack.i.b16 %v2344, %v2341
  %v2668 = vpack.i.b16 %v2345, %v2342
  %v2669 = vpack.i.b16 %v2346, %v2343
  %v2670 = vpack.i.b16 %v2350, %v2347
  %v2671 = vpack.i.b16 %v2351, %v2348
  %v2672 = vpack.i.b16 %v2352, %v2349
  %v2673 = vpack.i.b16 %v2356, %v2353
  %v2674 = vpack.i.b16 %v2357, %v2354
  %v2675 = vpack.i.b16 %v2358, %v2355
  %v2676 = vcombine.low %v2667, %v2670
  %v2677 = vcombine.high %v2667, %v2670
  %v2678 = vcombine.high %v2673, %v2673
  %v2680 = vunpack.c.l.s4 1966171168
  %v2681 = vunpack.c.0.s8 %v2680
  %v2682 = vlaneseq
  %v2683 = vshrl.u32 %v2682, 7
  %v2684 = vsub.s32 %v2681, %v2683
  %v2685 = vrot.slane %v2676, %v2684
  %v2687 = vunpack.c.l.s4 1966171168
  %v2688 = vunpack.c.0.s8 %v2687
  %v2689 = vlaneseq
  %v2690 = vshrl.u32 %v2689, 7
  %v2691 = vsub.s32 %v2688, %v2690
  %v2692 = vrot.slane %v2677, %v2691
  %v2694 = vunpack.c.l.s4 1966171168
  %v2695 = vunpack.c.0.s8 %v2694
  %v2696 = vlaneseq
  %v2697 = vshrl.u32 %v2696, 7
  %v2698 = vsub.s32 %v2695, %v2697
  %v2699 = vrot.slane %v2673, %v2698
  %v2701 = vunpack.c.l.s4 1966171168
  %v2702 = vunpack.c.0.s8 %v2701
  %v2703 = vlaneseq
  %v2704 = vshrl.u32 %v2703, 7
  %v2705 = vsub.s32 %v2702, %v2704
  %v2706 = vrot.slane %v2678, %v2705
  %v2707 = vcombine.low %v2685, %v2699
  %v2708 = vcombine.high %v2685, %v2699
  %v2709 = vcombine.low %v2692, %v2706
  %v2710 = vcombine.high %v2692, %v2706
  %v2712 = vunpack.c.l.s4 1966171168
  %v2713 = vunpack.c.0.s8 %v2712
  %v2714 = vlaneseq
  %v2715 = vshrl.u32 %v2714, 7
  %v2716 = vsub.s32 %v2713, %v2715
  %v2717 = vrot.slane %v2707, %v2716
  %v2719 = vunpack.c.l.s4 1966171168
  %v2720 = vunpack.c.0.s8 %v2719
  %v2721 = vlaneseq
  %v2722 = vshrl.u32 %v2721, 7
  %v2723 = vsub.s32 %v2720, %v2722
  %v2724 = vrot.slane %v2709, %v2723
  %v2726 = vunpack.c.l.s4 1966171168
  %v2727 = vunpack.c.0.s8 %v2726
  %v2728 = vlaneseq
  %v2729 = vshrl.u32 %v2728, 7
  %v2730 = vsub.s32 %v2727, %v2729
  %v2731 = vrot.slane %v2708, %v2730
  %v2733 = vunpack.c.l.s4 1966171168
  %v2734 = vunpack.c.0.s8 %v2733
  %v2735 = vlaneseq
  %v2736 = vshrl.u32 %v2735, 7
  %v2737 = vsub.s32 %v2734, %v2736
  %v2738 = vrot.slane %v2710, %v2737
  %v2739 = vcombine.high %v2717, %v2717
  %v2740 = vcombine.high %v2724, %v2724
  %v2741 = vcombine.high %v2731, %v2731
  %v2742 = vcombine.high %v2738, %v2738
  %v2743 = vcombine.low %v2668, %v2671
  %v2744 = vcombine.high %v2668, %v2671
  %v2745 = vcombine.high %v2674, %v2674
  %v2747 = vunpack.c.l.s4 1966171168
  %v2748 = vunpack.c.0.s8 %v2747
  %v2749 = vlaneseq
  %v2750 = vshrl.u32 %v2749, 7
  %v2751 = vsub.s32 %v2748, %v2750
  %v2752 = vrot.slane %v2743, %v2751
  %v2754 = vunpack.c.l.s4 1966171168
  %v2755 = vunpack.c.0.s8 %v2754
  %v2756 = vlaneseq
  %v2757 = vshrl.u32 %v2756, 7
  %v2758 = vsub.s32 %v2755, %v2757
  %v2759 = vrot.slane %v2744, %v2758
  %v2761 = vunpack.c.l.s4 1966171168
  %v2762 = vunpack.c.0.s8 %v2761
  %v2763 = vlaneseq
  %v2764 = vshrl.u32 %v2763, 7
  %v2765 = vsub.s32 %v2762, %v2764
  %v2766 = vrot.slane %v2674, %v2765
  %v2768 = vunpack.c.l.s4 1966171168
  %v2769 = vunpack.c.0.s8 %v2768
  %v2770 = vlaneseq
  %v2771 = vshrl.u32 %v2770, 7
  %v2772 = vsub.s32 %v2769, %v2771
  %v2773 = vrot.slane %v2745, %v2772
  %v2774 = vcombine.low %v2752, %v2766
  %v2775 = vcombine.high %v2752, %v2766
  %v2776 = vcombine.low %v2759, %v2773
  %v2777 = vcombine.high %v2759, %v2773
  %v2779 = vunpack.c.l.s4 1966171168
  %v2780 = vunpack.c.0.s8 %v2779
  %v2781 = vlaneseq
  %v2782 = vshrl.u32 %v2781, 7
  %v2783 = vsub.s32 %v2780, %v2782
  %v2784 = vrot.slane %v2774, %v2783
  %v2786 = vunpack.c.l.s4 1966171168
  %v2787 = vunpack.c.0.s8 %v2786
  %v2788 = vlaneseq
  %v2789 = vshrl.u32 %v2788, 7
  %v2790 = vsub.s32 %v2787, %v2789
  %v2791 = vrot.slane %v2776, %v2790
  %v2793 = vunpack.c.l.s4 1966171168
  %v2794 = vunpack.c.0.s8 %v2793
  %v2795 = vlaneseq
  %v2796 = vshrl.u32 %v2795, 7
  %v2797 = vsub.s32 %v2794, %v2796
  %v2798 = vrot.slane %v2775, %v2797
  %v2800 = vunpack.c.l.s4 1966171168
  %v2801 = vunpack.c.0.s8 %v2800
  %v2802 = vlaneseq
  %v2803 = vshrl.u32 %v2802, 7
  %v2804 = vsub.s32 %v2801, %v2803
  %v2805 = vrot.slane %v2777, %v2804
  %v2806 = vcombine.high %v2784, %v2784
  %v2807 = vcombine.high %v2791, %v2791
  %v2808 = vcombine.high %v2798, %v2798
  %v2809 = vcombine.high %v2805, %v2805
  %v2810 = vcombine.low %v2669, %v2672
  %v2812 = vunpack.c.l.s4 1966171168
  %v2813 = vunpack.c.0.s8 %v2812
  %v2814 = vlaneseq
  %v2815 = vshrl.u32 %v2814, 7
  %v2816 = vsub.s32 %v2813, %v2815
  %v2817 = vrot.slane %v2810, %v2816
  %v2819 = vunpack.c.l.s4 1966171168
  %v2820 = vunpack.c.0.s8 %v2819
  %v2821 = vlaneseq
  %v2822 = vshrl.u32 %v2821, 7
  %v2823 = vsub.s32 %v2820, %v2822
  %v2824 = vrot.slane %v2675, %v2823
  %v2825 = vcombine.low %v2817, %v2824
  %v2826 = vcombine.high %v2817, %v2824
  %v2828 = vunpack.c.l.s4 1966171168
  %v2829 = vunpack.c.0.s8 %v2828
  %v2830 = vlaneseq
  %v2831 = vshrl.u32 %v2830, 7
  %v2832 = vsub.s32 %v2829, %v2831
  %v2833 = vrot.slane %v2825, %v2832
  %v2835 = vunpack.c.l.s4 1966171168
  %v2836 = vunpack.c.0.s8 %v2835
  %v2837 = vlaneseq
  %v2838 = vshrl.u32 %v2837, 7
  %v2839 = vsub.s32 %v2836, %v2838
  %v2840 = vrot.slane %v2826, %v2839
  %v2841 = vcombine.high %v2833, %v2833
  %v3165 = vunpack.c.l.b16 %v2359
  %v3166 = vunpack.c.l.b16 %v2360
  %v3167 = vunpack.c.l.b16 %v2361
  %v3168 = vunpack.c.l.b16 %v2362
  %v3169 = vunpack.c.l.b16 %v2363
  %v3170 = vunpack.c.l.b16 %v2364
  %v3171 = vunpack.c.l.b16 %v2365
  %v3172 = vunpack.c.l.b16 %v2366
  %v3173 = vunpack.c.l.b16 %v2367
  %v3174 = vunpack.c.l.b16 %v2368
  %v3175 = vunpack.c.l.b16 %v2369
  %v3176 = vunpack.c.l.b16 %v2370
  %v3177 = vunpack.c.l.b16 %v2371
  %v3178 = vunpack.c.l.b16 %v2372
  %v3179 = vunpack.c.l.b16 %v2373
  %v3180 = vunpack.c.l.b16 %v2374
  %v3181 = vunpack.c.l.b16 %v2375
  %v3182 = vunpack.c.l.b16 %v2376
  %v3183 = vunpack.c.l.b16 %v2377
  %v3184 = vunpack.c.l.b16 %v2378
  %v3185 = vunpack.c.l.b16 %v2379
  %v3186 = vunpack.c.l.b16 %v2380
  %v3187 = vunpack.c.l.b16 %v2381
  %v3188 = vunpack.c.l.b16 %v2382
  %v3189 = vunpack.c.l.b16 %v2383
  %v3190 = vunpack.c.l.b16 %v2384
  %v3191 = vunpack.c.l.b16 %v2385
  %v3192 = vunpack.c.l.b16 %v2386
  %v3193 = vunpack.c.l.b16 %v2387
  %v3194 = vunpack.c.l.b16 %v2388
  %v3195 = vunpack.c.l.b16 %v2389
  %v3196 = vunpack.c.l.b16 %v2390
  %v3197 = vunpack.c.l.b16 %v2391
  %v3198 = vunpack.c.l.b16 %v2392
  %v3199 = vunpack.c.l.b16 %v2393
  %v3200 = vunpack.c.l.b16 %v2394
  %v3201 = vunpack.c.l.b16 %v2395
  %v3202 = vunpack.c.l.b16 %v2396
  %v3203 = vunpack.c.l.b16 %v2397
  %v3204 = vunpack.c.l.b16 %v2398
  %v3205 = vunpack.c.l.b16 %v2399
  %v3206 = vunpack.c.l.b16 %v2400
  %v3207 = vunpack.c.l.b16 %v2401
  %v3208 = vunpack.c.l.b16 %v2402
  %v3209 = vunpack.c.l.b16 %v2403
  %v3210 = vunpack.c.l.b16 %v2404
  %v3211 = vunpack.c.l.b16 %v2405
  %v3212 = vunpack.c.l.b16 %v2406
  %v3213 = vunpack.c.l.b16 %v2407
  %v3214 = vunpack.c.l.b16 %v2408
  %v3215 = vunpack.c.l.b16 %v2409
  %v3216 = vunpack.c.l.b16 %v2410
  %v3217 = vunpack.c.l.b16 %v2411
  %v3218 = vunpack.c.l.b16 %v2412
  %v3219 = vunpack.c.l.b16 %v2413
  %v3220 = vunpack.c.l.b16 %v2414
  %v3221 = vunpack.c.l.b16 %v2415
  %v3222 = vunpack.c.l.b16 %v2416
  %v3223 = vunpack.c.l.b16 %v2417
  %v3224 = vunpack.c.l.b16 %v2418
  %v3225 = vunpack.c.l.b16 %v2419
  %v3226 = vunpack.c.l.b16 %v2420
  %v3227 = vunpack.c.l.b16 %v2421
  %v3228 = vunpack.c.l.b16 %v2422
  %v3229 = vunpack.c.l.b16 %v2423
  %v3230 = vunpack.c.l.b16 %v2424
  %v3231 = vunpack.c.l.b16 %v2425
  %v3232 = vunpack.c.l.b16 %v2426
  %v3233 = vunpack.c.l.b16 %v2427
  %v3234 = vunpack.c.l.b16 %v2428
  %v3235 = vunpack.c.l.b16 %v2429
  %v3236 = vunpack.c.l.b16 %v2430
  %v3237 = vunpack.c.l.b16 %v2431
  %v3238 = vunpack.c.l.b16 %v2432
  %v3239 = vunpack.c.l.b16 %v2433
  %v3240 = vunpack.c.l.b16 %v2434
  %v3241 = vunpack.c.l.b16 %v2435
  %v3242 = vunpack.c.l.b16 %v2436
  %v3243 = vunpack.c.l.b16 %v2437
  %v3244 = vunpack.c.l.b16 %v2438
  %v3245 = vunpack.c.l.b16 %v2439
  %v3246 = vunpack.c.l.b16 %v2440
  %v3247 = vunpack.c.l.b16 %v2441
  %v3248 = vunpack.c.l.b16 %v2442
  %v3249 = vunpack.c.l.b16 %v2443
  %v3250 = vunpack.c.l.b16 %v2444
  %v3251 = vunpack.c.l.b16 %v2445
  %v3252 = vunpack.c.l.b16 %v2446
  %v3253 = vunpack.c.l.b16 %v2447
  %v3254 = vunpack.c.l.b16 %v2448
  %v3255 = vunpack.c.l.b16 %v2449
  %v3256 = vunpack.c.l.b16 %v2450
  %v3257 = vunpack.c.l.b16 %v2451
  %v3258 = vunpack.c.l.b16 %v2452
  %v3259 = vunpack.c.l.b16 %v2453
  %v3260 = vunpack.c.l.b16 %v2454
  %v3261 = vunpack.c.l.b16 %v2455
  %v3262 = vunpack.c.l.b16 %v2456
  %v3263 = vunpack.c.l.b16 %v2457
  %v3264 = vunpack.c.l.b16 %v2458
  %v3265 = vunpack.c.l.b16 %v2459
  %v3266 = vunpack.c.l.b16 %v2460
  %v3267 = vunpack.c.l.b16 %v2461
  %v3268 = vunpack.c.l.b16 %v2462
  %v3269 = vunpack.c.l.b16 %v2463
  %v3270 = vunpack.c.l.b16 %v2464
  %v3271 = vunpack.c.l.b16 %v2465
  %v3272 = vunpack.c.l.b16 %v2466
  %v3273 = vunpack.c.l.b16 %v2467
  %v3274 = vunpack.c.l.b16 %v2468
  %v3275 = vunpack.c.l.b16 %v2469
  %v3276 = vunpack.c.l.b16 %v2470
  %v3277 = vunpack.c.l.b16 %v2471
  %v3278 = vunpack.c.l.b16 %v2472
  %v3279 = vunpack.c.l.b16 %v2473
  %v3280 = vunpack.c.l.b16 %v2474
  %v3281 = vunpack.c.l.b16 %v2475
  %v3282 = vunpack.c.l.b16 %v2476
  %v3283 = vunpack.c.l.b16 %v2477
  %v3284 = vunpack.c.l.b16 %v2478
  %v3285 = vunpack.c.l.b16 %v2479
  %v3286 = vunpack.c.l.b16 %v2480
  %v3287 = vunpack.c.l.b16 %v2481
  %v3288 = vunpack.c.l.b16 %v2482
  %v3289 = vunpack.c.l.b16 %v2483
  %v3290 = vunpack.c.l.b16 %v2484
  %v3291 = vunpack.c.l.b16 %v2485
  %v3292 = vunpack.c.l.b16 %v2486
  %v3293 = vunpack.c.l.b16 %v2487
  %v3294 = vunpack.c.l.b16 %v2488
  %v3295 = vunpack.c.l.b16 %v2489
  %v3296 = vunpack.c.l.b16 %v2490
  %v3297 = vunpack.c.l.b16 %v2491
  %v3298 = vunpack.c.l.b16 %v2492
  %v3299 = vunpack.c.l.b16 %v2493
  %v3300 = vunpack.c.l.b16 %v2494
  %v3301 = vunpack.c.l.b16 %v2495
  %v3302 = vunpack.c.l.b16 %v2496
  %v3303 = vunpack.c.l.b16 %v2497
  %v3304 = vunpack.c.l.b16 %v2498
  %v3305 = vunpack.c.l.b16 %v2499
  %v3306 = vunpack.c.l.b16 %v2500
  %v3307 = vunpack.c.l.b16 %v2501
  %v3308 = vunpack.c.l.b16 %v2502
  %v3309 = vunpack.c.l.b16 %v2503
  %v3310 = vunpack.c.l.b16 %v2504
  %v3311 = vunpack.c.l.b16 %v2505
  %v3312 = vunpack.c.l.b16 %v2506
  %v3313 = vunpack.c.l.b16 %v2507
  %v3314 = vunpack.c.l.b16 %v2508
  %v3315 = vunpack.c.l.b16 %v2509
  %v3316 = vunpack.c.l.b16 %v2510
  %v3317 = vunpack.c.l.b16 %v2511
  %v3318 = vunpack.c.l.b16 %v2512
  %v3319 = vunpack.c.l.b16 %v2513
  %v3320 = vunpack.c.l.b16 %v2514
  %v3321 = vunpack.c.l.b16 %v2515
  %v3322 = vunpack.c.l.b16 %v2516
  %v3323 = vunpack.c.l.b16 %v2517
  %v3324 = vunpack.c.l.b16 %v2518
  %v3325 = vunpack.c.l.b16 %v2519
  %v3326 = vunpack.c.l.b16 %v2520
  %v3327 = vunpack.c.l.b16 %v2521
  %v3328 = vunpack.c.l.b16 %v2522
  %v3329 = vunpack.c.l.b16 %v2523
  %v3330 = vunpack.c.l.b16 %v2524
  %v3331 = vunpack.c.l.b16 %v2525
  %v3332 = vunpack.c.l.b16 %v2526
  %v3333 = vunpack.c.l.b16 %v2527
  %v3334 = vunpack.c.l.b16 %v2528
  %v3335 = vunpack.c.l.b16 %v2529
  %v3336 = vunpack.c.l.b16 %v2530
  %v3337 = vunpack.c.l.b16 %v2531
  %v3338 = vunpack.c.l.b16 %v2532
  %v3339 = vunpack.c.l.b16 %v2533
  %v3340 = vunpack.c.l.b16 %v2534
  %v3341 = vunpack.c.l.b16 %v2535
  %v3342 = vunpack.c.l.b16 %v2536
  %v3343 = vunpack.c.l.b16 %v2537
  %v3344 = vunpack.c.l.b16 %v2538
  %v3345 = vunpack.c.l.b16 %v2539
  %v3346 = vunpack.c.l.b16 %v2540
  %v3347 = vunpack.c.l.b16 %v2541
  %v3348 = vunpack.c.l.b16 %v2542
  %v3349 = vunpack.c.l.b16 %v2543
  %v3350 = vunpack.c.l.b16 %v2544
  %v3351 = vunpack.c.l.b16 %v2545
  %v3352 = vunpack.c.l.b16 %v2546
  %v3353 = vunpack.c.l.b16 %v2547
  %v3354 = vunpack.c.l.b16 %v2548
  %v3355 = vunpack.c.l.b16 %v2549
  %v3356 = vunpack.c.l.b16 %v2550
  %v3357 = vunpack.c.l.b16 %v2551
  %v3358 = vunpack.c.l.b16 %v2552
  %v3359 = vunpack.c.l.b16 %v2553
  %v3360 = vunpack.c.l.b16 %v2554
  %v3361 = vunpack.c.l.b16 %v2555
  %v3362 = vunpack.c.l.b16 %v2556
  %v3363 = vunpack.c.l.b16 %v2557
  %v3364 = vunpack.c.l.b16 %v2558
  %v3365 = vunpack.c.l.b16 %v2559
  %v3366 = vunpack.c.l.b16 %v2560
  %v3367 = vunpack.c.l.b16 %v2561
  %v3368 = vunpack.c.l.b16 %v2562
  %v3369 = vunpack.c.l.b16 %v2563
  %v3370 = vunpack.c.l.b16 %v2564
  %v3371 = vunpack.c.l.b16 %v2565
  %v3372 = vunpack.c.l.b16 %v2566
  %v3373 = vunpack.c.l.b16 %v2567
  %v3374 = vunpack.c.l.b16 %v2568
  %v3375 = vunpack.c.l.b16 %v2569
  %v3376 = vunpack.c.l.b16 %v2570
  %v3377 = vunpack.c.l.b16 %v2571
  %v3378 = vunpack.c.l.b16 %v2572
  %v3379 = vunpack.c.l.b16 %v2573
  %v3380 = vunpack.c.l.b16 %v2574
  %v3381 = vunpack.c.l.b16 %v2575
  %v3382 = vunpack.c.l.b16 %v2576
  %v3383 = vunpack.c.l.b16 %v2577
  %v3384 = vunpack.c.l.b16 %v2578
  %v3385 = vunpack.c.l.b16 %v2579
  %v3386 = vunpack.c.l.b16 %v2580
  %v3387 = vunpack.c.l.b16 %v2581
  %v3388 = vunpack.c.l.b16 %v2582
  %v3389 = vunpack.c.l.b16 %v2583
  %v3390 = vunpack.c.l.b16 %v2584
  %v3391 = vunpack.c.l.b16 %v2585
  %v3392 = vunpack.c.l.b16 %v2586
  %v3393 = vunpack.c.l.b16 %v2587
  %v3394 = vunpack.c.l.b16 %v2588
  %v3395 = vunpack.c.l.b16 %v2589
  %v3396 = vunpack.c.l.b16 %v2590
  %v3397 = vunpack.c.l.b16 %v2591
  %v3398 = vunpack.c.l.b16 %v2592
  %v3399 = vunpack.c.l.b16 %v2593
  %v3400 = vunpack.c.l.b16 %v2594
  %v3401 = vunpack.c.l.b16 %v2595
  %v3402 = vunpack.c.l.b16 %v2596
  %v3403 = vunpack.c.l.b16 %v2597
  %v3404 = vunpack.c.l.b16 %v2598
  %v3405 = vunpack.c.l.b16 %v2599
  %v3406 = vunpack.c.l.b16 %v2600
  %v3407 = vunpack.c.l.b16 %v2601
  %v3408 = vunpack.c.l.b16 %v2602
  %v3409 = vunpack.c.l.b16 %v2603
  %v3410 = vunpack.c.l.b16 %v2604
  %v3411 = vunpack.c.l.b16 %v2605
  %v3412 = vunpack.c.l.b16 %v2606
  %v3413 = vunpack.c.l.b16 %v2607
  %v3414 = vunpack.c.l.b16 %v2608
  %v3415 = vunpack.c.l.b16 %v2609
  %v3416 = vunpack.c.l.b16 %v2610
  %v3417 = vunpack.c.l.b16 %v2611
  %v3418 = vunpack.c.l.b16 %v2612
  %v3419 = vunpack.c.l.b16 %v2613
  %v3420 = vunpack.c.l.b16 %v2614
  %v3421 = vunpack.c.l.b16 %v2615
  %v3422 = vunpack.c.l.b16 %v2616
  %v3423 = vunpack.c.l.b16 %v2617
  %v3424 = vunpack.c.l.b16 %v2618
  %v3425 = vunpack.c.l.b16 %v2619
  %v3426 = vunpack.c.l.b16 %v2620
  %v3427 = vunpack.c.l.b16 %v2621
  %v3428 = vunpack.c.l.b16 %v2622
  %v3429 = vunpack.c.l.b16 %v2623
  %v3430 = vunpack.c.l.b16 %v2624
  %v3431 = vunpack.c.l.b16 %v2625
  %v3432 = vunpack.c.l.b16 %v2626
  %v3433 = vunpack.c.l.b16 %v2627
  %v3434 = vunpack.c.l.b16 %v2628
  %v3435 = vunpack.c.l.b16 %v2629
  %v3436 = vunpack.c.l.b16 %v2630
  %v3437 = vunpack.c.l.b16 %v2631
  %v3438 = vunpack.c.l.b16 %v2632
  %v3439 = vunpack.c.l.b16 %v2633
  %v3440 = vunpack.c.l.b16 %v2634
  %v3441 = vunpack.c.l.b16 %v2635
  %v3442 = vunpack.c.l.b16 %v2636
  %v3443 = vunpack.c.l.b16 %v2637
  %v3444 = vunpack.c.l.b16 %v2638
  %v3445 = vunpack.c.l.b16 %v2639
  %v3446 = vunpack.c.l.b16 %v2640
  %v3447 = vunpack.c.l.b16 %v2641
  %v3448 = vunpack.c.l.b16 %v2642
  %v3449 = vunpack.c.l.b16 %v2643
  %v3450 = vunpack.c.l.b16 %v2644
  %v3451 = vunpack.c.l.b16 %v2645
  %v3452 = vunpack.c.l.b16 %v2646
  %v3453 = vunpack.c.l.b16 %v2647
  %v3454 = vunpack.c.l.b16 %v2648
  %v3455 = vunpack.c.l.b16 %v2649
  %v3456 = vunpack.c.l.b16 %v2650
  %v3457 = vunpack.c.l.b16 %v2651
  %v3458 = vunpack.c.l.b16 %v2652
  %v3459 = vunpack.c.l.b16 %v2653
  %v3460 = vunpack.c.l.b16 %v2654
  %v3461 = vunpack.c.l.b16 %v2655
  %v3462 = vunpack.c.l.b16 %v2656
  %v3463 = vunpack.c.l.b16 %v2657
  %v3464 = vunpack.c.l.b16 %v2658
  %v3465 = vunpack.c.l.b16 %v2659
  %v3466 = vunpack.c.l.b16 %v2660
  %v3467 = vunpack.c.l.b16 %v2661
  %v3468 = vunpack.c.l.b16 %v2662
  %v3469 = vpack.c.b16 %v3166, %v3165
  %v3470 = vpack.c.b16 %v3168, %v3167
  %v3471 = vpack.c.b16 %v3170, %v3169
  %v3472 = vpack.c.b16 %v3172, %v3171
  %v3473 = vpack.c.b16 %v3174, %v3173
  %v3474 = vpack.c.b16 %v3176, %v3175
  %v3475 = vpack.c.b16 %v3178, %v3177
  %v3476 = vpack.c.b16 %v3180, %v3179
  %v3477 = vpack.c.b16 %v3182, %v3181
  %v3478 = vpack.c.b16 %v3184, %v3183
  %v3479 = vpack.c.b16 %v3186, %v3185
  %v3480 = vpack.c.b16 %v3188, %v3187
  %v3481 = vpack.c.b16 %v3190, %v3189
  %v3482 = vpack.c.b16 %v3192, %v3191
  %v3483 = vpack.c.b16 %v3194, %v3193
  %v3484 = vpack.c.b16 %v3196, %v3195
  %v3485 = vpack.c.b16 %v3198, %v3197
  %v3486 = vpack.c.b16 %v3200, %v3199
  %v3487 = vpack.c.b16 %v3202, %v3201
  %v3488 = vpack.c.b16 %v3204, %v3203
  %v3489 = vpack.c.b16 %v3206, %v3205
  %v3490 = vpack.c.b16 %v3208, %v3207
  %v3491 = vpack.c.b16 %v3210, %v3209
  %v3492 = vpack.c.b16 %v3212, %v3211
  %v3493 = vpack.c.b16 %v3214, %v3213
  %v3494 = vpack.c.b16 %v3216, %v3215
  %v3495 = vpack.c.b16 %v3218, %v3217
  %v3496 = vpack.c.b16 %v3220, %v3219
  %v3497 = vpack.c.b16 %v3222, %v3221
  %v3498 = vpack.c.b16 %v3224, %v3223
  %v3499 = vpack.c.b16 %v3226, %v3225
  %v3500 = vpack.c.b16 %v3228, %v3227
  %v3501 = vpack.c.b16 %v3230, %v3229
  %v3502 = vpack.c.b16 %v3232, %v3231
  %v3503 = vpack.c.b16 %v3234, %v3233
  %v3504 = vpack.c.b16 %v3236, %v3235
  %v3505 = vpack.c.b16 %v3238, %v3237
  %v3506 = vpack.c.b16 %v3240, %v3239
  %v3507 = vpack.c.b16 %v3242, %v3241
  %v3508 = vpack.c.b16 %v3244, %v3243
  %v3509 = vpack.c.b16 %v3246, %v3245
  %v3510 = vpack.c.b16 %v3248, %v3247
  %v3511 = vpack.c.b16 %v3250, %v3249
  %v3512 = vpack.c.b16 %v3252, %v3251
  %v3513 = vpack.c.b16 %v3254, %v3253
  %v3514 = vpack.c.b16 %v3256, %v3255
  %v3515 = vpack.c.b16 %v3258, %v3257
  %v3516 = vpack.c.b16 %v3260, %v3259
  %v3517 = vpack.c.b16 %v3262, %v3261
  %v3518 = vpack.c.b16 %v3264, %v3263
  %v3519 = vpack.c.b16 %v3266, %v3265
  %v3520 = vpack.c.b16 %v3268, %v3267
  %v3521 = vpack.c.b16 %v3270, %v3269
  %v3522 = vpack.c.b16 %v3272, %v3271
  %v3523 = vpack.c.b16 %v3274, %v3273
  %v3524 = vpack.c.b16 %v3276, %v3275
  %v3525 = vpack.c.b16 %v3278, %v3277
  %v3526 = vpack.c.b16 %v3280, %v3279
  %v3527 = vpack.c.b16 %v3282, %v3281
  %v3528 = vpack.c.b16 %v3284, %v3283
  %v3529 = vpack.c.b16 %v3286, %v3285
  %v3530 = vpack.c.b16 %v3288, %v3287
  %v3531 = vpack.c.b16 %v3290, %v3289
  %v3532 = vpack.c.b16 %v3292, %v3291
  %v3533 = vpack.c.b16 %v3294, %v3293
  %v3534 = vpack.c.b16 %v3296, %v3295
  %v3535 = vpack.c.b16 %v3298, %v3297
  %v3536 = vpack.c.b16 %v3300, %v3299
  %v3537 = vpack.c.b16 %v3302, %v3301
  %v3538 = vpack.c.b16 %v3304, %v3303
  %v3539 = vpack.c.b16 %v3306, %v3305
  %v3540 = vpack.c.b16 %v3308, %v3307
  %v3541 = vpack.c.b16 %v3310, %v3309
  %v3542 = vpack.c.b16 %v3312, %v3311
  %v3543 = vpack.c.b16 %v3314, %v3313
  %v3544 = vpack.c.b16 %v3316, %v3315
  %v3545 = vpack.c.b16 %v3318, %v3317
  %v3546 = vpack.c.b16 %v3320, %v3319
  %v3547 = vpack.c.b16 %v3322, %v3321
  %v3548 = vpack.c.b16 %v3324, %v3323
  %v3549 = vpack.c.b16 %v3326, %v3325
  %v3550 = vpack.c.b16 %v3328, %v3327
  %v3551 = vpack.c.b16 %v3330, %v3329
  %v3552 = vpack.c.b16 %v3332, %v3331
  %v3553 = vpack.c.b16 %v3334, %v3333
  %v3554 = vpack.c.b16 %v3336, %v3335
  %v3555 = vpack.c.b16 %v3338, %v3337
  %v3556 = vpack.c.b16 %v3340, %v3339
  %v3557 = vpack.c.b16 %v3342, %v3341
  %v3558 = vpack.c.b16 %v3344, %v3343
  %v3559 = vpack.c.b16 %v3346, %v3345
  %v3560 = vpack.c.b16 %v3348, %v3347
  %v3561 = vpack.c.b16 %v3350, %v3349
  %v3562 = vpack.c.b16 %v3352, %v3351
  %v3563 = vpack.c.b16 %v3354, %v3353
  %v3564 = vpack.c.b16 %v3356, %v3355
  %v3565 = vpack.c.b16 %v3358, %v3357
  %v3566 = vpack.c.b16 %v3360, %v3359
  %v3567 = vpack.c.b16 %v3362, %v3361
  %v3568 = vpack.c.b16 %v3364, %v3363
  %v3569 = vpack.c.b16 %v3366, %v3365
  %v3570 = vpack.c.b16 %v3368, %v3367
  %v3571 = vpack.c.b16 %v3370, %v3369
  %v3572 = vpack.c.b16 %v3372, %v3371
  %v3573 = vpack.c.b16 %v3374, %v3373
  %v3574 = vpack.c.b16 %v3376, %v3375
  %v3575 = vpack.c.b16 %v3378, %v3377
  %v3576 = vpack.c.b16 %v3380, %v3379
  %v3577 = vpack.c.b16 %v3382, %v3381
  %v3578 = vpack.c.b16 %v3384, %v3383
  %v3579 = vpack.c.b16 %v3386, %v3385
  %v3580 = vpack.c.b16 %v3388, %v3387
  %v3581 = vpack.c.b16 %v3390, %v3389
  %v3582 = vpack.c.b16 %v3392, %v3391
  %v3583 = vpack.c.b16 %v3394, %v3393
  %v3584 = vpack.c.b16 %v3396, %v3395
  %v3585 = vpack.c.b16 %v3398, %v3397
  %v3586 = vpack.c.b16 %v3400, %v3399
  %v3587 = vpack.c.b16 %v3402, %v3401
  %v3588 = vpack.c.b16 %v3404, %v3403
  %v3589 = vpack.c.b16 %v3406, %v3405
  %v3590 = vpack.c.b16 %v3408, %v3407
  %v3591 = vpack.c.b16 %v3410, %v3409
  %v3592 = vpack.c.b16 %v3412, %v3411
  %v3593 = vpack.c.b16 %v3414, %v3413
  %v3594 = vpack.c.b16 %v3416, %v3415
  %v3595 = vpack.c.b16 %v3418, %v3417
  %v3596 = vpack.c.b16 %v3420, %v3419
  %v3597 = vpack.c.b16 %v3422, %v3421
  %v3598 = vpack.c.b16 %v3424, %v3423
  %v3599 = vpack.c.b16 %v3426, %v3425
  %v3600 = vpack.c.b16 %v3428, %v3427
  %v3601 = vpack.c.b16 %v3430, %v3429
  %v3602 = vpack.c.b16 %v3432, %v3431
  %v3603 = vpack.c.b16 %v3434, %v3433
  %v3604 = vpack.c.b16 %v3436, %v3435
  %v3605 = vpack.c.b16 %v3438, %v3437
  %v3606 = vpack.c.b16 %v3440, %v3439
  %v3607 = vpack.c.b16 %v3442, %v3441
  %v3608 = vpack.c.b16 %v3444, %v3443
  %v3609 = vpack.c.b16 %v3446, %v3445
  %v3610 = vpack.c.b16 %v3448, %v3447
  %v3611 = vpack.c.b16 %v3450, %v3449
  %v3612 = vpack.c.b16 %v3452, %v3451
  %v3613 = vpack.c.b16 %v3454, %v3453
  %v3614 = vpack.c.b16 %v3456, %v3455
  %v3615 = vpack.c.b16 %v3458, %v3457
  %v3616 = vpack.c.b16 %v3460, %v3459
  %v3617 = vpack.c.b16 %v3462, %v3461
  %v3618 = vpack.c.b16 %v3464, %v3463
  %v3619 = vpack.c.b16 %v3466, %v3465
  %v3620 = vpack.c.b16 %v3468, %v3467
  %3773 = vmatprep.subr.bf16.mxu0 0
  %3774 = vmatpush1.bf16.msra.mxu0 %v3469
  %3775 = vmatprep.subr.bf16.mxu0 0
  %3776 = vmatpush1.bf16.msra.mxu0 %v3470
  %3777 = vmatprep.subr.bf16.mxu0 0
  %3778 = vmatpush1.bf16.msra.mxu0 %v3471
  %3779 = vmatprep.subr.bf16.mxu0 0
  %3780 = vmatpush1.bf16.msra.mxu0 %v3472
  %3781 = vmatprep.subr.bf16.mxu0 0
  %3782 = vmatpush1.bf16.msra.mxu0 %v3473
  %3783 = vmatprep.subr.bf16.mxu0 0
  %3784 = vmatpush1.bf16.msra.mxu0 %v3474
  %3785 = vmatprep.subr.bf16.mxu0 0
  %3786 = vmatpush1.bf16.msra.mxu0 %v3475
  %3787 = vmatprep.subr.bf16.mxu0 0
  %3788 = vmatpush1.bf16.msra.mxu0 %v3476
  %3789 = vmatprep.subr.bf16.mxu0 0
  %3790 = vmatpush1.bf16.msra.mxu0 %v3477
  %3791 = vmatprep.subr.bf16.mxu0 0
  %3792 = vmatpush1.bf16.msra.mxu0 %v3478
  %3793 = vmatprep.subr.bf16.mxu0 0
  %3794 = vmatpush1.bf16.msra.mxu0 %v3479
  %3795 = vmatprep.subr.bf16.mxu0 0
  %3796 = vmatpush1.bf16.msra.mxu0 %v3480
  %3797 = vmatprep.subr.bf16.mxu0 0
  %3798 = vmatpush1.bf16.msra.mxu0 %v3481
  %3799 = vmatprep.subr.bf16.mxu0 0
  %3800 = vmatpush1.bf16.msra.mxu0 %v3482
  %3801 = vmatprep.subr.bf16.mxu0 0
  %3802 = vmatpush1.bf16.msra.mxu0 %v3483
  %3803 = vmatprep.subr.bf16.mxu0 0
  %3804 = vmatpush1.bf16.msra.mxu0 %v3484
  %3805 = vmatprep.mubr.bf16.mxu0 %v2731
  %3806 = vmatmul.mubr.bf16.gmra.mrb[0].mxu0 %v2717
  %v3807 = vpop.f32.mrb[0].mxu0
  %v3808 = vadd.f32 %v2666, %v3807
  %v3809 = vpop.f32.mrb[0].mxu0
  %v3810 = vpop.f32.mrb[0].mxu0
  %v3811 = vpop.f32.mrb[0].mxu0
  %3812 = vdwg.mxu0
  %3813 = vmatprep.subr.bf16.mxu0 0
  %3814 = vmatpush1.bf16.msra.mxu0 %v3485
  %3815 = vmatprep.subr.bf16.mxu0 0
  %3816 = vmatpush1.bf16.msra.mxu0 %v3486
  %3817 = vmatprep.subr.bf16.mxu0 0
  %3818 = vmatpush1.bf16.msra.mxu0 %v3487
  %3819 = vmatprep.subr.bf16.mxu0 0
  %3820 = vmatpush1.bf16.msra.mxu0 %v3488
  %3821 = vmatprep.subr.bf16.mxu0 0
  %3822 = vmatpush1.bf16.msra.mxu0 %v3489
  %3823 = vmatprep.subr.bf16.mxu0 0
  %3824 = vmatpush1.bf16.msra.mxu0 %v3490
  %3825 = vmatprep.subr.bf16.mxu0 0
  %3826 = vmatpush1.bf16.msra.mxu0 %v3491
  %3827 = vmatprep.subr.bf16.mxu0 0
  %3828 = vmatpush1.bf16.msra.mxu0 %v3492
  %3829 = vmatprep.subr.bf16.mxu0 0
  %3830 = vmatpush1.bf16.msra.mxu0 %v3493
  %3831 = vmatprep.subr.bf16.mxu0 0
  %3832 = vmatpush1.bf16.msra.mxu0 %v3494
  %3833 = vmatprep.subr.bf16.mxu0 0
  %3834 = vmatpush1.bf16.msra.mxu0 %v3495
  %3835 = vmatprep.subr.bf16.mxu0 0
  %3836 = vmatpush1.bf16.msra.mxu0 %v3496
  %3837 = vmatprep.subr.bf16.mxu0 0
  %3838 = vmatpush1.bf16.msra.mxu0 %v3497
  %3839 = vmatprep.subr.bf16.mxu0 0
  %3840 = vmatpush1.bf16.msra.mxu0 %v3498
  %3841 = vmatprep.subr.bf16.mxu0 0
  %3842 = vmatpush1.bf16.msra.mxu0 %v3499
  %3843 = vmatprep.subr.bf16.mxu0 0
  %3844 = vmatpush1.bf16.msra.mxu0 %v3500
  %3845 = vmatprep.mubr.bf16.mxu0 %v2741
  %3846 = vmatmul.mubr.bf16.gmra.mrb[0].mxu0 %v2739
  %v3847 = vpop.f32.mrb[0].mxu0
  %v3848 = vadd.f32 %v3808, %v3847
  %v3849 = vpop.f32.mrb[0].mxu0
  %v3850 = vpop.f32.mrb[0].mxu0
  %v3851 = vpop.f32.mrb[0].mxu0
  %3852 = vdwg.mxu0
  %3853 = vmatprep.subr.bf16.mxu0 0
  %3854 = vmatpush1.bf16.msra.mxu0 %v3501
  %3855 = vmatprep.subr.bf16.mxu0 0
  %3856 = vmatpush1.bf16.msra.mxu0 %v3502
  %3857 = vmatprep.subr.bf16.mxu0 0
  %3858 = vmatpush1.bf16.msra.mxu0 %v3503
  %3859 = vmatprep.subr.bf16.mxu0 0
  %3860 = vmatpush1.bf16.msra.mxu0 %v3504
  %3861 = vmatprep.subr.bf16.mxu0 0
  %3862 = vmatpush1.bf16.msra.mxu0 %v3505
  %3863 = vmatprep.subr.bf16.mxu0 0
  %3864 = vmatpush1.bf16.msra.mxu0 %v3506
  %3865 = vmatprep.subr.bf16.mxu0 0
  %3866 = vmatpush1.bf16.msra.mxu0 %v3507
  %3867 = vmatprep.subr.bf16.mxu0 0
  %3868 = vmatpush1.bf16.msra.mxu0 %v3508
  %3869 = vmatprep.subr.bf16.mxu0 0
  %3870 = vmatpush1.bf16.msra.mxu0 %v3509
  %3871 = vmatprep.subr.bf16.mxu0 0
  %3872 = vmatpush1.bf16.msra.mxu0 %v3510
  %3873 = vmatprep.subr.bf16.mxu0 0
  %3874 = vmatpush1.bf16.msra.mxu0 %v3511
  %3875 = vmatprep.subr.bf16.mxu0 0
  %3876 = vmatpush1.bf16.msra.mxu0 %v3512
  %3877 = vmatprep.subr.bf16.mxu0 0
  %3878 = vmatpush1.bf16.msra.mxu0 %v3513
  %3879 = vmatprep.subr.bf16.mxu0 0
  %3880 = vmatpush1.bf16.msra.mxu0 %v3514
  %3881 = vmatprep.subr.bf16.mxu0 0
  %3882 = vmatpush1.bf16.msra.mxu0 %v3515
  %3883 = vmatprep.subr.bf16.mxu0 0
  %3884 = vmatpush1.bf16.msra.mxu0 %v3516
  %3885 = vmatprep.mubr.bf16.mxu0 %v2738
  %3886 = vmatmul.mubr.bf16.gmra.mrb[0].mxu0 %v2724
  %v3887 = vpop.f32.mrb[0].mxu0
  %v3888 = vadd.f32 %v3848, %v3887
  %v3889 = vpop.f32.mrb[0].mxu0
  %v3890 = vpop.f32.mrb[0].mxu0
  %v3891 = vpop.f32.mrb[0].mxu0
  %3892 = vdwg.mxu0
  %3893 = vmatprep.subr.bf16.mxu0 0
  %3894 = vmatpush1.bf16.msra.mxu0 %v3517
  %3895 = vmatprep.subr.bf16.mxu0 0
  %3896 = vmatpush1.bf16.msra.mxu0 %v3518
  %3897 = vmatprep.subr.bf16.mxu0 0
  %3898 = vmatpush1.bf16.msra.mxu0 %v3519
  %3899 = vmatprep.subr.bf16.mxu0 0
  %3900 = vmatpush1.bf16.msra.mxu0 %v3520
  %3901 = vmatprep.subr.bf16.mxu0 0
  %3902 = vmatpush1.bf16.msra.mxu0 %v3521
  %3903 = vmatprep.subr.bf16.mxu0 0
  %3904 = vmatpush1.bf16.msra.mxu0 %v3522
  %3905 = vmatprep.subr.bf16.mxu0 0
  %3906 = vmatpush1.bf16.msra.mxu0 %v3523
  %3907 = vmatprep.subr.bf16.mxu0 0
  %3908 = vmatpush1.bf16.msra.mxu0 %v3524
  %3909 = vmatprep.subr.bf16.mxu0 0
  %3910 = vmatpush1.bf16.msra.mxu0 %v3525
  %3911 = vmatprep.subr.bf16.mxu0 0
  %3912 = vmatpush1.bf16.msra.mxu0 %v3526
  %3913 = vmatprep.subr.bf16.mxu0 0
  %3914 = vmatpush1.bf16.msra.mxu0 %v3527
  %3915 = vmatprep.subr.bf16.mxu0 0
  %3916 = vmatpush1.bf16.msra.mxu0 %v3528
  %3917 = vmatprep.subr.bf16.mxu0 0
  %3918 = vmatpush1.bf16.msra.mxu0 %v3529
  %3919 = vmatprep.subr.bf16.mxu0 0
  %3920 = vmatpush1.bf16.msra.mxu0 %v3530
  %3921 = vmatprep.subr.bf16.mxu0 0
  %3922 = vmatpush1.bf16.msra.mxu0 %v3531
  %3923 = vmatprep.subr.bf16.mxu0 0
  %3924 = vmatpush1.bf16.msra.mxu0 %v3532
  %3925 = vmatprep.mubr.bf16.mxu0 %v2742
  %3926 = vmatmul.mubr.bf16.gmra.mrb[0].mxu0 %v2740
  %v3927 = vpop.f32.mrb[0].mxu0
  %v3928 = vadd.f32 %v3888, %v3927
  %v3929 = vpop.f32.mrb[0].mxu0
  %v3930 = vpop.f32.mrb[0].mxu0
  %v3931 = vpop.f32.mrb[0].mxu0
  %3932 = vdwg.mxu0
  %3933 = vmatprep.subr.bf16.mxu0 0
  %3934 = vmatpush1.bf16.msra.mxu0 %v3533
  %3935 = vmatprep.subr.bf16.mxu0 0
  %3936 = vmatpush1.bf16.msra.mxu0 %v3534
  %3937 = vmatprep.subr.bf16.mxu0 0
  %3938 = vmatpush1.bf16.msra.mxu0 %v3535
  %3939 = vmatprep.subr.bf16.mxu0 0
  %3940 = vmatpush1.bf16.msra.mxu0 %v3536
  %3941 = vmatprep.subr.bf16.mxu0 0
  %3942 = vmatpush1.bf16.msra.mxu0 %v3537
  %3943 = vmatprep.subr.bf16.mxu0 0
  %3944 = vmatpush1.bf16.msra.mxu0 %v3538
  %3945 = vmatprep.subr.bf16.mxu0 0
  %3946 = vmatpush1.bf16.msra.mxu0 %v3539
  %3947 = vmatprep.subr.bf16.mxu0 0
  %3948 = vmatpush1.bf16.msra.mxu0 %v3540
  %3949 = vmatprep.subr.bf16.mxu0 0
  %3950 = vmatpush1.bf16.msra.mxu0 %v3541
  %3951 = vmatprep.subr.bf16.mxu0 0
  %3952 = vmatpush1.bf16.msra.mxu0 %v3542
  %3953 = vmatprep.subr.bf16.mxu0 0
  %3954 = vmatpush1.bf16.msra.mxu0 %v3543
  %3955 = vmatprep.subr.bf16.mxu0 0
  %3956 = vmatpush1.bf16.msra.mxu0 %v3544
  %3957 = vmatprep.subr.bf16.mxu0 0
  %3958 = vmatpush1.bf16.msra.mxu0 %v3545
  %3959 = vmatprep.subr.bf16.mxu0 0
  %3960 = vmatpush1.bf16.msra.mxu0 %v3546
  %3961 = vmatprep.subr.bf16.mxu0 0
  %3962 = vmatpush1.bf16.msra.mxu0 %v3547
  %3963 = vmatprep.subr.bf16.mxu0 0
  %3964 = vmatpush1.bf16.msra.mxu0 %v3548
  %3965 = vmatprep.mubr.bf16.mxu0 %v2798
  %3966 = vmatmul.mubr.bf16.gmra.mrb[0].mxu0 %v2784
  %v3967 = vpop.f32.mrb[0].mxu0
  %v3968 = vadd.f32 %v3928, %v3967
  %v3969 = vpop.f32.mrb[0].mxu0
  %v3970 = vpop.f32.mrb[0].mxu0
  %v3971 = vpop.f32.mrb[0].mxu0
  %3972 = vdwg.mxu0
  %3973 = vmatprep.subr.bf16.mxu0 0
  %3974 = vmatpush1.bf16.msra.mxu0 %v3549
  %3975 = vmatprep.subr.bf16.mxu0 0
  %3976 = vmatpush1.bf16.msra.mxu0 %v3550
  %3977 = vmatprep.subr.bf16.mxu0 0
  %3978 = vmatpush1.bf16.msra.mxu0 %v3551
  %3979 = vmatprep.subr.bf16.mxu0 0
  %3980 = vmatpush1.bf16.msra.mxu0 %v3552
  %3981 = vmatprep.subr.bf16.mxu0 0
  %3982 = vmatpush1.bf16.msra.mxu0 %v3553
  %3983 = vmatprep.subr.bf16.mxu0 0
  %3984 = vmatpush1.bf16.msra.mxu0 %v3554
  %3985 = vmatprep.subr.bf16.mxu0 0
  %3986 = vmatpush1.bf16.msra.mxu0 %v3555
  %3987 = vmatprep.subr.bf16.mxu0 0
  %3988 = vmatpush1.bf16.msra.mxu0 %v3556
  %3989 = vmatprep.subr.bf16.mxu0 0
  %3990 = vmatpush1.bf16.msra.mxu0 %v3557
  %3991 = vmatprep.subr.bf16.mxu0 0
  %3992 = vmatpush1.bf16.msra.mxu0 %v3558
  %3993 = vmatprep.subr.bf16.mxu0 0
  %3994 = vmatpush1.bf16.msra.mxu0 %v3559
  %3995 = vmatprep.subr.bf16.mxu0 0
  %3996 = vmatpush1.bf16.msra.mxu0 %v3560
  %3997 = vmatprep.subr.bf16.mxu0 0
  %3998 = vmatpush1.bf16.msra.mxu0 %v3561
  %3999 = vmatprep.subr.bf16.mxu0 0
  %4000 = vmatpush1.bf16.msra.mxu0 %v3562
  %4001 = vmatprep.subr.bf16.mxu0 0
  %4002 = vmatpush1.bf16.msra.mxu0 %v3563
  %4003 = vmatprep.subr.bf16.mxu0 0
  %4004 = vmatpush1.bf16.msra.mxu0 %v3564
  %4005 = vmatprep.mubr.bf16.mxu0 %v2808
  %4006 = vmatmul.mubr.bf16.gmra.mrb[0].mxu0 %v2806
  %v4007 = vpop.f32.mrb[0].mxu0
  %v4008 = vadd.f32 %v3968, %v4007
  %v4009 = vpop.f32.mrb[0].mxu0
  %v4010 = vpop.f32.mrb[0].mxu0
  %v4011 = vpop.f32.mrb[0].mxu0
  %4012 = vdwg.mxu0
  %4013 = vmatprep.subr.bf16.mxu0 0
  %4014 = vmatpush1.bf16.msra.mxu0 %v3565
  %4015 = vmatprep.subr.bf16.mxu0 0
  %4016 = vmatpush1.bf16.msra.mxu0 %v3566
  %4017 = vmatprep.subr.bf16.mxu0 0
  %4018 = vmatpush1.bf16.msra.mxu0 %v3567
  %4019 = vmatprep.subr.bf16.mxu0 0
  %4020 = vmatpush1.bf16.msra.mxu0 %v3568
  %4021 = vmatprep.subr.bf16.mxu0 0
  %4022 = vmatpush1.bf16.msra.mxu0 %v3569
  %4023 = vmatprep.subr.bf16.mxu0 0
  %4024 = vmatpush1.bf16.msra.mxu0 %v3570
  %4025 = vmatprep.subr.bf16.mxu0 0
  %4026 = vmatpush1.bf16.msra.mxu0 %v3571
  %4027 = vmatprep.subr.bf16.mxu0 0
  %4028 = vmatpush1.bf16.msra.mxu0 %v3572
  %4029 = vmatprep.subr.bf16.mxu0 0
  %4030 = vmatpush1.bf16.msra.mxu0 %v3573
  %4031 = vmatprep.subr.bf16.mxu0 0
  %4032 = vmatpush1.bf16.msra.mxu0 %v3574
  %4033 = vmatprep.subr.bf16.mxu0 0
  %4034 = vmatpush1.bf16.msra.mxu0 %v3575
  %4035 = vmatprep.subr.bf16.mxu0 0
  %4036 = vmatpush1.bf16.msra.mxu0 %v3576
  %4037 = vmatprep.subr.bf16.mxu0 0
  %4038 = vmatpush1.bf16.msra.mxu0 %v3577
  %4039 = vmatprep.subr.bf16.mxu0 0
  %4040 = vmatpush1.bf16.msra.mxu0 %v3578
  %4041 = vmatprep.subr.bf16.mxu0 0
  %4042 = vmatpush1.bf16.msra.mxu0 %v3579
  %4043 = vmatprep.subr.bf16.mxu0 0
  %4044 = vmatpush1.bf16.msra.mxu0 %v3580
  %4045 = vmatprep.mubr.bf16.mxu0 %v2805
  %4046 = vmatmul.mubr.bf16.gmra.mrb[0].mxu0 %v2791
  %v4047 = vpop.f32.mrb[0].mxu0
  %v4048 = vadd.f32 %v4008, %v4047
  %v4049 = vpop.f32.mrb[0].mxu0
  %v4050 = vpop.f32.mrb[0].mxu0
  %v4051 = vpop.f32.mrb[0].mxu0
  %4052 = vdwg.mxu0
  %4053 = vmatprep.subr.bf16.mxu0 0
  %4054 = vmatpush1.bf16.msra.mxu0 %v3581
  %4055 = vmatprep.subr.bf16.mxu0 0
  %4056 = vmatpush1.bf16.msra.mxu0 %v3582
  %4057 = vmatprep.subr.bf16.mxu0 0
  %4058 = vmatpush1.bf16.msra.mxu0 %v3583
  %4059 = vmatprep.subr.bf16.mxu0 0
  %4060 = vmatpush1.bf16.msra.mxu0 %v3584
  %4061 = vmatprep.subr.bf16.mxu0 0
  %4062 = vmatpush1.bf16.msra.mxu0 %v3585
  %4063 = vmatprep.subr.bf16.mxu0 0
  %4064 = vmatpush1.bf16.msra.mxu0 %v3586
  %4065 = vmatprep.subr.bf16.mxu0 0
  %4066 = vmatpush1.bf16.msra.mxu0 %v3587
  %4067 = vmatprep.subr.bf16.mxu0 0
  %4068 = vmatpush1.bf16.msra.mxu0 %v3588
  %4069 = vmatprep.subr.bf16.mxu0 0
  %4070 = vmatpush1.bf16.msra.mxu0 %v3589
  %4071 = vmatprep.subr.bf16.mxu0 0
  %4072 = vmatpush1.bf16.msra.mxu0 %v3590
  %4073 = vmatprep.subr.bf16.mxu0 0
  %4074 = vmatpush1.bf16.msra.mxu0 %v3591
  %4075 = vmatprep.subr.bf16.mxu0 0
  %4076 = vmatpush1.bf16.msra.mxu0 %v3592
  %4077 = vmatprep.subr.bf16.mxu0 0
  %4078 = vmatpush1.bf16.msra.mxu0 %v3593
  %4079 = vmatprep.subr.bf16.mxu0 0
  %4080 = vmatpush1.bf16.msra.mxu0 %v3594
  %4081 = vmatprep.subr.bf16.mxu0 0
  %4082 = vmatpush1.bf16.msra.mxu0 %v3595
  %4083 = vmatprep.subr.bf16.mxu0 0
  %4084 = vmatpush1.bf16.msra.mxu0 %v3596
  %4085 = vmatprep.mubr.bf16.mxu0 %v2809
  %4086 = vmatmul.mubr.bf16.gmra.mrb[0].mxu0 %v2807
  %v4087 = vpop.f32.mrb[0].mxu0
  %v4088 = vadd.f32 %v4048, %v4087
  %v4089 = vpop.f32.mrb[0].mxu0
  %v4090 = vpop.f32.mrb[0].mxu0
  %v4091 = vpop.f32.mrb[0].mxu0
  %4092 = vdwg.mxu0
  %4093 = vmatprep.subr.bf16.mxu0 0
  %4094 = vmatpush1.bf16.msra.mxu0 %v3597
  %4095 = vmatprep.subr.bf16.mxu0 0
  %4096 = vmatpush1.bf16.msra.mxu0 %v3598
  %4097 = vmatprep.subr.bf16.mxu0 0
  %4098 = vmatpush1.bf16.msra.mxu0 %v3599
  %4099 = vmatprep.subr.bf16.mxu0 0
  %4100 = vmatpush1.bf16.msra.mxu0 %v3600
  %4101 = vmatprep.subr.bf16.mxu0 0
  %4102 = vmatpush1.bf16.msra.mxu0 %v3601
  %4103 = vmatprep.subr.bf16.mxu0 0
  %4104 = vmatpush1.bf16.msra.mxu0 %v3602
  %4105 = vmatprep.subr.bf16.mxu0 0
  %4106 = vmatpush1.bf16.msra.mxu0 %v3603
  %4107 = vmatprep.subr.bf16.mxu0 0
  %4108 = vmatpush1.bf16.msra.mxu0 %v3604
  %4109 = vmatprep.subr.bf16.mxu0 0
  %4110 = vmatpush1.bf16.msra.mxu0 %v3605
  %4111 = vmatprep.subr.bf16.mxu0 0
  %4112 = vmatpush1.bf16.msra.mxu0 %v3606
  %4113 = vmatprep.subr.bf16.mxu0 0
  %4114 = vmatpush1.bf16.msra.mxu0 %v3607
  %4115 = vmatprep.subr.bf16.mxu0 0
  %4116 = vmatpush1.bf16.msra.mxu0 %v3608
  %4117 = vmatprep.subr.bf16.mxu0 0
  %4118 = vmatpush1.bf16.msra.mxu0 %v3609
  %4119 = vmatprep.subr.bf16.mxu0 0
  %4120 = vmatpush1.bf16.msra.mxu0 %v3610
  %4121 = vmatprep.subr.bf16.mxu0 0
  %4122 = vmatpush1.bf16.msra.mxu0 %v3611
  %4123 = vmatprep.subr.bf16.mxu0 0
  %4124 = vmatpush1.bf16.msra.mxu0 %v3612
  %4125 = vmatprep.mubr.bf16.mxu0 %v2840
  %4126 = vmatmul.mubr.bf16.gmra.mrb[0].mxu0 %v2833
  %v4127 = vpop.f32.mrb[0].mxu0
  %v4128 = vadd.f32 %v4088, %v4127
  %v4129 = vpop.f32.mrb[0].mxu0
  %v4130 = vpop.f32.mrb[0].mxu0
  %v4131 = vpop.f32.mrb[0].mxu0
  %4132 = vdwg.mxu0
  %4133 = vmatprep.subr.bf16.mxu0 0
  %4134 = vmatpush1.bf16.msra.mxu0 %v3613
  %4135 = vmatprep.subr.bf16.mxu0 0
  %4136 = vmatpush1.bf16.msra.mxu0 %v3614
  %4137 = vmatprep.subr.bf16.mxu0 0
  %4138 = vmatpush1.bf16.msra.mxu0 %v3615
  %4139 = vmatprep.subr.bf16.mxu0 0
  %4140 = vmatpush1.bf16.msra.mxu0 %v3616
  %4141 = vmatprep.subr.bf16.mxu0 0
  %4142 = vmatpush1.bf16.msra.mxu0 %v3617
  %4143 = vmatprep.subr.bf16.mxu0 0
  %4144 = vmatpush1.bf16.msra.mxu0 %v3618
  %4145 = vmatprep.subr.bf16.mxu0 0
  %4146 = vmatpush1.bf16.msra.mxu0 %v3619
  %4147 = vmatprep.subr.bf16.mxu0 0
  %4148 = vmatpush1.bf16.msra.mxu0 %v3620
  %4149 = vmatprep.subr.bf16.mxu0 0
  %4150 = vmatpush1.bf16.msra.mxu0 0
  %4151 = vmatprep.subr.bf16.mxu0 0
  %4152 = vmatpush1.bf16.msra.mxu0 0
  %4153 = vmatprep.subr.bf16.mxu0 0
  %4154 = vmatpush1.bf16.msra.mxu0 0
  %4155 = vmatprep.subr.bf16.mxu0 0
  %4156 = vmatpush1.bf16.msra.mxu0 0
  %4157 = vmatprep.subr.bf16.mxu0 0
  %4158 = vmatpush1.bf16.msra.mxu0 0
  %4159 = vmatprep.subr.bf16.mxu0 0
  %4160 = vmatpush1.bf16.msra.mxu0 0
  %4161 = vmatprep.subr.bf16.mxu0 0
  %4162 = vmatpush1.bf16.msra.mxu0 0
  %4163 = vmatprep.subr.bf16.mxu0 0
  %4164 = vmatpush1.bf16.msra.mxu0 0
  %4165 = vmatprep.mubr.bf16.mxu0 0
  %4166 = vmatmul.mubr.bf16.gmra.mrb[0].mxu0 %v2841
  %v4167 = vpop.f32.mrb[0].mxu0
  %v4168 = vadd.f32 %v4128, %v4167
  %v4169 = vpop.f32.mrb[0].mxu0
  %v4170 = vpop.f32.mrb[0].mxu0
  %v4171 = vpop.f32.mrb[0].mxu0
  %4172 = vdwg.mxu0
  %v4173 = vmax.f32 %v4168, 0.0
  %v4174 = vld [vmem:[%s1] sm:$0xf]
  %v4175 = vld [vmem:[%s1 + $0x4] sm:$0xf]
  %v4176 = vld [vmem:[%s1 + $0x8] sm:$0xf]
  %v4177 = vld [vmem:[%s1 + $0xc] sm:$0xf]
  %v4178 = vld [vmem:[%s1 + $0x10] sm:$0xf]
  %v4179 = vld [vmem:[%s1 + $0x14] sm:$0xf]
  %v4180 = vld [vmem:[%s1 + $0x18] sm:$0xf]
  %v4181 = vld [vmem:[%s1 + $0x1c] sm:$0xf]
  %v4182 = vld [vmem:[%s1 + $0x20] sm:$0xf]
  %v4183 = vld [vmem:[%s1 + $0x24] sm:$0xf]
  %v4184 = vld [vmem:[%s1 + $0x28] sm:$0xf]
  %v4185 = vld [vmem:[%s1 + $0x2c] sm:$0xf]
  %v4186 = vld [vmem:[%s1 + $0x30] sm:$0xf]
  %v4187 = vld [vmem:[%s1 + $0x34] sm:$0xf]
  %v4188 = vld [vmem:[%s1 + $0x38] sm:$0xf]
  %v4189 = vld [vmem:[%s1 + $0x3c] sm:$0xf]
  %v4190 = vld [vmem:[%s1 + $0x40] sm:$0xf]
  %v4191 = vld [vmem:[%s1 + $0x44] sm:$0xf]
  %v4192 = vld [vmem:[%s1 + $0x48] sm:$0xf]
  %v4193 = vld [vmem:[%s1 + $0x4c] sm:$0xf]
  %v4215 = vunpack.c.l.s4 1966171168
  %v4216 = vunpack.c.0.s8 %v4215
  %v4217 = vlaneseq
  %v4218 = vshrl.u32 %v4217, 7
  %v4219 = vsub.s32 %v4216, %v4218
  %v4220 = vrot.slane %v4174, %v4219
  %v4221 = vcombine.high %v4220, %v4220
  %v4223 = vunpack.c.l.s4 1966171168
  %v4224 = vunpack.c.0.s8 %v4223
  %v4225 = vlaneseq
  %v4226 = vshrl.u32 %v4225, 7
  %v4227 = vsub.s32 %v4224, %v4226
  %v4228 = vrot.slane %v4220, %v4227
  %v4230 = vunpack.c.l.s4 1966171168
  %v4231 = vunpack.c.0.s8 %v4230
  %v4232 = vlaneseq
  %v4233 = vshrl.u32 %v4232, 7
  %v4234 = vsub.s32 %v4231, %v4233
  %v4235 = vrot.slane %v4221, %v4234
  %v4236 = vcombine.high %v4228, %v4228
  %v4237 = vcombine.high %v4235, %v4235
  %v4239 = vunpack.c.l.s4 1966171168
  %v4240 = vunpack.c.0.s8 %v4239
  %v4241 = vlaneseq
  %v4242 = vshrl.u32 %v4241, 7
  %v4243 = vsub.s32 %v4240, %v4242
  %v4244 = vrot.slane %v4175, %v4243
  %v4245 = vcombine.high %v4244, %v4244
  %v4247 = vunpack.c.l.s4 1966171168
  %v4248 = vunpack.c.0.s8 %v4247
  %v4249 = vlaneseq
  %v4250 = vshrl.u32 %v4249, 7
  %v4251 = vsub.s32 %v4248, %v4250
  %v4252 = vrot.slane %v4244, %v4251
  %v4254 = vunpack.c.l.s4 1966171168
  %v4255 = vunpack.c.0.s8 %v4254
  %v4256 = vlaneseq
  %v4257 = vshrl.u32 %v4256, 7
  %v4258 = vsub.s32 %v4255, %v4257
  %v4259 = vrot.slane %v4245, %v4258
  %v4260 = vcombine.high %v4252, %v4252
  %v4261 = vcombine.high %v4259, %v4259
  %v4263 = vunpack.c.l.s4 1966171168
  %v4264 = vunpack.c.0.s8 %v4263
  %v4265 = vlaneseq
  %v4266 = vshrl.u32 %v4265, 7
  %v4267 = vsub.s32 %v4264, %v4266
  %v4268 = vrot.slane %v4176, %v4267
  %v4269 = vcombine.high %v4268, %v4268
  %v4271 = vunpack.c.l.s4 1966171168
  %v4272 = vunpack.c.0.s8 %v4271
  %v4273 = vlaneseq
  %v4274 = vshrl.u32 %v4273, 7
  %v4275 = vsub.s32 %v4272, %v4274
  %v4276 = vrot.slane %v4268, %v4275
  %v4278 = vunpack.c.l.s4 1966171168
  %v4279 = vunpack.c.0.s8 %v4278
  %v4280 = vlaneseq
  %v4281 = vshrl.u32 %v4280, 7
  %v4282 = vsub.s32 %v4279, %v4281
  %v4283 = vrot.slane %v4269, %v4282
  %v4284 = vcombine.high %v4276, %v4276
  %v4285 = vcombine.high %v4283, %v4283
  %v4287 = vunpack.c.l.s4 1966171168
  %v4288 = vunpack.c.0.s8 %v4287
  %v4289 = vlaneseq
  %v4290 = vshrl.u32 %v4289, 7
  %v4291 = vsub.s32 %v4288, %v4290
  %v4292 = vrot.slane %v4177, %v4291
  %v4293 = vcombine.high %v4292, %v4292
  %v4295 = vunpack.c.l.s4 1966171168
  %v4296 = vunpack.c.0.s8 %v4295
  %v4297 = vlaneseq
  %v4298 = vshrl.u32 %v4297, 7
  %v4299 = vsub.s32 %v4296, %v4298
  %v4300 = vrot.slane %v4292, %v4299
  %v4302 = vunpack.c.l.s4 1966171168
  %v4303 = vunpack.c.0.s8 %v4302
  %v4304 = vlaneseq
  %v4305 = vshrl.u32 %v4304, 7
  %v4306 = vsub.s32 %v4303, %v4305
  %v4307 = vrot.slane %v4293, %v4306
  %v4308 = vcombine.high %v4300, %v4300
  %v4309 = vcombine.high %v4307, %v4307
  %v4311 = vunpack.c.l.s4 1966171168
  %v4312 = vunpack.c.0.s8 %v4311
  %v4313 = vlaneseq
  %v4314 = vshrl.u32 %v4313, 7
  %v4315 = vsub.s32 %v4312, %v4314
  %v4316 = vrot.slane %v4178, %v4315
  %v4317 = vcombine.high %v4316, %v4316
  %v4319 = vunpack.c.l.s4 1966171168
  %v4320 = vunpack.c.0.s8 %v4319
  %v4321 = vlaneseq
  %v4322 = vshrl.u32 %v4321, 7
  %v4323 = vsub.s32 %v4320, %v4322
  %v4324 = vrot.slane %v4316, %v4323
  %v4326 = vunpack.c.l.s4 1966171168
  %v4327 = vunpack.c.0.s8 %v4326
  %v4328 = vlaneseq
  %v4329 = vshrl.u32 %v4328, 7
  %v4330 = vsub.s32 %v4327, %v4329
  %v4331 = vrot.slane %v4317, %v4330
  %v4332 = vcombine.high %v4324, %v4324
  %v4333 = vcombine.high %v4331, %v4331
  %v4335 = vunpack.c.l.s4 1966171168
  %v4336 = vunpack.c.0.s8 %v4335
  %v4337 = vlaneseq
  %v4338 = vshrl.u32 %v4337, 7
  %v4339 = vsub.s32 %v4336, %v4338
  %v4340 = vrot.slane %v4179, %v4339
  %v4341 = vcombine.high %v4340, %v4340
  %v4343 = vunpack.c.l.s4 1966171168
  %v4344 = vunpack.c.0.s8 %v4343
  %v4345 = vlaneseq
  %v4346 = vshrl.u32 %v4345, 7
  %v4347 = vsub.s32 %v4344, %v4346
  %v4348 = vrot.slane %v4340, %v4347
  %v4350 = vunpack.c.l.s4 1966171168
  %v4351 = vunpack.c.0.s8 %v4350
  %v4352 = vlaneseq
  %v4353 = vshrl.u32 %v4352, 7
  %v4354 = vsub.s32 %v4351, %v4353
  %v4355 = vrot.slane %v4341, %v4354
  %v4356 = vcombine.high %v4348, %v4348
  %v4357 = vcombine.high %v4355, %v4355
  %v4359 = vunpack.c.l.s4 1966171168
  %v4360 = vunpack.c.0.s8 %v4359
  %v4361 = vlaneseq
  %v4362 = vshrl.u32 %v4361, 7
  %v4363 = vsub.s32 %v4360, %v4362
  %v4364 = vrot.slane %v4180, %v4363
  %v4365 = vcombine.high %v4364, %v4364
  %v4367 = vunpack.c.l.s4 1966171168
  %v4368 = vunpack.c.0.s8 %v4367
  %v4369 = vlaneseq
  %v4370 = vshrl.u32 %v4369, 7
  %v4371 = vsub.s32 %v4368, %v4370
  %v4372 = vrot.slane %v4364, %v4371
  %v4374 = vunpack.c.l.s4 1966171168
  %v4375 = vunpack.c.0.s8 %v4374
  %v4376 = vlaneseq
  %v4377 = vshrl.u32 %v4376, 7
  %v4378 = vsub.s32 %v4375, %v4377
  %v4379 = vrot.slane %v4365, %v4378
  %v4380 = vcombine.high %v4372, %v4372
  %v4381 = vcombine.high %v4379, %v4379
  %v4383 = vunpack.c.l.s4 1966171168
  %v4384 = vunpack.c.0.s8 %v4383
  %v4385 = vlaneseq
  %v4386 = vshrl.u32 %v4385, 7
  %v4387 = vsub.s32 %v4384, %v4386
  %v4388 = vrot.slane %v4181, %v4387
  %v4389 = vcombine.high %v4388, %v4388
  %v4391 = vunpack.c.l.s4 1966171168
  %v4392 = vunpack.c.0.s8 %v4391
  %v4393 = vlaneseq
  %v4394 = vshrl.u32 %v4393, 7
  %v4395 = vsub.s32 %v4392, %v4394
  %v4396 = vrot.slane %v4388, %v4395
  %v4398 = vunpack.c.l.s4 1966171168
  %v4399 = vunpack.c.0.s8 %v4398
  %v4400 = vlaneseq
  %v4401 = vshrl.u32 %v4400, 7
  %v4402 = vsub.s32 %v4399, %v4401
  %v4403 = vrot.slane %v4389, %v4402
  %v4404 = vcombine.high %v4396, %v4396
  %v4405 = vcombine.high %v4403, %v4403
  %v4407 = vunpack.c.l.s4 1966171168
  %v4408 = vunpack.c.0.s8 %v4407
  %v4409 = vlaneseq
  %v4410 = vshrl.u32 %v4409, 7
  %v4411 = vsub.s32 %v4408, %v4410
  %v4412 = vrot.slane %v4182, %v4411
  %v4413 = vcombine.high %v4412, %v4412
  %v4415 = vunpack.c.l.s4 1966171168
  %v4416 = vunpack.c.0.s8 %v4415
  %v4417 = vlaneseq
  %v4418 = vshrl.u32 %v4417, 7
  %v4419 = vsub.s32 %v4416, %v4418
  %v4420 = vrot.slane %v4412, %v4419
  %v4422 = vunpack.c.l.s4 1966171168
  %v4423 = vunpack.c.0.s8 %v4422
  %v4424 = vlaneseq
  %v4425 = vshrl.u32 %v4424, 7
  %v4426 = vsub.s32 %v4423, %v4425
  %v4427 = vrot.slane %v4413, %v4426
  %v4428 = vcombine.high %v4420, %v4420
  %v4429 = vcombine.high %v4427, %v4427
  %v4431 = vunpack.c.l.s4 1966171168
  %v4432 = vunpack.c.0.s8 %v4431
  %v4433 = vlaneseq
  %v4434 = vshrl.u32 %v4433, 7
  %v4435 = vsub.s32 %v4432, %v4434
  %v4436 = vrot.slane %v4183, %v4435
  %v4437 = vcombine.high %v4436, %v4436
  %v4439 = vunpack.c.l.s4 1966171168
  %v4440 = vunpack.c.0.s8 %v4439
  %v4441 = vlaneseq
  %v4442 = vshrl.u32 %v4441, 7
  %v4443 = vsub.s32 %v4440, %v4442
  %v4444 = vrot.slane %v4436, %v4443
  %v4446 = vunpack.c.l.s4 1966171168
  %v4447 = vunpack.c.0.s8 %v4446
  %v4448 = vlaneseq
  %v4449 = vshrl.u32 %v4448, 7
  %v4450 = vsub.s32 %v4447, %v4449
  %v4451 = vrot.slane %v4437, %v4450
  %v4452 = vcombine.high %v4444, %v4444
  %v4453 = vcombine.high %v4451, %v4451
  %v4455 = vunpack.c.l.s4 1966171168
  %v4456 = vunpack.c.0.s8 %v4455
  %v4457 = vlaneseq
  %v4458 = vshrl.u32 %v4457, 7
  %v4459 = vsub.s32 %v4456, %v4458
  %v4460 = vrot.slane %v4184, %v4459
  %v4461 = vcombine.high %v4460, %v4460
  %v4463 = vunpack.c.l.s4 1966171168
  %v4464 = vunpack.c.0.s8 %v4463
  %v4465 = vlaneseq
  %v4466 = vshrl.u32 %v4465, 7
  %v4467 = vsub.s32 %v4464, %v4466
  %v4468 = vrot.slane %v4460, %v4467
  %v4470 = vunpack.c.l.s4 1966171168
  %v4471 = vunpack.c.0.s8 %v4470
  %v4472 = vlaneseq
  %v4473 = vshrl.u32 %v4472, 7
  %v4474 = vsub.s32 %v4471, %v4473
  %v4475 = vrot.slane %v4461, %v4474
  %v4476 = vcombine.high %v4468, %v4468
  %v4477 = vcombine.high %v4475, %v4475
  %v4479 = vunpack.c.l.s4 1966171168
  %v4480 = vunpack.c.0.s8 %v4479
  %v4481 = vlaneseq
  %v4482 = vshrl.u32 %v4481, 7
  %v4483 = vsub.s32 %v4480, %v4482
  %v4484 = vrot.slane %v4185, %v4483
  %v4485 = vcombine.high %v4484, %v4484
  %v4487 = vunpack.c.l.s4 1966171168
  %v4488 = vunpack.c.0.s8 %v4487
  %v4489 = vlaneseq
  %v4490 = vshrl.u32 %v4489, 7
  %v4491 = vsub.s32 %v4488, %v4490
  %v4492 = vrot.slane %v4484, %v4491
  %v4494 = vunpack.c.l.s4 1966171168
  %v4495 = vunpack.c.0.s8 %v4494
  %v4496 = vlaneseq
  %v4497 = vshrl.u32 %v4496, 7
  %v4498 = vsub.s32 %v4495, %v4497
  %v4499 = vrot.slane %v4485, %v4498
  %v4500 = vcombine.high %v4492, %v4492
  %v4501 = vcombine.high %v4499, %v4499
  %v4503 = vunpack.c.l.s4 1966171168
  %v4504 = vunpack.c.0.s8 %v4503
  %v4505 = vlaneseq
  %v4506 = vshrl.u32 %v4505, 7
  %v4507 = vsub.s32 %v4504, %v4506
  %v4508 = vrot.slane %v4186, %v4507
  %v4509 = vcombine.high %v4508, %v4508
  %v4511 = vunpack.c.l.s4 1966171168
  %v4512 = vunpack.c.0.s8 %v4511
  %v4513 = vlaneseq
  %v4514 = vshrl.u32 %v4513, 7
  %v4515 = vsub.s32 %v4512, %v4514
  %v4516 = vrot.slane %v4508, %v4515
  %v4518 = vunpack.c.l.s4 1966171168
  %v4519 = vunpack.c.0.s8 %v4518
  %v4520 = vlaneseq
  %v4521 = vshrl.u32 %v4520, 7
  %v4522 = vsub.s32 %v4519, %v4521
  %v4523 = vrot.slane %v4509, %v4522
  %v4524 = vcombine.high %v4516, %v4516
  %v4525 = vcombine.high %v4523, %v4523
  %v4527 = vunpack.c.l.s4 1966171168
  %v4528 = vunpack.c.0.s8 %v4527
  %v4529 = vlaneseq
  %v4530 = vshrl.u32 %v4529, 7
  %v4531 = vsub.s32 %v4528, %v4530
  %v4532 = vrot.slane %v4187, %v4531
  %v4533 = vcombine.high %v4532, %v4532
  %v4535 = vunpack.c.l.s4 1966171168
  %v4536 = vunpack.c.0.s8 %v4535
  %v4537 = vlaneseq
  %v4538 = vshrl.u32 %v4537, 7
  %v4539 = vsub.s32 %v4536, %v4538
  %v4540 = vrot.slane %v4532, %v4539
  %v4542 = vunpack.c.l.s4 1966171168
  %v4543 = vunpack.c.0.s8 %v4542
  %v4544 = vlaneseq
  %v4545 = vshrl.u32 %v4544, 7
  %v4546 = vsub.s32 %v4543, %v4545
  %v4547 = vrot.slane %v4533, %v4546
  %v4548 = vcombine.high %v4540, %v4540
  %v4549 = vcombine.high %v4547, %v4547
  %v4551 = vunpack.c.l.s4 1966171168
  %v4552 = vunpack.c.0.s8 %v4551
  %v4553 = vlaneseq
  %v4554 = vshrl.u32 %v4553, 7
  %v4555 = vsub.s32 %v4552, %v4554
  %v4556 = vrot.slane %v4188, %v4555
  %v4557 = vcombine.high %v4556, %v4556
  %v4559 = vunpack.c.l.s4 1966171168
  %v4560 = vunpack.c.0.s8 %v4559
  %v4561 = vlaneseq
  %v4562 = vshrl.u32 %v4561, 7
  %v4563 = vsub.s32 %v4560, %v4562
  %v4564 = vrot.slane %v4556, %v4563
  %v4566 = vunpack.c.l.s4 1966171168
  %v4567 = vunpack.c.0.s8 %v4566
  %v4568 = vlaneseq
  %v4569 = vshrl.u32 %v4568, 7
  %v4570 = vsub.s32 %v4567, %v4569
  %v4571 = vrot.slane %v4557, %v4570
  %v4572 = vcombine.high %v4564, %v4564
  %v4573 = vcombine.high %v4571, %v4571
  %v4575 = vunpack.c.l.s4 1966171168
  %v4576 = vunpack.c.0.s8 %v4575
  %v4577 = vlaneseq
  %v4578 = vshrl.u32 %v4577, 7
  %v4579 = vsub.s32 %v4576, %v4578
  %v4580 = vrot.slane %v4189, %v4579
  %v4581 = vcombine.high %v4580, %v4580
  %v4583 = vunpack.c.l.s4 1966171168
  %v4584 = vunpack.c.0.s8 %v4583
  %v4585 = vlaneseq
  %v4586 = vshrl.u32 %v4585, 7
  %v4587 = vsub.s32 %v4584, %v4586
  %v4588 = vrot.slane %v4580, %v4587
  %v4590 = vunpack.c.l.s4 1966171168
  %v4591 = vunpack.c.0.s8 %v4590
  %v4592 = vlaneseq
  %v4593 = vshrl.u32 %v4592, 7
  %v4594 = vsub.s32 %v4591, %v4593
  %v4595 = vrot.slane %v4581, %v4594
  %v4596 = vcombine.high %v4588, %v4588
  %v4597 = vcombine.high %v4595, %v4595
  %v4599 = vunpack.c.l.s4 1966171168
  %v4600 = vunpack.c.0.s8 %v4599
  %v4601 = vlaneseq
  %v4602 = vshrl.u32 %v4601, 7
  %v4603 = vsub.s32 %v4600, %v4602
  %v4604 = vrot.slane %v4190, %v4603
  %v4605 = vcombine.high %v4604, %v4604
  %v4607 = vunpack.c.l.s4 1966171168
  %v4608 = vunpack.c.0.s8 %v4607
  %v4609 = vlaneseq
  %v4610 = vshrl.u32 %v4609, 7
  %v4611 = vsub.s32 %v4608, %v4610
  %v4612 = vrot.slane %v4604, %v4611
  %v4614 = vunpack.c.l.s4 1966171168
  %v4615 = vunpack.c.0.s8 %v4614
  %v4616 = vlaneseq
  %v4617 = vshrl.u32 %v4616, 7
  %v4618 = vsub.s32 %v4615, %v4617
  %v4619 = vrot.slane %v4605, %v4618
  %v4620 = vcombine.high %v4612, %v4612
  %v4621 = vcombine.high %v4619, %v4619
  %v4623 = vunpack.c.l.s4 1966171168
  %v4624 = vunpack.c.0.s8 %v4623
  %v4625 = vlaneseq
  %v4626 = vshrl.u32 %v4625, 7
  %v4627 = vsub.s32 %v4624, %v4626
  %v4628 = vrot.slane %v4191, %v4627
  %v4629 = vcombine.high %v4628, %v4628
  %v4631 = vunpack.c.l.s4 1966171168
  %v4632 = vunpack.c.0.s8 %v4631
  %v4633 = vlaneseq
  %v4634 = vshrl.u32 %v4633, 7
  %v4635 = vsub.s32 %v4632, %v4634
  %v4636 = vrot.slane %v4628, %v4635
  %v4638 = vunpack.c.l.s4 1966171168
  %v4639 = vunpack.c.0.s8 %v4638
  %v4640 = vlaneseq
  %v4641 = vshrl.u32 %v4640, 7
  %v4642 = vsub.s32 %v4639, %v4641
  %v4643 = vrot.slane %v4629, %v4642
  %v4644 = vcombine.high %v4636, %v4636
  %v4645 = vcombine.high %v4643, %v4643
  %v4647 = vunpack.c.l.s4 1966171168
  %v4648 = vunpack.c.0.s8 %v4647
  %v4649 = vlaneseq
  %v4650 = vshrl.u32 %v4649, 7
  %v4651 = vsub.s32 %v4648, %v4650
  %v4652 = vrot.slane %v4192, %v4651
  %v4653 = vcombine.high %v4652, %v4652
  %v4655 = vunpack.c.l.s4 1966171168
  %v4656 = vunpack.c.0.s8 %v4655
  %v4657 = vlaneseq
  %v4658 = vshrl.u32 %v4657, 7
  %v4659 = vsub.s32 %v4656, %v4658
  %v4660 = vrot.slane %v4652, %v4659
  %v4662 = vunpack.c.l.s4 1966171168
  %v4663 = vunpack.c.0.s8 %v4662
  %v4664 = vlaneseq
  %v4665 = vshrl.u32 %v4664, 7
  %v4666 = vsub.s32 %v4663, %v4665
  %v4667 = vrot.slane %v4653, %v4666
  %v4668 = vcombine.high %v4660, %v4660
  %v4669 = vcombine.high %v4667, %v4667
  %v4671 = vunpack.c.l.s4 1966171168
  %v4672 = vunpack.c.0.s8 %v4671
  %v4673 = vlaneseq
  %v4674 = vshrl.u32 %v4673, 7
  %v4675 = vsub.s32 %v4672, %v4674
  %v4676 = vrot.slane %v4193, %v4675
  %v4677 = vcombine.high %v4676, %v4676
  %v4679 = vunpack.c.l.s4 1966171168
  %v4680 = vunpack.c.0.s8 %v4679
  %v4681 = vlaneseq
  %v4682 = vshrl.u32 %v4681, 7
  %v4683 = vsub.s32 %v4680, %v4682
  %v4684 = vrot.slane %v4676, %v4683
  %v4686 = vunpack.c.l.s4 1966171168
  %v4687 = vunpack.c.0.s8 %v4686
  %v4688 = vlaneseq
  %v4689 = vshrl.u32 %v4688, 7
  %v4690 = vsub.s32 %v4687, %v4689
  %v4691 = vrot.slane %v4677, %v4690
  %v4692 = vcombine.high %v4684, %v4684
  %v4693 = vcombine.high %v4691, %v4691
  %v4694 = vunpack.i.l.s16 %v4228
  %v4695 = vunpack.i.h.s16 %v4228
  %v4696 = vunpack.i.l.s16 %v4235
  %v4697 = vunpack.i.h.s16 %v4235
  %v4698 = vunpack.i.l.s16 %v4236
  %v4699 = vunpack.i.h.s16 %v4236
  %v4700 = vunpack.i.l.s16 %v4237
  %v4701 = vunpack.i.h.s16 %v4237
  %v4702 = vunpack.i.l.s16 %v4252
  %v4703 = vunpack.i.h.s16 %v4252
  %v4704 = vunpack.i.l.s16 %v4259
  %v4705 = vunpack.i.h.s16 %v4259
  %v4706 = vunpack.i.l.s16 %v4260
  %v4707 = vunpack.i.h.s16 %v4260
  %v4708 = vunpack.i.l.s16 %v4261
  %v4709 = vunpack.i.h.s16 %v4261
  %v4710 = vunpack.i.l.s16 %v4276
  %v4711 = vunpack.i.h.s16 %v4276
  %v4712 = vunpack.i.l.s16 %v4283
  %v4713 = vunpack.i.h.s16 %v4283
  %v4714 = vunpack.i.l.s16 %v4284
  %v4715 = vunpack.i.h.s16 %v4284
  %v4716 = vunpack.i.l.s16 %v4285
  %v4717 = vunpack.i.h.s16 %v4285
  %v4718 = vunpack.i.l.s16 %v4300
  %v4719 = vunpack.i.h.s16 %v4300
  %v4720 = vunpack.i.l.s16 %v4307
  %v4721 = vunpack.i.h.s16 %v4307
  %v4722 = vunpack.i.l.s16 %v4308
  %v4723 = vunpack.i.h.s16 %v4308
  %v4724 = vunpack.i.l.s16 %v4309
  %v4725 = vunpack.i.h.s16 %v4309
  %v4726 = vunpack.i.l.s16 %v4324
  %v4727 = vunpack.i.h.s16 %v4324
  %v4728 = vunpack.i.l.s16 %v4331
  %v4729 = vunpack.i.h.s16 %v4331
  %v4730 = vunpack.i.l.s16 %v4332
  %v4731 = vunpack.i.h.s16 %v4332
  %v4732 = vunpack.i.l.s16 %v4333
  %v4733 = vunpack.i.h.s16 %v4333
  %v4734 = vunpack.i.l.s16 %v4348
  %v4735 = vunpack.i.h.s16 %v4348
  %v4736 = vunpack.i.l.s16 %v4355
  %v4737 = vunpack.i.h.s16 %v4355
  %v4738 = vunpack.i.l.s16 %v4356
  %v4739 = vunpack.i.h.s16 %v4356
  %v4740 = vunpack.i.l.s16 %v4357
  %v4741 = vunpack.i.h.s16 %v4357
  %v4742 = vunpack.i.l.s16 %v4372
  %v4743 = vunpack.i.h.s16 %v4372
  %v4744 = vunpack.i.l.s16 %v4379
  %v4745 = vunpack.i.h.s16 %v4379
  %v4746 = vunpack.i.l.s16 %v4380
  %v4747 = vunpack.i.h.s16 %v4380
  %v4748 = vunpack.i.l.s16 %v4381
  %v4749 = vunpack.i.h.s16 %v4381
  %v4750 = vunpack.i.l.s16 %v4396
  %v4751 = vunpack.i.h.s16 %v4396
  %v4752 = vunpack.i.l.s16 %v4403
  %v4753 = vunpack.i.h.s16 %v4403
  %v4754 = vunpack.i.l.s16 %v4404
  %v4755 = vunpack.i.h.s16 %v4404
  %v4756 = vunpack.i.l.s16 %v4405
  %v4757 = vunpack.i.h.s16 %v4405
  %v4758 = vunpack.i.l.s16 %v4420
  %v4759 = vunpack.i.h.s16 %v4420
  %v4760 = vunpack.i.l.s16 %v4427
  %v4761 = vunpack.i.h.s16 %v4427
  %v4762 = vunpack.i.l.s16 %v4428
  %v4763 = vunpack.i.h.s16 %v4428
  %v4764 = vunpack.i.l.s16 %v4429
  %v4765 = vunpack.i.h.s16 %v4429
  %v4766 = vunpack.i.l.s16 %v4444
  %v4767 = vunpack.i.h.s16 %v4444
  %v4768 = vunpack.i.l.s16 %v4451
  %v4769 = vunpack.i.h.s16 %v4451
  %v4770 = vunpack.i.l.s16 %v4452
  %v4771 = vunpack.i.h.s16 %v4452
  %v4772 = vunpack.i.l.s16 %v4453
  %v4773 = vunpack.i.l.s16 %v4468
  %v4774 = vunpack.i.h.s16 %v4468
  %v4775 = vunpack.i.l.s16 %v4475
  %v4776 = vunpack.i.h.s16 %v4475
  %v4777 = vunpack.i.l.s16 %v4476
  %v4778 = vunpack.i.h.s16 %v4476
  %v4779 = vunpack.i.l.s16 %v4477
  %v4780 = vunpack.i.h.s16 %v4477
  %v4781 = vunpack.i.l.s16 %v4492
  %v4782 = vunpack.i.h.s16 %v4492
  %v4783 = vunpack.i.l.s16 %v4499
  %v4784 = vunpack.i.h.s16 %v4499
  %v4785 = vunpack.i.l.s16 %v4500
  %v4786 = vunpack.i.h.s16 %v4500
  %v4787 = vunpack.i.l.s16 %v4501
  %v4788 = vunpack.i.h.s16 %v4501
  %v4789 = vunpack.i.l.s16 %v4516
  %v4790 = vunpack.i.h.s16 %v4516
  %v4791 = vunpack.i.l.s16 %v4523
  %v4792 = vunpack.i.h.s16 %v4523
  %v4793 = vunpack.i.l.s16 %v4524
  %v4794 = vunpack.i.h.s16 %v4524
  %v4795 = vunpack.i.l.s16 %v4525
  %v4796 = vunpack.i.h.s16 %v4525
  %v4797 = vunpack.i.l.s16 %v4540
  %v4798 = vunpack.i.h.s16 %v4540
  %v4799 = vunpack.i.l.s16 %v4547
  %v4800 = vunpack.i.h.s16 %v4547
  %v4801 = vunpack.i.l.s16 %v4548
  %v4802 = vunpack.i.h.s16 %v4548
  %v4803 = vunpack.i.l.s16 %v4549
  %v4804 = vunpack.i.h.s16 %v4549
  %v4805 = vunpack.i.l.s16 %v4564
  %v4806 = vunpack.i.h.s16 %v4564
  %v4807 = vunpack.i.l.s16 %v4571
  %v4808 = vunpack.i.h.s16 %v4571
  %v4809 = vunpack.i.l.s16 %v4572
  %v4810 = vunpack.i.h.s16 %v4572
  %v4811 = vunpack.i.l.s16 %v4573
  %v4812 = vunpack.i.h.s16 %v4573
  %v4813 = vunpack.i.l.s16 %v4588
  %v4814 = vunpack.i.h.s16 %v4588
  %v4815 = vunpack.i.l.s16 %v4595
  %v4816 = vunpack.i.h.s16 %v4595
  %v4817 = vunpack.i.l.s16 %v4596
  %v4818 = vunpack.i.h.s16 %v4596
  %v4819 = vunpack.i.l.s16 %v4597
  %v4820 = vunpack.i.h.s16 %v4597
  %v4821 = vunpack.i.l.s16 %v4612
  %v4822 = vunpack.i.h.s16 %v4612
  %v4823 = vunpack.i.l.s16 %v4619
  %v4824 = vunpack.i.h.s16 %v4619
  %v4825 = vunpack.i.l.s16 %v4620
  %v4826 = vunpack.i.h.s16 %v4620
  %v4827 = vunpack.i.l.s16 %v4621
  %v4828 = vunpack.i.h.s16 %v4621
  %v4829 = vunpack.i.l.s16 %v4636
  %v4830 = vunpack.i.h.s16 %v4636
  %v4831 = vunpack.i.l.s16 %v4643
  %v4832 = vunpack.i.h.s16 %v4643
  %v4833 = vunpack.i.l.s16 %v4644
  %v4834 = vunpack.i.h.s16 %v4644
  %v4835 = vunpack.i.l.s16 %v4645
  %v4836 = vunpack.i.h.s16 %v4645
  %v4837 = vunpack.i.l.s16 %v4660
  %v4838 = vunpack.i.h.s16 %v4660
  %v4839 = vunpack.i.l.s16 %v4667
  %v4840 = vunpack.i.h.s16 %v4667
  %v4841 = vunpack.i.l.s16 %v4668
  %v4842 = vunpack.i.h.s16 %v4668
  %v4843 = vunpack.i.l.s16 %v4669
  %v4844 = vunpack.i.h.s16 %v4669
  %v4845 = vunpack.i.l.s16 %v4684
  %v4846 = vunpack.i.h.s16 %v4684
  %v4847 = vunpack.i.l.s16 %v4691
  %v4848 = vunpack.i.h.s16 %v4691
  %v4849 = vunpack.i.l.s16 %v4692
  %v4850 = vunpack.i.h.s16 %v4692
  %v4851 = vunpack.i.l.s16 %v4693
  %v4852 = vld [vmem:[%s3] sm:$0xf]
  %v4853 = vld [vmem:[%s3 + $0x4] sm:$0xf]
  %v4854 = vld [vmem:[%s3 + $0x8] sm:$0xf]
  %v4855 = vld [vmem:[%s3 + $0xc] sm:$0xf]
  %v4856 = vld [vmem:[%s3 + $0x10] sm:$0x3]
  %v4857 = vlaneseq
  %v4858 = vshrl.u32 %v4857, 7
  %v4859 = vsub.s32 2, %v4858
  %v4860 = vrot.slane %v36, %v4859
  %v4861 = vpack.i.b16 %v4695, %v4694
  %v4862 = vpack.i.b16 %v4697, %v4696
  %v4863 = vpack.i.b16 %v4699, %v4698
  %v4864 = vpack.i.b16 %v4701, %v4700
  %v4865 = vpack.i.b16 %v4703, %v4702
  %v4866 = vpack.i.b16 %v4705, %v4704
  %v4867 = vpack.i.b16 %v4707, %v4706
  %v4868 = vpack.i.b16 %v4709, %v4708
  %v4869 = vpack.i.b16 %v4711, %v4710
  %v4870 = vpack.i.b16 %v4713, %v4712
  %v4871 = vpack.i.b16 %v4715, %v4714
  %v4872 = vpack.i.b16 %v4717, %v4716
  %v4873 = vpack.i.b16 %v4719, %v4718
  %v4874 = vpack.i.b16 %v4721, %v4720
  %v4875 = vpack.i.b16 %v4723, %v4722
  %v4876 = vpack.i.b16 %v4725, %v4724
  %v4877 = vpack.i.b16 %v4727, %v4726
  %v4878 = vpack.i.b16 %v4729, %v4728
  %v4879 = vpack.i.b16 %v4731, %v4730
  %v4880 = vpack.i.b16 %v4733, %v4732
  %v4881 = vpack.i.b16 %v4735, %v4734
  %v4882 = vpack.i.b16 %v4737, %v4736
  %v4883 = vpack.i.b16 %v4739, %v4738
  %v4884 = vpack.i.b16 %v4741, %v4740
  %v4885 = vpack.i.b16 %v4743, %v4742
  %v4886 = vpack.i.b16 %v4745, %v4744
  %v4887 = vpack.i.b16 %v4747, %v4746
  %v4888 = vpack.i.b16 %v4749, %v4748
  %v4889 = vpack.i.b16 %v4751, %v4750
  %v4890 = vpack.i.b16 %v4753, %v4752
  %v4891 = vpack.i.b16 %v4755, %v4754
  %v4892 = vpack.i.b16 %v4757, %v4756
  %v4893 = vpack.i.b16 %v4759, %v4758
  %v4894 = vpack.i.b16 %v4761, %v4760
  %v4895 = vpack.i.b16 %v4763, %v4762
  %v4896 = vpack.i.b16 %v4765, %v4764
  %v4897 = vpack.i.b16 %v4767, %v4766
  %v4898 = vpack.i.b16 %v4769, %v4768
  %v4899 = vpack.i.b16 %v4771, %v4770
  %v4900 = vpack.i.b16 %v4773, %v4772
  %v4901 = vpack.i.b16 %v4775, %v4774
  %v4902 = vpack.i.b16 %v4777, %v4776
  %v4903 = vpack.i.b16 %v4779, %v4778
  %v4904 = vpack.i.b16 %v4781, %v4780
  %v4905 = vpack.i.b16 %v4783, %v4782
  %v4906 = vpack.i.b16 %v4785, %v4784
  %v4907 = vpack.i.b16 %v4787, %v4786
  %v4908 = vpack.i.b16 %v4789, %v4788
  %v4909 = vpack.i.b16 %v4791, %v4790
  %v4910 = vpack.i.b16 %v4793, %v4792
  %v4911 = vpack.i.b16 %v4795, %v4794
  %v4912 = vpack.i.b16 %v4797, %v4796
  %v4913 = vpack.i.b16 %v4799, %v4798
  %v4914 = vpack.i.b16 %v4801, %v4800
  %v4915 = vpack.i.b16 %v4803, %v4802
  %v4916 = vpack.i.b16 %v4805, %v4804
  %v4917 = vpack.i.b16 %v4807, %v4806
  %v4918 = vpack.i.b16 %v4809, %v4808
  %v4919 = vpack.i.b16 %v4811, %v4810
  %v4920 = vpack.i.b16 %v4813, %v4812
  %v4921 = vpack.i.b16 %v4815, %v4814
  %v4922 = vpack.i.b16 %v4817, %v4816
  %v4923 = vpack.i.b16 %v4819, %v4818
  %v4924 = vpack.i.b16 %v4821, %v4820
  %v4925 = vpack.i.b16 %v4823, %v4822
  %v4926 = vpack.i.b16 %v4825, %v4824
  %v4927 = vpack.i.b16 %v4827, %v4826
  %v4928 = vpack.i.b16 %v4829, %v4828
  %v4929 = vpack.i.b16 %v4831, %v4830
  %v4930 = vpack.i.b16 %v4833, %v4832
  %v4931 = vpack.i.b16 %v4835, %v4834
  %v4932 = vpack.i.b16 %v4837, %v4836
  %v4933 = vpack.i.b16 %v4839, %v4838
  %v4934 = vpack.i.b16 %v4841, %v4840
  %v4935 = vpack.i.b16 %v4843, %v4842
  %v4936 = vpack.i.b16 %v4845, %v4844
  %v4937 = vpack.i.b16 %v4847, %v4846
  %v4938 = vpack.i.b16 %v4849, %v4848
  %v4939 = vpack.i.b16 %v4851, %v4850
  %v4940 = vcombine.low %v4861, %v4862
  %v4941 = vcombine.low %v4863, %v4864
  %v4942 = vcombine.low %v4865, %v4866
  %v4943 = vcombine.low %v4867, %v4868
  %v4945 = vunpack.c.l.s4 1966171168
  %v4946 = vunpack.c.0.s8 %v4945
  %v4947 = vlaneseq
  %v4948 = vshrl.u32 %v4947, 7
  %v4949 = vsub.s32 %v4946, %v4948
  %v4950 = vrot.slane %v4940, %v4949
  %v4952 = vunpack.c.l.s4 1966171168
  %v4953 = vunpack.c.0.s8 %v4952
  %v4954 = vlaneseq
  %v4955 = vshrl.u32 %v4954, 7
  %v4956 = vsub.s32 %v4953, %v4955
  %v4957 = vrot.slane %v4941, %v4956
  %v4959 = vunpack.c.l.s4 1966171168
  %v4960 = vunpack.c.0.s8 %v4959
  %v4961 = vlaneseq
  %v4962 = vshrl.u32 %v4961, 7
  %v4963 = vsub.s32 %v4960, %v4962
  %v4964 = vrot.slane %v4942, %v4963
  %v4966 = vunpack.c.l.s4 1966171168
  %v4967 = vunpack.c.0.s8 %v4966
  %v4968 = vlaneseq
  %v4969 = vshrl.u32 %v4968, 7
  %v4970 = vsub.s32 %v4967, %v4969
  %v4971 = vrot.slane %v4943, %v4970
  %v4972 = vcombine.low %v4950, %v4957
  %v4973 = vcombine.low %v4964, %v4971
  %v4975 = vunpack.c.l.s4 1966171168
  %v4976 = vunpack.c.0.s8 %v4975
  %v4977 = vlaneseq
  %v4978 = vshrl.u32 %v4977, 7
  %v4979 = vsub.s32 %v4976, %v4978
  %v4980 = vrot.slane %v4972, %v4979
  %v4982 = vunpack.c.l.s4 1966171168
  %v4983 = vunpack.c.0.s8 %v4982
  %v4984 = vlaneseq
  %v4985 = vshrl.u32 %v4984, 7
  %v4986 = vsub.s32 %v4983, %v4985
  %v4987 = vrot.slane %v4973, %v4986
  %v4988 = vcombine.low %v4980, %v4987
  %v4989 = vcombine.low %v4869, %v4870
  %v4990 = vcombine.low %v4871, %v4872
  %v4991 = vcombine.low %v4873, %v4874
  %v4992 = vcombine.low %v4875, %v4876
  %v4994 = vunpack.c.l.s4 1966171168
  %v4995 = vunpack.c.0.s8 %v4994
  %v4996 = vlaneseq
  %v4997 = vshrl.u32 %v4996, 7
  %v4998 = vsub.s32 %v4995, %v4997
  %v4999 = vrot.slane %v4989, %v4998
  %v5001 = vunpack.c.l.s4 1966171168
  %v5002 = vunpack.c.0.s8 %v5001
  %v5003 = vlaneseq
  %v5004 = vshrl.u32 %v5003, 7
  %v5005 = vsub.s32 %v5002, %v5004
  %v5006 = vrot.slane %v4990, %v5005
  %v5008 = vunpack.c.l.s4 1966171168
  %v5009 = vunpack.c.0.s8 %v5008
  %v5010 = vlaneseq
  %v5011 = vshrl.u32 %v5010, 7
  %v5012 = vsub.s32 %v5009, %v5011
  %v5013 = vrot.slane %v4991, %v5012
  %v5015 = vunpack.c.l.s4 1966171168
  %v5016 = vunpack.c.0.s8 %v5015
  %v5017 = vlaneseq
  %v5018 = vshrl.u32 %v5017, 7
  %v5019 = vsub.s32 %v5016, %v5018
  %v5020 = vrot.slane %v4992, %v5019
  %v5021 = vcombine.low %v4999, %v5006
  %v5022 = vcombine.low %v5013, %v5020
  %v5024 = vunpack.c.l.s4 1966171168
  %v5025 = vunpack.c.0.s8 %v5024
  %v5026 = vlaneseq
  %v5027 = vshrl.u32 %v5026, 7
  %v5028 = vsub.s32 %v5025, %v5027
  %v5029 = vrot.slane %v5021, %v5028
  %v5031 = vunpack.c.l.s4 1966171168
  %v5032 = vunpack.c.0.s8 %v5031
  %v5033 = vlaneseq
  %v5034 = vshrl.u32 %v5033, 7
  %v5035 = vsub.s32 %v5032, %v5034
  %v5036 = vrot.slane %v5022, %v5035
  %v5037 = vcombine.low %v5029, %v5036
  %v5038 = vcombine.low %v4877, %v4878
  %v5039 = vcombine.low %v4879, %v4880
  %v5040 = vcombine.low %v4881, %v4882
  %v5041 = vcombine.low %v4883, %v4884
  %v5043 = vunpack.c.l.s4 1966171168
  %v5044 = vunpack.c.0.s8 %v5043
  %v5045 = vlaneseq
  %v5046 = vshrl.u32 %v5045, 7
  %v5047 = vsub.s32 %v5044, %v5046
  %v5048 = vrot.slane %v5038, %v5047
  %v5050 = vunpack.c.l.s4 1966171168
  %v5051 = vunpack.c.0.s8 %v5050
  %v5052 = vlaneseq
  %v5053 = vshrl.u32 %v5052, 7
  %v5054 = vsub.s32 %v5051, %v5053
  %v5055 = vrot.slane %v5039, %v5054
  %v5057 = vunpack.c.l.s4 1966171168
  %v5058 = vunpack.c.0.s8 %v5057
  %v5059 = vlaneseq
  %v5060 = vshrl.u32 %v5059, 7
  %v5061 = vsub.s32 %v5058, %v5060
  %v5062 = vrot.slane %v5040, %v5061
  %v5064 = vunpack.c.l.s4 1966171168
  %v5065 = vunpack.c.0.s8 %v5064
  %v5066 = vlaneseq
  %v5067 = vshrl.u32 %v5066, 7
  %v5068 = vsub.s32 %v5065, %v5067
  %v5069 = vrot.slane %v5041, %v5068
  %v5070 = vcombine.low %v5048, %v5055
  %v5071 = vcombine.low %v5062, %v5069
  %v5073 = vunpack.c.l.s4 1966171168
  %v5074 = vunpack.c.0.s8 %v5073
  %v5075 = vlaneseq
  %v5076 = vshrl.u32 %v5075, 7
  %v5077 = vsub.s32 %v5074, %v5076
  %v5078 = vrot.slane %v5070, %v5077
  %v5080 = vunpack.c.l.s4 1966171168
  %v5081 = vunpack.c.0.s8 %v5080
  %v5082 = vlaneseq
  %v5083 = vshrl.u32 %v5082, 7
  %v5084 = vsub.s32 %v5081, %v5083
  %v5085 = vrot.slane %v5071, %v5084
  %v5086 = vcombine.low %v5078, %v5085
  %v5087 = vcombine.low %v4885, %v4886
  %v5088 = vcombine.low %v4887, %v4888
  %v5089 = vcombine.low %v4889, %v4890
  %v5090 = vcombine.low %v4891, %v4892
  %v5092 = vunpack.c.l.s4 1966171168
  %v5093 = vunpack.c.0.s8 %v5092
  %v5094 = vlaneseq
  %v5095 = vshrl.u32 %v5094, 7
  %v5096 = vsub.s32 %v5093, %v5095
  %v5097 = vrot.slane %v5087, %v5096
  %v5099 = vunpack.c.l.s4 1966171168
  %v5100 = vunpack.c.0.s8 %v5099
  %v5101 = vlaneseq
  %v5102 = vshrl.u32 %v5101, 7
  %v5103 = vsub.s32 %v5100, %v5102
  %v5104 = vrot.slane %v5088, %v5103
  %v5106 = vunpack.c.l.s4 1966171168
  %v5107 = vunpack.c.0.s8 %v5106
  %v5108 = vlaneseq
  %v5109 = vshrl.u32 %v5108, 7
  %v5110 = vsub.s32 %v5107, %v5109
  %v5111 = vrot.slane %v5089, %v5110
  %v5113 = vunpack.c.l.s4 1966171168
  %v5114 = vunpack.c.0.s8 %v5113
  %v5115 = vlaneseq
  %v5116 = vshrl.u32 %v5115, 7
  %v5117 = vsub.s32 %v5114, %v5116
  %v5118 = vrot.slane %v5090, %v5117
  %v5119 = vcombine.low %v5097, %v5104
  %v5120 = vcombine.low %v5111, %v5118
  %v5122 = vunpack.c.l.s4 1966171168
  %v5123 = vunpack.c.0.s8 %v5122
  %v5124 = vlaneseq
  %v5125 = vshrl.u32 %v5124, 7
  %v5126 = vsub.s32 %v5123, %v5125
  %v5127 = vrot.slane %v5119, %v5126
  %v5129 = vunpack.c.l.s4 1966171168
  %v5130 = vunpack.c.0.s8 %v5129
  %v5131 = vlaneseq
  %v5132 = vshrl.u32 %v5131, 7
  %v5133 = vsub.s32 %v5130, %v5132
  %v5134 = vrot.slane %v5120, %v5133
  %v5135 = vcombine.low %v5127, %v5134
  %v5136 = vcombine.low %v4893, %v4894
  %v5137 = vcombine.low %v4895, %v4896
  %v5138 = vcombine.low %v4897, %v4898
  %v5139 = vcombine.low %v4899, %v4900
  %v5141 = vunpack.c.l.s4 1966171168
  %v5142 = vunpack.c.0.s8 %v5141
  %v5143 = vlaneseq
  %v5144 = vshrl.u32 %v5143, 7
  %v5145 = vsub.s32 %v5142, %v5144
  %v5146 = vrot.slane %v5136, %v5145
  %v5148 = vunpack.c.l.s4 1966171168
  %v5149 = vunpack.c.0.s8 %v5148
  %v5150 = vlaneseq
  %v5151 = vshrl.u32 %v5150, 7
  %v5152 = vsub.s32 %v5149, %v5151
  %v5153 = vrot.slane %v5137, %v5152
  %v5155 = vunpack.c.l.s4 1966171168
  %v5156 = vunpack.c.0.s8 %v5155
  %v5157 = vlaneseq
  %v5158 = vshrl.u32 %v5157, 7
  %v5159 = vsub.s32 %v5156, %v5158
  %v5160 = vrot.slane %v5138, %v5159
  %v5162 = vunpack.c.l.s4 1966171168
  %v5163 = vunpack.c.0.s8 %v5162
  %v5164 = vlaneseq
  %v5165 = vshrl.u32 %v5164, 7
  %v5166 = vsub.s32 %v5163, %v5165
  %v5167 = vrot.slane %v5139, %v5166
  %v5168 = vcombine.low %v5146, %v5153
  %v5169 = vcombine.low %v5160, %v5167
  %v5171 = vunpack.c.l.s4 1966171168
  %v5172 = vunpack.c.0.s8 %v5171
  %v5173 = vlaneseq
  %v5174 = vshrl.u32 %v5173, 7
  %v5175 = vsub.s32 %v5172, %v5174
  %v5176 = vrot.slane %v5168, %v5175
  %v5178 = vunpack.c.l.s4 1966171168
  %v5179 = vunpack.c.0.s8 %v5178
  %v5180 = vlaneseq
  %v5181 = vshrl.u32 %v5180, 7
  %v5182 = vsub.s32 %v5179, %v5181
  %v5183 = vrot.slane %v5169, %v5182
  %v5184 = vcombine.low %v5176, %v5183
  %v5185 = vcombine.low %v4901, %v4902
  %v5186 = vcombine.low %v4903, %v4904
  %v5187 = vcombine.low %v4905, %v4906
  %v5188 = vcombine.low %v4907, %v4908
  %v5190 = vunpack.c.l.s4 1966171168
  %v5191 = vunpack.c.0.s8 %v5190
  %v5192 = vlaneseq
  %v5193 = vshrl.u32 %v5192, 7
  %v5194 = vsub.s32 %v5191, %v5193
  %v5195 = vrot.slane %v5185, %v5194
  %v5197 = vunpack.c.l.s4 1966171168
  %v5198 = vunpack.c.0.s8 %v5197
  %v5199 = vlaneseq
  %v5200 = vshrl.u32 %v5199, 7
  %v5201 = vsub.s32 %v5198, %v5200
  %v5202 = vrot.slane %v5186, %v5201
  %v5204 = vunpack.c.l.s4 1966171168
  %v5205 = vunpack.c.0.s8 %v5204
  %v5206 = vlaneseq
  %v5207 = vshrl.u32 %v5206, 7
  %v5208 = vsub.s32 %v5205, %v5207
  %v5209 = vrot.slane %v5187, %v5208
  %v5211 = vunpack.c.l.s4 1966171168
  %v5212 = vunpack.c.0.s8 %v5211
  %v5213 = vlaneseq
  %v5214 = vshrl.u32 %v5213, 7
  %v5215 = vsub.s32 %v5212, %v5214
  %v5216 = vrot.slane %v5188, %v5215
  %v5217 = vcombine.low %v5195, %v5202
  %v5218 = vcombine.low %v5209, %v5216
  %v5220 = vunpack.c.l.s4 1966171168
  %v5221 = vunpack.c.0.s8 %v5220
  %v5222 = vlaneseq
  %v5223 = vshrl.u32 %v5222, 7
  %v5224 = vsub.s32 %v5221, %v5223
  %v5225 = vrot.slane %v5217, %v5224
  %v5227 = vunpack.c.l.s4 1966171168
  %v5228 = vunpack.c.0.s8 %v5227
  %v5229 = vlaneseq
  %v5230 = vshrl.u32 %v5229, 7
  %v5231 = vsub.s32 %v5228, %v5230
  %v5232 = vrot.slane %v5218, %v5231
  %v5233 = vcombine.low %v5225, %v5232
  %v5234 = vcombine.low %v4909, %v4910
  %v5235 = vcombine.low %v4911, %v4912
  %v5236 = vcombine.low %v4913, %v4914
  %v5237 = vcombine.low %v4915, %v4916
  %v5239 = vunpack.c.l.s4 1966171168
  %v5240 = vunpack.c.0.s8 %v5239
  %v5241 = vlaneseq
  %v5242 = vshrl.u32 %v5241, 7
  %v5243 = vsub.s32 %v5240, %v5242
  %v5244 = vrot.slane %v5234, %v5243
  %v5246 = vunpack.c.l.s4 1966171168
  %v5247 = vunpack.c.0.s8 %v5246
  %v5248 = vlaneseq
  %v5249 = vshrl.u32 %v5248, 7
  %v5250 = vsub.s32 %v5247, %v5249
  %v5251 = vrot.slane %v5235, %v5250
  %v5253 = vunpack.c.l.s4 1966171168
  %v5254 = vunpack.c.0.s8 %v5253
  %v5255 = vlaneseq
  %v5256 = vshrl.u32 %v5255, 7
  %v5257 = vsub.s32 %v5254, %v5256
  %v5258 = vrot.slane %v5236, %v5257
  %v5260 = vunpack.c.l.s4 1966171168
  %v5261 = vunpack.c.0.s8 %v5260
  %v5262 = vlaneseq
  %v5263 = vshrl.u32 %v5262, 7
  %v5264 = vsub.s32 %v5261, %v5263
  %v5265 = vrot.slane %v5237, %v5264
  %v5266 = vcombine.low %v5244, %v5251
  %v5267 = vcombine.low %v5258, %v5265
  %v5269 = vunpack.c.l.s4 1966171168
  %v5270 = vunpack.c.0.s8 %v5269
  %v5271 = vlaneseq
  %v5272 = vshrl.u32 %v5271, 7
  %v5273 = vsub.s32 %v5270, %v5272
  %v5274 = vrot.slane %v5266, %v5273
  %v5276 = vunpack.c.l.s4 1966171168
  %v5277 = vunpack.c.0.s8 %v5276
  %v5278 = vlaneseq
  %v5279 = vshrl.u32 %v5278, 7
  %v5280 = vsub.s32 %v5277, %v5279
  %v5281 = vrot.slane %v5267, %v5280
  %v5282 = vcombine.low %v5274, %v5281
  %v5283 = vcombine.low %v4917, %v4918
  %v5284 = vcombine.low %v4919, %v4920
  %v5285 = vcombine.low %v4921, %v4922
  %v5286 = vcombine.low %v4923, %v4924
  %v5288 = vunpack.c.l.s4 1966171168
  %v5289 = vunpack.c.0.s8 %v5288
  %v5290 = vlaneseq
  %v5291 = vshrl.u32 %v5290, 7
  %v5292 = vsub.s32 %v5289, %v5291
  %v5293 = vrot.slane %v5283, %v5292
  %v5295 = vunpack.c.l.s4 1966171168
  %v5296 = vunpack.c.0.s8 %v5295
  %v5297 = vlaneseq
  %v5298 = vshrl.u32 %v5297, 7
  %v5299 = vsub.s32 %v5296, %v5298
  %v5300 = vrot.slane %v5284, %v5299
  %v5302 = vunpack.c.l.s4 1966171168
  %v5303 = vunpack.c.0.s8 %v5302
  %v5304 = vlaneseq
  %v5305 = vshrl.u32 %v5304, 7
  %v5306 = vsub.s32 %v5303, %v5305
  %v5307 = vrot.slane %v5285, %v5306
  %v5309 = vunpack.c.l.s4 1966171168
  %v5310 = vunpack.c.0.s8 %v5309
  %v5311 = vlaneseq
  %v5312 = vshrl.u32 %v5311, 7
  %v5313 = vsub.s32 %v5310, %v5312
  %v5314 = vrot.slane %v5286, %v5313
  %v5315 = vcombine.low %v5293, %v5300
  %v5316 = vcombine.low %v5307, %v5314
  %v5318 = vunpack.c.l.s4 1966171168
  %v5319 = vunpack.c.0.s8 %v5318
  %v5320 = vlaneseq
  %v5321 = vshrl.u32 %v5320, 7
  %v5322 = vsub.s32 %v5319, %v5321
  %v5323 = vrot.slane %v5315, %v5322
  %v5325 = vunpack.c.l.s4 1966171168
  %v5326 = vunpack.c.0.s8 %v5325
  %v5327 = vlaneseq
  %v5328 = vshrl.u32 %v5327, 7
  %v5329 = vsub.s32 %v5326, %v5328
  %v5330 = vrot.slane %v5316, %v5329
  %v5331 = vcombine.low %v5323, %v5330
  %v5332 = vcombine.low %v4925, %v4926
  %v5333 = vcombine.low %v4927, %v4928
  %v5334 = vcombine.low %v4929, %v4930
  %v5335 = vcombine.low %v4931, %v4932
  %v5337 = vunpack.c.l.s4 1966171168
  %v5338 = vunpack.c.0.s8 %v5337
  %v5339 = vlaneseq
  %v5340 = vshrl.u32 %v5339, 7
  %v5341 = vsub.s32 %v5338, %v5340
  %v5342 = vrot.slane %v5332, %v5341
  %v5344 = vunpack.c.l.s4 1966171168
  %v5345 = vunpack.c.0.s8 %v5344
  %v5346 = vlaneseq
  %v5347 = vshrl.u32 %v5346, 7
  %v5348 = vsub.s32 %v5345, %v5347
  %v5349 = vrot.slane %v5333, %v5348
  %v5351 = vunpack.c.l.s4 1966171168
  %v5352 = vunpack.c.0.s8 %v5351
  %v5353 = vlaneseq
  %v5354 = vshrl.u32 %v5353, 7
  %v5355 = vsub.s32 %v5352, %v5354
  %v5356 = vrot.slane %v5334, %v5355
  %v5358 = vunpack.c.l.s4 1966171168
  %v5359 = vunpack.c.0.s8 %v5358
  %v5360 = vlaneseq
  %v5361 = vshrl.u32 %v5360, 7
  %v5362 = vsub.s32 %v5359, %v5361
  %v5363 = vrot.slane %v5335, %v5362
  %v5364 = vcombine.low %v5342, %v5349
  %v5365 = vcombine.low %v5356, %v5363
  %v5367 = vunpack.c.l.s4 1966171168
  %v5368 = vunpack.c.0.s8 %v5367
  %v5369 = vlaneseq
  %v5370 = vshrl.u32 %v5369, 7
  %v5371 = vsub.s32 %v5368, %v5370
  %v5372 = vrot.slane %v5364, %v5371
  %v5374 = vunpack.c.l.s4 1966171168
  %v5375 = vunpack.c.0.s8 %v5374
  %v5376 = vlaneseq
  %v5377 = vshrl.u32 %v5376, 7
  %v5378 = vsub.s32 %v5375, %v5377
  %v5379 = vrot.slane %v5365, %v5378
  %v5380 = vcombine.low %v5372, %v5379
  %v5381 = vcombine.low %v4933, %v4934
  %v5382 = vcombine.low %v4935, %v4936
  %v5383 = vcombine.low %v4937, %v4938
  %v5385 = vunpack.c.l.s4 1966171168
  %v5386 = vunpack.c.0.s8 %v5385
  %v5387 = vlaneseq
  %v5388 = vshrl.u32 %v5387, 7
  %v5389 = vsub.s32 %v5386, %v5388
  %v5390 = vrot.slane %v5381, %v5389
  %v5392 = vunpack.c.l.s4 1966171168
  %v5393 = vunpack.c.0.s8 %v5392
  %v5394 = vlaneseq
  %v5395 = vshrl.u32 %v5394, 7
  %v5396 = vsub.s32 %v5393, %v5395
  %v5397 = vrot.slane %v5382, %v5396
  %v5399 = vunpack.c.l.s4 1966171168
  %v5400 = vunpack.c.0.s8 %v5399
  %v5401 = vlaneseq
  %v5402 = vshrl.u32 %v5401, 7
  %v5403 = vsub.s32 %v5400, %v5402
  %v5404 = vrot.slane %v5383, %v5403
  %v5406 = vunpack.c.l.s4 1966171168
  %v5407 = vunpack.c.0.s8 %v5406
  %v5408 = vlaneseq
  %v5409 = vshrl.u32 %v5408, 7
  %v5410 = vsub.s32 %v5407, %v5409
  %v5411 = vrot.slane %v4939, %v5410
  %v5412 = vcombine.low %v5390, %v5397
  %v5413 = vcombine.low %v5404, %v5411
  %v5415 = vunpack.c.l.s4 1966171168
  %v5416 = vunpack.c.0.s8 %v5415
  %v5417 = vlaneseq
  %v5418 = vshrl.u32 %v5417, 7
  %v5419 = vsub.s32 %v5416, %v5418
  %v5420 = vrot.slane %v5412, %v5419
  %v5422 = vunpack.c.l.s4 1966171168
  %v5423 = vunpack.c.0.s8 %v5422
  %v5424 = vlaneseq
  %v5425 = vshrl.u32 %v5424, 7
  %v5426 = vsub.s32 %v5423, %v5425
  %v5427 = vrot.slane %v5413, %v5426
  %v5428 = vcombine.low %v5420, %v5427
  %v5434 = vunpack.c.l.b16 %v4852
  %v5435 = vunpack.c.l.b16 %v4853
  %v5436 = vunpack.c.l.b16 %v4854
  %v5437 = vunpack.c.l.b16 %v4855
  %v5438 = vunpack.c.l.b16 %v4856
  %v5439 = vpack.c.b16 %v5435, %v5434
  %v5440 = vpack.c.b16 %v5437, %v5436
  %v5441 = vpack.c.b16 %v5438, %v5438
  %vm5444 = vcmask 293888
  %v5446 = vsel %vm5444, %v4988, 0
  %v5449 = vsel %vm5444, %v5037, 0
  %v5452 = vsel %vm5444, %v5086, 0
  %v5455 = vsel %vm5444, %v5135, 0
  %v5458 = vsel %vm5444, %v5184, 0
  %v5461 = vsel %vm5444, %v5233, 0
  %v5464 = vsel %vm5444, %v5282, 0
  %v5467 = vsel %vm5444, %v5331, 0
  %v5470 = vsel %vm5444, %v5380, 0
  %v5473 = vsel %vm5444, %v5428, 0
  %vm5475 = vcmask 1041408
  %v5477 = vsel %vm5475, %v5441, 0
  %5479 = vmatprep.subr.bf16.mxu0 0
  %5480 = vmatpush1.bf16.msra.mxu0 %v5439
  %5481 = vmatprep.subr.bf16.mxu0 0
  %5482 = vmatpush1.bf16.msra.mxu0 %v5440
  %5483 = vmatprep.subr.bf16.mxu0 0
  %5484 = vmatpush1.bf16.msra.mxu0 %v5477
  %5485 = vmatprep.subr.bf16.mxu0 0
  %5486 = vmatpush1.bf16.msra.mxu0 0
  %5487 = vmatprep.subr.bf16.mxu0 0
  %5488 = vmatpush1.bf16.msra.mxu0 0
  %5489 = vmatprep.subr.bf16.mxu0 0
  %5490 = vmatpush1.bf16.msra.mxu0 0
  %5491 = vmatprep.subr.bf16.mxu0 0
  %5492 = vmatpush1.bf16.msra.mxu0 0
  %5493 = vmatprep.subr.bf16.mxu0 0
  %5494 = vmatpush1.bf16.msra.mxu0 0
  %5495 = vmatprep.subr.bf16.mxu0 0
  %5496 = vmatpush1.bf16.msra.mxu0 0
  %5497 = vmatprep.subr.bf16.mxu0 0
  %5498 = vmatpush1.bf16.msra.mxu0 0
  %5499 = vmatprep.subr.bf16.mxu0 0
  %5500 = vmatpush1.bf16.msra.mxu0 0
  %5501 = vmatprep.subr.bf16.mxu0 0
  %5502 = vmatpush1.bf16.msra.mxu0 0
  %5503 = vmatprep.subr.bf16.mxu0 0
  %5504 = vmatpush1.bf16.msra.mxu0 0
  %5505 = vmatprep.subr.bf16.mxu0 0
  %5506 = vmatpush1.bf16.msra.mxu0 0
  %5507 = vmatprep.subr.bf16.mxu0 0
  %5508 = vmatpush1.bf16.msra.mxu0 0
  %5509 = vmatprep.subr.bf16.mxu0 0
  %5510 = vmatpush1.bf16.msra.mxu0 0
  %5511 = vmatprep.mubr.bf16.mxu0 0
  %5512 = vmatmul.mubr.bf16.gmra.mrb[0].mxu0 %v5446
  %v5513 = vpop.f32.mrb[0].mxu0
  %v5514 = vadd.f32 %v4860, %v5513
  %v5515 = vpop.f32.mrb[0].mxu0
  %v5516 = vpop.f32.mrb[0].mxu0
  %v5517 = vadd.f32 %v4860, %v5516
  %v5518 = vpop.f32.mrb[0].mxu0
  %5519 = vmatprep.mubr.bf16.mxu0 0
  %5520 = vmatmul.mubr.bf16.gmra.mrb[0].mxu0 %v5449
  %v5521 = vpop.f32.mrb[0].mxu0
  %v5522 = vadd.f32 %v4860, %v5521
  %v5523 = vpop.f32.mrb[0].mxu0
  %v5524 = vpop.f32.mrb[0].mxu0
  %v5525 = vadd.f32 %v4860, %v5524
  %v5526 = vpop.f32.mrb[0].mxu0
  %5527 = vmatprep.mubr.bf16.mxu0 0
  %5528 = vmatmul.mubr.bf16.gmra.mrb[0].mxu0 %v5452
  %v5529 = vpop.f32.mrb[0].mxu0
  %v5530 = vadd.f32 %v4860, %v5529
  %v5531 = vpop.f32.mrb[0].mxu0
  %v5532 = vpop.f32.mrb[0].mxu0
  %v5533 = vadd.f32 %v4860, %v5532
  %v5534 = vpop.f32.mrb[0].mxu0
  %5535 = vmatprep.mubr.bf16.mxu0 0
  %5536 = vmatmul.mubr.bf16.gmra.mrb[0].mxu0 %v5455
  %v5537 = vpop.f32.mrb[0].mxu0
  %v5538 = vadd.f32 %v4860, %v5537
  %v5539 = vpop.f32.mrb[0].mxu0
  %v5540 = vpop.f32.mrb[0].mxu0
  %v5541 = vadd.f32 %v4860, %v5540
  %v5542 = vpop.f32.mrb[0].mxu0
  %5543 = vmatprep.mubr.bf16.mxu0 0
  %5544 = vmatmul.mubr.bf16.gmra.mrb[0].mxu0 %v5458
  %v5545 = vpop.f32.mrb[0].mxu0
  %v5546 = vadd.f32 %v4860, %v5545
  %v5547 = vpop.f32.mrb[0].mxu0
  %v5548 = vpop.f32.mrb[0].mxu0
  %v5549 = vadd.f32 %v4860, %v5548
  %v5550 = vpop.f32.mrb[0].mxu0
  %5551 = vmatprep.mubr.bf16.mxu0 0
  %5552 = vmatmul.mubr.bf16.gmra.mrb[0].mxu0 %v5461
  %v5553 = vpop.f32.mrb[0].mxu0
  %v5554 = vadd.f32 %v4860, %v5553
  %v5555 = vpop.f32.mrb[0].mxu0
  %v5556 = vpop.f32.mrb[0].mxu0
  %v5557 = vadd.f32 %v4860, %v5556
  %v5558 = vpop.f32.mrb[0].mxu0
  %5559 = vmatprep.mubr.bf16.mxu0 0
  %5560 = vmatmul.mubr.bf16.gmra.mrb[0].mxu0 %v5464
  %v5561 = vpop.f32.mrb[0].mxu0
  %v5562 = vadd.f32 %v4860, %v5561
  %v5563 = vpop.f32.mrb[0].mxu0
  %v5564 = vpop.f32.mrb[0].mxu0
  %v5565 = vadd.f32 %v4860, %v5564
  %v5566 = vpop.f32.mrb[0].mxu0
  %5567 = vmatprep.mubr.bf16.mxu0 0
  %5568 = vmatmul.mubr.bf16.gmra.mrb[0].mxu0 %v5467
  %v5569 = vpop.f32.mrb[0].mxu0
  %v5570 = vadd.f32 %v4860, %v5569
  %v5571 = vpop.f32.mrb[0].mxu0
  %v5572 = vpop.f32.mrb[0].mxu0
  %v5573 = vadd.f32 %v4860, %v5572
  %v5574 = vpop.f32.mrb[0].mxu0
  %5575 = vmatprep.mubr.bf16.mxu0 0
  %5576 = vmatmul.mubr.bf16.gmra.mrb[0].mxu0 %v5470
  %v5577 = vpop.f32.mrb[0].mxu0
  %v5578 = vadd.f32 %v4860, %v5577
  %v5579 = vpop.f32.mrb[0].mxu0
  %v5580 = vpop.f32.mrb[0].mxu0
  %v5581 = vadd.f32 %v4860, %v5580
  %v5582 = vpop.f32.mrb[0].mxu0
  %5583 = vmatprep.mubr.bf16.mxu0 0
  %5584 = vmatmul.mubr.bf16.gmra.mrb[0].mxu0 %v5473
  %v5585 = vpop.f32.mrb[0].mxu0
  %v5586 = vadd.f32 %v4860, %v5585
  %v5587 = vpop.f32.mrb[0].mxu0
  %v5588 = vpop.f32.mrb[0].mxu0
  %v5589 = vadd.f32 %v4860, %v5588
  %v5590 = vpop.f32.mrb[0].mxu0
  %5591 = vdwg.mxu0
  %v5592 = vmax.f32 %v5514, 0.0
  %v5593 = vmax.f32 %v5517, 0.0
  %v5594 = vmax.f32 %v5522, 0.0
  %v5595 = vmax.f32 %v5525, 0.0
  %v5596 = vmax.f32 %v5530, 0.0
  %v5597 = vmax.f32 %v5533, 0.0
  %v5598 = vmax.f32 %v5538, 0.0
  %v5599 = vmax.f32 %v5541, 0.0
  %v5600 = vmax.f32 %v5546, 0.0
  %v5601 = vmax.f32 %v5549, 0.0
  %v5602 = vmax.f32 %v5554, 0.0
  %v5603 = vmax.f32 %v5557, 0.0
  %v5604 = vmax.f32 %v5562, 0.0
  %v5605 = vmax.f32 %v5565, 0.0
  %v5606 = vmax.f32 %v5570, 0.0
  %v5607 = vmax.f32 %v5573, 0.0
  %v5608 = vmax.f32 %v5578, 0.0
  %v5609 = vmax.f32 %v5581, 0.0
  %v5610 = vmax.f32 %v5586, 0.0
  %v5611 = vmax.f32 %v5589, 0.0
  %v5632 = vcombine.high %v5592, %v5592
  %v5634 = vunpack.c.l.s4 1966171168
  %v5635 = vunpack.c.0.s8 %v5634
  %v5636 = vlaneseq
  %v5637 = vshrl.u32 %v5636, 7
  %v5638 = vsub.s32 %v5635, %v5637
  %v5639 = vrot.slane %v5592, %v5638
  %v5641 = vunpack.c.l.s4 1966171168
  %v5642 = vunpack.c.0.s8 %v5641
  %v5643 = vlaneseq
  %v5644 = vshrl.u32 %v5643, 7
  %v5645 = vsub.s32 %v5642, %v5644
  %v5646 = vrot.slane %v5632, %v5645
  %v5647 = vcombine.high %v5639, %v5639
  %v5648 = vcombine.high %v5646, %v5646
  %v5650 = vunpack.c.l.s4 1966171168
  %v5651 = vunpack.c.0.s8 %v5650
  %v5652 = vlaneseq
  %v5653 = vshrl.u32 %v5652, 7
  %v5654 = vsub.s32 %v5651, %v5653
  %v5655 = vrot.slane %v5639, %v5654
  %v5657 = vunpack.c.l.s4 1966171168
  %v5658 = vunpack.c.0.s8 %v5657
  %v5659 = vlaneseq
  %v5660 = vshrl.u32 %v5659, 7
  %v5661 = vsub.s32 %v5658, %v5660
  %v5662 = vrot.slane %v5646, %v5661
  %v5664 = vunpack.c.l.s4 1966171168
  %v5665 = vunpack.c.0.s8 %v5664
  %v5666 = vlaneseq
  %v5667 = vshrl.u32 %v5666, 7
  %v5668 = vsub.s32 %v5665, %v5667
  %v5669 = vrot.slane %v5647, %v5668
  %v5671 = vunpack.c.l.s4 1966171168
  %v5672 = vunpack.c.0.s8 %v5671
  %v5673 = vlaneseq
  %v5674 = vshrl.u32 %v5673, 7
  %v5675 = vsub.s32 %v5672, %v5674
  %v5676 = vrot.slane %v5648, %v5675
  %v5677 = vcombine.high %v5655, %v5655
  %v5678 = vcombine.high %v5662, %v5662
  %v5679 = vcombine.high %v5669, %v5669
  %v5680 = vcombine.high %v5676, %v5676
  %v5681 = vcombine.high %v5593, %v5593
  %v5683 = vunpack.c.l.s4 1966171168
  %v5684 = vunpack.c.0.s8 %v5683
  %v5685 = vlaneseq
  %v5686 = vshrl.u32 %v5685, 7
  %v5687 = vsub.s32 %v5684, %v5686
  %v5688 = vrot.slane %v5593, %v5687
  %v5690 = vunpack.c.l.s4 1966171168
  %v5691 = vunpack.c.0.s8 %v5690
  %v5692 = vlaneseq
  %v5693 = vshrl.u32 %v5692, 7
  %v5694 = vsub.s32 %v5691, %v5693
  %v5695 = vrot.slane %v5681, %v5694
  %v5696 = vcombine.high %v5688, %v5688
  %v5697 = vcombine.high %v5695, %v5695
  %v5699 = vunpack.c.l.s4 1966171168
  %v5700 = vunpack.c.0.s8 %v5699
  %v5701 = vlaneseq
  %v5702 = vshrl.u32 %v5701, 7
  %v5703 = vsub.s32 %v5700, %v5702
  %v5704 = vrot.slane %v5688, %v5703
  %v5706 = vunpack.c.l.s4 1966171168
  %v5707 = vunpack.c.0.s8 %v5706
  %v5708 = vlaneseq
  %v5709 = vshrl.u32 %v5708, 7
  %v5710 = vsub.s32 %v5707, %v5709
  %v5711 = vrot.slane %v5695, %v5710
  %v5713 = vunpack.c.l.s4 1966171168
  %v5714 = vunpack.c.0.s8 %v5713
  %v5715 = vlaneseq
  %v5716 = vshrl.u32 %v5715, 7
  %v5717 = vsub.s32 %v5714, %v5716
  %v5718 = vrot.slane %v5696, %v5717
  %v5720 = vunpack.c.l.s4 1966171168
  %v5721 = vunpack.c.0.s8 %v5720
  %v5722 = vlaneseq
  %v5723 = vshrl.u32 %v5722, 7
  %v5724 = vsub.s32 %v5721, %v5723
  %v5725 = vrot.slane %v5697, %v5724
  %v5726 = vcombine.high %v5704, %v5704
  %v5727 = vcombine.high %v5711, %v5711
  %v5728 = vcombine.high %v5718, %v5718
  %v5729 = vcombine.high %v5725, %v5725
  %v5730 = vcombine.high %v5594, %v5594
  %v5732 = vunpack.c.l.s4 1966171168
  %v5733 = vunpack.c.0.s8 %v5732
  %v5734 = vlaneseq
  %v5735 = vshrl.u32 %v5734, 7
  %v5736 = vsub.s32 %v5733, %v5735
  %v5737 = vrot.slane %v5594, %v5736
  %v5739 = vunpack.c.l.s4 1966171168
  %v5740 = vunpack.c.0.s8 %v5739
  %v5741 = vlaneseq
  %v5742 = vshrl.u32 %v5741, 7
  %v5743 = vsub.s32 %v5740, %v5742
  %v5744 = vrot.slane %v5730, %v5743
  %v5745 = vcombine.high %v5737, %v5737
  %v5746 = vcombine.high %v5744, %v5744
  %v5748 = vunpack.c.l.s4 1966171168
  %v5749 = vunpack.c.0.s8 %v5748
  %v5750 = vlaneseq
  %v5751 = vshrl.u32 %v5750, 7
  %v5752 = vsub.s32 %v5749, %v5751
  %v5753 = vrot.slane %v5737, %v5752
  %v5755 = vunpack.c.l.s4 1966171168
  %v5756 = vunpack.c.0.s8 %v5755
  %v5757 = vlaneseq
  %v5758 = vshrl.u32 %v5757, 7
  %v5759 = vsub.s32 %v5756, %v5758
  %v5760 = vrot.slane %v5744, %v5759
  %v5762 = vunpack.c.l.s4 1966171168
  %v5763 = vunpack.c.0.s8 %v5762
  %v5764 = vlaneseq
  %v5765 = vshrl.u32 %v5764, 7
  %v5766 = vsub.s32 %v5763, %v5765
  %v5767 = vrot.slane %v5745, %v5766
  %v5769 = vunpack.c.l.s4 1966171168
  %v5770 = vunpack.c.0.s8 %v5769
  %v5771 = vlaneseq
  %v5772 = vshrl.u32 %v5771, 7
  %v5773 = vsub.s32 %v5770, %v5772
  %v5774 = vrot.slane %v5746, %v5773
  %v5775 = vcombine.high %v5753, %v5753
  %v5776 = vcombine.high %v5760, %v5760
  %v5777 = vcombine.high %v5767, %v5767
  %v5778 = vcombine.high %v5774, %v5774
  %v5779 = vcombine.high %v5595, %v5595
  %v5781 = vunpack.c.l.s4 1966171168
  %v5782 = vunpack.c.0.s8 %v5781
  %v5783 = vlaneseq
  %v5784 = vshrl.u32 %v5783, 7
  %v5785 = vsub.s32 %v5782, %v5784
  %v5786 = vrot.slane %v5595, %v5785
  %v5788 = vunpack.c.l.s4 1966171168
  %v5789 = vunpack.c.0.s8 %v5788
  %v5790 = vlaneseq
  %v5791 = vshrl.u32 %v5790, 7
  %v5792 = vsub.s32 %v5789, %v5791
  %v5793 = vrot.slane %v5779, %v5792
  %v5794 = vcombine.high %v5786, %v5786
  %v5795 = vcombine.high %v5793, %v5793
  %v5797 = vunpack.c.l.s4 1966171168
  %v5798 = vunpack.c.0.s8 %v5797
  %v5799 = vlaneseq
  %v5800 = vshrl.u32 %v5799, 7
  %v5801 = vsub.s32 %v5798, %v5800
  %v5802 = vrot.slane %v5786, %v5801
  %v5804 = vunpack.c.l.s4 1966171168
  %v5805 = vunpack.c.0.s8 %v5804
  %v5806 = vlaneseq
  %v5807 = vshrl.u32 %v5806, 7
  %v5808 = vsub.s32 %v5805, %v5807
  %v5809 = vrot.slane %v5793, %v5808
  %v5811 = vunpack.c.l.s4 1966171168
  %v5812 = vunpack.c.0.s8 %v5811
  %v5813 = vlaneseq
  %v5814 = vshrl.u32 %v5813, 7
  %v5815 = vsub.s32 %v5812, %v5814
  %v5816 = vrot.slane %v5794, %v5815
  %v5818 = vunpack.c.l.s4 1966171168
  %v5819 = vunpack.c.0.s8 %v5818
  %v5820 = vlaneseq
  %v5821 = vshrl.u32 %v5820, 7
  %v5822 = vsub.s32 %v5819, %v5821
  %v5823 = vrot.slane %v5795, %v5822
  %v5824 = vcombine.high %v5802, %v5802
  %v5825 = vcombine.high %v5809, %v5809
  %v5826 = vcombine.high %v5816, %v5816
  %v5827 = vcombine.high %v5823, %v5823
  %v5828 = vcombine.high %v5596, %v5596
  %v5830 = vunpack.c.l.s4 1966171168
  %v5831 = vunpack.c.0.s8 %v5830
  %v5832 = vlaneseq
  %v5833 = vshrl.u32 %v5832, 7
  %v5834 = vsub.s32 %v5831, %v5833
  %v5835 = vrot.slane %v5596, %v5834
  %v5837 = vunpack.c.l.s4 1966171168
  %v5838 = vunpack.c.0.s8 %v5837
  %v5839 = vlaneseq
  %v5840 = vshrl.u32 %v5839, 7
  %v5841 = vsub.s32 %v5838, %v5840
  %v5842 = vrot.slane %v5828, %v5841
  %v5843 = vcombine.high %v5835, %v5835
  %v5844 = vcombine.high %v5842, %v5842
  %v5846 = vunpack.c.l.s4 1966171168
  %v5847 = vunpack.c.0.s8 %v5846
  %v5848 = vlaneseq
  %v5849 = vshrl.u32 %v5848, 7
  %v5850 = vsub.s32 %v5847, %v5849
  %v5851 = vrot.slane %v5835, %v5850
  %v5853 = vunpack.c.l.s4 1966171168
  %v5854 = vunpack.c.0.s8 %v5853
  %v5855 = vlaneseq
  %v5856 = vshrl.u32 %v5855, 7
  %v5857 = vsub.s32 %v5854, %v5856
  %v5858 = vrot.slane %v5842, %v5857
  %v5860 = vunpack.c.l.s4 1966171168
  %v5861 = vunpack.c.0.s8 %v5860
  %v5862 = vlaneseq
  %v5863 = vshrl.u32 %v5862, 7
  %v5864 = vsub.s32 %v5861, %v5863
  %v5865 = vrot.slane %v5843, %v5864
  %v5867 = vunpack.c.l.s4 1966171168
  %v5868 = vunpack.c.0.s8 %v5867
  %v5869 = vlaneseq
  %v5870 = vshrl.u32 %v5869, 7
  %v5871 = vsub.s32 %v5868, %v5870
  %v5872 = vrot.slane %v5844, %v5871
  %v5873 = vcombine.high %v5851, %v5851
  %v5874 = vcombine.high %v5858, %v5858
  %v5875 = vcombine.high %v5865, %v5865
  %v5876 = vcombine.high %v5872, %v5872
  %v5877 = vcombine.high %v5597, %v5597
  %v5879 = vunpack.c.l.s4 1966171168
  %v5880 = vunpack.c.0.s8 %v5879
  %v5881 = vlaneseq
  %v5882 = vshrl.u32 %v5881, 7
  %v5883 = vsub.s32 %v5880, %v5882
  %v5884 = vrot.slane %v5597, %v5883
  %v5886 = vunpack.c.l.s4 1966171168
  %v5887 = vunpack.c.0.s8 %v5886
  %v5888 = vlaneseq
  %v5889 = vshrl.u32 %v5888, 7
  %v5890 = vsub.s32 %v5887, %v5889
  %v5891 = vrot.slane %v5877, %v5890
  %v5892 = vcombine.high %v5884, %v5884
  %v5893 = vcombine.high %v5891, %v5891
  %v5895 = vunpack.c.l.s4 1966171168
  %v5896 = vunpack.c.0.s8 %v5895
  %v5897 = vlaneseq
  %v5898 = vshrl.u32 %v5897, 7
  %v5899 = vsub.s32 %v5896, %v5898
  %v5900 = vrot.slane %v5884, %v5899
  %v5902 = vunpack.c.l.s4 1966171168
  %v5903 = vunpack.c.0.s8 %v5902
  %v5904 = vlaneseq
  %v5905 = vshrl.u32 %v5904, 7
  %v5906 = vsub.s32 %v5903, %v5905
  %v5907 = vrot.slane %v5891, %v5906
  %v5909 = vunpack.c.l.s4 1966171168
  %v5910 = vunpack.c.0.s8 %v5909
  %v5911 = vlaneseq
  %v5912 = vshrl.u32 %v5911, 7
  %v5913 = vsub.s32 %v5910, %v5912
  %v5914 = vrot.slane %v5892, %v5913
  %v5916 = vunpack.c.l.s4 1966171168
  %v5917 = vunpack.c.0.s8 %v5916
  %v5918 = vlaneseq
  %v5919 = vshrl.u32 %v5918, 7
  %v5920 = vsub.s32 %v5917, %v5919
  %v5921 = vrot.slane %v5893, %v5920
  %v5922 = vcombine.high %v5900, %v5900
  %v5923 = vcombine.high %v5907, %v5907
  %v5924 = vcombine.high %v5914, %v5914
  %v5925 = vcombine.high %v5921, %v5921
  %v5926 = vcombine.high %v5598, %v5598
  %v5928 = vunpack.c.l.s4 1966171168
  %v5929 = vunpack.c.0.s8 %v5928
  %v5930 = vlaneseq
  %v5931 = vshrl.u32 %v5930, 7
  %v5932 = vsub.s32 %v5929, %v5931
  %v5933 = vrot.slane %v5598, %v5932
  %v5935 = vunpack.c.l.s4 1966171168
  %v5936 = vunpack.c.0.s8 %v5935
  %v5937 = vlaneseq
  %v5938 = vshrl.u32 %v5937, 7
  %v5939 = vsub.s32 %v5936, %v5938
  %v5940 = vrot.slane %v5926, %v5939
  %v5941 = vcombine.high %v5933, %v5933
  %v5942 = vcombine.high %v5940, %v5940
  %v5944 = vunpack.c.l.s4 1966171168
  %v5945 = vunpack.c.0.s8 %v5944
  %v5946 = vlaneseq
  %v5947 = vshrl.u32 %v5946, 7
  %v5948 = vsub.s32 %v5945, %v5947
  %v5949 = vrot.slane %v5933, %v5948
  %v5951 = vunpack.c.l.s4 1966171168
  %v5952 = vunpack.c.0.s8 %v5951
  %v5953 = vlaneseq
  %v5954 = vshrl.u32 %v5953, 7
  %v5955 = vsub.s32 %v5952, %v5954
  %v5956 = vrot.slane %v5940, %v5955
  %v5958 = vunpack.c.l.s4 1966171168
  %v5959 = vunpack.c.0.s8 %v5958
  %v5960 = vlaneseq
  %v5961 = vshrl.u32 %v5960, 7
  %v5962 = vsub.s32 %v5959, %v5961
  %v5963 = vrot.slane %v5941, %v5962
  %v5965 = vunpack.c.l.s4 1966171168
  %v5966 = vunpack.c.0.s8 %v5965
  %v5967 = vlaneseq
  %v5968 = vshrl.u32 %v5967, 7
  %v5969 = vsub.s32 %v5966, %v5968
  %v5970 = vrot.slane %v5942, %v5969
  %v5971 = vcombine.high %v5949, %v5949
  %v5972 = vcombine.high %v5956, %v5956
  %v5973 = vcombine.high %v5963, %v5963
  %v5974 = vcombine.high %v5970, %v5970
  %v5975 = vcombine.high %v5599, %v5599
  %v5977 = vunpack.c.l.s4 1966171168
  %v5978 = vunpack.c.0.s8 %v5977
  %v5979 = vlaneseq
  %v5980 = vshrl.u32 %v5979, 7
  %v5981 = vsub.s32 %v5978, %v5980
  %v5982 = vrot.slane %v5599, %v5981
  %v5984 = vunpack.c.l.s4 1966171168
  %v5985 = vunpack.c.0.s8 %v5984
  %v5986 = vlaneseq
  %v5987 = vshrl.u32 %v5986, 7
  %v5988 = vsub.s32 %v5985, %v5987
  %v5989 = vrot.slane %v5975, %v5988
  %v5990 = vcombine.high %v5982, %v5982
  %v5991 = vcombine.high %v5989, %v5989
  %v5993 = vunpack.c.l.s4 1966171168
  %v5994 = vunpack.c.0.s8 %v5993
  %v5995 = vlaneseq
  %v5996 = vshrl.u32 %v5995, 7
  %v5997 = vsub.s32 %v5994, %v5996
  %v5998 = vrot.slane %v5982, %v5997
  %v6000 = vunpack.c.l.s4 1966171168
  %v6001 = vunpack.c.0.s8 %v6000
  %v6002 = vlaneseq
  %v6003 = vshrl.u32 %v6002, 7
  %v6004 = vsub.s32 %v6001, %v6003
  %v6005 = vrot.slane %v5989, %v6004
  %v6007 = vunpack.c.l.s4 1966171168
  %v6008 = vunpack.c.0.s8 %v6007
  %v6009 = vlaneseq
  %v6010 = vshrl.u32 %v6009, 7
  %v6011 = vsub.s32 %v6008, %v6010
  %v6012 = vrot.slane %v5990, %v6011
  %v6014 = vunpack.c.l.s4 1966171168
  %v6015 = vunpack.c.0.s8 %v6014
  %v6016 = vlaneseq
  %v6017 = vshrl.u32 %v6016, 7
  %v6018 = vsub.s32 %v6015, %v6017
  %v6019 = vrot.slane %v5991, %v6018
  %v6020 = vcombine.high %v5998, %v5998
  %v6021 = vcombine.high %v6005, %v6005
  %v6022 = vcombine.high %v6012, %v6012
  %v6023 = vcombine.high %v6019, %v6019
  %v6024 = vcombine.high %v5600, %v5600
  %v6026 = vunpack.c.l.s4 1966171168
  %v6027 = vunpack.c.0.s8 %v6026
  %v6028 = vlaneseq
  %v6029 = vshrl.u32 %v6028, 7
  %v6030 = vsub.s32 %v6027, %v6029
  %v6031 = vrot.slane %v5600, %v6030
  %v6033 = vunpack.c.l.s4 1966171168
  %v6034 = vunpack.c.0.s8 %v6033
  %v6035 = vlaneseq
  %v6036 = vshrl.u32 %v6035, 7
  %v6037 = vsub.s32 %v6034, %v6036
  %v6038 = vrot.slane %v6024, %v6037
  %v6039 = vcombine.high %v6031, %v6031
  %v6040 = vcombine.high %v6038, %v6038
  %v6042 = vunpack.c.l.s4 1966171168
  %v6043 = vunpack.c.0.s8 %v6042
  %v6044 = vlaneseq
  %v6045 = vshrl.u32 %v6044, 7
  %v6046 = vsub.s32 %v6043, %v6045
  %v6047 = vrot.slane %v6031, %v6046
  %v6049 = vunpack.c.l.s4 1966171168
  %v6050 = vunpack.c.0.s8 %v6049
  %v6051 = vlaneseq
  %v6052 = vshrl.u32 %v6051, 7
  %v6053 = vsub.s32 %v6050, %v6052
  %v6054 = vrot.slane %v6038, %v6053
  %v6056 = vunpack.c.l.s4 1966171168
  %v6057 = vunpack.c.0.s8 %v6056
  %v6058 = vlaneseq
  %v6059 = vshrl.u32 %v6058, 7
  %v6060 = vsub.s32 %v6057, %v6059
  %v6061 = vrot.slane %v6039, %v6060
  %v6063 = vunpack.c.l.s4 1966171168
  %v6064 = vunpack.c.0.s8 %v6063
  %v6065 = vlaneseq
  %v6066 = vshrl.u32 %v6065, 7
  %v6067 = vsub.s32 %v6064, %v6066
  %v6068 = vrot.slane %v6040, %v6067
  %v6069 = vcombine.high %v6047, %v6047
  %v6070 = vcombine.high %v6054, %v6054
  %v6071 = vcombine.high %v6061, %v6061
  %v6072 = vcombine.high %v6068, %v6068
  %v6073 = vcombine.high %v5601, %v5601
  %v6075 = vunpack.c.l.s4 1966171168
  %v6076 = vunpack.c.0.s8 %v6075
  %v6077 = vlaneseq
  %v6078 = vshrl.u32 %v6077, 7
  %v6079 = vsub.s32 %v6076, %v6078
  %v6080 = vrot.slane %v5601, %v6079
  %v6082 = vunpack.c.l.s4 1966171168
  %v6083 = vunpack.c.0.s8 %v6082
  %v6084 = vlaneseq
  %v6085 = vshrl.u32 %v6084, 7
  %v6086 = vsub.s32 %v6083, %v6085
  %v6087 = vrot.slane %v6073, %v6086
  %v6088 = vcombine.high %v6080, %v6080
  %v6089 = vcombine.high %v6087, %v6087
  %v6091 = vunpack.c.l.s4 1966171168
  %v6092 = vunpack.c.0.s8 %v6091
  %v6093 = vlaneseq
  %v6094 = vshrl.u32 %v6093, 7
  %v6095 = vsub.s32 %v6092, %v6094
  %v6096 = vrot.slane %v6080, %v6095
  %v6098 = vunpack.c.l.s4 1966171168
  %v6099 = vunpack.c.0.s8 %v6098
  %v6100 = vlaneseq
  %v6101 = vshrl.u32 %v6100, 7
  %v6102 = vsub.s32 %v6099, %v6101
  %v6103 = vrot.slane %v6087, %v6102
  %v6105 = vunpack.c.l.s4 1966171168
  %v6106 = vunpack.c.0.s8 %v6105
  %v6107 = vlaneseq
  %v6108 = vshrl.u32 %v6107, 7
  %v6109 = vsub.s32 %v6106, %v6108
  %v6110 = vrot.slane %v6088, %v6109
  %v6112 = vunpack.c.l.s4 1966171168
  %v6113 = vunpack.c.0.s8 %v6112
  %v6114 = vlaneseq
  %v6115 = vshrl.u32 %v6114, 7
  %v6116 = vsub.s32 %v6113, %v6115
  %v6117 = vrot.slane %v6089, %v6116
  %v6118 = vcombine.high %v6096, %v6096
  %v6119 = vcombine.high %v6103, %v6103
  %v6120 = vcombine.high %v6110, %v6110
  %v6121 = vcombine.high %v6117, %v6117
  %v6122 = vcombine.high %v5602, %v5602
  %v6124 = vunpack.c.l.s4 1966171168
  %v6125 = vunpack.c.0.s8 %v6124
  %v6126 = vlaneseq
  %v6127 = vshrl.u32 %v6126, 7
  %v6128 = vsub.s32 %v6125, %v6127
  %v6129 = vrot.slane %v5602, %v6128
  %v6131 = vunpack.c.l.s4 1966171168
  %v6132 = vunpack.c.0.s8 %v6131
  %v6133 = vlaneseq
  %v6134 = vshrl.u32 %v6133, 7
  %v6135 = vsub.s32 %v6132, %v6134
  %v6136 = vrot.slane %v6122, %v6135
  %v6137 = vcombine.high %v6129, %v6129
  %v6138 = vcombine.high %v6136, %v6136
  %v6140 = vunpack.c.l.s4 1966171168
  %v6141 = vunpack.c.0.s8 %v6140
  %v6142 = vlaneseq
  %v6143 = vshrl.u32 %v6142, 7
  %v6144 = vsub.s32 %v6141, %v6143
  %v6145 = vrot.slane %v6129, %v6144
  %v6147 = vunpack.c.l.s4 1966171168
  %v6148 = vunpack.c.0.s8 %v6147
  %v6149 = vlaneseq
  %v6150 = vshrl.u32 %v6149, 7
  %v6151 = vsub.s32 %v6148, %v6150
  %v6152 = vrot.slane %v6136, %v6151
  %v6154 = vunpack.c.l.s4 1966171168
  %v6155 = vunpack.c.0.s8 %v6154
  %v6156 = vlaneseq
  %v6157 = vshrl.u32 %v6156, 7
  %v6158 = vsub.s32 %v6155, %v6157
  %v6159 = vrot.slane %v6137, %v6158
  %v6161 = vunpack.c.l.s4 1966171168
  %v6162 = vunpack.c.0.s8 %v6161
  %v6163 = vlaneseq
  %v6164 = vshrl.u32 %v6163, 7
  %v6165 = vsub.s32 %v6162, %v6164
  %v6166 = vrot.slane %v6138, %v6165
  %v6167 = vcombine.high %v6145, %v6145
  %v6168 = vcombine.high %v6152, %v6152
  %v6169 = vcombine.high %v6159, %v6159
  %v6170 = vcombine.high %v6166, %v6166
  %v6171 = vcombine.high %v5603, %v5603
  %v6173 = vunpack.c.l.s4 1966171168
  %v6174 = vunpack.c.0.s8 %v6173
  %v6175 = vlaneseq
  %v6176 = vshrl.u32 %v6175, 7
  %v6177 = vsub.s32 %v6174, %v6176
  %v6178 = vrot.slane %v5603, %v6177
  %v6180 = vunpack.c.l.s4 1966171168
  %v6181 = vunpack.c.0.s8 %v6180
  %v6182 = vlaneseq
  %v6183 = vshrl.u32 %v6182, 7
  %v6184 = vsub.s32 %v6181, %v6183
  %v6185 = vrot.slane %v6171, %v6184
  %v6186 = vcombine.high %v6178, %v6178
  %v6187 = vcombine.high %v6185, %v6185
  %v6189 = vunpack.c.l.s4 1966171168
  %v6190 = vunpack.c.0.s8 %v6189
  %v6191 = vlaneseq
  %v6192 = vshrl.u32 %v6191, 7
  %v6193 = vsub.s32 %v6190, %v6192
  %v6194 = vrot.slane %v6178, %v6193
  %v6196 = vunpack.c.l.s4 1966171168
  %v6197 = vunpack.c.0.s8 %v6196
  %v6198 = vlaneseq
  %v6199 = vshrl.u32 %v6198, 7
  %v6200 = vsub.s32 %v6197, %v6199
  %v6201 = vrot.slane %v6185, %v6200
  %v6203 = vunpack.c.l.s4 1966171168
  %v6204 = vunpack.c.0.s8 %v6203
  %v6205 = vlaneseq
  %v6206 = vshrl.u32 %v6205, 7
  %v6207 = vsub.s32 %v6204, %v6206
  %v6208 = vrot.slane %v6186, %v6207
  %v6210 = vunpack.c.l.s4 1966171168
  %v6211 = vunpack.c.0.s8 %v6210
  %v6212 = vlaneseq
  %v6213 = vshrl.u32 %v6212, 7
  %v6214 = vsub.s32 %v6211, %v6213
  %v6215 = vrot.slane %v6187, %v6214
  %v6216 = vcombine.high %v6194, %v6194
  %v6217 = vcombine.high %v6201, %v6201
  %v6218 = vcombine.high %v6208, %v6208
  %v6219 = vcombine.high %v6215, %v6215
  %v6220 = vcombine.high %v5604, %v5604
  %v6222 = vunpack.c.l.s4 1966171168
  %v6223 = vunpack.c.0.s8 %v6222
  %v6224 = vlaneseq
  %v6225 = vshrl.u32 %v6224, 7
  %v6226 = vsub.s32 %v6223, %v6225
  %v6227 = vrot.slane %v5604, %v6226
  %v6229 = vunpack.c.l.s4 1966171168
  %v6230 = vunpack.c.0.s8 %v6229
  %v6231 = vlaneseq
  %v6232 = vshrl.u32 %v6231, 7
  %v6233 = vsub.s32 %v6230, %v6232
  %v6234 = vrot.slane %v6220, %v6233
  %v6235 = vcombine.high %v6227, %v6227
  %v6236 = vcombine.high %v6234, %v6234
  %v6238 = vunpack.c.l.s4 1966171168
  %v6239 = vunpack.c.0.s8 %v6238
  %v6240 = vlaneseq
  %v6241 = vshrl.u32 %v6240, 7
  %v6242 = vsub.s32 %v6239, %v6241
  %v6243 = vrot.slane %v6227, %v6242
  %v6245 = vunpack.c.l.s4 1966171168
  %v6246 = vunpack.c.0.s8 %v6245
  %v6247 = vlaneseq
  %v6248 = vshrl.u32 %v6247, 7
  %v6249 = vsub.s32 %v6246, %v6248
  %v6250 = vrot.slane %v6234, %v6249
  %v6252 = vunpack.c.l.s4 1966171168
  %v6253 = vunpack.c.0.s8 %v6252
  %v6254 = vlaneseq
  %v6255 = vshrl.u32 %v6254, 7
  %v6256 = vsub.s32 %v6253, %v6255
  %v6257 = vrot.slane %v6235, %v6256
  %v6259 = vunpack.c.l.s4 1966171168
  %v6260 = vunpack.c.0.s8 %v6259
  %v6261 = vlaneseq
  %v6262 = vshrl.u32 %v6261, 7
  %v6263 = vsub.s32 %v6260, %v6262
  %v6264 = vrot.slane %v6236, %v6263
  %v6265 = vcombine.high %v6243, %v6243
  %v6266 = vcombine.high %v6250, %v6250
  %v6267 = vcombine.high %v6257, %v6257
  %v6268 = vcombine.high %v6264, %v6264
  %v6269 = vcombine.high %v5605, %v5605
  %v6271 = vunpack.c.l.s4 1966171168
  %v6272 = vunpack.c.0.s8 %v6271
  %v6273 = vlaneseq
  %v6274 = vshrl.u32 %v6273, 7
  %v6275 = vsub.s32 %v6272, %v6274
  %v6276 = vrot.slane %v5605, %v6275
  %v6278 = vunpack.c.l.s4 1966171168
  %v6279 = vunpack.c.0.s8 %v6278
  %v6280 = vlaneseq
  %v6281 = vshrl.u32 %v6280, 7
  %v6282 = vsub.s32 %v6279, %v6281
  %v6283 = vrot.slane %v6269, %v6282
  %v6284 = vcombine.high %v6276, %v6276
  %v6285 = vcombine.high %v6283, %v6283
  %v6287 = vunpack.c.l.s4 1966171168
  %v6288 = vunpack.c.0.s8 %v6287
  %v6289 = vlaneseq
  %v6290 = vshrl.u32 %v6289, 7
  %v6291 = vsub.s32 %v6288, %v6290
  %v6292 = vrot.slane %v6276, %v6291
  %v6294 = vunpack.c.l.s4 1966171168
  %v6295 = vunpack.c.0.s8 %v6294
  %v6296 = vlaneseq
  %v6297 = vshrl.u32 %v6296, 7
  %v6298 = vsub.s32 %v6295, %v6297
  %v6299 = vrot.slane %v6283, %v6298
  %v6301 = vunpack.c.l.s4 1966171168
  %v6302 = vunpack.c.0.s8 %v6301
  %v6303 = vlaneseq
  %v6304 = vshrl.u32 %v6303, 7
  %v6305 = vsub.s32 %v6302, %v6304
  %v6306 = vrot.slane %v6284, %v6305
  %v6308 = vunpack.c.l.s4 1966171168
  %v6309 = vunpack.c.0.s8 %v6308
  %v6310 = vlaneseq
  %v6311 = vshrl.u32 %v6310, 7
  %v6312 = vsub.s32 %v6309, %v6311
  %v6313 = vrot.slane %v6285, %v6312
  %v6314 = vcombine.high %v6292, %v6292
  %v6315 = vcombine.high %v6299, %v6299
  %v6316 = vcombine.high %v6306, %v6306
  %v6317 = vcombine.high %v6313, %v6313
  %v6318 = vcombine.high %v5606, %v5606
  %v6320 = vunpack.c.l.s4 1966171168
  %v6321 = vunpack.c.0.s8 %v6320
  %v6322 = vlaneseq
  %v6323 = vshrl.u32 %v6322, 7
  %v6324 = vsub.s32 %v6321, %v6323
  %v6325 = vrot.slane %v5606, %v6324
  %v6327 = vunpack.c.l.s4 1966171168
  %v6328 = vunpack.c.0.s8 %v6327
  %v6329 = vlaneseq
  %v6330 = vshrl.u32 %v6329, 7
  %v6331 = vsub.s32 %v6328, %v6330
  %v6332 = vrot.slane %v6318, %v6331
  %v6333 = vcombine.high %v6325, %v6325
  %v6334 = vcombine.high %v6332, %v6332
  %v6336 = vunpack.c.l.s4 1966171168
  %v6337 = vunpack.c.0.s8 %v6336
  %v6338 = vlaneseq
  %v6339 = vshrl.u32 %v6338, 7
  %v6340 = vsub.s32 %v6337, %v6339
  %v6341 = vrot.slane %v6325, %v6340
  %v6343 = vunpack.c.l.s4 1966171168
  %v6344 = vunpack.c.0.s8 %v6343
  %v6345 = vlaneseq
  %v6346 = vshrl.u32 %v6345, 7
  %v6347 = vsub.s32 %v6344, %v6346
  %v6348 = vrot.slane %v6332, %v6347
  %v6350 = vunpack.c.l.s4 1966171168
  %v6351 = vunpack.c.0.s8 %v6350
  %v6352 = vlaneseq
  %v6353 = vshrl.u32 %v6352, 7
  %v6354 = vsub.s32 %v6351, %v6353
  %v6355 = vrot.slane %v6333, %v6354
  %v6357 = vunpack.c.l.s4 1966171168
  %v6358 = vunpack.c.0.s8 %v6357
  %v6359 = vlaneseq
  %v6360 = vshrl.u32 %v6359, 7
  %v6361 = vsub.s32 %v6358, %v6360
  %v6362 = vrot.slane %v6334, %v6361
  %v6363 = vcombine.high %v6341, %v6341
  %v6364 = vcombine.high %v6348, %v6348
  %v6365 = vcombine.high %v6355, %v6355
  %v6366 = vcombine.high %v6362, %v6362
  %v6367 = vcombine.high %v5607, %v5607
  %v6369 = vunpack.c.l.s4 1966171168
  %v6370 = vunpack.c.0.s8 %v6369
  %v6371 = vlaneseq
  %v6372 = vshrl.u32 %v6371, 7
  %v6373 = vsub.s32 %v6370, %v6372
  %v6374 = vrot.slane %v5607, %v6373
  %v6376 = vunpack.c.l.s4 1966171168
  %v6377 = vunpack.c.0.s8 %v6376
  %v6378 = vlaneseq
  %v6379 = vshrl.u32 %v6378, 7
  %v6380 = vsub.s32 %v6377, %v6379
  %v6381 = vrot.slane %v6367, %v6380
  %v6382 = vcombine.high %v6374, %v6374
  %v6383 = vcombine.high %v6381, %v6381
  %v6385 = vunpack.c.l.s4 1966171168
  %v6386 = vunpack.c.0.s8 %v6385
  %v6387 = vlaneseq
  %v6388 = vshrl.u32 %v6387, 7
  %v6389 = vsub.s32 %v6386, %v6388
  %v6390 = vrot.slane %v6374, %v6389
  %v6392 = vunpack.c.l.s4 1966171168
  %v6393 = vunpack.c.0.s8 %v6392
  %v6394 = vlaneseq
  %v6395 = vshrl.u32 %v6394, 7
  %v6396 = vsub.s32 %v6393, %v6395
  %v6397 = vrot.slane %v6381, %v6396
  %v6399 = vunpack.c.l.s4 1966171168
  %v6400 = vunpack.c.0.s8 %v6399
  %v6401 = vlaneseq
  %v6402 = vshrl.u32 %v6401, 7
  %v6403 = vsub.s32 %v6400, %v6402
  %v6404 = vrot.slane %v6382, %v6403
  %v6406 = vunpack.c.l.s4 1966171168
  %v6407 = vunpack.c.0.s8 %v6406
  %v6408 = vlaneseq
  %v6409 = vshrl.u32 %v6408, 7
  %v6410 = vsub.s32 %v6407, %v6409
  %v6411 = vrot.slane %v6383, %v6410
  %v6412 = vcombine.high %v6390, %v6390
  %v6413 = vcombine.high %v6397, %v6397
  %v6414 = vcombine.high %v6404, %v6404
  %v6415 = vcombine.high %v6411, %v6411
  %v6416 = vcombine.high %v5608, %v5608
  %v6418 = vunpack.c.l.s4 1966171168
  %v6419 = vunpack.c.0.s8 %v6418
  %v6420 = vlaneseq
  %v6421 = vshrl.u32 %v6420, 7
  %v6422 = vsub.s32 %v6419, %v6421
  %v6423 = vrot.slane %v5608, %v6422
  %v6425 = vunpack.c.l.s4 1966171168
  %v6426 = vunpack.c.0.s8 %v6425
  %v6427 = vlaneseq
  %v6428 = vshrl.u32 %v6427, 7
  %v6429 = vsub.s32 %v6426, %v6428
  %v6430 = vrot.slane %v6416, %v6429
  %v6431 = vcombine.high %v6423, %v6423
  %v6432 = vcombine.high %v6430, %v6430
  %v6434 = vunpack.c.l.s4 1966171168
  %v6435 = vunpack.c.0.s8 %v6434
  %v6436 = vlaneseq
  %v6437 = vshrl.u32 %v6436, 7
  %v6438 = vsub.s32 %v6435, %v6437
  %v6439 = vrot.slane %v6423, %v6438
  %v6441 = vunpack.c.l.s4 1966171168
  %v6442 = vunpack.c.0.s8 %v6441
  %v6443 = vlaneseq
  %v6444 = vshrl.u32 %v6443, 7
  %v6445 = vsub.s32 %v6442, %v6444
  %v6446 = vrot.slane %v6430, %v6445
  %v6448 = vunpack.c.l.s4 1966171168
  %v6449 = vunpack.c.0.s8 %v6448
  %v6450 = vlaneseq
  %v6451 = vshrl.u32 %v6450, 7
  %v6452 = vsub.s32 %v6449, %v6451
  %v6453 = vrot.slane %v6431, %v6452
  %v6455 = vunpack.c.l.s4 1966171168
  %v6456 = vunpack.c.0.s8 %v6455
  %v6457 = vlaneseq
  %v6458 = vshrl.u32 %v6457, 7
  %v6459 = vsub.s32 %v6456, %v6458
  %v6460 = vrot.slane %v6432, %v6459
  %v6461 = vcombine.high %v6439, %v6439
  %v6462 = vcombine.high %v6446, %v6446
  %v6463 = vcombine.high %v6453, %v6453
  %v6464 = vcombine.high %v6460, %v6460
  %v6465 = vcombine.high %v5609, %v5609
  %v6467 = vunpack.c.l.s4 1966171168
  %v6468 = vunpack.c.0.s8 %v6467
  %v6469 = vlaneseq
  %v6470 = vshrl.u32 %v6469, 7
  %v6471 = vsub.s32 %v6468, %v6470
  %v6472 = vrot.slane %v5609, %v6471
  %v6474 = vunpack.c.l.s4 1966171168
  %v6475 = vunpack.c.0.s8 %v6474
  %v6476 = vlaneseq
  %v6477 = vshrl.u32 %v6476, 7
  %v6478 = vsub.s32 %v6475, %v6477
  %v6479 = vrot.slane %v6465, %v6478
  %v6480 = vcombine.high %v6472, %v6472
  %v6481 = vcombine.high %v6479, %v6479
  %v6483 = vunpack.c.l.s4 1966171168
  %v6484 = vunpack.c.0.s8 %v6483
  %v6485 = vlaneseq
  %v6486 = vshrl.u32 %v6485, 7
  %v6487 = vsub.s32 %v6484, %v6486
  %v6488 = vrot.slane %v6472, %v6487
  %v6490 = vunpack.c.l.s4 1966171168
  %v6491 = vunpack.c.0.s8 %v6490
  %v6492 = vlaneseq
  %v6493 = vshrl.u32 %v6492, 7
  %v6494 = vsub.s32 %v6491, %v6493
  %v6495 = vrot.slane %v6479, %v6494
  %v6497 = vunpack.c.l.s4 1966171168
  %v6498 = vunpack.c.0.s8 %v6497
  %v6499 = vlaneseq
  %v6500 = vshrl.u32 %v6499, 7
  %v6501 = vsub.s32 %v6498, %v6500
  %v6502 = vrot.slane %v6480, %v6501
  %v6504 = vunpack.c.l.s4 1966171168
  %v6505 = vunpack.c.0.s8 %v6504
  %v6506 = vlaneseq
  %v6507 = vshrl.u32 %v6506, 7
  %v6508 = vsub.s32 %v6505, %v6507
  %v6509 = vrot.slane %v6481, %v6508
  %v6510 = vcombine.high %v6488, %v6488
  %v6511 = vcombine.high %v6495, %v6495
  %v6512 = vcombine.high %v6502, %v6502
  %v6513 = vcombine.high %v6509, %v6509
  %v6514 = vcombine.high %v5610, %v5610
  %v6516 = vunpack.c.l.s4 1966171168
  %v6517 = vunpack.c.0.s8 %v6516
  %v6518 = vlaneseq
  %v6519 = vshrl.u32 %v6518, 7
  %v6520 = vsub.s32 %v6517, %v6519
  %v6521 = vrot.slane %v5610, %v6520
  %v6523 = vunpack.c.l.s4 1966171168
  %v6524 = vunpack.c.0.s8 %v6523
  %v6525 = vlaneseq
  %v6526 = vshrl.u32 %v6525, 7
  %v6527 = vsub.s32 %v6524, %v6526
  %v6528 = vrot.slane %v6514, %v6527
  %v6529 = vcombine.high %v6521, %v6521
  %v6530 = vcombine.high %v6528, %v6528
  %v6532 = vunpack.c.l.s4 1966171168
  %v6533 = vunpack.c.0.s8 %v6532
  %v6534 = vlaneseq
  %v6535 = vshrl.u32 %v6534, 7
  %v6536 = vsub.s32 %v6533, %v6535
  %v6537 = vrot.slane %v6521, %v6536
  %v6539 = vunpack.c.l.s4 1966171168
  %v6540 = vunpack.c.0.s8 %v6539
  %v6541 = vlaneseq
  %v6542 = vshrl.u32 %v6541, 7
  %v6543 = vsub.s32 %v6540, %v6542
  %v6544 = vrot.slane %v6528, %v6543
  %v6546 = vunpack.c.l.s4 1966171168
  %v6547 = vunpack.c.0.s8 %v6546
  %v6548 = vlaneseq
  %v6549 = vshrl.u32 %v6548, 7
  %v6550 = vsub.s32 %v6547, %v6549
  %v6551 = vrot.slane %v6529, %v6550
  %v6553 = vunpack.c.l.s4 1966171168
  %v6554 = vunpack.c.0.s8 %v6553
  %v6555 = vlaneseq
  %v6556 = vshrl.u32 %v6555, 7
  %v6557 = vsub.s32 %v6554, %v6556
  %v6558 = vrot.slane %v6530, %v6557
  %v6559 = vcombine.high %v6537, %v6537
  %v6560 = vcombine.high %v6544, %v6544
  %v6561 = vcombine.high %v6551, %v6551
  %v6562 = vcombine.high %v6558, %v6558
  %v6563 = vcombine.high %v5611, %v5611
  %v6565 = vunpack.c.l.s4 1966171168
  %v6566 = vunpack.c.0.s8 %v6565
  %v6567 = vlaneseq
  %v6568 = vshrl.u32 %v6567, 7
  %v6569 = vsub.s32 %v6566, %v6568
  %v6570 = vrot.slane %v5611, %v6569
  %v6572 = vunpack.c.l.s4 1966171168
  %v6573 = vunpack.c.0.s8 %v6572
  %v6574 = vlaneseq
  %v6575 = vshrl.u32 %v6574, 7
  %v6576 = vsub.s32 %v6573, %v6575
  %v6577 = vrot.slane %v6563, %v6576
  %v6578 = vcombine.high %v6570, %v6570
  %v6579 = vcombine.high %v6577, %v6577
  %v6581 = vunpack.c.l.s4 1966171168
  %v6582 = vunpack.c.0.s8 %v6581
  %v6583 = vlaneseq
  %v6584 = vshrl.u32 %v6583, 7
  %v6585 = vsub.s32 %v6582, %v6584
  %v6586 = vrot.slane %v6570, %v6585
  %v6588 = vunpack.c.l.s4 1966171168
  %v6589 = vunpack.c.0.s8 %v6588
  %v6590 = vlaneseq
  %v6591 = vshrl.u32 %v6590, 7
  %v6592 = vsub.s32 %v6589, %v6591
  %v6593 = vrot.slane %v6577, %v6592
  %v6595 = vunpack.c.l.s4 1966171168
  %v6596 = vunpack.c.0.s8 %v6595
  %v6597 = vlaneseq
  %v6598 = vshrl.u32 %v6597, 7
  %v6599 = vsub.s32 %v6596, %v6598
  %v6600 = vrot.slane %v6578, %v6599
  %v6602 = vunpack.c.l.s4 1966171168
  %v6603 = vunpack.c.0.s8 %v6602
  %v6604 = vlaneseq
  %v6605 = vshrl.u32 %v6604, 7
  %v6606 = vsub.s32 %v6603, %v6605
  %v6607 = vrot.slane %v6579, %v6606
  %v6608 = vcombine.high %v6586, %v6586
  %v6609 = vcombine.high %v6600, %v6600
  %v6610 = vcombine.low %v5655, %v5669
  %v6611 = vcombine.low %v5677, %v5679
  %v6612 = vcombine.low %v5662, %v5676
  %v6613 = vcombine.low %v5678, %v5680
  %v6615 = vunpack.c.l.s4 1966171168
  %v6616 = vunpack.c.0.s8 %v6615
  %v6617 = vlaneseq
  %v6618 = vshrl.u32 %v6617, 7
  %v6619 = vsub.s32 %v6616, %v6618
  %v6620 = vrot.slane %v6610, %v6619
  %v6622 = vunpack.c.l.s4 1966171168
  %v6623 = vunpack.c.0.s8 %v6622
  %v6624 = vlaneseq
  %v6625 = vshrl.u32 %v6624, 7
  %v6626 = vsub.s32 %v6623, %v6625
  %v6627 = vrot.slane %v6611, %v6626
  %v6629 = vunpack.c.l.s4 1966171168
  %v6630 = vunpack.c.0.s8 %v6629
  %v6631 = vlaneseq
  %v6632 = vshrl.u32 %v6631, 7
  %v6633 = vsub.s32 %v6630, %v6632
  %v6634 = vrot.slane %v6612, %v6633
  %v6636 = vunpack.c.l.s4 1966171168
  %v6637 = vunpack.c.0.s8 %v6636
  %v6638 = vlaneseq
  %v6639 = vshrl.u32 %v6638, 7
  %v6640 = vsub.s32 %v6637, %v6639
  %v6641 = vrot.slane %v6613, %v6640
  %v6642 = vcombine.low %v6620, %v6627
  %v6643 = vcombine.low %v6634, %v6641
  %v6645 = vunpack.c.l.s4 1966171168
  %v6646 = vunpack.c.0.s8 %v6645
  %v6647 = vlaneseq
  %v6648 = vshrl.u32 %v6647, 7
  %v6649 = vsub.s32 %v6646, %v6648
  %v6650 = vrot.slane %v6642, %v6649
  %v6652 = vunpack.c.l.s4 1966171168
  %v6653 = vunpack.c.0.s8 %v6652
  %v6654 = vlaneseq
  %v6655 = vshrl.u32 %v6654, 7
  %v6656 = vsub.s32 %v6653, %v6655
  %v6657 = vrot.slane %v6643, %v6656
  %v6658 = vcombine.low %v6650, %v6657
  %v6659 = vcombine.low %v5704, %v5718
  %v6660 = vcombine.low %v5726, %v5728
  %v6661 = vcombine.low %v5711, %v5725
  %v6662 = vcombine.low %v5727, %v5729
  %v6664 = vunpack.c.l.s4 1966171168
  %v6665 = vunpack.c.0.s8 %v6664
  %v6666 = vlaneseq
  %v6667 = vshrl.u32 %v6666, 7
  %v6668 = vsub.s32 %v6665, %v6667
  %v6669 = vrot.slane %v6659, %v6668
  %v6671 = vunpack.c.l.s4 1966171168
  %v6672 = vunpack.c.0.s8 %v6671
  %v6673 = vlaneseq
  %v6674 = vshrl.u32 %v6673, 7
  %v6675 = vsub.s32 %v6672, %v6674
  %v6676 = vrot.slane %v6660, %v6675
  %v6678 = vunpack.c.l.s4 1966171168
  %v6679 = vunpack.c.0.s8 %v6678
  %v6680 = vlaneseq
  %v6681 = vshrl.u32 %v6680, 7
  %v6682 = vsub.s32 %v6679, %v6681
  %v6683 = vrot.slane %v6661, %v6682
  %v6685 = vunpack.c.l.s4 1966171168
  %v6686 = vunpack.c.0.s8 %v6685
  %v6687 = vlaneseq
  %v6688 = vshrl.u32 %v6687, 7
  %v6689 = vsub.s32 %v6686, %v6688
  %v6690 = vrot.slane %v6662, %v6689
  %v6691 = vcombine.low %v6669, %v6676
  %v6692 = vcombine.low %v6683, %v6690
  %v6694 = vunpack.c.l.s4 1966171168
  %v6695 = vunpack.c.0.s8 %v6694
  %v6696 = vlaneseq
  %v6697 = vshrl.u32 %v6696, 7
  %v6698 = vsub.s32 %v6695, %v6697
  %v6699 = vrot.slane %v6691, %v6698
  %v6701 = vunpack.c.l.s4 1966171168
  %v6702 = vunpack.c.0.s8 %v6701
  %v6703 = vlaneseq
  %v6704 = vshrl.u32 %v6703, 7
  %v6705 = vsub.s32 %v6702, %v6704
  %v6706 = vrot.slane %v6692, %v6705
  %v6707 = vcombine.low %v6699, %v6706
  %v6708 = vcombine.low %v5753, %v5767
  %v6709 = vcombine.low %v5775, %v5777
  %v6710 = vcombine.low %v5760, %v5774
  %v6711 = vcombine.low %v5776, %v5778
  %v6713 = vunpack.c.l.s4 1966171168
  %v6714 = vunpack.c.0.s8 %v6713
  %v6715 = vlaneseq
  %v6716 = vshrl.u32 %v6715, 7
  %v6717 = vsub.s32 %v6714, %v6716
  %v6718 = vrot.slane %v6708, %v6717
  %v6720 = vunpack.c.l.s4 1966171168
  %v6721 = vunpack.c.0.s8 %v6720
  %v6722 = vlaneseq
  %v6723 = vshrl.u32 %v6722, 7
  %v6724 = vsub.s32 %v6721, %v6723
  %v6725 = vrot.slane %v6709, %v6724
  %v6727 = vunpack.c.l.s4 1966171168
  %v6728 = vunpack.c.0.s8 %v6727
  %v6729 = vlaneseq
  %v6730 = vshrl.u32 %v6729, 7
  %v6731 = vsub.s32 %v6728, %v6730
  %v6732 = vrot.slane %v6710, %v6731
  %v6734 = vunpack.c.l.s4 1966171168
  %v6735 = vunpack.c.0.s8 %v6734
  %v6736 = vlaneseq
  %v6737 = vshrl.u32 %v6736, 7
  %v6738 = vsub.s32 %v6735, %v6737
  %v6739 = vrot.slane %v6711, %v6738
  %v6740 = vcombine.low %v6718, %v6725
  %v6741 = vcombine.low %v6732, %v6739
  %v6743 = vunpack.c.l.s4 1966171168
  %v6744 = vunpack.c.0.s8 %v6743
  %v6745 = vlaneseq
  %v6746 = vshrl.u32 %v6745, 7
  %v6747 = vsub.s32 %v6744, %v6746
  %v6748 = vrot.slane %v6740, %v6747
  %v6750 = vunpack.c.l.s4 1966171168
  %v6751 = vunpack.c.0.s8 %v6750
  %v6752 = vlaneseq
  %v6753 = vshrl.u32 %v6752, 7
  %v6754 = vsub.s32 %v6751, %v6753
  %v6755 = vrot.slane %v6741, %v6754
  %v6756 = vcombine.low %v6748, %v6755
  %v6757 = vcombine.low %v5802, %v5816
  %v6758 = vcombine.low %v5824, %v5826
  %v6759 = vcombine.low %v5809, %v5823
  %v6760 = vcombine.low %v5825, %v5827
  %v6762 = vunpack.c.l.s4 1966171168
  %v6763 = vunpack.c.0.s8 %v6762
  %v6764 = vlaneseq
  %v6765 = vshrl.u32 %v6764, 7
  %v6766 = vsub.s32 %v6763, %v6765
  %v6767 = vrot.slane %v6757, %v6766
  %v6769 = vunpack.c.l.s4 1966171168
  %v6770 = vunpack.c.0.s8 %v6769
  %v6771 = vlaneseq
  %v6772 = vshrl.u32 %v6771, 7
  %v6773 = vsub.s32 %v6770, %v6772
  %v6774 = vrot.slane %v6758, %v6773
  %v6776 = vunpack.c.l.s4 1966171168
  %v6777 = vunpack.c.0.s8 %v6776
  %v6778 = vlaneseq
  %v6779 = vshrl.u32 %v6778, 7
  %v6780 = vsub.s32 %v6777, %v6779
  %v6781 = vrot.slane %v6759, %v6780
  %v6783 = vunpack.c.l.s4 1966171168
  %v6784 = vunpack.c.0.s8 %v6783
  %v6785 = vlaneseq
  %v6786 = vshrl.u32 %v6785, 7
  %v6787 = vsub.s32 %v6784, %v6786
  %v6788 = vrot.slane %v6760, %v6787
  %v6789 = vcombine.low %v6767, %v6774
  %v6790 = vcombine.low %v6781, %v6788
  %v6792 = vunpack.c.l.s4 1966171168
  %v6793 = vunpack.c.0.s8 %v6792
  %v6794 = vlaneseq
  %v6795 = vshrl.u32 %v6794, 7
  %v6796 = vsub.s32 %v6793, %v6795
  %v6797 = vrot.slane %v6789, %v6796
  %v6799 = vunpack.c.l.s4 1966171168
  %v6800 = vunpack.c.0.s8 %v6799
  %v6801 = vlaneseq
  %v6802 = vshrl.u32 %v6801, 7
  %v6803 = vsub.s32 %v6800, %v6802
  %v6804 = vrot.slane %v6790, %v6803
  %v6805 = vcombine.low %v6797, %v6804
  %v6806 = vcombine.low %v5851, %v5865
  %v6807 = vcombine.low %v5873, %v5875
  %v6808 = vcombine.low %v5858, %v5872
  %v6809 = vcombine.low %v5874, %v5876
  %v6811 = vunpack.c.l.s4 1966171168
  %v6812 = vunpack.c.0.s8 %v6811
  %v6813 = vlaneseq
  %v6814 = vshrl.u32 %v6813, 7
  %v6815 = vsub.s32 %v6812, %v6814
  %v6816 = vrot.slane %v6806, %v6815
  %v6818 = vunpack.c.l.s4 1966171168
  %v6819 = vunpack.c.0.s8 %v6818
  %v6820 = vlaneseq
  %v6821 = vshrl.u32 %v6820, 7
  %v6822 = vsub.s32 %v6819, %v6821
  %v6823 = vrot.slane %v6807, %v6822
  %v6825 = vunpack.c.l.s4 1966171168
  %v6826 = vunpack.c.0.s8 %v6825
  %v6827 = vlaneseq
  %v6828 = vshrl.u32 %v6827, 7
  %v6829 = vsub.s32 %v6826, %v6828
  %v6830 = vrot.slane %v6808, %v6829
  %v6832 = vunpack.c.l.s4 1966171168
  %v6833 = vunpack.c.0.s8 %v6832
  %v6834 = vlaneseq
  %v6835 = vshrl.u32 %v6834, 7
  %v6836 = vsub.s32 %v6833, %v6835
  %v6837 = vrot.slane %v6809, %v6836
  %v6838 = vcombine.low %v6816, %v6823
  %v6839 = vcombine.low %v6830, %v6837
  %v6841 = vunpack.c.l.s4 1966171168
  %v6842 = vunpack.c.0.s8 %v6841
  %v6843 = vlaneseq
  %v6844 = vshrl.u32 %v6843, 7
  %v6845 = vsub.s32 %v6842, %v6844
  %v6846 = vrot.slane %v6838, %v6845
  %v6848 = vunpack.c.l.s4 1966171168
  %v6849 = vunpack.c.0.s8 %v6848
  %v6850 = vlaneseq
  %v6851 = vshrl.u32 %v6850, 7
  %v6852 = vsub.s32 %v6849, %v6851
  %v6853 = vrot.slane %v6839, %v6852
  %v6854 = vcombine.low %v6846, %v6853
  %v6855 = vcombine.low %v5900, %v5914
  %v6856 = vcombine.low %v5922, %v5924
  %v6857 = vcombine.low %v5907, %v5921
  %v6858 = vcombine.low %v5923, %v5925
  %v6860 = vunpack.c.l.s4 1966171168
  %v6861 = vunpack.c.0.s8 %v6860
  %v6862 = vlaneseq
  %v6863 = vshrl.u32 %v6862, 7
  %v6864 = vsub.s32 %v6861, %v6863
  %v6865 = vrot.slane %v6855, %v6864
  %v6867 = vunpack.c.l.s4 1966171168
  %v6868 = vunpack.c.0.s8 %v6867
  %v6869 = vlaneseq
  %v6870 = vshrl.u32 %v6869, 7
  %v6871 = vsub.s32 %v6868, %v6870
  %v6872 = vrot.slane %v6856, %v6871
  %v6874 = vunpack.c.l.s4 1966171168
  %v6875 = vunpack.c.0.s8 %v6874
  %v6876 = vlaneseq
  %v6877 = vshrl.u32 %v6876, 7
  %v6878 = vsub.s32 %v6875, %v6877
  %v6879 = vrot.slane %v6857, %v6878
  %v6881 = vunpack.c.l.s4 1966171168
  %v6882 = vunpack.c.0.s8 %v6881
  %v6883 = vlaneseq
  %v6884 = vshrl.u32 %v6883, 7
  %v6885 = vsub.s32 %v6882, %v6884
  %v6886 = vrot.slane %v6858, %v6885
  %v6887 = vcombine.low %v6865, %v6872
  %v6888 = vcombine.low %v6879, %v6886
  %v6890 = vunpack.c.l.s4 1966171168
  %v6891 = vunpack.c.0.s8 %v6890
  %v6892 = vlaneseq
  %v6893 = vshrl.u32 %v6892, 7
  %v6894 = vsub.s32 %v6891, %v6893
  %v6895 = vrot.slane %v6887, %v6894
  %v6897 = vunpack.c.l.s4 1966171168
  %v6898 = vunpack.c.0.s8 %v6897
  %v6899 = vlaneseq
  %v6900 = vshrl.u32 %v6899, 7
  %v6901 = vsub.s32 %v6898, %v6900
  %v6902 = vrot.slane %v6888, %v6901
  %v6903 = vcombine.low %v6895, %v6902
  %v6904 = vcombine.low %v5949, %v5963
  %v6905 = vcombine.low %v5971, %v5973
  %v6906 = vcombine.low %v5956, %v5970
  %v6907 = vcombine.low %v5972, %v5974
  %v6909 = vunpack.c.l.s4 1966171168
  %v6910 = vunpack.c.0.s8 %v6909
  %v6911 = vlaneseq
  %v6912 = vshrl.u32 %v6911, 7
  %v6913 = vsub.s32 %v6910, %v6912
  %v6914 = vrot.slane %v6904, %v6913
  %v6916 = vunpack.c.l.s4 1966171168
  %v6917 = vunpack.c.0.s8 %v6916
  %v6918 = vlaneseq
  %v6919 = vshrl.u32 %v6918, 7
  %v6920 = vsub.s32 %v6917, %v6919
  %v6921 = vrot.slane %v6905, %v6920
  %v6923 = vunpack.c.l.s4 1966171168
  %v6924 = vunpack.c.0.s8 %v6923
  %v6925 = vlaneseq
  %v6926 = vshrl.u32 %v6925, 7
  %v6927 = vsub.s32 %v6924, %v6926
  %v6928 = vrot.slane %v6906, %v6927
  %v6930 = vunpack.c.l.s4 1966171168
  %v6931 = vunpack.c.0.s8 %v6930
  %v6932 = vlaneseq
  %v6933 = vshrl.u32 %v6932, 7
  %v6934 = vsub.s32 %v6931, %v6933
  %v6935 = vrot.slane %v6907, %v6934
  %v6936 = vcombine.low %v6914, %v6921
  %v6937 = vcombine.low %v6928, %v6935
  %v6939 = vunpack.c.l.s4 1966171168
  %v6940 = vunpack.c.0.s8 %v6939
  %v6941 = vlaneseq
  %v6942 = vshrl.u32 %v6941, 7
  %v6943 = vsub.s32 %v6940, %v6942
  %v6944 = vrot.slane %v6936, %v6943
  %v6946 = vunpack.c.l.s4 1966171168
  %v6947 = vunpack.c.0.s8 %v6946
  %v6948 = vlaneseq
  %v6949 = vshrl.u32 %v6948, 7
  %v6950 = vsub.s32 %v6947, %v6949
  %v6951 = vrot.slane %v6937, %v6950
  %v6952 = vcombine.low %v6944, %v6951
  %v6953 = vcombine.low %v5998, %v6012
  %v6954 = vcombine.low %v6020, %v6022
  %v6955 = vcombine.low %v6005, %v6019
  %v6956 = vcombine.low %v6021, %v6023
  %v6958 = vunpack.c.l.s4 1966171168
  %v6959 = vunpack.c.0.s8 %v6958
  %v6960 = vlaneseq
  %v6961 = vshrl.u32 %v6960, 7
  %v6962 = vsub.s32 %v6959, %v6961
  %v6963 = vrot.slane %v6953, %v6962
  %v6965 = vunpack.c.l.s4 1966171168
  %v6966 = vunpack.c.0.s8 %v6965
  %v6967 = vlaneseq
  %v6968 = vshrl.u32 %v6967, 7
  %v6969 = vsub.s32 %v6966, %v6968
  %v6970 = vrot.slane %v6954, %v6969
  %v6972 = vunpack.c.l.s4 1966171168
  %v6973 = vunpack.c.0.s8 %v6972
  %v6974 = vlaneseq
  %v6975 = vshrl.u32 %v6974, 7
  %v6976 = vsub.s32 %v6973, %v6975
  %v6977 = vrot.slane %v6955, %v6976
  %v6979 = vunpack.c.l.s4 1966171168
  %v6980 = vunpack.c.0.s8 %v6979
  %v6981 = vlaneseq
  %v6982 = vshrl.u32 %v6981, 7
  %v6983 = vsub.s32 %v6980, %v6982
  %v6984 = vrot.slane %v6956, %v6983
  %v6985 = vcombine.low %v6963, %v6970
  %v6986 = vcombine.low %v6977, %v6984
  %v6988 = vunpack.c.l.s4 1966171168
  %v6989 = vunpack.c.0.s8 %v6988
  %v6990 = vlaneseq
  %v6991 = vshrl.u32 %v6990, 7
  %v6992 = vsub.s32 %v6989, %v6991
  %v6993 = vrot.slane %v6985, %v6992
  %v6995 = vunpack.c.l.s4 1966171168
  %v6996 = vunpack.c.0.s8 %v6995
  %v6997 = vlaneseq
  %v6998 = vshrl.u32 %v6997, 7
  %v6999 = vsub.s32 %v6996, %v6998
  %v7000 = vrot.slane %v6986, %v6999
  %v7001 = vcombine.low %v6993, %v7000
  %v7002 = vcombine.low %v6047, %v6061
  %v7003 = vcombine.low %v6069, %v6071
  %v7004 = vcombine.low %v6054, %v6068
  %v7005 = vcombine.low %v6070, %v6072
  %v7007 = vunpack.c.l.s4 1966171168
  %v7008 = vunpack.c.0.s8 %v7007
  %v7009 = vlaneseq
  %v7010 = vshrl.u32 %v7009, 7
  %v7011 = vsub.s32 %v7008, %v7010
  %v7012 = vrot.slane %v7002, %v7011
  %v7014 = vunpack.c.l.s4 1966171168
  %v7015 = vunpack.c.0.s8 %v7014
  %v7016 = vlaneseq
  %v7017 = vshrl.u32 %v7016, 7
  %v7018 = vsub.s32 %v7015, %v7017
  %v7019 = vrot.slane %v7003, %v7018
  %v7021 = vunpack.c.l.s4 1966171168
  %v7022 = vunpack.c.0.s8 %v7021
  %v7023 = vlaneseq
  %v7024 = vshrl.u32 %v7023, 7
  %v7025 = vsub.s32 %v7022, %v7024
  %v7026 = vrot.slane %v7004, %v7025
  %v7028 = vunpack.c.l.s4 1966171168
  %v7029 = vunpack.c.0.s8 %v7028
  %v7030 = vlaneseq
  %v7031 = vshrl.u32 %v7030, 7
  %v7032 = vsub.s32 %v7029, %v7031
  %v7033 = vrot.slane %v7005, %v7032
  %v7034 = vcombine.low %v7012, %v7019
  %v7035 = vcombine.low %v7026, %v7033
  %v7037 = vunpack.c.l.s4 1966171168
  %v7038 = vunpack.c.0.s8 %v7037
  %v7039 = vlaneseq
  %v7040 = vshrl.u32 %v7039, 7
  %v7041 = vsub.s32 %v7038, %v7040
  %v7042 = vrot.slane %v7034, %v7041
  %v7044 = vunpack.c.l.s4 1966171168
  %v7045 = vunpack.c.0.s8 %v7044
  %v7046 = vlaneseq
  %v7047 = vshrl.u32 %v7046, 7
  %v7048 = vsub.s32 %v7045, %v7047
  %v7049 = vrot.slane %v7035, %v7048
  %v7050 = vcombine.low %v7042, %v7049
  %v7051 = vcombine.low %v6096, %v6110
  %v7052 = vcombine.low %v6118, %v6120
  %v7053 = vcombine.low %v6103, %v6117
  %v7055 = vunpack.c.l.s4 1966171168
  %v7056 = vunpack.c.0.s8 %v7055
  %v7057 = vlaneseq
  %v7058 = vshrl.u32 %v7057, 7
  %v7059 = vsub.s32 %v7056, %v7058
  %v7060 = vrot.slane %v7051, %v7059
  %v7062 = vunpack.c.l.s4 1966171168
  %v7063 = vunpack.c.0.s8 %v7062
  %v7064 = vlaneseq
  %v7065 = vshrl.u32 %v7064, 7
  %v7066 = vsub.s32 %v7063, %v7065
  %v7067 = vrot.slane %v7052, %v7066
  %v7069 = vunpack.c.l.s4 1966171168
  %v7070 = vunpack.c.0.s8 %v7069
  %v7071 = vlaneseq
  %v7072 = vshrl.u32 %v7071, 7
  %v7073 = vsub.s32 %v7070, %v7072
  %v7074 = vrot.slane %v7053, %v7073
  %v7076 = vunpack.c.l.s4 1966171168
  %v7077 = vunpack.c.0.s8 %v7076
  %v7078 = vlaneseq
  %v7079 = vshrl.u32 %v7078, 7
  %v7080 = vsub.s32 %v7077, %v7079
  %v7081 = vrot.slane %v6119, %v7080
  %v7082 = vcombine.low %v7060, %v7067
  %v7083 = vcombine.low %v7074, %v7081
  %v7085 = vunpack.c.l.s4 1966171168
  %v7086 = vunpack.c.0.s8 %v7085
  %v7087 = vlaneseq
  %v7088 = vshrl.u32 %v7087, 7
  %v7089 = vsub.s32 %v7086, %v7088
  %v7090 = vrot.slane %v7082, %v7089
  %v7092 = vunpack.c.l.s4 1966171168
  %v7093 = vunpack.c.0.s8 %v7092
  %v7094 = vlaneseq
  %v7095 = vshrl.u32 %v7094, 7
  %v7096 = vsub.s32 %v7093, %v7095
  %v7097 = vrot.slane %v7083, %v7096
  %v7098 = vcombine.low %v7090, %v7097
  %v7099 = vcombine.low %v6121, %v6145
  %v7100 = vcombine.low %v6159, %v6167
  %v7101 = vcombine.low %v6169, %v6152
  %v7102 = vcombine.low %v6166, %v6168
  %v7104 = vunpack.c.l.s4 1966171168
  %v7105 = vunpack.c.0.s8 %v7104
  %v7106 = vlaneseq
  %v7107 = vshrl.u32 %v7106, 7
  %v7108 = vsub.s32 %v7105, %v7107
  %v7109 = vrot.slane %v7099, %v7108
  %v7111 = vunpack.c.l.s4 1966171168
  %v7112 = vunpack.c.0.s8 %v7111
  %v7113 = vlaneseq
  %v7114 = vshrl.u32 %v7113, 7
  %v7115 = vsub.s32 %v7112, %v7114
  %v7116 = vrot.slane %v7100, %v7115
  %v7118 = vunpack.c.l.s4 1966171168
  %v7119 = vunpack.c.0.s8 %v7118
  %v7120 = vlaneseq
  %v7121 = vshrl.u32 %v7120, 7
  %v7122 = vsub.s32 %v7119, %v7121
  %v7123 = vrot.slane %v7101, %v7122
  %v7125 = vunpack.c.l.s4 1966171168
  %v7126 = vunpack.c.0.s8 %v7125
  %v7127 = vlaneseq
  %v7128 = vshrl.u32 %v7127, 7
  %v7129 = vsub.s32 %v7126, %v7128
  %v7130 = vrot.slane %v7102, %v7129
  %v7131 = vcombine.low %v7109, %v7116
  %v7132 = vcombine.low %v7123, %v7130
  %v7134 = vunpack.c.l.s4 1966171168
  %v7135 = vunpack.c.0.s8 %v7134
  %v7136 = vlaneseq
  %v7137 = vshrl.u32 %v7136, 7
  %v7138 = vsub.s32 %v7135, %v7137
  %v7139 = vrot.slane %v7131, %v7138
  %v7141 = vunpack.c.l.s4 1966171168
  %v7142 = vunpack.c.0.s8 %v7141
  %v7143 = vlaneseq
  %v7144 = vshrl.u32 %v7143, 7
  %v7145 = vsub.s32 %v7142, %v7144
  %v7146 = vrot.slane %v7132, %v7145
  %v7147 = vcombine.low %v7139, %v7146
  %v7148 = vcombine.low %v6170, %v6194
  %v7149 = vcombine.low %v6208, %v6216
  %v7150 = vcombine.low %v6218, %v6201
  %v7151 = vcombine.low %v6215, %v6217
  %v7153 = vunpack.c.l.s4 1966171168
  %v7154 = vunpack.c.0.s8 %v7153
  %v7155 = vlaneseq
  %v7156 = vshrl.u32 %v7155, 7
  %v7157 = vsub.s32 %v7154, %v7156
  %v7158 = vrot.slane %v7148, %v7157
  %v7160 = vunpack.c.l.s4 1966171168
  %v7161 = vunpack.c.0.s8 %v7160
  %v7162 = vlaneseq
  %v7163 = vshrl.u32 %v7162, 7
  %v7164 = vsub.s32 %v7161, %v7163
  %v7165 = vrot.slane %v7149, %v7164
  %v7167 = vunpack.c.l.s4 1966171168
  %v7168 = vunpack.c.0.s8 %v7167
  %v7169 = vlaneseq
  %v7170 = vshrl.u32 %v7169, 7
  %v7171 = vsub.s32 %v7168, %v7170
  %v7172 = vrot.slane %v7150, %v7171
  %v7174 = vunpack.c.l.s4 1966171168
  %v7175 = vunpack.c.0.s8 %v7174
  %v7176 = vlaneseq
  %v7177 = vshrl.u32 %v7176, 7
  %v7178 = vsub.s32 %v7175, %v7177
  %v7179 = vrot.slane %v7151, %v7178
  %v7180 = vcombine.low %v7158, %v7165
  %v7181 = vcombine.low %v7172, %v7179
  %v7183 = vunpack.c.l.s4 1966171168
  %v7184 = vunpack.c.0.s8 %v7183
  %v7185 = vlaneseq
  %v7186 = vshrl.u32 %v7185, 7
  %v7187 = vsub.s32 %v7184, %v7186
  %v7188 = vrot.slane %v7180, %v7187
  %v7190 = vunpack.c.l.s4 1966171168
  %v7191 = vunpack.c.0.s8 %v7190
  %v7192 = vlaneseq
  %v7193 = vshrl.u32 %v7192, 7
  %v7194 = vsub.s32 %v7191, %v7193
  %v7195 = vrot.slane %v7181, %v7194
  %v7196 = vcombine.low %v7188, %v7195
  %v7197 = vcombine.low %v6219, %v6243
  %v7198 = vcombine.low %v6257, %v6265
  %v7199 = vcombine.low %v6267, %v6250
  %v7200 = vcombine.low %v6264, %v6266
  %v7202 = vunpack.c.l.s4 1966171168
  %v7203 = vunpack.c.0.s8 %v7202
  %v7204 = vlaneseq
  %v7205 = vshrl.u32 %v7204, 7
  %v7206 = vsub.s32 %v7203, %v7205
  %v7207 = vrot.slane %v7197, %v7206
  %v7209 = vunpack.c.l.s4 1966171168
  %v7210 = vunpack.c.0.s8 %v7209
  %v7211 = vlaneseq
  %v7212 = vshrl.u32 %v7211, 7
  %v7213 = vsub.s32 %v7210, %v7212
  %v7214 = vrot.slane %v7198, %v7213
  %v7216 = vunpack.c.l.s4 1966171168
  %v7217 = vunpack.c.0.s8 %v7216
  %v7218 = vlaneseq
  %v7219 = vshrl.u32 %v7218, 7
  %v7220 = vsub.s32 %v7217, %v7219
  %v7221 = vrot.slane %v7199, %v7220
  %v7223 = vunpack.c.l.s4 1966171168
  %v7224 = vunpack.c.0.s8 %v7223
  %v7225 = vlaneseq
  %v7226 = vshrl.u32 %v7225, 7
  %v7227 = vsub.s32 %v7224, %v7226
  %v7228 = vrot.slane %v7200, %v7227
  %v7229 = vcombine.low %v7207, %v7214
  %v7230 = vcombine.low %v7221, %v7228
  %v7232 = vunpack.c.l.s4 1966171168
  %v7233 = vunpack.c.0.s8 %v7232
  %v7234 = vlaneseq
  %v7235 = vshrl.u32 %v7234, 7
  %v7236 = vsub.s32 %v7233, %v7235
  %v7237 = vrot.slane %v7229, %v7236
  %v7239 = vunpack.c.l.s4 1966171168
  %v7240 = vunpack.c.0.s8 %v7239
  %v7241 = vlaneseq
  %v7242 = vshrl.u32 %v7241, 7
  %v7243 = vsub.s32 %v7240, %v7242
  %v7244 = vrot.slane %v7230, %v7243
  %v7245 = vcombine.low %v7237, %v7244
  %v7246 = vcombine.low %v6268, %v6292
  %v7247 = vcombine.low %v6306, %v6314
  %v7248 = vcombine.low %v6316, %v6299
  %v7249 = vcombine.low %v6313, %v6315
  %v7251 = vunpack.c.l.s4 1966171168
  %v7252 = vunpack.c.0.s8 %v7251
  %v7253 = vlaneseq
  %v7254 = vshrl.u32 %v7253, 7
  %v7255 = vsub.s32 %v7252, %v7254
  %v7256 = vrot.slane %v7246, %v7255
  %v7258 = vunpack.c.l.s4 1966171168
  %v7259 = vunpack.c.0.s8 %v7258
  %v7260 = vlaneseq
  %v7261 = vshrl.u32 %v7260, 7
  %v7262 = vsub.s32 %v7259, %v7261
  %v7263 = vrot.slane %v7247, %v7262
  %v7265 = vunpack.c.l.s4 1966171168
  %v7266 = vunpack.c.0.s8 %v7265
  %v7267 = vlaneseq
  %v7268 = vshrl.u32 %v7267, 7
  %v7269 = vsub.s32 %v7266, %v7268
  %v7270 = vrot.slane %v7248, %v7269
  %v7272 = vunpack.c.l.s4 1966171168
  %v7273 = vunpack.c.0.s8 %v7272
  %v7274 = vlaneseq
  %v7275 = vshrl.u32 %v7274, 7
  %v7276 = vsub.s32 %v7273, %v7275
  %v7277 = vrot.slane %v7249, %v7276
  %v7278 = vcombine.low %v7256, %v7263
  %v7279 = vcombine.low %v7270, %v7277
  %v7281 = vunpack.c.l.s4 1966171168
  %v7282 = vunpack.c.0.s8 %v7281
  %v7283 = vlaneseq
  %v7284 = vshrl.u32 %v7283, 7
  %v7285 = vsub.s32 %v7282, %v7284
  %v7286 = vrot.slane %v7278, %v7285
  %v7288 = vunpack.c.l.s4 1966171168
  %v7289 = vunpack.c.0.s8 %v7288
  %v7290 = vlaneseq
  %v7291 = vshrl.u32 %v7290, 7
  %v7292 = vsub.s32 %v7289, %v7291
  %v7293 = vrot.slane %v7279, %v7292
  %v7294 = vcombine.low %v7286, %v7293
  %v7295 = vcombine.low %v6317, %v6341
  %v7296 = vcombine.low %v6355, %v6363
  %v7297 = vcombine.low %v6365, %v6348
  %v7298 = vcombine.low %v6362, %v6364
  %v7300 = vunpack.c.l.s4 1966171168
  %v7301 = vunpack.c.0.s8 %v7300
  %v7302 = vlaneseq
  %v7303 = vshrl.u32 %v7302, 7
  %v7304 = vsub.s32 %v7301, %v7303
  %v7305 = vrot.slane %v7295, %v7304
  %v7307 = vunpack.c.l.s4 1966171168
  %v7308 = vunpack.c.0.s8 %v7307
  %v7309 = vlaneseq
  %v7310 = vshrl.u32 %v7309, 7
  %v7311 = vsub.s32 %v7308, %v7310
  %v7312 = vrot.slane %v7296, %v7311
  %v7314 = vunpack.c.l.s4 1966171168
  %v7315 = vunpack.c.0.s8 %v7314
  %v7316 = vlaneseq
  %v7317 = vshrl.u32 %v7316, 7
  %v7318 = vsub.s32 %v7315, %v7317
  %v7319 = vrot.slane %v7297, %v7318
  %v7321 = vunpack.c.l.s4 1966171168
  %v7322 = vunpack.c.0.s8 %v7321
  %v7323 = vlaneseq
  %v7324 = vshrl.u32 %v7323, 7
  %v7325 = vsub.s32 %v7322, %v7324
  %v7326 = vrot.slane %v7298, %v7325
  %v7327 = vcombine.low %v7305, %v7312
  %v7328 = vcombine.low %v7319, %v7326
  %v7330 = vunpack.c.l.s4 1966171168
  %v7331 = vunpack.c.0.s8 %v7330
  %v7332 = vlaneseq
  %v7333 = vshrl.u32 %v7332, 7
  %v7334 = vsub.s32 %v7331, %v7333
  %v7335 = vrot.slane %v7327, %v7334
  %v7337 = vunpack.c.l.s4 1966171168
  %v7338 = vunpack.c.0.s8 %v7337
  %v7339 = vlaneseq
  %v7340 = vshrl.u32 %v7339, 7
  %v7341 = vsub.s32 %v7338, %v7340
  %v7342 = vrot.slane %v7328, %v7341
  %v7343 = vcombine.low %v7335, %v7342
  %v7344 = vcombine.low %v6366, %v6390
  %v7345 = vcombine.low %v6404, %v6412
  %v7346 = vcombine.low %v6414, %v6397
  %v7347 = vcombine.low %v6411, %v6413
  %v7349 = vunpack.c.l.s4 1966171168
  %v7350 = vunpack.c.0.s8 %v7349
  %v7351 = vlaneseq
  %v7352 = vshrl.u32 %v7351, 7
  %v7353 = vsub.s32 %v7350, %v7352
  %v7354 = vrot.slane %v7344, %v7353
  %v7356 = vunpack.c.l.s4 1966171168
  %v7357 = vunpack.c.0.s8 %v7356
  %v7358 = vlaneseq
  %v7359 = vshrl.u32 %v7358, 7
  %v7360 = vsub.s32 %v7357, %v7359
  %v7361 = vrot.slane %v7345, %v7360
  %v7363 = vunpack.c.l.s4 1966171168
  %v7364 = vunpack.c.0.s8 %v7363
  %v7365 = vlaneseq
  %v7366 = vshrl.u32 %v7365, 7
  %v7367 = vsub.s32 %v7364, %v7366
  %v7368 = vrot.slane %v7346, %v7367
  %v7370 = vunpack.c.l.s4 1966171168
  %v7371 = vunpack.c.0.s8 %v7370
  %v7372 = vlaneseq
  %v7373 = vshrl.u32 %v7372, 7
  %v7374 = vsub.s32 %v7371, %v7373
  %v7375 = vrot.slane %v7347, %v7374
  %v7376 = vcombine.low %v7354, %v7361
  %v7377 = vcombine.low %v7368, %v7375
  %v7379 = vunpack.c.l.s4 1966171168
  %v7380 = vunpack.c.0.s8 %v7379
  %v7381 = vlaneseq
  %v7382 = vshrl.u32 %v7381, 7
  %v7383 = vsub.s32 %v7380, %v7382
  %v7384 = vrot.slane %v7376, %v7383
  %v7386 = vunpack.c.l.s4 1966171168
  %v7387 = vunpack.c.0.s8 %v7386
  %v7388 = vlaneseq
  %v7389 = vshrl.u32 %v7388, 7
  %v7390 = vsub.s32 %v7387, %v7389
  %v7391 = vrot.slane %v7377, %v7390
  %v7392 = vcombine.low %v7384, %v7391
  %v7393 = vcombine.low %v6415, %v6439
  %v7394 = vcombine.low %v6453, %v6461
  %v7395 = vcombine.low %v6463, %v6446
  %v7396 = vcombine.low %v6460, %v6462
  %v7398 = vunpack.c.l.s4 1966171168
  %v7399 = vunpack.c.0.s8 %v7398
  %v7400 = vlaneseq
  %v7401 = vshrl.u32 %v7400, 7
  %v7402 = vsub.s32 %v7399, %v7401
  %v7403 = vrot.slane %v7393, %v7402
  %v7405 = vunpack.c.l.s4 1966171168
  %v7406 = vunpack.c.0.s8 %v7405
  %v7407 = vlaneseq
  %v7408 = vshrl.u32 %v7407, 7
  %v7409 = vsub.s32 %v7406, %v7408
  %v7410 = vrot.slane %v7394, %v7409
  %v7412 = vunpack.c.l.s4 1966171168
  %v7413 = vunpack.c.0.s8 %v7412
  %v7414 = vlaneseq
  %v7415 = vshrl.u32 %v7414, 7
  %v7416 = vsub.s32 %v7413, %v7415
  %v7417 = vrot.slane %v7395, %v7416
  %v7419 = vunpack.c.l.s4 1966171168
  %v7420 = vunpack.c.0.s8 %v7419
  %v7421 = vlaneseq
  %v7422 = vshrl.u32 %v7421, 7
  %v7423 = vsub.s32 %v7420, %v7422
  %v7424 = vrot.slane %v7396, %v7423
  %v7425 = vcombine.low %v7403, %v7410
  %v7426 = vcombine.low %v7417, %v7424
  %v7428 = vunpack.c.l.s4 1966171168
  %v7429 = vunpack.c.0.s8 %v7428
  %v7430 = vlaneseq
  %v7431 = vshrl.u32 %v7430, 7
  %v7432 = vsub.s32 %v7429, %v7431
  %v7433 = vrot.slane %v7425, %v7432
  %v7435 = vunpack.c.l.s4 1966171168
  %v7436 = vunpack.c.0.s8 %v7435
  %v7437 = vlaneseq
  %v7438 = vshrl.u32 %v7437, 7
  %v7439 = vsub.s32 %v7436, %v7438
  %v7440 = vrot.slane %v7426, %v7439
  %v7441 = vcombine.low %v7433, %v7440
  %v7442 = vcombine.low %v6464, %v6488
  %v7443 = vcombine.low %v6502, %v6510
  %v7444 = vcombine.low %v6512, %v6495
  %v7445 = vcombine.low %v6509, %v6511
  %v7447 = vunpack.c.l.s4 1966171168
  %v7448 = vunpack.c.0.s8 %v7447
  %v7449 = vlaneseq
  %v7450 = vshrl.u32 %v7449, 7
  %v7451 = vsub.s32 %v7448, %v7450
  %v7452 = vrot.slane %v7442, %v7451
  %v7454 = vunpack.c.l.s4 1966171168
  %v7455 = vunpack.c.0.s8 %v7454
  %v7456 = vlaneseq
  %v7457 = vshrl.u32 %v7456, 7
  %v7458 = vsub.s32 %v7455, %v7457
  %v7459 = vrot.slane %v7443, %v7458
  %v7461 = vunpack.c.l.s4 1966171168
  %v7462 = vunpack.c.0.s8 %v7461
  %v7463 = vlaneseq
  %v7464 = vshrl.u32 %v7463, 7
  %v7465 = vsub.s32 %v7462, %v7464
  %v7466 = vrot.slane %v7444, %v7465
  %v7468 = vunpack.c.l.s4 1966171168
  %v7469 = vunpack.c.0.s8 %v7468
  %v7470 = vlaneseq
  %v7471 = vshrl.u32 %v7470, 7
  %v7472 = vsub.s32 %v7469, %v7471
  %v7473 = vrot.slane %v7445, %v7472
  %v7474 = vcombine.low %v7452, %v7459
  %v7475 = vcombine.low %v7466, %v7473
  %v7477 = vunpack.c.l.s4 1966171168
  %v7478 = vunpack.c.0.s8 %v7477
  %v7479 = vlaneseq
  %v7480 = vshrl.u32 %v7479, 7
  %v7481 = vsub.s32 %v7478, %v7480
  %v7482 = vrot.slane %v7474, %v7481
  %v7484 = vunpack.c.l.s4 1966171168
  %v7485 = vunpack.c.0.s8 %v7484
  %v7486 = vlaneseq
  %v7487 = vshrl.u32 %v7486, 7
  %v7488 = vsub.s32 %v7485, %v7487
  %v7489 = vrot.slane %v7475, %v7488
  %v7490 = vcombine.low %v7482, %v7489
  %v7491 = vcombine.low %v6513, %v6537
  %v7492 = vcombine.low %v6551, %v6559
  %v7493 = vcombine.low %v6561, %v6544
  %v7494 = vcombine.low %v6558, %v6560
  %v7496 = vunpack.c.l.s4 1966171168
  %v7497 = vunpack.c.0.s8 %v7496
  %v7498 = vlaneseq
  %v7499 = vshrl.u32 %v7498, 7
  %v7500 = vsub.s32 %v7497, %v7499
  %v7501 = vrot.slane %v7491, %v7500
  %v7503 = vunpack.c.l.s4 1966171168
  %v7504 = vunpack.c.0.s8 %v7503
  %v7505 = vlaneseq
  %v7506 = vshrl.u32 %v7505, 7
  %v7507 = vsub.s32 %v7504, %v7506
  %v7508 = vrot.slane %v7492, %v7507
  %v7510 = vunpack.c.l.s4 1966171168
  %v7511 = vunpack.c.0.s8 %v7510
  %v7512 = vlaneseq
  %v7513 = vshrl.u32 %v7512, 7
  %v7514 = vsub.s32 %v7511, %v7513
  %v7515 = vrot.slane %v7493, %v7514
  %v7517 = vunpack.c.l.s4 1966171168
  %v7518 = vunpack.c.0.s8 %v7517
  %v7519 = vlaneseq
  %v7520 = vshrl.u32 %v7519, 7
  %v7521 = vsub.s32 %v7518, %v7520
  %v7522 = vrot.slane %v7494, %v7521
  %v7523 = vcombine.low %v7501, %v7508
  %v7524 = vcombine.low %v7515, %v7522
  %v7526 = vunpack.c.l.s4 1966171168
  %v7527 = vunpack.c.0.s8 %v7526
  %v7528 = vlaneseq
  %v7529 = vshrl.u32 %v7528, 7
  %v7530 = vsub.s32 %v7527, %v7529
  %v7531 = vrot.slane %v7523, %v7530
  %v7533 = vunpack.c.l.s4 1966171168
  %v7534 = vunpack.c.0.s8 %v7533
  %v7535 = vlaneseq
  %v7536 = vshrl.u32 %v7535, 7
  %v7537 = vsub.s32 %v7534, %v7536
  %v7538 = vrot.slane %v7524, %v7537
  %v7539 = vcombine.low %v7531, %v7538
  %v7540 = vcombine.low %v6562, %v6586
  %v7541 = vcombine.low %v6600, %v6608
  %v7542 = vcombine.low %v6609, %v6593
  %v7544 = vunpack.c.l.s4 1966171168
  %v7545 = vunpack.c.0.s8 %v7544
  %v7546 = vlaneseq
  %v7547 = vshrl.u32 %v7546, 7
  %v7548 = vsub.s32 %v7545, %v7547
  %v7549 = vrot.slane %v7540, %v7548
  %v7551 = vunpack.c.l.s4 1966171168
  %v7552 = vunpack.c.0.s8 %v7551
  %v7553 = vlaneseq
  %v7554 = vshrl.u32 %v7553, 7
  %v7555 = vsub.s32 %v7552, %v7554
  %v7556 = vrot.slane %v7541, %v7555
  %v7558 = vunpack.c.l.s4 1966171168
  %v7559 = vunpack.c.0.s8 %v7558
  %v7560 = vlaneseq
  %v7561 = vshrl.u32 %v7560, 7
  %v7562 = vsub.s32 %v7559, %v7561
  %v7563 = vrot.slane %v7542, %v7562
  %v7565 = vunpack.c.l.s4 1966171168
  %v7566 = vunpack.c.0.s8 %v7565
  %v7567 = vlaneseq
  %v7568 = vshrl.u32 %v7567, 7
  %v7569 = vsub.s32 %v7566, %v7568
  %v7570 = vrot.slane %v6607, %v7569
  %v7571 = vcombine.low %v7549, %v7556
  %v7572 = vcombine.low %v7563, %v7570
  %v7574 = vunpack.c.l.s4 1966171168
  %v7575 = vunpack.c.0.s8 %v7574
  %v7576 = vlaneseq
  %v7577 = vshrl.u32 %v7576, 7
  %v7578 = vsub.s32 %v7575, %v7577
  %v7579 = vrot.slane %v7571, %v7578
  %v7581 = vunpack.c.l.s4 1966171168
  %v7582 = vunpack.c.0.s8 %v7581
  %v7583 = vlaneseq
  %v7584 = vshrl.u32 %v7583, 7
  %v7585 = vsub.s32 %v7582, %v7584
  %v7586 = vrot.slane %v7572, %v7585
  %v7587 = vcombine.low %v7579, %v7586
  %7608 = vst [vmem:[#allocation3] sm:$0xff] %v6658
  %7609 = vst [vmem:[#allocation3 + $0x8] sm:$0xff] %v6707
  %7610 = vst [vmem:[#allocation3 + $0x10] sm:$0xff] %v6756
  %7611 = vst [vmem:[#allocation3 + $0x18] sm:$0xff] %v6805
  %7612 = vst [vmem:[#allocation3 + $0x20] sm:$0xff] %v6854
  %7613 = vst [vmem:[#allocation3 + $0x28] sm:$0xff] %v6903
  %7614 = vst [vmem:[#allocation3 + $0x30] sm:$0xff] %v6952
  %7615 = vst [vmem:[#allocation3 + $0x38] sm:$0xff] %v7001
  %7616 = vst [vmem:[#allocation3 + $0x40] sm:$0xff] %v7050
  %7617 = vst [vmem:[#allocation3 + $0x48] sm:$0x7f] %v7098
  %7618 = vst [vmem:[#allocation3 + $0x50] sm:$0xff] %v7147
  %7619 = vst [vmem:[#allocation3 + $0x58] sm:$0xff] %v7196
  %7620 = vst [vmem:[#allocation3 + $0x60] sm:$0xff] %v7245
  %7621 = vst [vmem:[#allocation3 + $0x68] sm:$0xff] %v7294
  %7622 = vst [vmem:[#allocation3 + $0x70] sm:$0xff] %v7343
  %7623 = vst [vmem:[#allocation3 + $0x78] sm:$0xff] %v7392
  %7624 = vst [vmem:[#allocation3 + $0x80] sm:$0xff] %v7441
  %7625 = vst [vmem:[#allocation3 + $0x88] sm:$0xff] %v7490
  %7626 = vst [vmem:[#allocation3 + $0x90] sm:$0xff] %v7539
  %7627 = vst [vmem:[#allocation3 + $0x98] sm:$0x7f] %v7587
  %v7628 = vld [vmem:[#allocation3] ss:$5 sm:$0xff]
  %s7629 = scalar_lea.vmem [#allocation3], 40
  %v7630 = vld [vmem:[%s7629] ss:$5 sm:$0xff]
  %s7631 = scalar_lea.vmem [#allocation3], 80
  %v7632 = vld [vmem:[%s7631] ss:$5 sm:$0xff]
  %s7633 = scalar_lea.vmem [#allocation3], 120
  %v7634 = vld [vmem:[%s7633] ss:$5 sm:$0xff]
  %v7635 = vpack.c.bf16 %v7630, %v7628
  %v7636 = vpack.c.bf16 %v7634, %v7632
  %s7637 = scalar_lea.vmem [#allocation3], 1
  %v7638 = vld [vmem:[%s7637] ss:$5 sm:$0xff]
  %s7639 = scalar_lea.vmem [#allocation3], 41
  %v7640 = vld [vmem:[%s7639] ss:$5 sm:$0xff]
  %s7641 = scalar_lea.vmem [#allocation3], 81
  %v7642 = vld [vmem:[%s7641] ss:$5 sm:$0xff]
  %s7643 = scalar_lea.vmem [#allocation3], 121
  %v7644 = vld [vmem:[%s7643] ss:$5 sm:$0xff]
  %v7645 = vpack.c.bf16 %v7640, %v7638
  %v7646 = vpack.c.bf16 %v7644, %v7642
  %s7647 = scalar_lea.vmem [#allocation3], 2
  %v7648 = vld [vmem:[%s7647] ss:$5 sm:$0xff]
  %s7649 = scalar_lea.vmem [#allocation3], 42
  %v7650 = vld [vmem:[%s7649] ss:$5 sm:$0xff]
  %s7651 = scalar_lea.vmem [#allocation3], 82
  %v7652 = vld [vmem:[%s7651] ss:$5 sm:$0xff]
  %s7653 = scalar_lea.vmem [#allocation3], 122
  %v7654 = vld [vmem:[%s7653] ss:$5 sm:$0xff]
  %v7655 = vpack.c.bf16 %v7650, %v7648
  %v7656 = vpack.c.bf16 %v7654, %v7652
  %s7657 = scalar_lea.vmem [#allocation3], 3
  %v7658 = vld [vmem:[%s7657] ss:$5 sm:$0xff]
  %s7659 = scalar_lea.vmem [#allocation3], 43
  %v7660 = vld [vmem:[%s7659] ss:$5 sm:$0xff]
  %s7661 = scalar_lea.vmem [#allocation3], 83
  %v7662 = vld [vmem:[%s7661] ss:$5 sm:$0xff]
  %s7663 = scalar_lea.vmem [#allocation3], 123
  %v7664 = vld [vmem:[%s7663] ss:$5 sm:$0xff]
  %v7665 = vpack.c.bf16 %v7660, %v7658
  %v7666 = vpack.c.bf16 %v7664, %v7662
  %s7667 = scalar_lea.vmem [#allocation3], 4
  %v7668 = vld [vmem:[%s7667] ss:$5 sm:$0xff]
  %s7669 = scalar_lea.vmem [#allocation3], 44
  %v7670 = vld [vmem:[%s7669] ss:$5 sm:$0x7f]
  %s7671 = scalar_lea.vmem [#allocation3], 84
  %v7672 = vld [vmem:[%s7671] ss:$5 sm:$0xff]
  %s7673 = scalar_lea.vmem [#allocation3], 124
  %v7674 = vld [vmem:[%s7673] ss:$5 sm:$0x7f]
  %v7675 = vpack.c.bf16 %v7670, %v7668
  %v7676 = vpack.c.bf16 %v7674, %v7672
  %v7678 = vshrl.u32 %v7635, 16
  %v7680 = vshll.u32 %v7635, 16
  %v7682 = vrot.slane %v7680, 1
  %v7683 = vor.u32 %v7678, %v7682
  %v7685 = vshrl.u32 %v7636, 16
  %v7687 = vshll.u32 %v7636, 16
  %v7689 = vrot.slane %v7687, 1
  %v7690 = vor.u32 %v7685, %v7689
  %v7692 = vshrl.u32 %v7645, 16
  %v7694 = vshll.u32 %v7645, 16
  %v7696 = vrot.slane %v7694, 1
  %v7697 = vor.u32 %v7692, %v7696
  %v7699 = vshrl.u32 %v7646, 16
  %v7701 = vshll.u32 %v7646, 16
  %v7703 = vrot.slane %v7701, 1
  %v7704 = vor.u32 %v7699, %v7703
  %v7706 = vshrl.u32 %v7655, 16
  %v7708 = vshll.u32 %v7655, 16
  %v7710 = vrot.slane %v7708, 1
  %v7711 = vor.u32 %v7706, %v7710
  %v7713 = vshrl.u32 %v7656, 16
  %v7715 = vshll.u32 %v7656, 16
  %v7717 = vrot.slane %v7715, 1
  %v7718 = vor.u32 %v7713, %v7717
  %v7720 = vshrl.u32 %v7665, 16
  %v7722 = vshll.u32 %v7665, 16
  %v7724 = vrot.slane %v7722, 1
  %v7725 = vor.u32 %v7720, %v7724
  %v7727 = vshrl.u32 %v7666, 16
  %v7729 = vshll.u32 %v7666, 16
  %v7731 = vrot.slane %v7729, 1
  %v7732 = vor.u32 %v7727, %v7731
  %v7743 = vcombine.low %v7635, %v7683
  %v7744 = vcombine.high %v7635, %v7683
  %v7745 = vcombine.low %v7645, %v7697
  %v7746 = vcombine.high %v7645, %v7697
  %v7747 = vcombine.low %v7655, %v7711
  %v7748 = vcombine.high %v7655, %v7711
  %v7749 = vcombine.low %v7665, %v7725
  %v7750 = vcombine.high %v7665, %v7725
  %v7752 = vunpack.c.l.s4 1966171168
  %v7753 = vunpack.c.0.s8 %v7752
  %v7754 = vlaneseq
  %v7755 = vshrl.u32 %v7754, 7
  %v7756 = vsub.s32 %v7753, %v7755
  %v7757 = vrot.slane %v7743, %v7756
  %v7759 = vunpack.c.l.s4 1966171168
  %v7760 = vunpack.c.0.s8 %v7759
  %v7761 = vlaneseq
  %v7762 = vshrl.u32 %v7761, 7
  %v7763 = vsub.s32 %v7760, %v7762
  %v7764 = vrot.slane %v7744, %v7763
  %v7766 = vunpack.c.l.s4 1966171168
  %v7767 = vunpack.c.0.s8 %v7766
  %v7768 = vlaneseq
  %v7769 = vshrl.u32 %v7768, 7
  %v7770 = vsub.s32 %v7767, %v7769
  %v7771 = vrot.slane %v7745, %v7770
  %v7773 = vunpack.c.l.s4 1966171168
  %v7774 = vunpack.c.0.s8 %v7773
  %v7775 = vlaneseq
  %v7776 = vshrl.u32 %v7775, 7
  %v7777 = vsub.s32 %v7774, %v7776
  %v7778 = vrot.slane %v7746, %v7777
  %v7780 = vunpack.c.l.s4 1966171168
  %v7781 = vunpack.c.0.s8 %v7780
  %v7782 = vlaneseq
  %v7783 = vshrl.u32 %v7782, 7
  %v7784 = vsub.s32 %v7781, %v7783
  %v7785 = vrot.slane %v7747, %v7784
  %v7787 = vunpack.c.l.s4 1966171168
  %v7788 = vunpack.c.0.s8 %v7787
  %v7789 = vlaneseq
  %v7790 = vshrl.u32 %v7789, 7
  %v7791 = vsub.s32 %v7788, %v7790
  %v7792 = vrot.slane %v7748, %v7791
  %v7794 = vunpack.c.l.s4 1966171168
  %v7795 = vunpack.c.0.s8 %v7794
  %v7796 = vlaneseq
  %v7797 = vshrl.u32 %v7796, 7
  %v7798 = vsub.s32 %v7795, %v7797
  %v7799 = vrot.slane %v7749, %v7798
  %v7801 = vunpack.c.l.s4 1966171168
  %v7802 = vunpack.c.0.s8 %v7801
  %v7803 = vlaneseq
  %v7804 = vshrl.u32 %v7803, 7
  %v7805 = vsub.s32 %v7802, %v7804
  %v7806 = vrot.slane %v7750, %v7805
  %v7807 = vcombine.low %v7757, %v7771
  %v7808 = vcombine.high %v7757, %v7771
  %v7809 = vcombine.low %v7764, %v7778
  %v7810 = vcombine.high %v7764, %v7778
  %v7811 = vcombine.low %v7785, %v7799
  %v7812 = vcombine.high %v7785, %v7799
  %v7813 = vcombine.low %v7792, %v7806
  %v7814 = vcombine.high %v7792, %v7806
  %v7816 = vunpack.c.l.s4 1966171168
  %v7817 = vunpack.c.0.s8 %v7816
  %v7818 = vlaneseq
  %v7819 = vshrl.u32 %v7818, 7
  %v7820 = vsub.s32 %v7817, %v7819
  %v7821 = vrot.slane %v7807, %v7820
  %v7823 = vunpack.c.l.s4 1966171168
  %v7824 = vunpack.c.0.s8 %v7823
  %v7825 = vlaneseq
  %v7826 = vshrl.u32 %v7825, 7
  %v7827 = vsub.s32 %v7824, %v7826
  %v7828 = vrot.slane %v7809, %v7827
  %v7830 = vunpack.c.l.s4 1966171168
  %v7831 = vunpack.c.0.s8 %v7830
  %v7832 = vlaneseq
  %v7833 = vshrl.u32 %v7832, 7
  %v7834 = vsub.s32 %v7831, %v7833
  %v7835 = vrot.slane %v7808, %v7834
  %v7837 = vunpack.c.l.s4 1966171168
  %v7838 = vunpack.c.0.s8 %v7837
  %v7839 = vlaneseq
  %v7840 = vshrl.u32 %v7839, 7
  %v7841 = vsub.s32 %v7838, %v7840
  %v7842 = vrot.slane %v7810, %v7841
  %v7844 = vunpack.c.l.s4 1966171168
  %v7845 = vunpack.c.0.s8 %v7844
  %v7846 = vlaneseq
  %v7847 = vshrl.u32 %v7846, 7
  %v7848 = vsub.s32 %v7845, %v7847
  %v7849 = vrot.slane %v7811, %v7848
  %v7851 = vunpack.c.l.s4 1966171168
  %v7852 = vunpack.c.0.s8 %v7851
  %v7853 = vlaneseq
  %v7854 = vshrl.u32 %v7853, 7
  %v7855 = vsub.s32 %v7852, %v7854
  %v7856 = vrot.slane %v7813, %v7855
  %v7858 = vunpack.c.l.s4 1966171168
  %v7859 = vunpack.c.0.s8 %v7858
  %v7860 = vlaneseq
  %v7861 = vshrl.u32 %v7860, 7
  %v7862 = vsub.s32 %v7859, %v7861
  %v7863 = vrot.slane %v7812, %v7862
  %v7865 = vunpack.c.l.s4 1966171168
  %v7866 = vunpack.c.0.s8 %v7865
  %v7867 = vlaneseq
  %v7868 = vshrl.u32 %v7867, 7
  %v7869 = vsub.s32 %v7866, %v7868
  %v7870 = vrot.slane %v7814, %v7869
  %v7871 = vcombine.low %v7821, %v7849
  %v7872 = vcombine.high %v7821, %v7849
  %v7873 = vcombine.low %v7828, %v7856
  %v7874 = vcombine.high %v7828, %v7856
  %v7875 = vcombine.low %v7835, %v7863
  %v7876 = vcombine.high %v7835, %v7863
  %v7877 = vcombine.low %v7842, %v7870
  %v7878 = vcombine.high %v7842, %v7870
  %v7879 = vcombine.high %v7675, %v7675
  %v7881 = vunpack.c.l.s4 1966171168
  %v7882 = vunpack.c.0.s8 %v7881
  %v7883 = vlaneseq
  %v7884 = vshrl.u32 %v7883, 7
  %v7885 = vsub.s32 %v7882, %v7884
  %v7886 = vrot.slane %v7675, %v7885
  %v7888 = vunpack.c.l.s4 1966171168
  %v7889 = vunpack.c.0.s8 %v7888
  %v7890 = vlaneseq
  %v7891 = vshrl.u32 %v7890, 7
  %v7892 = vsub.s32 %v7889, %v7891
  %v7893 = vrot.slane %v7879, %v7892
  %v7894 = vcombine.high %v7886, %v7886
  %v7895 = vcombine.high %v7893, %v7893
  %v7897 = vunpack.c.l.s4 1966171168
  %v7898 = vunpack.c.0.s8 %v7897
  %v7899 = vlaneseq
  %v7900 = vshrl.u32 %v7899, 7
  %v7901 = vsub.s32 %v7898, %v7900
  %v7902 = vrot.slane %v7886, %v7901
  %v7904 = vunpack.c.l.s4 1966171168
  %v7905 = vunpack.c.0.s8 %v7904
  %v7906 = vlaneseq
  %v7907 = vshrl.u32 %v7906, 7
  %v7908 = vsub.s32 %v7905, %v7907
  %v7909 = vrot.slane %v7893, %v7908
  %v7911 = vunpack.c.l.s4 1966171168
  %v7912 = vunpack.c.0.s8 %v7911
  %v7913 = vlaneseq
  %v7914 = vshrl.u32 %v7913, 7
  %v7915 = vsub.s32 %v7912, %v7914
  %v7916 = vrot.slane %v7894, %v7915
  %v7918 = vunpack.c.l.s4 1966171168
  %v7919 = vunpack.c.0.s8 %v7918
  %v7920 = vlaneseq
  %v7921 = vshrl.u32 %v7920, 7
  %v7922 = vsub.s32 %v7919, %v7921
  %v7923 = vrot.slane %v7895, %v7922
  %v7924 = vcombine.high %v7902, %v7902
  %v7925 = vcombine.high %v7909, %v7909
  %v7926 = vcombine.high %v7916, %v7916
  %v7927 = vcombine.high %v7923, %v7923
  %v7928 = vcombine.low %v7636, %v7690
  %v7929 = vcombine.high %v7636, %v7690
  %v7930 = vcombine.low %v7646, %v7704
  %v7931 = vcombine.high %v7646, %v7704
  %v7932 = vcombine.low %v7656, %v7718
  %v7933 = vcombine.high %v7656, %v7718
  %v7934 = vcombine.low %v7666, %v7732
  %v7935 = vcombine.high %v7666, %v7732
  %v7937 = vunpack.c.l.s4 1966171168
  %v7938 = vunpack.c.0.s8 %v7937
  %v7939 = vlaneseq
  %v7940 = vshrl.u32 %v7939, 7
  %v7941 = vsub.s32 %v7938, %v7940
  %v7942 = vrot.slane %v7928, %v7941
  %v7944 = vunpack.c.l.s4 1966171168
  %v7945 = vunpack.c.0.s8 %v7944
  %v7946 = vlaneseq
  %v7947 = vshrl.u32 %v7946, 7
  %v7948 = vsub.s32 %v7945, %v7947
  %v7949 = vrot.slane %v7929, %v7948
  %v7951 = vunpack.c.l.s4 1966171168
  %v7952 = vunpack.c.0.s8 %v7951
  %v7953 = vlaneseq
  %v7954 = vshrl.u32 %v7953, 7
  %v7955 = vsub.s32 %v7952, %v7954
  %v7956 = vrot.slane %v7930, %v7955
  %v7958 = vunpack.c.l.s4 1966171168
  %v7959 = vunpack.c.0.s8 %v7958
  %v7960 = vlaneseq
  %v7961 = vshrl.u32 %v7960, 7
  %v7962 = vsub.s32 %v7959, %v7961
  %v7963 = vrot.slane %v7931, %v7962
  %v7965 = vunpack.c.l.s4 1966171168
  %v7966 = vunpack.c.0.s8 %v7965
  %v7967 = vlaneseq
  %v7968 = vshrl.u32 %v7967, 7
  %v7969 = vsub.s32 %v7966, %v7968
  %v7970 = vrot.slane %v7932, %v7969
  %v7972 = vunpack.c.l.s4 1966171168
  %v7973 = vunpack.c.0.s8 %v7972
  %v7974 = vlaneseq
  %v7975 = vshrl.u32 %v7974, 7
  %v7976 = vsub.s32 %v7973, %v7975
  %v7977 = vrot.slane %v7933, %v7976
  %v7979 = vunpack.c.l.s4 1966171168
  %v7980 = vunpack.c.0.s8 %v7979
  %v7981 = vlaneseq
  %v7982 = vshrl.u32 %v7981, 7
  %v7983 = vsub.s32 %v7980, %v7982
  %v7984 = vrot.slane %v7934, %v7983
  %v7986 = vunpack.c.l.s4 1966171168
  %v7987 = vunpack.c.0.s8 %v7986
  %v7988 = vlaneseq
  %v7989 = vshrl.u32 %v7988, 7
  %v7990 = vsub.s32 %v7987, %v7989
  %v7991 = vrot.slane %v7935, %v7990
  %v7992 = vcombine.low %v7942, %v7956
  %v7993 = vcombine.high %v7942, %v7956
  %v7994 = vcombine.low %v7949, %v7963
  %v7995 = vcombine.high %v7949, %v7963
  %v7996 = vcombine.low %v7970, %v7984
  %v7997 = vcombine.high %v7970, %v7984
  %v7998 = vcombine.low %v7977, %v7991
  %v7999 = vcombine.high %v7977, %v7991
  %v8001 = vunpack.c.l.s4 1966171168
  %v8002 = vunpack.c.0.s8 %v8001
  %v8003 = vlaneseq
  %v8004 = vshrl.u32 %v8003, 7
  %v8005 = vsub.s32 %v8002, %v8004
  %v8006 = vrot.slane %v7992, %v8005
  %v8008 = vunpack.c.l.s4 1966171168
  %v8009 = vunpack.c.0.s8 %v8008
  %v8010 = vlaneseq
  %v8011 = vshrl.u32 %v8010, 7
  %v8012 = vsub.s32 %v8009, %v8011
  %v8013 = vrot.slane %v7994, %v8012
  %v8015 = vunpack.c.l.s4 1966171168
  %v8016 = vunpack.c.0.s8 %v8015
  %v8017 = vlaneseq
  %v8018 = vshrl.u32 %v8017, 7
  %v8019 = vsub.s32 %v8016, %v8018
  %v8020 = vrot.slane %v7993, %v8019
  %v8022 = vunpack.c.l.s4 1966171168
  %v8023 = vunpack.c.0.s8 %v8022
  %v8024 = vlaneseq
  %v8025 = vshrl.u32 %v8024, 7
  %v8026 = vsub.s32 %v8023, %v8025
  %v8027 = vrot.slane %v7995, %v8026
  %v8029 = vunpack.c.l.s4 1966171168
  %v8030 = vunpack.c.0.s8 %v8029
  %v8031 = vlaneseq
  %v8032 = vshrl.u32 %v8031, 7
  %v8033 = vsub.s32 %v8030, %v8032
  %v8034 = vrot.slane %v7996, %v8033
  %v8036 = vunpack.c.l.s4 1966171168
  %v8037 = vunpack.c.0.s8 %v8036
  %v8038 = vlaneseq
  %v8039 = vshrl.u32 %v8038, 7
  %v8040 = vsub.s32 %v8037, %v8039
  %v8041 = vrot.slane %v7998, %v8040
  %v8043 = vunpack.c.l.s4 1966171168
  %v8044 = vunpack.c.0.s8 %v8043
  %v8045 = vlaneseq
  %v8046 = vshrl.u32 %v8045, 7
  %v8047 = vsub.s32 %v8044, %v8046
  %v8048 = vrot.slane %v7997, %v8047
  %v8050 = vunpack.c.l.s4 1966171168
  %v8051 = vunpack.c.0.s8 %v8050
  %v8052 = vlaneseq
  %v8053 = vshrl.u32 %v8052, 7
  %v8054 = vsub.s32 %v8051, %v8053
  %v8055 = vrot.slane %v7999, %v8054
  %v8056 = vcombine.low %v8006, %v8034
  %v8057 = vcombine.high %v8006, %v8034
  %v8058 = vcombine.low %v8013, %v8041
  %v8059 = vcombine.high %v8013, %v8041
  %v8060 = vcombine.low %v8020, %v8048
  %v8061 = vcombine.high %v8020, %v8048
  %v8062 = vcombine.low %v8027, %v8055
  %v8063 = vcombine.high %v8027, %v8055
  %v8064 = vcombine.high %v7676, %v7676
  %v8066 = vunpack.c.l.s4 1966171168
  %v8067 = vunpack.c.0.s8 %v8066
  %v8068 = vlaneseq
  %v8069 = vshrl.u32 %v8068, 7
  %v8070 = vsub.s32 %v8067, %v8069
  %v8071 = vrot.slane %v7676, %v8070
  %v8073 = vunpack.c.l.s4 1966171168
  %v8074 = vunpack.c.0.s8 %v8073
  %v8075 = vlaneseq
  %v8076 = vshrl.u32 %v8075, 7
  %v8077 = vsub.s32 %v8074, %v8076
  %v8078 = vrot.slane %v8064, %v8077
  %v8079 = vcombine.high %v8071, %v8071
  %v8080 = vcombine.high %v8078, %v8078
  %v8082 = vunpack.c.l.s4 1966171168
  %v8083 = vunpack.c.0.s8 %v8082
  %v8084 = vlaneseq
  %v8085 = vshrl.u32 %v8084, 7
  %v8086 = vsub.s32 %v8083, %v8085
  %v8087 = vrot.slane %v8071, %v8086
  %v8089 = vunpack.c.l.s4 1966171168
  %v8090 = vunpack.c.0.s8 %v8089
  %v8091 = vlaneseq
  %v8092 = vshrl.u32 %v8091, 7
  %v8093 = vsub.s32 %v8090, %v8092
  %v8094 = vrot.slane %v8078, %v8093
  %v8096 = vunpack.c.l.s4 1966171168
  %v8097 = vunpack.c.0.s8 %v8096
  %v8098 = vlaneseq
  %v8099 = vshrl.u32 %v8098, 7
  %v8100 = vsub.s32 %v8097, %v8099
  %v8101 = vrot.slane %v8079, %v8100
  %v8103 = vunpack.c.l.s4 1966171168
  %v8104 = vunpack.c.0.s8 %v8103
  %v8105 = vlaneseq
  %v8106 = vshrl.u32 %v8105, 7
  %v8107 = vsub.s32 %v8104, %v8106
  %v8108 = vrot.slane %v8080, %v8107
  %v8109 = vcombine.high %v8087, %v8087
  %v8110 = vcombine.high %v8094, %v8094
  %v8111 = vcombine.high %v8101, %v8101
  %v8112 = vcombine.high %v8108, %v8108
  %v8113 = vunpack.i.l.s16 %v7871
  %v8114 = vunpack.i.l.s16 %v7902
  %v8115 = vunpack.i.h.s16 %v7871
  %v8116 = vunpack.i.h.s16 %v7902
  %v8117 = vunpack.i.l.s16 %v7875
  %v8118 = vunpack.i.l.s16 %v7916
  %v8119 = vunpack.i.h.s16 %v7875
  %v8120 = vunpack.i.h.s16 %v7916
  %v8121 = vunpack.i.l.s16 %v7872
  %v8122 = vunpack.i.l.s16 %v7924
  %v8123 = vunpack.i.h.s16 %v7872
  %v8124 = vunpack.i.h.s16 %v7924
  %v8125 = vunpack.i.l.s16 %v7876
  %v8126 = vunpack.i.l.s16 %v7926
  %v8127 = vunpack.i.h.s16 %v7876
  %v8128 = vunpack.i.h.s16 %v7926
  %v8129 = vunpack.i.l.s16 %v7873
  %v8130 = vunpack.i.l.s16 %v7909
  %v8131 = vunpack.i.h.s16 %v7873
  %v8132 = vunpack.i.h.s16 %v7909
  %v8133 = vunpack.i.l.s16 %v7877
  %v8134 = vunpack.i.l.s16 %v7923
  %v8135 = vunpack.i.h.s16 %v7877
  %v8136 = vunpack.i.h.s16 %v7923
  %v8137 = vunpack.i.l.s16 %v7874
  %v8138 = vunpack.i.l.s16 %v7925
  %v8139 = vunpack.i.h.s16 %v7874
  %v8140 = vunpack.i.h.s16 %v7925
  %v8141 = vunpack.i.l.s16 %v7878
  %v8142 = vunpack.i.l.s16 %v7927
  %v8143 = vunpack.i.l.s16 %v8056
  %v8144 = vunpack.i.l.s16 %v8087
  %v8145 = vunpack.i.h.s16 %v8056
  %v8146 = vunpack.i.h.s16 %v8087
  %v8147 = vunpack.i.l.s16 %v8060
  %v8148 = vunpack.i.l.s16 %v8101
  %v8149 = vunpack.i.h.s16 %v8060
  %v8150 = vunpack.i.h.s16 %v8101
  %v8151 = vunpack.i.l.s16 %v8057
  %v8152 = vunpack.i.l.s16 %v8109
  %v8153 = vunpack.i.h.s16 %v8057
  %v8154 = vunpack.i.h.s16 %v8109
  %v8155 = vunpack.i.l.s16 %v8061
  %v8156 = vunpack.i.l.s16 %v8111
  %v8157 = vunpack.i.h.s16 %v8061
  %v8158 = vunpack.i.h.s16 %v8111
  %v8159 = vunpack.i.l.s16 %v8058
  %v8160 = vunpack.i.l.s16 %v8094
  %v8161 = vunpack.i.h.s16 %v8058
  %v8162 = vunpack.i.h.s16 %v8094
  %v8163 = vunpack.i.l.s16 %v8062
  %v8164 = vunpack.i.l.s16 %v8108
  %v8165 = vunpack.i.h.s16 %v8062
  %v8166 = vunpack.i.h.s16 %v8108
  %v8167 = vunpack.i.l.s16 %v8059
  %v8168 = vunpack.i.l.s16 %v8110
  %v8169 = vunpack.i.h.s16 %v8059
  %v8170 = vunpack.i.h.s16 %v8110
  %v8171 = vunpack.i.l.s16 %v8063
  %v8172 = vunpack.i.l.s16 %v8112
  %v8173 = vld [vmem:[%s5] sm:$0xf]
  %v8174 = vld [vmem:[%s5 + $0x4] sm:$0xf]
  %v8175 = vld [vmem:[%s5 + $0x8] sm:$0xf]
  %v8176 = vld [vmem:[%s5 + $0xc] sm:$0xf]
  %v8177 = vld [vmem:[%s5 + $0x10] sm:$0xf]
  %v8178 = vld [vmem:[%s5 + $0x14] sm:$0xf]
  %v8179 = vld [vmem:[%s5 + $0x18] sm:$0xf]
  %v8180 = vld [vmem:[%s5 + $0x1c] sm:$0xf]
  %v8181 = vld [vmem:[%s5 + $0x20] sm:$0xf]
  %v8182 = vld [vmem:[%s5 + $0x24] sm:$0xf]
  %v8183 = vld [vmem:[%s5 + $0x28] sm:$0xf]
  %v8184 = vld [vmem:[%s5 + $0x2c] sm:$0xf]
  %v8185 = vld [vmem:[%s5 + $0x30] sm:$0xf]
  %v8186 = vld [vmem:[%s5 + $0x34] sm:$0xf]
  %v8187 = vld [vmem:[%s5 + $0x38] sm:$0xf]
  %v8188 = vld [vmem:[%s5 + $0x3c] sm:$0xf]
  %v8189 = vld [vmem:[%s5 + $0x40] sm:$0xf]
  %v8190 = vld [vmem:[%s5 + $0x44] sm:$0xf]
  %v8191 = vld [vmem:[%s5 + $0x48] sm:$0xf]
  %v8192 = vld [vmem:[%s5 + $0x4c] sm:$0xf]
  %v8193 = vld [vmem:[%s5 + $0x50] sm:$0xf]
  %v8194 = vld [vmem:[%s5 + $0x54] sm:$0xf]
  %v8195 = vld [vmem:[%s5 + $0x58] sm:$0xf]
  %v8196 = vld [vmem:[%s5 + $0x5c] sm:$0xf]
  %v8197 = vld [vmem:[%s5 + $0x60] sm:$0xf]
  %v8198 = vld [vmem:[%s5 + $0x64] sm:$0xf]
  %v8199 = vld [vmem:[%s5 + $0x68] sm:$0xf]
  %v8200 = vld [vmem:[%s5 + $0x6c] sm:$0xf]
  %v8201 = vld [vmem:[%s5 + $0x70] sm:$0xf]
  %v8202 = vld [vmem:[%s5 + $0x74] sm:$0xf]
  %v8203 = vld [vmem:[%s5 + $0x78] sm:$0xf]
  %v8204 = vld [vmem:[%s5 + $0x7c] sm:$0xf]
  %v8205 = vld [vmem:[%s5 + $0x80] sm:$0xf]
  %v8206 = vld [vmem:[%s5 + $0x84] sm:$0xf]
  %v8207 = vld [vmem:[%s5 + $0x88] sm:$0xf]
  %v8208 = vld [vmem:[%s5 + $0x8c] sm:$0xf]
  %v8209 = vld [vmem:[%s5 + $0x90] sm:$0xf]
  %v8210 = vld [vmem:[%s5 + $0x94] sm:$0xf]
  %v8211 = vld [vmem:[%s5 + $0x98] sm:$0xf]
  %v8212 = vld [vmem:[%s5 + $0x9c] sm:$0xf]
  %v8213 = vld [vmem:[%s5 + $0xa0] sm:$0xf]
  %v8214 = vld [vmem:[%s5 + $0xa4] sm:$0xf]
  %v8215 = vld [vmem:[%s5 + $0xa8] sm:$0xf]
  %v8216 = vld [vmem:[%s5 + $0xac] sm:$0xf]
  %v8217 = vld [vmem:[%s5 + $0xb0] sm:$0xf]
  %v8218 = vld [vmem:[%s5 + $0xb4] sm:$0xf]
  %v8219 = vld [vmem:[%s5 + $0xb8] sm:$0xf]
  %v8220 = vld [vmem:[%s5 + $0xbc] sm:$0xf]
  %v8221 = vld [vmem:[%s5 + $0xc0] sm:$0xf]
  %v8222 = vld [vmem:[%s5 + $0xc4] sm:$0xf]
  %v8223 = vld [vmem:[%s5 + $0xc8] sm:$0xf]
  %v8224 = vld [vmem:[%s5 + $0xcc] sm:$0xf]
  %v8225 = vld [vmem:[%s5 + $0xd0] sm:$0xf]
  %v8226 = vld [vmem:[%s5 + $0xd4] sm:$0xf]
  %v8227 = vld [vmem:[%s5 + $0xd8] sm:$0xf]
  %v8228 = vld [vmem:[%s5 + $0xdc] sm:$0xf]
  %v8229 = vld [vmem:[%s5 + $0xe0] sm:$0xf]
  %v8230 = vld [vmem:[%s5 + $0xe4] sm:$0xf]
  %v8231 = vld [vmem:[%s5 + $0xe8] sm:$0xf]
  %v8232 = vld [vmem:[%s5 + $0xec] sm:$0xf]
  %v8233 = vld [vmem:[%s5 + $0xf0] sm:$0xf]
  %v8234 = vld [vmem:[%s5 + $0xf4] sm:$0xf]
  %v8235 = vld [vmem:[%s5 + $0xf8] sm:$0xf]
  %v8236 = vld [vmem:[%s5 + $0xfc] sm:$0xf]
  %v8237 = vld [vmem:[%s5 + $0x100] sm:$0xf]
  %v8238 = vld [vmem:[%s5 + $0x104] sm:$0xf]
  %v8239 = vld [vmem:[%s5 + $0x108] sm:$0xf]
  %v8240 = vld [vmem:[%s5 + $0x10c] sm:$0xf]
  %v8241 = vld [vmem:[%s5 + $0x110] sm:$0xf]
  %v8242 = vld [vmem:[%s5 + $0x114] sm:$0xf]
  %v8243 = vld [vmem:[%s5 + $0x118] sm:$0xf]
  %v8244 = vld [vmem:[%s5 + $0x11c] sm:$0xf]
  %v8245 = vld [vmem:[%s5 + $0x120] sm:$0xf]
  %v8246 = vld [vmem:[%s5 + $0x124] sm:$0xf]
  %v8247 = vld [vmem:[%s5 + $0x128] sm:$0xf]
  %v8248 = vld [vmem:[%s5 + $0x12c] sm:$0xf]
  %v8249 = vld [vmem:[%s5 + $0x130] sm:$0xf]
  %v8250 = vld [vmem:[%s5 + $0x134] sm:$0xf]
  %v8251 = vld [vmem:[%s5 + $0x138] sm:$0xf]
  %v8252 = vld [vmem:[%s5 + $0x13c] sm:$0xf]
  %v8253 = vld [vmem:[%s5 + $0x140] sm:$0xf]
  %v8254 = vld [vmem:[%s5 + $0x144] sm:$0xf]
  %v8255 = vld [vmem:[%s5 + $0x148] sm:$0xf]
  %v8256 = vld [vmem:[%s5 + $0x14c] sm:$0xf]
  %v8257 = vld [vmem:[%s5 + $0x150] sm:$0xf]
  %v8258 = vld [vmem:[%s5 + $0x154] sm:$0xf]
  %v8259 = vld [vmem:[%s5 + $0x158] sm:$0xf]
  %v8260 = vld [vmem:[%s5 + $0x15c] sm:$0xf]
  %v8261 = vld [vmem:[%s5 + $0x160] sm:$0xf]
  %v8262 = vld [vmem:[%s5 + $0x164] sm:$0xf]
  %v8263 = vld [vmem:[%s5 + $0x168] sm:$0xf]
  %v8264 = vld [vmem:[%s5 + $0x16c] sm:$0xf]
  %v8265 = vld [vmem:[%s5 + $0x170] sm:$0xf]
  %v8266 = vld [vmem:[%s5 + $0x174] sm:$0xf]
  %v8267 = vld [vmem:[%s5 + $0x178] sm:$0xf]
  %v8268 = vld [vmem:[%s5 + $0x17c] sm:$0xf]
  %v8269 = vld [vmem:[%s5 + $0x180] sm:$0xf]
  %v8270 = vld [vmem:[%s5 + $0x184] sm:$0xf]
  %v8271 = vld [vmem:[%s5 + $0x188] sm:$0xf]
  %v8272 = vld [vmem:[%s5 + $0x18c] sm:$0xf]
  %v8273 = vld [vmem:[%s5 + $0x190] sm:$0xf]
  %v8274 = vld [vmem:[%s5 + $0x194] sm:$0xf]
  %v8275 = vld [vmem:[%s5 + $0x198] sm:$0xf]
  %v8276 = vld [vmem:[%s5 + $0x19c] sm:$0xf]
  %v8277 = vld [vmem:[%s5 + $0x1a0] sm:$0xf]
  %v8278 = vld [vmem:[%s5 + $0x1a4] sm:$0xf]
  %v8279 = vld [vmem:[%s5 + $0x1a8] sm:$0xf]
  %v8280 = vld [vmem:[%s5 + $0x1ac] sm:$0xf]
  %v8281 = vld [vmem:[%s5 + $0x1b0] sm:$0xf]
  %v8282 = vld [vmem:[%s5 + $0x1b4] sm:$0xf]
  %v8283 = vld [vmem:[%s5 + $0x1b8] sm:$0xf]
  %v8284 = vld [vmem:[%s5 + $0x1bc] sm:$0xf]
  %v8285 = vld [vmem:[%s5 + $0x1c0] sm:$0xf]
  %v8286 = vld [vmem:[%s5 + $0x1c4] sm:$0xf]
  %v8287 = vld [vmem:[%s5 + $0x1c8] sm:$0xf]
  %v8288 = vld [vmem:[%s5 + $0x1cc] sm:$0xf]
  %v8289 = vld [vmem:[%s5 + $0x1d0] sm:$0xf]
  %v8290 = vld [vmem:[%s5 + $0x1d4] sm:$0xf]
  %v8291 = vld [vmem:[%s5 + $0x1d8] sm:$0xf]
  %v8292 = vld [vmem:[%s5 + $0x1dc] sm:$0xf]
  %v8293 = vld [vmem:[%s5 + $0x1e0] sm:$0xf]
  %v8294 = vld [vmem:[%s5 + $0x1e4] sm:$0xf]
  %v8295 = vld [vmem:[%s5 + $0x1e8] sm:$0xf]
  %v8296 = vld [vmem:[%s5 + $0x1ec] sm:$0xf]
  %v8297 = vld [vmem:[%s5 + $0x1f0] sm:$0xf]
  %v8298 = vld [vmem:[%s5 + $0x1f4] sm:$0xf]
  %v8299 = vld [vmem:[%s5 + $0x1f8] sm:$0xf]
  %v8300 = vld [vmem:[%s5 + $0x1fc] sm:$0xf]
  %v8301 = vld [vmem:[%s5 + $0x200] sm:$0xf]
  %v8302 = vld [vmem:[%s5 + $0x204] sm:$0xf]
  %v8303 = vld [vmem:[%s5 + $0x208] sm:$0xf]
  %v8304 = vld [vmem:[%s5 + $0x20c] sm:$0xf]
  %v8305 = vld [vmem:[%s5 + $0x210] sm:$0xf]
  %v8306 = vld [vmem:[%s5 + $0x214] sm:$0xf]
  %v8307 = vld [vmem:[%s5 + $0x218] sm:$0xf]
  %v8308 = vld [vmem:[%s5 + $0x21c] sm:$0xf]
  %v8309 = vld [vmem:[%s5 + $0x220] sm:$0xf]
  %v8310 = vld [vmem:[%s5 + $0x224] sm:$0xf]
  %v8311 = vld [vmem:[%s5 + $0x228] sm:$0xf]
  %v8312 = vld [vmem:[%s5 + $0x22c] sm:$0xf]
  %v8313 = vld [vmem:[%s5 + $0x230] sm:$0xf]
  %v8314 = vld [vmem:[%s5 + $0x234] sm:$0xf]
  %v8315 = vld [vmem:[%s5 + $0x238] sm:$0xf]
  %v8316 = vld [vmem:[%s5 + $0x23c] sm:$0xf]
  %v8317 = vlaneseq
  %v8318 = vshrl.u32 %v8317, 7
  %v8319 = vsub.s32 3, %v8318
  %v8320 = vrot.slane %v36, %v8319
  %v8321 = vpack.i.b16 %v8115, %v8113
  %v8322 = vpack.i.b16 %v8116, %v8114
  %v8323 = vpack.i.b16 %v8119, %v8117
  %v8324 = vpack.i.b16 %v8120, %v8118
  %v8325 = vpack.i.b16 %v8123, %v8121
  %v8326 = vpack.i.b16 %v8124, %v8122
  %v8327 = vpack.i.b16 %v8127, %v8125
  %v8328 = vpack.i.b16 %v8128, %v8126
  %v8329 = vpack.i.b16 %v8131, %v8129
  %v8330 = vpack.i.b16 %v8132, %v8130
  %v8331 = vpack.i.b16 %v8135, %v8133
  %v8332 = vpack.i.b16 %v8136, %v8134
  %v8333 = vpack.i.b16 %v8139, %v8137
  %v8334 = vpack.i.b16 %v8140, %v8138
  %v8335 = vpack.i.b16 %v8143, %v8141
  %v8336 = vpack.i.b16 %v8144, %v8142
  %v8337 = vpack.i.b16 %v8147, %v8145
  %v8338 = vpack.i.b16 %v8148, %v8146
  %v8339 = vpack.i.b16 %v8151, %v8149
  %v8340 = vpack.i.b16 %v8152, %v8150
  %v8341 = vpack.i.b16 %v8155, %v8153
  %v8342 = vpack.i.b16 %v8156, %v8154
  %v8343 = vpack.i.b16 %v8159, %v8157
  %v8344 = vpack.i.b16 %v8160, %v8158
  %v8345 = vpack.i.b16 %v8163, %v8161
  %v8346 = vpack.i.b16 %v8164, %v8162
  %v8347 = vpack.i.b16 %v8167, %v8165
  %v8348 = vpack.i.b16 %v8168, %v8166
  %v8349 = vpack.i.b16 %v8171, %v8169
  %v8350 = vpack.i.b16 %v8172, %v8170
  %v8351 = vcombine.low %v8321, %v8323
  %v8352 = vcombine.high %v8321, %v8323
  %v8353 = vcombine.low %v8325, %v8327
  %v8354 = vcombine.high %v8325, %v8327
  %v8355 = vcombine.low %v8329, %v8331
  %v8356 = vcombine.high %v8329, %v8331
  %v8357 = vcombine.low %v8333, %v8335
  %v8358 = vcombine.high %v8333, %v8335
  %v8360 = vunpack.c.l.s4 1966171168
  %v8361 = vunpack.c.0.s8 %v8360
  %v8362 = vlaneseq
  %v8363 = vshrl.u32 %v8362, 7
  %v8364 = vsub.s32 %v8361, %v8363
  %v8365 = vrot.slane %v8351, %v8364
  %v8367 = vunpack.c.l.s4 1966171168
  %v8368 = vunpack.c.0.s8 %v8367
  %v8369 = vlaneseq
  %v8370 = vshrl.u32 %v8369, 7
  %v8371 = vsub.s32 %v8368, %v8370
  %v8372 = vrot.slane %v8352, %v8371
  %v8374 = vunpack.c.l.s4 1966171168
  %v8375 = vunpack.c.0.s8 %v8374
  %v8376 = vlaneseq
  %v8377 = vshrl.u32 %v8376, 7
  %v8378 = vsub.s32 %v8375, %v8377
  %v8379 = vrot.slane %v8353, %v8378
  %v8381 = vunpack.c.l.s4 1966171168
  %v8382 = vunpack.c.0.s8 %v8381
  %v8383 = vlaneseq
  %v8384 = vshrl.u32 %v8383, 7
  %v8385 = vsub.s32 %v8382, %v8384
  %v8386 = vrot.slane %v8354, %v8385
  %v8388 = vunpack.c.l.s4 1966171168
  %v8389 = vunpack.c.0.s8 %v8388
  %v8390 = vlaneseq
  %v8391 = vshrl.u32 %v8390, 7
  %v8392 = vsub.s32 %v8389, %v8391
  %v8393 = vrot.slane %v8355, %v8392
  %v8395 = vunpack.c.l.s4 1966171168
  %v8396 = vunpack.c.0.s8 %v8395
  %v8397 = vlaneseq
  %v8398 = vshrl.u32 %v8397, 7
  %v8399 = vsub.s32 %v8396, %v8398
  %v8400 = vrot.slane %v8356, %v8399
  %v8402 = vunpack.c.l.s4 1966171168
  %v8403 = vunpack.c.0.s8 %v8402
  %v8404 = vlaneseq
  %v8405 = vshrl.u32 %v8404, 7
  %v8406 = vsub.s32 %v8403, %v8405
  %v8407 = vrot.slane %v8357, %v8406
  %v8409 = vunpack.c.l.s4 1966171168
  %v8410 = vunpack.c.0.s8 %v8409
  %v8411 = vlaneseq
  %v8412 = vshrl.u32 %v8411, 7
  %v8413 = vsub.s32 %v8410, %v8412
  %v8414 = vrot.slane %v8358, %v8413
  %v8415 = vcombine.low %v8365, %v8379
  %v8416 = vcombine.high %v8365, %v8379
  %v8417 = vcombine.low %v8372, %v8386
  %v8418 = vcombine.high %v8372, %v8386
  %v8419 = vcombine.low %v8393, %v8407
  %v8420 = vcombine.high %v8393, %v8407
  %v8421 = vcombine.low %v8400, %v8414
  %v8422 = vcombine.high %v8400, %v8414
  %v8424 = vunpack.c.l.s4 1966171168
  %v8425 = vunpack.c.0.s8 %v8424
  %v8426 = vlaneseq
  %v8427 = vshrl.u32 %v8426, 7
  %v8428 = vsub.s32 %v8425, %v8427
  %v8429 = vrot.slane %v8415, %v8428
  %v8431 = vunpack.c.l.s4 1966171168
  %v8432 = vunpack.c.0.s8 %v8431
  %v8433 = vlaneseq
  %v8434 = vshrl.u32 %v8433, 7
  %v8435 = vsub.s32 %v8432, %v8434
  %v8436 = vrot.slane %v8417, %v8435
  %v8438 = vunpack.c.l.s4 1966171168
  %v8439 = vunpack.c.0.s8 %v8438
  %v8440 = vlaneseq
  %v8441 = vshrl.u32 %v8440, 7
  %v8442 = vsub.s32 %v8439, %v8441
  %v8443 = vrot.slane %v8416, %v8442
  %v8445 = vunpack.c.l.s4 1966171168
  %v8446 = vunpack.c.0.s8 %v8445
  %v8447 = vlaneseq
  %v8448 = vshrl.u32 %v8447, 7
  %v8449 = vsub.s32 %v8446, %v8448
  %v8450 = vrot.slane %v8418, %v8449
  %v8452 = vunpack.c.l.s4 1966171168
  %v8453 = vunpack.c.0.s8 %v8452
  %v8454 = vlaneseq
  %v8455 = vshrl.u32 %v8454, 7
  %v8456 = vsub.s32 %v8453, %v8455
  %v8457 = vrot.slane %v8419, %v8456
  %v8459 = vunpack.c.l.s4 1966171168
  %v8460 = vunpack.c.0.s8 %v8459
  %v8461 = vlaneseq
  %v8462 = vshrl.u32 %v8461, 7
  %v8463 = vsub.s32 %v8460, %v8462
  %v8464 = vrot.slane %v8421, %v8463
  %v8466 = vunpack.c.l.s4 1966171168
  %v8467 = vunpack.c.0.s8 %v8466
  %v8468 = vlaneseq
  %v8469 = vshrl.u32 %v8468, 7
  %v8470 = vsub.s32 %v8467, %v8469
  %v8471 = vrot.slane %v8420, %v8470
  %v8473 = vunpack.c.l.s4 1966171168
  %v8474 = vunpack.c.0.s8 %v8473
  %v8475 = vlaneseq
  %v8476 = vshrl.u32 %v8475, 7
  %v8477 = vsub.s32 %v8474, %v8476
  %v8478 = vrot.slane %v8422, %v8477
  %v8479 = vcombine.low %v8429, %v8457
  %v8480 = vcombine.high %v8429, %v8457
  %v8481 = vcombine.low %v8436, %v8464
  %v8482 = vcombine.high %v8436, %v8464
  %v8483 = vcombine.low %v8443, %v8471
  %v8484 = vcombine.high %v8443, %v8471
  %v8485 = vcombine.low %v8450, %v8478
  %v8486 = vcombine.high %v8450, %v8478
  %v8487 = vcombine.low %v8322, %v8324
  %v8488 = vcombine.low %v8326, %v8328
  %v8489 = vcombine.low %v8330, %v8332
  %v8490 = vcombine.low %v8334, %v8336
  %v8492 = vunpack.c.l.s4 1966171168
  %v8493 = vunpack.c.0.s8 %v8492
  %v8494 = vlaneseq
  %v8495 = vshrl.u32 %v8494, 7
  %v8496 = vsub.s32 %v8493, %v8495
  %v8497 = vrot.slane %v8487, %v8496
  %v8499 = vunpack.c.l.s4 1966171168
  %v8500 = vunpack.c.0.s8 %v8499
  %v8501 = vlaneseq
  %v8502 = vshrl.u32 %v8501, 7
  %v8503 = vsub.s32 %v8500, %v8502
  %v8504 = vrot.slane %v8488, %v8503
  %v8506 = vunpack.c.l.s4 1966171168
  %v8507 = vunpack.c.0.s8 %v8506
  %v8508 = vlaneseq
  %v8509 = vshrl.u32 %v8508, 7
  %v8510 = vsub.s32 %v8507, %v8509
  %v8511 = vrot.slane %v8489, %v8510
  %v8513 = vunpack.c.l.s4 1966171168
  %v8514 = vunpack.c.0.s8 %v8513
  %v8515 = vlaneseq
  %v8516 = vshrl.u32 %v8515, 7
  %v8517 = vsub.s32 %v8514, %v8516
  %v8518 = vrot.slane %v8490, %v8517
  %v8519 = vcombine.low %v8497, %v8504
  %v8520 = vcombine.low %v8511, %v8518
  %v8522 = vunpack.c.l.s4 1966171168
  %v8523 = vunpack.c.0.s8 %v8522
  %v8524 = vlaneseq
  %v8525 = vshrl.u32 %v8524, 7
  %v8526 = vsub.s32 %v8523, %v8525
  %v8527 = vrot.slane %v8519, %v8526
  %v8529 = vunpack.c.l.s4 1966171168
  %v8530 = vunpack.c.0.s8 %v8529
  %v8531 = vlaneseq
  %v8532 = vshrl.u32 %v8531, 7
  %v8533 = vsub.s32 %v8530, %v8532
  %v8534 = vrot.slane %v8520, %v8533
  %v8535 = vcombine.low %v8527, %v8534
  %v8536 = vcombine.low %v8337, %v8339
  %v8537 = vcombine.high %v8337, %v8339
  %v8538 = vcombine.low %v8341, %v8343
  %v8539 = vcombine.high %v8341, %v8343
  %v8540 = vcombine.low %v8345, %v8347
  %v8541 = vcombine.high %v8345, %v8347
  %v8542 = vcombine.high %v8349, %v8349
  %v8544 = vunpack.c.l.s4 1966171168
  %v8545 = vunpack.c.0.s8 %v8544
  %v8546 = vlaneseq
  %v8547 = vshrl.u32 %v8546, 7
  %v8548 = vsub.s32 %v8545, %v8547
  %v8549 = vrot.slane %v8536, %v8548
  %v8551 = vunpack.c.l.s4 1966171168
  %v8552 = vunpack.c.0.s8 %v8551
  %v8553 = vlaneseq
  %v8554 = vshrl.u32 %v8553, 7
  %v8555 = vsub.s32 %v8552, %v8554
  %v8556 = vrot.slane %v8537, %v8555
  %v8558 = vunpack.c.l.s4 1966171168
  %v8559 = vunpack.c.0.s8 %v8558
  %v8560 = vlaneseq
  %v8561 = vshrl.u32 %v8560, 7
  %v8562 = vsub.s32 %v8559, %v8561
  %v8563 = vrot.slane %v8538, %v8562
  %v8565 = vunpack.c.l.s4 1966171168
  %v8566 = vunpack.c.0.s8 %v8565
  %v8567 = vlaneseq
  %v8568 = vshrl.u32 %v8567, 7
  %v8569 = vsub.s32 %v8566, %v8568
  %v8570 = vrot.slane %v8539, %v8569
  %v8572 = vunpack.c.l.s4 1966171168
  %v8573 = vunpack.c.0.s8 %v8572
  %v8574 = vlaneseq
  %v8575 = vshrl.u32 %v8574, 7
  %v8576 = vsub.s32 %v8573, %v8575
  %v8577 = vrot.slane %v8540, %v8576
  %v8579 = vunpack.c.l.s4 1966171168
  %v8580 = vunpack.c.0.s8 %v8579
  %v8581 = vlaneseq
  %v8582 = vshrl.u32 %v8581, 7
  %v8583 = vsub.s32 %v8580, %v8582
  %v8584 = vrot.slane %v8541, %v8583
  %v8586 = vunpack.c.l.s4 1966171168
  %v8587 = vunpack.c.0.s8 %v8586
  %v8588 = vlaneseq
  %v8589 = vshrl.u32 %v8588, 7
  %v8590 = vsub.s32 %v8587, %v8589
  %v8591 = vrot.slane %v8349, %v8590
  %v8593 = vunpack.c.l.s4 1966171168
  %v8594 = vunpack.c.0.s8 %v8593
  %v8595 = vlaneseq
  %v8596 = vshrl.u32 %v8595, 7
  %v8597 = vsub.s32 %v8594, %v8596
  %v8598 = vrot.slane %v8542, %v8597
  %v8599 = vcombine.low %v8549, %v8563
  %v8600 = vcombine.high %v8549, %v8563
  %v8601 = vcombine.low %v8556, %v8570
  %v8602 = vcombine.high %v8556, %v8570
  %v8603 = vcombine.low %v8577, %v8591
  %v8604 = vcombine.high %v8577, %v8591
  %v8605 = vcombine.low %v8584, %v8598
  %v8606 = vcombine.high %v8584, %v8598
  %v8608 = vunpack.c.l.s4 1966171168
  %v8609 = vunpack.c.0.s8 %v8608
  %v8610 = vlaneseq
  %v8611 = vshrl.u32 %v8610, 7
  %v8612 = vsub.s32 %v8609, %v8611
  %v8613 = vrot.slane %v8599, %v8612
  %v8615 = vunpack.c.l.s4 1966171168
  %v8616 = vunpack.c.0.s8 %v8615
  %v8617 = vlaneseq
  %v8618 = vshrl.u32 %v8617, 7
  %v8619 = vsub.s32 %v8616, %v8618
  %v8620 = vrot.slane %v8601, %v8619
  %v8622 = vunpack.c.l.s4 1966171168
  %v8623 = vunpack.c.0.s8 %v8622
  %v8624 = vlaneseq
  %v8625 = vshrl.u32 %v8624, 7
  %v8626 = vsub.s32 %v8623, %v8625
  %v8627 = vrot.slane %v8600, %v8626
  %v8629 = vunpack.c.l.s4 1966171168
  %v8630 = vunpack.c.0.s8 %v8629
  %v8631 = vlaneseq
  %v8632 = vshrl.u32 %v8631, 7
  %v8633 = vsub.s32 %v8630, %v8632
  %v8634 = vrot.slane %v8602, %v8633
  %v8636 = vunpack.c.l.s4 1966171168
  %v8637 = vunpack.c.0.s8 %v8636
  %v8638 = vlaneseq
  %v8639 = vshrl.u32 %v8638, 7
  %v8640 = vsub.s32 %v8637, %v8639
  %v8641 = vrot.slane %v8603, %v8640
  %v8643 = vunpack.c.l.s4 1966171168
  %v8644 = vunpack.c.0.s8 %v8643
  %v8645 = vlaneseq
  %v8646 = vshrl.u32 %v8645, 7
  %v8647 = vsub.s32 %v8644, %v8646
  %v8648 = vrot.slane %v8605, %v8647
  %v8650 = vunpack.c.l.s4 1966171168
  %v8651 = vunpack.c.0.s8 %v8650
  %v8652 = vlaneseq
  %v8653 = vshrl.u32 %v8652, 7
  %v8654 = vsub.s32 %v8651, %v8653
  %v8655 = vrot.slane %v8604, %v8654
  %v8657 = vunpack.c.l.s4 1966171168
  %v8658 = vunpack.c.0.s8 %v8657
  %v8659 = vlaneseq
  %v8660 = vshrl.u32 %v8659, 7
  %v8661 = vsub.s32 %v8658, %v8660
  %v8662 = vrot.slane %v8606, %v8661
  %v8663 = vcombine.low %v8613, %v8641
  %v8664 = vcombine.high %v8613, %v8641
  %v8665 = vcombine.low %v8620, %v8648
  %v8666 = vcombine.high %v8620, %v8648
  %v8667 = vcombine.low %v8627, %v8655
  %v8668 = vcombine.high %v8627, %v8655
  %v8669 = vcombine.low %v8634, %v8662
  %v8670 = vcombine.high %v8634, %v8662
  %v8671 = vcombine.low %v8338, %v8340
  %v8672 = vcombine.low %v8342, %v8344
  %v8673 = vcombine.low %v8346, %v8348
  %v8675 = vunpack.c.l.s4 1966171168
  %v8676 = vunpack.c.0.s8 %v8675
  %v8677 = vlaneseq
  %v8678 = vshrl.u32 %v8677, 7
  %v8679 = vsub.s32 %v8676, %v8678
  %v8680 = vrot.slane %v8671, %v8679
  %v8682 = vunpack.c.l.s4 1966171168
  %v8683 = vunpack.c.0.s8 %v8682
  %v8684 = vlaneseq
  %v8685 = vshrl.u32 %v8684, 7
  %v8686 = vsub.s32 %v8683, %v8685
  %v8687 = vrot.slane %v8672, %v8686
  %v8689 = vunpack.c.l.s4 1966171168
  %v8690 = vunpack.c.0.s8 %v8689
  %v8691 = vlaneseq
  %v8692 = vshrl.u32 %v8691, 7
  %v8693 = vsub.s32 %v8690, %v8692
  %v8694 = vrot.slane %v8673, %v8693
  %v8696 = vunpack.c.l.s4 1966171168
  %v8697 = vunpack.c.0.s8 %v8696
  %v8698 = vlaneseq
  %v8699 = vshrl.u32 %v8698, 7
  %v8700 = vsub.s32 %v8697, %v8699
  %v8701 = vrot.slane %v8350, %v8700
  %v8702 = vcombine.low %v8680, %v8687
  %v8703 = vcombine.low %v8694, %v8701
  %v8705 = vunpack.c.l.s4 1966171168
  %v8706 = vunpack.c.0.s8 %v8705
  %v8707 = vlaneseq
  %v8708 = vshrl.u32 %v8707, 7
  %v8709 = vsub.s32 %v8706, %v8708
  %v8710 = vrot.slane %v8702, %v8709
  %v8712 = vunpack.c.l.s4 1966171168
  %v8713 = vunpack.c.0.s8 %v8712
  %v8714 = vlaneseq
  %v8715 = vshrl.u32 %v8714, 7
  %v8716 = vsub.s32 %v8713, %v8715
  %v8717 = vrot.slane %v8703, %v8716
  %v8718 = vcombine.low %v8710, %v8717
  %v8881 = vunpack.c.l.b16 %v8173
  %v8882 = vunpack.c.l.b16 %v8174
  %v8883 = vunpack.c.l.b16 %v8175
  %v8884 = vunpack.c.l.b16 %v8176
  %v8885 = vunpack.c.l.b16 %v8177
  %v8886 = vunpack.c.l.b16 %v8178
  %v8887 = vunpack.c.l.b16 %v8179
  %v8888 = vunpack.c.l.b16 %v8180
  %v8889 = vunpack.c.l.b16 %v8181
  %v8890 = vunpack.c.l.b16 %v8182
  %v8891 = vunpack.c.l.b16 %v8183
  %v8892 = vunpack.c.l.b16 %v8184
  %v8893 = vunpack.c.l.b16 %v8185
  %v8894 = vunpack.c.l.b16 %v8186
  %v8895 = vunpack.c.l.b16 %v8187
  %v8896 = vunpack.c.l.b16 %v8188
  %v8897 = vunpack.c.l.b16 %v8189
  %v8898 = vunpack.c.l.b16 %v8190
  %v8899 = vunpack.c.l.b16 %v8191
  %v8900 = vunpack.c.l.b16 %v8192
  %v8901 = vunpack.c.l.b16 %v8193
  %v8902 = vunpack.c.l.b16 %v8194
  %v8903 = vunpack.c.l.b16 %v8195
  %v8904 = vunpack.c.l.b16 %v8196
  %v8905 = vunpack.c.l.b16 %v8197
  %v8906 = vunpack.c.l.b16 %v8198
  %v8907 = vunpack.c.l.b16 %v8199
  %v8908 = vunpack.c.l.b16 %v8200
  %v8909 = vunpack.c.l.b16 %v8201
  %v8910 = vunpack.c.l.b16 %v8202
  %v8911 = vunpack.c.l.b16 %v8203
  %v8912 = vunpack.c.l.b16 %v8204
  %v8913 = vunpack.c.l.b16 %v8205
  %v8914 = vunpack.c.l.b16 %v8206
  %v8915 = vunpack.c.l.b16 %v8207
  %v8916 = vunpack.c.l.b16 %v8208
  %v8917 = vunpack.c.l.b16 %v8209
  %v8918 = vunpack.c.l.b16 %v8210
  %v8919 = vunpack.c.l.b16 %v8211
  %v8920 = vunpack.c.l.b16 %v8212
  %v8921 = vunpack.c.l.b16 %v8213
  %v8922 = vunpack.c.l.b16 %v8214
  %v8923 = vunpack.c.l.b16 %v8215
  %v8924 = vunpack.c.l.b16 %v8216
  %v8925 = vunpack.c.l.b16 %v8217
  %v8926 = vunpack.c.l.b16 %v8218
  %v8927 = vunpack.c.l.b16 %v8219
  %v8928 = vunpack.c.l.b16 %v8220
  %v8929 = vunpack.c.l.b16 %v8221
  %v8930 = vunpack.c.l.b16 %v8222
  %v8931 = vunpack.c.l.b16 %v8223
  %v8932 = vunpack.c.l.b16 %v8224
  %v8933 = vunpack.c.l.b16 %v8225
  %v8934 = vunpack.c.l.b16 %v8226
  %v8935 = vunpack.c.l.b16 %v8227
  %v8936 = vunpack.c.l.b16 %v8228
  %v8937 = vunpack.c.l.b16 %v8229
  %v8938 = vunpack.c.l.b16 %v8230
  %v8939 = vunpack.c.l.b16 %v8231
  %v8940 = vunpack.c.l.b16 %v8232
  %v8941 = vunpack.c.l.b16 %v8233
  %v8942 = vunpack.c.l.b16 %v8234
  %v8943 = vunpack.c.l.b16 %v8235
  %v8944 = vunpack.c.l.b16 %v8236
  %v8945 = vunpack.c.l.b16 %v8237
  %v8946 = vunpack.c.l.b16 %v8238
  %v8947 = vunpack.c.l.b16 %v8239
  %v8948 = vunpack.c.l.b16 %v8240
  %v8949 = vunpack.c.l.b16 %v8241
  %v8950 = vunpack.c.l.b16 %v8242
  %v8951 = vunpack.c.l.b16 %v8243
  %v8952 = vunpack.c.l.b16 %v8244
  %v8953 = vunpack.c.l.b16 %v8245
  %v8954 = vunpack.c.l.b16 %v8246
  %v8955 = vunpack.c.l.b16 %v8247
  %v8956 = vunpack.c.l.b16 %v8248
  %v8957 = vunpack.c.l.b16 %v8249
  %v8958 = vunpack.c.l.b16 %v8250
  %v8959 = vunpack.c.l.b16 %v8251
  %v8960 = vunpack.c.l.b16 %v8252
  %v8961 = vunpack.c.l.b16 %v8253
  %v8962 = vunpack.c.l.b16 %v8254
  %v8963 = vunpack.c.l.b16 %v8255
  %v8964 = vunpack.c.l.b16 %v8256
  %v8965 = vunpack.c.l.b16 %v8257
  %v8966 = vunpack.c.l.b16 %v8258
  %v8967 = vunpack.c.l.b16 %v8259
  %v8968 = vunpack.c.l.b16 %v8260
  %v8969 = vunpack.c.l.b16 %v8261
  %v8970 = vunpack.c.l.b16 %v8262
  %v8971 = vunpack.c.l.b16 %v8263
  %v8972 = vunpack.c.l.b16 %v8264
  %v8973 = vunpack.c.l.b16 %v8265
  %v8974 = vunpack.c.l.b16 %v8266
  %v8975 = vunpack.c.l.b16 %v8267
  %v8976 = vunpack.c.l.b16 %v8268
  %v8977 = vunpack.c.l.b16 %v8269
  %v8978 = vunpack.c.l.b16 %v8270
  %v8979 = vunpack.c.l.b16 %v8271
  %v8980 = vunpack.c.l.b16 %v8272
  %v8981 = vunpack.c.l.b16 %v8273
  %v8982 = vunpack.c.l.b16 %v8274
  %v8983 = vunpack.c.l.b16 %v8275
  %v8984 = vunpack.c.l.b16 %v8276
  %v8985 = vunpack.c.l.b16 %v8277
  %v8986 = vunpack.c.l.b16 %v8278
  %v8987 = vunpack.c.l.b16 %v8279
  %v8988 = vunpack.c.l.b16 %v8280
  %v8989 = vunpack.c.l.b16 %v8281
  %v8990 = vunpack.c.l.b16 %v8282
  %v8991 = vunpack.c.l.b16 %v8283
  %v8992 = vunpack.c.l.b16 %v8284
  %v8993 = vunpack.c.l.b16 %v8285
  %v8994 = vunpack.c.l.b16 %v8286
  %v8995 = vunpack.c.l.b16 %v8287
  %v8996 = vunpack.c.l.b16 %v8288
  %v8997 = vunpack.c.l.b16 %v8289
  %v8998 = vunpack.c.l.b16 %v8290
  %v8999 = vunpack.c.l.b16 %v8291
  %v9000 = vunpack.c.l.b16 %v8292
  %v9001 = vunpack.c.l.b16 %v8293
  %v9002 = vunpack.c.l.b16 %v8294
  %v9003 = vunpack.c.l.b16 %v8295
  %v9004 = vunpack.c.l.b16 %v8296
  %v9005 = vunpack.c.l.b16 %v8297
  %v9006 = vunpack.c.l.b16 %v8298
  %v9007 = vunpack.c.l.b16 %v8299
  %v9008 = vunpack.c.l.b16 %v8300
  %v9009 = vunpack.c.l.b16 %v8301
  %v9010 = vunpack.c.l.b16 %v8302
  %v9011 = vunpack.c.l.b16 %v8303
  %v9012 = vunpack.c.l.b16 %v8304
  %v9013 = vunpack.c.l.b16 %v8305
  %v9014 = vunpack.c.l.b16 %v8306
  %v9015 = vunpack.c.l.b16 %v8307
  %v9016 = vunpack.c.l.b16 %v8308
  %v9017 = vunpack.c.l.b16 %v8309
  %v9018 = vunpack.c.l.b16 %v8310
  %v9019 = vunpack.c.l.b16 %v8311
  %v9020 = vunpack.c.l.b16 %v8312
  %v9021 = vunpack.c.l.b16 %v8313
  %v9022 = vunpack.c.l.b16 %v8314
  %v9023 = vunpack.c.l.b16 %v8315
  %v9024 = vunpack.c.l.b16 %v8316
  %v9025 = vpack.c.b16 %v8882, %v8881
  %v9026 = vpack.c.b16 %v8884, %v8883
  %v9027 = vpack.c.b16 %v8886, %v8885
  %v9028 = vpack.c.b16 %v8888, %v8887
  %v9029 = vpack.c.b16 %v8890, %v8889
  %v9030 = vpack.c.b16 %v8892, %v8891
  %v9031 = vpack.c.b16 %v8894, %v8893
  %v9032 = vpack.c.b16 %v8896, %v8895
  %v9033 = vpack.c.b16 %v8898, %v8897
  %v9034 = vpack.c.b16 %v8900, %v8899
  %v9035 = vpack.c.b16 %v8902, %v8901
  %v9036 = vpack.c.b16 %v8904, %v8903
  %v9037 = vpack.c.b16 %v8906, %v8905
  %v9038 = vpack.c.b16 %v8908, %v8907
  %v9039 = vpack.c.b16 %v8910, %v8909
  %v9040 = vpack.c.b16 %v8912, %v8911
  %v9041 = vpack.c.b16 %v8914, %v8913
  %v9042 = vpack.c.b16 %v8916, %v8915
  %v9043 = vpack.c.b16 %v8918, %v8917
  %v9044 = vpack.c.b16 %v8920, %v8919
  %v9045 = vpack.c.b16 %v8922, %v8921
  %v9046 = vpack.c.b16 %v8924, %v8923
  %v9047 = vpack.c.b16 %v8926, %v8925
  %v9048 = vpack.c.b16 %v8928, %v8927
  %v9049 = vpack.c.b16 %v8930, %v8929
  %v9050 = vpack.c.b16 %v8932, %v8931
  %v9051 = vpack.c.b16 %v8934, %v8933
  %v9052 = vpack.c.b16 %v8936, %v8935
  %v9053 = vpack.c.b16 %v8938, %v8937
  %v9054 = vpack.c.b16 %v8940, %v8939
  %v9055 = vpack.c.b16 %v8942, %v8941
  %v9056 = vpack.c.b16 %v8944, %v8943
  %v9057 = vpack.c.b16 %v8946, %v8945
  %v9058 = vpack.c.b16 %v8948, %v8947
  %v9059 = vpack.c.b16 %v8950, %v8949
  %v9060 = vpack.c.b16 %v8952, %v8951
  %v9061 = vpack.c.b16 %v8954, %v8953
  %v9062 = vpack.c.b16 %v8956, %v8955
  %v9063 = vpack.c.b16 %v8958, %v8957
  %v9064 = vpack.c.b16 %v8960, %v8959
  %v9065 = vpack.c.b16 %v8962, %v8961
  %v9066 = vpack.c.b16 %v8964, %v8963
  %v9067 = vpack.c.b16 %v8966, %v8965
  %v9068 = vpack.c.b16 %v8968, %v8967
  %v9069 = vpack.c.b16 %v8970, %v8969
  %v9070 = vpack.c.b16 %v8972, %v8971
  %v9071 = vpack.c.b16 %v8974, %v8973
  %v9072 = vpack.c.b16 %v8976, %v8975
  %v9073 = vpack.c.b16 %v8978, %v8977
  %v9074 = vpack.c.b16 %v8980, %v8979
  %v9075 = vpack.c.b16 %v8982, %v8981
  %v9076 = vpack.c.b16 %v8984, %v8983
  %v9077 = vpack.c.b16 %v8986, %v8985
  %v9078 = vpack.c.b16 %v8988, %v8987
  %v9079 = vpack.c.b16 %v8990, %v8989
  %v9080 = vpack.c.b16 %v8992, %v8991
  %v9081 = vpack.c.b16 %v8994, %v8993
  %v9082 = vpack.c.b16 %v8996, %v8995
  %v9083 = vpack.c.b16 %v8998, %v8997
  %v9084 = vpack.c.b16 %v9000, %v8999
  %v9085 = vpack.c.b16 %v9002, %v9001
  %v9086 = vpack.c.b16 %v9004, %v9003
  %v9087 = vpack.c.b16 %v9006, %v9005
  %v9088 = vpack.c.b16 %v9008, %v9007
  %v9089 = vpack.c.b16 %v9010, %v9009
  %v9090 = vpack.c.b16 %v9012, %v9011
  %v9091 = vpack.c.b16 %v9014, %v9013
  %v9092 = vpack.c.b16 %v9016, %v9015
  %v9093 = vpack.c.b16 %v9018, %v9017
  %v9094 = vpack.c.b16 %v9020, %v9019
  %v9095 = vpack.c.b16 %v9022, %v9021
  %v9096 = vpack.c.b16 %v9024, %v9023
  %9169 = vmatprep.subr.bf16.mxu0 0
  %9170 = vmatpush1.bf16.msra.mxu0 %v9025
  %9171 = vmatprep.subr.bf16.mxu0 0
  %9172 = vmatpush1.bf16.msra.mxu0 %v9026
  %9173 = vmatprep.subr.bf16.mxu0 0
  %9174 = vmatpush1.bf16.msra.mxu0 %v9027
  %9175 = vmatprep.subr.bf16.mxu0 0
  %9176 = vmatpush1.bf16.msra.mxu0 %v9028
  %9177 = vmatprep.subr.bf16.mxu0 0
  %9178 = vmatpush1.bf16.msra.mxu0 %v9029
  %9179 = vmatprep.subr.bf16.mxu0 0
  %9180 = vmatpush1.bf16.msra.mxu0 %v9030
  %9181 = vmatprep.subr.bf16.mxu0 0
  %9182 = vmatpush1.bf16.msra.mxu0 %v9031
  %9183 = vmatprep.subr.bf16.mxu0 0
  %9184 = vmatpush1.bf16.msra.mxu0 %v9032
  %9185 = vmatprep.subr.bf16.mxu0 0
  %9186 = vmatpush1.bf16.msra.mxu0 %v9033
  %9187 = vmatprep.subr.bf16.mxu0 0
  %9188 = vmatpush1.bf16.msra.mxu0 %v9034
  %9189 = vmatprep.subr.bf16.mxu0 0
  %9190 = vmatpush1.bf16.msra.mxu0 %v9035
  %9191 = vmatprep.subr.bf16.mxu0 0
  %9192 = vmatpush1.bf16.msra.mxu0 %v9036
  %9193 = vmatprep.subr.bf16.mxu0 0
  %9194 = vmatpush1.bf16.msra.mxu0 %v9037
  %9195 = vmatprep.subr.bf16.mxu0 0
  %9196 = vmatpush1.bf16.msra.mxu0 %v9038
  %9197 = vmatprep.subr.bf16.mxu0 0
  %9198 = vmatpush1.bf16.msra.mxu0 %v9039
  %9199 = vmatprep.subr.bf16.mxu0 0
  %9200 = vmatpush1.bf16.msra.mxu0 %v9040
  %9201 = vmatprep.mubr.bf16.mxu0 %v8483
  %9202 = vmatmul.mubr.bf16.gmra.mrb[0].mxu0 %v8479
  %v9203 = vpop.f32.mrb[0].mxu0
  %v9204 = vadd.f32 %v8320, %v9203
  %v9205 = vpop.f32.mrb[0].mxu0
  %v9206 = vpop.f32.mrb[0].mxu0
  %v9207 = vadd.f32 %v8320, %v9206
  %v9208 = vpop.f32.mrb[0].mxu0
  %9209 = vmatprep.mubr.bf16.mxu0 %v8667
  %9210 = vmatmul.mubr.bf16.gmra.mrb[0].mxu0 %v8663
  %v9211 = vpop.f32.mrb[0].mxu0
  %v9212 = vadd.f32 %v8320, %v9211
  %v9213 = vpop.f32.mrb[0].mxu0
  %v9214 = vpop.f32.mrb[0].mxu0
  %v9215 = vadd.f32 %v8320, %v9214
  %v9216 = vpop.f32.mrb[0].mxu0
  %9217 = vdwg.mxu0
  %9218 = vmatprep.subr.bf16.mxu0 0
  %9219 = vmatpush1.bf16.msra.mxu0 %v9041
  %9220 = vmatprep.subr.bf16.mxu0 0
  %9221 = vmatpush1.bf16.msra.mxu0 %v9042
  %9222 = vmatprep.subr.bf16.mxu0 0
  %9223 = vmatpush1.bf16.msra.mxu0 %v9043
  %9224 = vmatprep.subr.bf16.mxu0 0
  %9225 = vmatpush1.bf16.msra.mxu0 %v9044
  %9226 = vmatprep.subr.bf16.mxu0 0
  %9227 = vmatpush1.bf16.msra.mxu0 %v9045
  %9228 = vmatprep.subr.bf16.mxu0 0
  %9229 = vmatpush1.bf16.msra.mxu0 %v9046
  %9230 = vmatprep.subr.bf16.mxu0 0
  %9231 = vmatpush1.bf16.msra.mxu0 %v9047
  %9232 = vmatprep.subr.bf16.mxu0 0
  %9233 = vmatpush1.bf16.msra.mxu0 %v9048
  %9234 = vmatprep.subr.bf16.mxu0 0
  %9235 = vmatpush1.bf16.msra.mxu0 %v9049
  %9236 = vmatprep.subr.bf16.mxu0 0
  %9237 = vmatpush1.bf16.msra.mxu0 %v9050
  %9238 = vmatprep.subr.bf16.mxu0 0
  %9239 = vmatpush1.bf16.msra.mxu0 %v9051
  %9240 = vmatprep.subr.bf16.mxu0 0
  %9241 = vmatpush1.bf16.msra.mxu0 %v9052
  %9242 = vmatprep.subr.bf16.mxu0 0
  %9243 = vmatpush1.bf16.msra.mxu0 %v9053
  %9244 = vmatprep.subr.bf16.mxu0 0
  %9245 = vmatpush1.bf16.msra.mxu0 %v9054
  %9246 = vmatprep.subr.bf16.mxu0 0
  %9247 = vmatpush1.bf16.msra.mxu0 %v9055
  %9248 = vmatprep.subr.bf16.mxu0 0
  %9249 = vmatpush1.bf16.msra.mxu0 %v9056
  %9250 = vmatprep.mubr.bf16.mxu0 %v8484
  %9251 = vmatmul.mubr.bf16.gmra.mrb[0].mxu0 %v8480
  %v9252 = vpop.f32.mrb[0].mxu0
  %v9253 = vadd.f32 %v9204, %v9252
  %v9254 = vpop.f32.mrb[0].mxu0
  %v9255 = vpop.f32.mrb[0].mxu0
  %v9256 = vadd.f32 %v9207, %v9255
  %v9257 = vpop.f32.mrb[0].mxu0
  %9258 = vmatprep.mubr.bf16.mxu0 %v8668
  %9259 = vmatmul.mubr.bf16.gmra.mrb[0].mxu0 %v8664
  %v9260 = vpop.f32.mrb[0].mxu0
  %v9261 = vadd.f32 %v9212, %v9260
  %v9262 = vpop.f32.mrb[0].mxu0
  %v9263 = vpop.f32.mrb[0].mxu0
  %v9264 = vadd.f32 %v9215, %v9263
  %v9265 = vpop.f32.mrb[0].mxu0
  %9266 = vdwg.mxu0
  %9267 = vmatprep.subr.bf16.mxu0 0
  %9268 = vmatpush1.bf16.msra.mxu0 %v9057
  %9269 = vmatprep.subr.bf16.mxu0 0
  %9270 = vmatpush1.bf16.msra.mxu0 %v9058
  %9271 = vmatprep.subr.bf16.mxu0 0
  %9272 = vmatpush1.bf16.msra.mxu0 %v9059
  %9273 = vmatprep.subr.bf16.mxu0 0
  %9274 = vmatpush1.bf16.msra.mxu0 %v9060
  %9275 = vmatprep.subr.bf16.mxu0 0
  %9276 = vmatpush1.bf16.msra.mxu0 %v9061
  %9277 = vmatprep.subr.bf16.mxu0 0
  %9278 = vmatpush1.bf16.msra.mxu0 %v9062
  %9279 = vmatprep.subr.bf16.mxu0 0
  %9280 = vmatpush1.bf16.msra.mxu0 %v9063
  %9281 = vmatprep.subr.bf16.mxu0 0
  %9282 = vmatpush1.bf16.msra.mxu0 %v9064
  %9283 = vmatprep.subr.bf16.mxu0 0
  %9284 = vmatpush1.bf16.msra.mxu0 %v9065
  %9285 = vmatprep.subr.bf16.mxu0 0
  %9286 = vmatpush1.bf16.msra.mxu0 %v9066
  %9287 = vmatprep.subr.bf16.mxu0 0
  %9288 = vmatpush1.bf16.msra.mxu0 %v9067
  %9289 = vmatprep.subr.bf16.mxu0 0
  %9290 = vmatpush1.bf16.msra.mxu0 %v9068
  %9291 = vmatprep.subr.bf16.mxu0 0
  %9292 = vmatpush1.bf16.msra.mxu0 %v9069
  %9293 = vmatprep.subr.bf16.mxu0 0
  %9294 = vmatpush1.bf16.msra.mxu0 %v9070
  %9295 = vmatprep.subr.bf16.mxu0 0
  %9296 = vmatpush1.bf16.msra.mxu0 %v9071
  %9297 = vmatprep.subr.bf16.mxu0 0
  %9298 = vmatpush1.bf16.msra.mxu0 %v9072
  %9299 = vmatprep.mubr.bf16.mxu0 %v8485
  %9300 = vmatmul.mubr.bf16.gmra.mrb[0].mxu0 %v8481
  %v9301 = vpop.f32.mrb[0].mxu0
  %v9302 = vadd.f32 %v9253, %v9301
  %v9303 = vpop.f32.mrb[0].mxu0
  %v9304 = vpop.f32.mrb[0].mxu0
  %v9305 = vadd.f32 %v9256, %v9304
  %v9306 = vpop.f32.mrb[0].mxu0
  %9307 = vmatprep.mubr.bf16.mxu0 %v8669
  %9308 = vmatmul.mubr.bf16.gmra.mrb[0].mxu0 %v8665
  %v9309 = vpop.f32.mrb[0].mxu0
  %v9310 = vadd.f32 %v9261, %v9309
  %v9311 = vpop.f32.mrb[0].mxu0
  %v9312 = vpop.f32.mrb[0].mxu0
  %v9313 = vadd.f32 %v9264, %v9312
  %v9314 = vpop.f32.mrb[0].mxu0
  %9315 = vdwg.mxu0
  %9316 = vmatprep.subr.bf16.mxu0 0
  %9317 = vmatpush1.bf16.msra.mxu0 %v9073
  %9318 = vmatprep.subr.bf16.mxu0 0
  %9319 = vmatpush1.bf16.msra.mxu0 %v9074
  %9320 = vmatprep.subr.bf16.mxu0 0
  %9321 = vmatpush1.bf16.msra.mxu0 %v9075
  %9322 = vmatprep.subr.bf16.mxu0 0
  %9323 = vmatpush1.bf16.msra.mxu0 %v9076
  %9324 = vmatprep.subr.bf16.mxu0 0
  %9325 = vmatpush1.bf16.msra.mxu0 %v9077
  %9326 = vmatprep.subr.bf16.mxu0 0
  %9327 = vmatpush1.bf16.msra.mxu0 %v9078
  %9328 = vmatprep.subr.bf16.mxu0 0
  %9329 = vmatpush1.bf16.msra.mxu0 %v9079
  %9330 = vmatprep.subr.bf16.mxu0 0
  %9331 = vmatpush1.bf16.msra.mxu0 %v9080
  %9332 = vmatprep.subr.bf16.mxu0 0
  %9333 = vmatpush1.bf16.msra.mxu0 %v9081
  %9334 = vmatprep.subr.bf16.mxu0 0
  %9335 = vmatpush1.bf16.msra.mxu0 %v9082
  %9336 = vmatprep.subr.bf16.mxu0 0
  %9337 = vmatpush1.bf16.msra.mxu0 %v9083
  %9338 = vmatprep.subr.bf16.mxu0 0
  %9339 = vmatpush1.bf16.msra.mxu0 %v9084
  %9340 = vmatprep.subr.bf16.mxu0 0
  %9341 = vmatpush1.bf16.msra.mxu0 %v9085
  %9342 = vmatprep.subr.bf16.mxu0 0
  %9343 = vmatpush1.bf16.msra.mxu0 %v9086
  %9344 = vmatprep.subr.bf16.mxu0 0
  %9345 = vmatpush1.bf16.msra.mxu0 %v9087
  %9346 = vmatprep.subr.bf16.mxu0 0
  %9347 = vmatpush1.bf16.msra.mxu0 %v9088
  %9348 = vmatprep.mubr.bf16.mxu0 %v8486
  %9349 = vmatmul.mubr.bf16.gmra.mrb[0].mxu0 %v8482
  %v9350 = vpop.f32.mrb[0].mxu0
  %v9351 = vadd.f32 %v9302, %v9350
  %v9352 = vpop.f32.mrb[0].mxu0
  %v9353 = vpop.f32.mrb[0].mxu0
  %v9354 = vadd.f32 %v9305, %v9353
  %v9355 = vpop.f32.mrb[0].mxu0
  %9356 = vmatprep.mubr.bf16.mxu0 %v8670
  %9357 = vmatmul.mubr.bf16.gmra.mrb[0].mxu0 %v8666
  %v9358 = vpop.f32.mrb[0].mxu0
  %v9359 = vadd.f32 %v9310, %v9358
  %v9360 = vpop.f32.mrb[0].mxu0
  %v9361 = vpop.f32.mrb[0].mxu0
  %v9362 = vadd.f32 %v9313, %v9361
  %v9363 = vpop.f32.mrb[0].mxu0
  %9364 = vdwg.mxu0
  %9365 = vmatprep.subr.bf16.mxu0 0
  %9366 = vmatpush1.bf16.msra.mxu0 %v9089
  %9367 = vmatprep.subr.bf16.mxu0 0
  %9368 = vmatpush1.bf16.msra.mxu0 %v9090
  %9369 = vmatprep.subr.bf16.mxu0 0
  %9370 = vmatpush1.bf16.msra.mxu0 %v9091
  %9371 = vmatprep.subr.bf16.mxu0 0
  %9372 = vmatpush1.bf16.msra.mxu0 %v9092
  %9373 = vmatprep.subr.bf16.mxu0 0
  %9374 = vmatpush1.bf16.msra.mxu0 %v9093
  %9375 = vmatprep.subr.bf16.mxu0 0
  %9376 = vmatpush1.bf16.msra.mxu0 %v9094
  %9377 = vmatprep.subr.bf16.mxu0 0
  %9378 = vmatpush1.bf16.msra.mxu0 %v9095
  %9379 = vmatprep.subr.bf16.mxu0 0
  %9380 = vmatpush1.bf16.msra.mxu0 %v9096
  %9381 = vmatprep.subr.bf16.mxu0 0
  %9382 = vmatpush1.bf16.msra.mxu0 0
  %9383 = vmatprep.subr.bf16.mxu0 0
  %9384 = vmatpush1.bf16.msra.mxu0 0
  %9385 = vmatprep.subr.bf16.mxu0 0
  %9386 = vmatpush1.bf16.msra.mxu0 0
  %9387 = vmatprep.subr.bf16.mxu0 0
  %9388 = vmatpush1.bf16.msra.mxu0 0
  %9389 = vmatprep.subr.bf16.mxu0 0
  %9390 = vmatpush1.bf16.msra.mxu0 0
  %9391 = vmatprep.subr.bf16.mxu0 0
  %9392 = vmatpush1.bf16.msra.mxu0 0
  %9393 = vmatprep.subr.bf16.mxu0 0
  %9394 = vmatpush1.bf16.msra.mxu0 0
  %9395 = vmatprep.subr.bf16.mxu0 0
  %9396 = vmatpush1.bf16.msra.mxu0 0
  %9397 = vmatprep.mubr.bf16.mxu0 0
  %9398 = vmatmul.mubr.bf16.gmra.mrb[0].mxu0 %v8535
  %v9399 = vpop.f32.mrb[0].mxu0
  %v9400 = vadd.f32 %v9351, %v9399
  %v9401 = vpop.f32.mrb[0].mxu0
  %v9402 = vpop.f32.mrb[0].mxu0
  %v9403 = vadd.f32 %v9354, %v9402
  %v9404 = vpop.f32.mrb[0].mxu0
  %9405 = vmatprep.mubr.bf16.mxu0 0
  %9406 = vmatmul.mubr.bf16.gmra.mrb[0].mxu0 %v8718
  %v9407 = vpop.f32.mrb[0].mxu0
  %v9408 = vadd.f32 %v9359, %v9407
  %v9409 = vpop.f32.mrb[0].mxu0
  %v9410 = vpop.f32.mrb[0].mxu0
  %v9411 = vadd.f32 %v9362, %v9410
  %v9412 = vpop.f32.mrb[0].mxu0
  %9413 = vdwg.mxu0
  %v9414 = vmax.f32 %v9400, 0.0
  %v9415 = vmax.f32 %v9403, 0.0
  %v9416 = vmax.f32 %v9408, 0.0
  %v9417 = vmax.f32 %v9411, 0.0
  %v9422 = vcombine.high %v9414, %v9414
  %v9424 = vunpack.c.l.s4 1966171168
  %v9425 = vunpack.c.0.s8 %v9424
  %v9426 = vlaneseq
  %v9427 = vshrl.u32 %v9426, 7
  %v9428 = vsub.s32 %v9425, %v9427
  %v9429 = vrot.slane %v9414, %v9428
  %v9431 = vunpack.c.l.s4 1966171168
  %v9432 = vunpack.c.0.s8 %v9431
  %v9433 = vlaneseq
  %v9434 = vshrl.u32 %v9433, 7
  %v9435 = vsub.s32 %v9432, %v9434
  %v9436 = vrot.slane %v9422, %v9435
  %v9437 = vcombine.high %v9429, %v9429
  %v9438 = vcombine.high %v9436, %v9436
  %v9440 = vunpack.c.l.s4 1966171168
  %v9441 = vunpack.c.0.s8 %v9440
  %v9442 = vlaneseq
  %v9443 = vshrl.u32 %v9442, 7
  %v9444 = vsub.s32 %v9441, %v9443
  %v9445 = vrot.slane %v9429, %v9444
  %v9447 = vunpack.c.l.s4 1966171168
  %v9448 = vunpack.c.0.s8 %v9447
  %v9449 = vlaneseq
  %v9450 = vshrl.u32 %v9449, 7
  %v9451 = vsub.s32 %v9448, %v9450
  %v9452 = vrot.slane %v9436, %v9451
  %v9454 = vunpack.c.l.s4 1966171168
  %v9455 = vunpack.c.0.s8 %v9454
  %v9456 = vlaneseq
  %v9457 = vshrl.u32 %v9456, 7
  %v9458 = vsub.s32 %v9455, %v9457
  %v9459 = vrot.slane %v9437, %v9458
  %v9461 = vunpack.c.l.s4 1966171168
  %v9462 = vunpack.c.0.s8 %v9461
  %v9463 = vlaneseq
  %v9464 = vshrl.u32 %v9463, 7
  %v9465 = vsub.s32 %v9462, %v9464
  %v9466 = vrot.slane %v9438, %v9465
  %v9467 = vcombine.high %v9445, %v9445
  %v9468 = vcombine.high %v9452, %v9452
  %v9469 = vcombine.high %v9459, %v9459
  %v9470 = vcombine.high %v9466, %v9466
  %v9471 = vcombine.high %v9415, %v9415
  %v9473 = vunpack.c.l.s4 1966171168
  %v9474 = vunpack.c.0.s8 %v9473
  %v9475 = vlaneseq
  %v9476 = vshrl.u32 %v9475, 7
  %v9477 = vsub.s32 %v9474, %v9476
  %v9478 = vrot.slane %v9415, %v9477
  %v9480 = vunpack.c.l.s4 1966171168
  %v9481 = vunpack.c.0.s8 %v9480
  %v9482 = vlaneseq
  %v9483 = vshrl.u32 %v9482, 7
  %v9484 = vsub.s32 %v9481, %v9483
  %v9485 = vrot.slane %v9471, %v9484
  %v9486 = vcombine.high %v9478, %v9478
  %v9487 = vcombine.high %v9485, %v9485
  %v9489 = vunpack.c.l.s4 1966171168
  %v9490 = vunpack.c.0.s8 %v9489
  %v9491 = vlaneseq
  %v9492 = vshrl.u32 %v9491, 7
  %v9493 = vsub.s32 %v9490, %v9492
  %v9494 = vrot.slane %v9478, %v9493
  %v9496 = vunpack.c.l.s4 1966171168
  %v9497 = vunpack.c.0.s8 %v9496
  %v9498 = vlaneseq
  %v9499 = vshrl.u32 %v9498, 7
  %v9500 = vsub.s32 %v9497, %v9499
  %v9501 = vrot.slane %v9485, %v9500
  %v9503 = vunpack.c.l.s4 1966171168
  %v9504 = vunpack.c.0.s8 %v9503
  %v9505 = vlaneseq
  %v9506 = vshrl.u32 %v9505, 7
  %v9507 = vsub.s32 %v9504, %v9506
  %v9508 = vrot.slane %v9486, %v9507
  %v9510 = vunpack.c.l.s4 1966171168
  %v9511 = vunpack.c.0.s8 %v9510
  %v9512 = vlaneseq
  %v9513 = vshrl.u32 %v9512, 7
  %v9514 = vsub.s32 %v9511, %v9513
  %v9515 = vrot.slane %v9487, %v9514
  %v9516 = vcombine.high %v9494, %v9494
  %v9517 = vcombine.high %v9501, %v9501
  %v9518 = vcombine.high %v9508, %v9508
  %v9519 = vcombine.high %v9515, %v9515
  %v9520 = vcombine.high %v9416, %v9416
  %v9522 = vunpack.c.l.s4 1966171168
  %v9523 = vunpack.c.0.s8 %v9522
  %v9524 = vlaneseq
  %v9525 = vshrl.u32 %v9524, 7
  %v9526 = vsub.s32 %v9523, %v9525
  %v9527 = vrot.slane %v9416, %v9526
  %v9529 = vunpack.c.l.s4 1966171168
  %v9530 = vunpack.c.0.s8 %v9529
  %v9531 = vlaneseq
  %v9532 = vshrl.u32 %v9531, 7
  %v9533 = vsub.s32 %v9530, %v9532
  %v9534 = vrot.slane %v9520, %v9533
  %v9535 = vcombine.high %v9527, %v9527
  %v9536 = vcombine.high %v9534, %v9534
  %v9538 = vunpack.c.l.s4 1966171168
  %v9539 = vunpack.c.0.s8 %v9538
  %v9540 = vlaneseq
  %v9541 = vshrl.u32 %v9540, 7
  %v9542 = vsub.s32 %v9539, %v9541
  %v9543 = vrot.slane %v9527, %v9542
  %v9545 = vunpack.c.l.s4 1966171168
  %v9546 = vunpack.c.0.s8 %v9545
  %v9547 = vlaneseq
  %v9548 = vshrl.u32 %v9547, 7
  %v9549 = vsub.s32 %v9546, %v9548
  %v9550 = vrot.slane %v9534, %v9549
  %v9552 = vunpack.c.l.s4 1966171168
  %v9553 = vunpack.c.0.s8 %v9552
  %v9554 = vlaneseq
  %v9555 = vshrl.u32 %v9554, 7
  %v9556 = vsub.s32 %v9553, %v9555
  %v9557 = vrot.slane %v9535, %v9556
  %v9559 = vunpack.c.l.s4 1966171168
  %v9560 = vunpack.c.0.s8 %v9559
  %v9561 = vlaneseq
  %v9562 = vshrl.u32 %v9561, 7
  %v9563 = vsub.s32 %v9560, %v9562
  %v9564 = vrot.slane %v9536, %v9563
  %v9565 = vcombine.high %v9543, %v9543
  %v9566 = vcombine.high %v9550, %v9550
  %v9567 = vcombine.high %v9557, %v9557
  %v9568 = vcombine.high %v9564, %v9564
  %v9569 = vcombine.high %v9417, %v9417
  %v9571 = vunpack.c.l.s4 1966171168
  %v9572 = vunpack.c.0.s8 %v9571
  %v9573 = vlaneseq
  %v9574 = vshrl.u32 %v9573, 7
  %v9575 = vsub.s32 %v9572, %v9574
  %v9576 = vrot.slane %v9417, %v9575
  %v9578 = vunpack.c.l.s4 1966171168
  %v9579 = vunpack.c.0.s8 %v9578
  %v9580 = vlaneseq
  %v9581 = vshrl.u32 %v9580, 7
  %v9582 = vsub.s32 %v9579, %v9581
  %v9583 = vrot.slane %v9569, %v9582
  %v9584 = vcombine.high %v9576, %v9576
  %v9585 = vcombine.high %v9583, %v9583
  %v9587 = vunpack.c.l.s4 1966171168
  %v9588 = vunpack.c.0.s8 %v9587
  %v9589 = vlaneseq
  %v9590 = vshrl.u32 %v9589, 7
  %v9591 = vsub.s32 %v9588, %v9590
  %v9592 = vrot.slane %v9576, %v9591
  %v9594 = vunpack.c.l.s4 1966171168
  %v9595 = vunpack.c.0.s8 %v9594
  %v9596 = vlaneseq
  %v9597 = vshrl.u32 %v9596, 7
  %v9598 = vsub.s32 %v9595, %v9597
  %v9599 = vrot.slane %v9583, %v9598
  %v9601 = vunpack.c.l.s4 1966171168
  %v9602 = vunpack.c.0.s8 %v9601
  %v9603 = vlaneseq
  %v9604 = vshrl.u32 %v9603, 7
  %v9605 = vsub.s32 %v9602, %v9604
  %v9606 = vrot.slane %v9584, %v9605
  %v9608 = vunpack.c.l.s4 1966171168
  %v9609 = vunpack.c.0.s8 %v9608
  %v9610 = vlaneseq
  %v9611 = vshrl.u32 %v9610, 7
  %v9612 = vsub.s32 %v9609, %v9611
  %v9613 = vrot.slane %v9585, %v9612
  %v9614 = vcombine.high %v9592, %v9592
  %v9615 = vcombine.high %v9606, %v9606
  %v9616 = vcombine.low %v9445, %v9459
  %v9617 = vcombine.low %v9467, %v9469
  %v9618 = vcombine.low %v9452, %v9466
  %v9619 = vcombine.low %v9468, %v9470
  %v9621 = vunpack.c.l.s4 1966171168
  %v9622 = vunpack.c.0.s8 %v9621
  %v9623 = vlaneseq
  %v9624 = vshrl.u32 %v9623, 7
  %v9625 = vsub.s32 %v9622, %v9624
  %v9626 = vrot.slane %v9616, %v9625
  %v9628 = vunpack.c.l.s4 1966171168
  %v9629 = vunpack.c.0.s8 %v9628
  %v9630 = vlaneseq
  %v9631 = vshrl.u32 %v9630, 7
  %v9632 = vsub.s32 %v9629, %v9631
  %v9633 = vrot.slane %v9617, %v9632
  %v9635 = vunpack.c.l.s4 1966171168
  %v9636 = vunpack.c.0.s8 %v9635
  %v9637 = vlaneseq
  %v9638 = vshrl.u32 %v9637, 7
  %v9639 = vsub.s32 %v9636, %v9638
  %v9640 = vrot.slane %v9618, %v9639
  %v9642 = vunpack.c.l.s4 1966171168
  %v9643 = vunpack.c.0.s8 %v9642
  %v9644 = vlaneseq
  %v9645 = vshrl.u32 %v9644, 7
  %v9646 = vsub.s32 %v9643, %v9645
  %v9647 = vrot.slane %v9619, %v9646
  %v9648 = vcombine.low %v9626, %v9633
  %v9649 = vcombine.low %v9640, %v9647
  %v9651 = vunpack.c.l.s4 1966171168
  %v9652 = vunpack.c.0.s8 %v9651
  %v9653 = vlaneseq
  %v9654 = vshrl.u32 %v9653, 7
  %v9655 = vsub.s32 %v9652, %v9654
  %v9656 = vrot.slane %v9648, %v9655
  %v9658 = vunpack.c.l.s4 1966171168
  %v9659 = vunpack.c.0.s8 %v9658
  %v9660 = vlaneseq
  %v9661 = vshrl.u32 %v9660, 7
  %v9662 = vsub.s32 %v9659, %v9661
  %v9663 = vrot.slane %v9649, %v9662
  %v9664 = vcombine.low %v9656, %v9663
  %v9665 = vcombine.low %v9494, %v9508
  %v9666 = vcombine.low %v9516, %v9518
  %v9667 = vcombine.low %v9501, %v9515
  %v9669 = vunpack.c.l.s4 1966171168
  %v9670 = vunpack.c.0.s8 %v9669
  %v9671 = vlaneseq
  %v9672 = vshrl.u32 %v9671, 7
  %v9673 = vsub.s32 %v9670, %v9672
  %v9674 = vrot.slane %v9665, %v9673
  %v9676 = vunpack.c.l.s4 1966171168
  %v9677 = vunpack.c.0.s8 %v9676
  %v9678 = vlaneseq
  %v9679 = vshrl.u32 %v9678, 7
  %v9680 = vsub.s32 %v9677, %v9679
  %v9681 = vrot.slane %v9666, %v9680
  %v9683 = vunpack.c.l.s4 1966171168
  %v9684 = vunpack.c.0.s8 %v9683
  %v9685 = vlaneseq
  %v9686 = vshrl.u32 %v9685, 7
  %v9687 = vsub.s32 %v9684, %v9686
  %v9688 = vrot.slane %v9667, %v9687
  %v9690 = vunpack.c.l.s4 1966171168
  %v9691 = vunpack.c.0.s8 %v9690
  %v9692 = vlaneseq
  %v9693 = vshrl.u32 %v9692, 7
  %v9694 = vsub.s32 %v9691, %v9693
  %v9695 = vrot.slane %v9517, %v9694
  %v9696 = vcombine.low %v9674, %v9681
  %v9697 = vcombine.low %v9688, %v9695
  %v9699 = vunpack.c.l.s4 1966171168
  %v9700 = vunpack.c.0.s8 %v9699
  %v9701 = vlaneseq
  %v9702 = vshrl.u32 %v9701, 7
  %v9703 = vsub.s32 %v9700, %v9702
  %v9704 = vrot.slane %v9696, %v9703
  %v9706 = vunpack.c.l.s4 1966171168
  %v9707 = vunpack.c.0.s8 %v9706
  %v9708 = vlaneseq
  %v9709 = vshrl.u32 %v9708, 7
  %v9710 = vsub.s32 %v9707, %v9709
  %v9711 = vrot.slane %v9697, %v9710
  %v9712 = vcombine.low %v9704, %v9711
  %v9713 = vcombine.low %v9519, %v9543
  %v9714 = vcombine.low %v9557, %v9565
  %v9715 = vcombine.low %v9567, %v9550
  %v9716 = vcombine.low %v9564, %v9566
  %v9718 = vunpack.c.l.s4 1966171168
  %v9719 = vunpack.c.0.s8 %v9718
  %v9720 = vlaneseq
  %v9721 = vshrl.u32 %v9720, 7
  %v9722 = vsub.s32 %v9719, %v9721
  %v9723 = vrot.slane %v9713, %v9722
  %v9725 = vunpack.c.l.s4 1966171168
  %v9726 = vunpack.c.0.s8 %v9725
  %v9727 = vlaneseq
  %v9728 = vshrl.u32 %v9727, 7
  %v9729 = vsub.s32 %v9726, %v9728
  %v9730 = vrot.slane %v9714, %v9729
  %v9732 = vunpack.c.l.s4 1966171168
  %v9733 = vunpack.c.0.s8 %v9732
  %v9734 = vlaneseq
  %v9735 = vshrl.u32 %v9734, 7
  %v9736 = vsub.s32 %v9733, %v9735
  %v9737 = vrot.slane %v9715, %v9736
  %v9739 = vunpack.c.l.s4 1966171168
  %v9740 = vunpack.c.0.s8 %v9739
  %v9741 = vlaneseq
  %v9742 = vshrl.u32 %v9741, 7
  %v9743 = vsub.s32 %v9740, %v9742
  %v9744 = vrot.slane %v9716, %v9743
  %v9745 = vcombine.low %v9723, %v9730
  %v9746 = vcombine.low %v9737, %v9744
  %v9748 = vunpack.c.l.s4 1966171168
  %v9749 = vunpack.c.0.s8 %v9748
  %v9750 = vlaneseq
  %v9751 = vshrl.u32 %v9750, 7
  %v9752 = vsub.s32 %v9749, %v9751
  %v9753 = vrot.slane %v9745, %v9752
  %v9755 = vunpack.c.l.s4 1966171168
  %v9756 = vunpack.c.0.s8 %v9755
  %v9757 = vlaneseq
  %v9758 = vshrl.u32 %v9757, 7
  %v9759 = vsub.s32 %v9756, %v9758
  %v9760 = vrot.slane %v9746, %v9759
  %v9761 = vcombine.low %v9753, %v9760
  %v9762 = vcombine.low %v9568, %v9592
  %v9763 = vcombine.low %v9606, %v9614
  %v9764 = vcombine.low %v9615, %v9599
  %v9766 = vunpack.c.l.s4 1966171168
  %v9767 = vunpack.c.0.s8 %v9766
  %v9768 = vlaneseq
  %v9769 = vshrl.u32 %v9768, 7
  %v9770 = vsub.s32 %v9767, %v9769
  %v9771 = vrot.slane %v9762, %v9770
  %v9773 = vunpack.c.l.s4 1966171168
  %v9774 = vunpack.c.0.s8 %v9773
  %v9775 = vlaneseq
  %v9776 = vshrl.u32 %v9775, 7
  %v9777 = vsub.s32 %v9774, %v9776
  %v9778 = vrot.slane %v9763, %v9777
  %v9780 = vunpack.c.l.s4 1966171168
  %v9781 = vunpack.c.0.s8 %v9780
  %v9782 = vlaneseq
  %v9783 = vshrl.u32 %v9782, 7
  %v9784 = vsub.s32 %v9781, %v9783
  %v9785 = vrot.slane %v9764, %v9784
  %v9787 = vunpack.c.l.s4 1966171168
  %v9788 = vunpack.c.0.s8 %v9787
  %v9789 = vlaneseq
  %v9790 = vshrl.u32 %v9789, 7
  %v9791 = vsub.s32 %v9788, %v9790
  %v9792 = vrot.slane %v9613, %v9791
  %v9793 = vcombine.low %v9771, %v9778
  %v9794 = vcombine.low %v9785, %v9792
  %v9796 = vunpack.c.l.s4 1966171168
  %v9797 = vunpack.c.0.s8 %v9796
  %v9798 = vlaneseq
  %v9799 = vshrl.u32 %v9798, 7
  %v9800 = vsub.s32 %v9797, %v9799
  %v9801 = vrot.slane %v9793, %v9800
  %v9803 = vunpack.c.l.s4 1966171168
  %v9804 = vunpack.c.0.s8 %v9803
  %v9805 = vlaneseq
  %v9806 = vshrl.u32 %v9805, 7
  %v9807 = vsub.s32 %v9804, %v9806
  %v9808 = vrot.slane %v9794, %v9807
  %v9809 = vcombine.low %v9801, %v9808
  %9814 = vst [vmem:[#allocation4] sm:$0xff] %v9664
  %9815 = vst [vmem:[#allocation4 + $0x8] sm:$0x7f] %v9712
  %9816 = vst [vmem:[#allocation4 + $0x10] sm:$0xff] %v9761
  %9817 = vst [vmem:[#allocation4 + $0x18] sm:$0x7f] %v9809
  %v9818 = vld [vmem:[#allocation4] ss:$4 sm:$0xf]
  %s9819 = scalar_lea.vmem [#allocation4], 16
  %v9820 = vld [vmem:[%s9819] ss:$4 sm:$0xf]
  %v9821 = vpack.c.bf16 %v9818, %v9818
  %v9822 = vpack.c.bf16 %v9820, %v9820
  %s9823 = scalar_lea.vmem [#allocation4], 1
  %v9824 = vld [vmem:[%s9823] ss:$4 sm:$0xf]
  %s9825 = scalar_lea.vmem [#allocation4], 17
  %v9826 = vld [vmem:[%s9825] ss:$4 sm:$0xf]
  %v9827 = vpack.c.bf16 %v9824, %v9824
  %v9828 = vpack.c.bf16 %v9826, %v9826
  %s9829 = scalar_lea.vmem [#allocation4], 2
  %v9830 = vld [vmem:[%s9829] ss:$4 sm:$0xf]
  %s9831 = scalar_lea.vmem [#allocation4], 18
  %v9832 = vld [vmem:[%s9831] ss:$4 sm:$0xf]
  %v9833 = vpack.c.bf16 %v9830, %v9830
  %v9834 = vpack.c.bf16 %v9832, %v9832
  %s9835 = scalar_lea.vmem [#allocation4], 3
  %v9836 = vld [vmem:[%s9835] ss:$4 sm:$0x7]
  %s9837 = scalar_lea.vmem [#allocation4], 19
  %v9838 = vld [vmem:[%s9837] ss:$4 sm:$0x7]
  %v9839 = vpack.c.bf16 %v9836, %v9836
  %v9840 = vpack.c.bf16 %v9838, %v9838
  %v9842 = vshrl.u32 %v9821, 16
  %v9844 = vshll.u32 %v9821, 16
  %v9846 = vrot.slane %v9844, 1
  %v9847 = vor.u32 %v9842, %v9846
  %v9849 = vshrl.u32 %v9822, 16
  %v9851 = vshll.u32 %v9822, 16
  %v9853 = vrot.slane %v9851, 1
  %v9854 = vor.u32 %v9849, %v9853
  %v9856 = vshrl.u32 %v9827, 16
  %v9858 = vshll.u32 %v9827, 16
  %v9860 = vrot.slane %v9858, 1
  %v9861 = vor.u32 %v9856, %v9860
  %v9863 = vshrl.u32 %v9828, 16
  %v9865 = vshll.u32 %v9828, 16
  %v9867 = vrot.slane %v9865, 1
  %v9868 = vor.u32 %v9863, %v9867
  %v9870 = vshrl.u32 %v9833, 16
  %v9872 = vshll.u32 %v9833, 16
  %v9874 = vrot.slane %v9872, 1
  %v9875 = vor.u32 %v9870, %v9874
  %v9877 = vshrl.u32 %v9834, 16
  %v9879 = vshll.u32 %v9834, 16
  %v9881 = vrot.slane %v9879, 1
  %v9882 = vor.u32 %v9877, %v9881
  %v9891 = vcombine.low %v9821, %v9847
  %v9892 = vcombine.low %v9827, %v9861
  %v9893 = vcombine.low %v9833, %v9875
  %v9895 = vunpack.c.l.s4 1966171168
  %v9896 = vunpack.c.0.s8 %v9895
  %v9897 = vlaneseq
  %v9898 = vshrl.u32 %v9897, 7
  %v9899 = vsub.s32 %v9896, %v9898
  %v9900 = vrot.slane %v9891, %v9899
  %v9902 = vunpack.c.l.s4 1966171168
  %v9903 = vunpack.c.0.s8 %v9902
  %v9904 = vlaneseq
  %v9905 = vshrl.u32 %v9904, 7
  %v9906 = vsub.s32 %v9903, %v9905
  %v9907 = vrot.slane %v9892, %v9906
  %v9909 = vunpack.c.l.s4 1966171168
  %v9910 = vunpack.c.0.s8 %v9909
  %v9911 = vlaneseq
  %v9912 = vshrl.u32 %v9911, 7
  %v9913 = vsub.s32 %v9910, %v9912
  %v9914 = vrot.slane %v9893, %v9913
  %v9916 = vunpack.c.l.s4 1966171168
  %v9917 = vunpack.c.0.s8 %v9916
  %v9918 = vlaneseq
  %v9919 = vshrl.u32 %v9918, 7
  %v9920 = vsub.s32 %v9917, %v9919
  %v9921 = vrot.slane %v9839, %v9920
  %v9922 = vcombine.low %v9900, %v9907
  %v9923 = vcombine.high %v9900, %v9907
  %v9924 = vcombine.low %v9914, %v9921
  %v9925 = vcombine.high %v9914, %v9921
  %v9927 = vunpack.c.l.s4 1966171168
  %v9928 = vunpack.c.0.s8 %v9927
  %v9929 = vlaneseq
  %v9930 = vshrl.u32 %v9929, 7
  %v9931 = vsub.s32 %v9928, %v9930
  %v9932 = vrot.slane %v9922, %v9931
  %v9934 = vunpack.c.l.s4 1966171168
  %v9935 = vunpack.c.0.s8 %v9934
  %v9936 = vlaneseq
  %v9937 = vshrl.u32 %v9936, 7
  %v9938 = vsub.s32 %v9935, %v9937
  %v9939 = vrot.slane %v9923, %v9938
  %v9941 = vunpack.c.l.s4 1966171168
  %v9942 = vunpack.c.0.s8 %v9941
  %v9943 = vlaneseq
  %v9944 = vshrl.u32 %v9943, 7
  %v9945 = vsub.s32 %v9942, %v9944
  %v9946 = vrot.slane %v9924, %v9945
  %v9948 = vunpack.c.l.s4 1966171168
  %v9949 = vunpack.c.0.s8 %v9948
  %v9950 = vlaneseq
  %v9951 = vshrl.u32 %v9950, 7
  %v9952 = vsub.s32 %v9949, %v9951
  %v9953 = vrot.slane %v9925, %v9952
  %v9954 = vcombine.low %v9932, %v9946
  %v9955 = vcombine.low %v9939, %v9953
  %v9956 = vcombine.low %v9822, %v9854
  %v9957 = vcombine.low %v9828, %v9868
  %v9958 = vcombine.low %v9834, %v9882
  %v9960 = vunpack.c.l.s4 1966171168
  %v9961 = vunpack.c.0.s8 %v9960
  %v9962 = vlaneseq
  %v9963 = vshrl.u32 %v9962, 7
  %v9964 = vsub.s32 %v9961, %v9963
  %v9965 = vrot.slane %v9956, %v9964
  %v9967 = vunpack.c.l.s4 1966171168
  %v9968 = vunpack.c.0.s8 %v9967
  %v9969 = vlaneseq
  %v9970 = vshrl.u32 %v9969, 7
  %v9971 = vsub.s32 %v9968, %v9970
  %v9972 = vrot.slane %v9957, %v9971
  %v9974 = vunpack.c.l.s4 1966171168
  %v9975 = vunpack.c.0.s8 %v9974
  %v9976 = vlaneseq
  %v9977 = vshrl.u32 %v9976, 7
  %v9978 = vsub.s32 %v9975, %v9977
  %v9979 = vrot.slane %v9958, %v9978
  %v9981 = vunpack.c.l.s4 1966171168
  %v9982 = vunpack.c.0.s8 %v9981
  %v9983 = vlaneseq
  %v9984 = vshrl.u32 %v9983, 7
  %v9985 = vsub.s32 %v9982, %v9984
  %v9986 = vrot.slane %v9840, %v9985
  %v9987 = vcombine.low %v9965, %v9972
  %v9988 = vcombine.high %v9965, %v9972
  %v9989 = vcombine.low %v9979, %v9986
  %v9990 = vcombine.high %v9979, %v9986
  %v9992 = vunpack.c.l.s4 1966171168
  %v9993 = vunpack.c.0.s8 %v9992
  %v9994 = vlaneseq
  %v9995 = vshrl.u32 %v9994, 7
  %v9996 = vsub.s32 %v9993, %v9995
  %v9997 = vrot.slane %v9987, %v9996
  %v9999 = vunpack.c.l.s4 1966171168
  %v10000 = vunpack.c.0.s8 %v9999
  %v10001 = vlaneseq
  %v10002 = vshrl.u32 %v10001, 7
  %v10003 = vsub.s32 %v10000, %v10002
  %v10004 = vrot.slane %v9988, %v10003
  %v10006 = vunpack.c.l.s4 1966171168
  %v10007 = vunpack.c.0.s8 %v10006
  %v10008 = vlaneseq
  %v10009 = vshrl.u32 %v10008, 7
  %v10010 = vsub.s32 %v10007, %v10009
  %v10011 = vrot.slane %v9989, %v10010
  %v10013 = vunpack.c.l.s4 1966171168
  %v10014 = vunpack.c.0.s8 %v10013
  %v10015 = vlaneseq
  %v10016 = vshrl.u32 %v10015, 7
  %v10017 = vsub.s32 %v10014, %v10016
  %v10018 = vrot.slane %v9990, %v10017
  %v10019 = vcombine.low %v9997, %v10011
  %v10020 = vcombine.low %v10004, %v10018
  %v10021 = vunpack.i.l.s16 %v9954
  %v10022 = vunpack.i.h.s16 %v9954
  %v10023 = vunpack.i.l.s16 %v9955
  %v10024 = vunpack.i.l.s16 %v10019
  %v10025 = vunpack.i.h.s16 %v10019
  %v10026 = vunpack.i.l.s16 %v10020
  %v10027 = vld [vmem:[%s6] sm:$0xf]
  %v10028 = vld [vmem:[%s6 + $0x4] sm:$0xf]
  %v10029 = vld [vmem:[%s6 + $0x8] sm:$0xf]
  %v10030 = vld [vmem:[%s6 + $0xc] sm:$0xf]
  %v10031 = vld [vmem:[%s6 + $0x10] sm:$0xf]
  %v10032 = vld [vmem:[%s6 + $0x14] sm:$0xf]
  %v10033 = vld [vmem:[%s6 + $0x18] sm:$0xf]
  %v10034 = vld [vmem:[%s6 + $0x1c] sm:$0xf]
  %v10035 = vld [vmem:[%s6 + $0x20] sm:$0xf]
  %v10036 = vld [vmem:[%s6 + $0x24] sm:$0xf]
  %v10037 = vld [vmem:[%s6 + $0x28] sm:$0xf]
  %v10038 = vld [vmem:[%s6 + $0x2c] sm:$0xf]
  %v10039 = vld [vmem:[%s6 + $0x30] sm:$0xf]
  %v10040 = vld [vmem:[%s6 + $0x34] sm:$0xf]
  %v10041 = vld [vmem:[%s6 + $0x38] sm:$0xf]
  %v10042 = vld [vmem:[%s6 + $0x3c] sm:$0xf]
  %v10043 = vld [vmem:[%s6 + $0x40] sm:$0xf]
  %v10044 = vld [vmem:[%s6 + $0x44] sm:$0xf]
  %v10045 = vld [vmem:[%s6 + $0x48] sm:$0xf]
  %v10046 = vld [vmem:[%s6 + $0x4c] sm:$0xf]
  %v10047 = vld [vmem:[%s6 + $0x50] sm:$0xf]
  %v10048 = vld [vmem:[%s6 + $0x54] sm:$0xf]
  %v10049 = vld [vmem:[%s6 + $0x58] sm:$0xf]
  %v10050 = vld [vmem:[%s6 + $0x5c] sm:$0xf]
  %v10051 = vld [vmem:[%s6 + $0x60] sm:$0xf]
  %v10052 = vld [vmem:[%s6 + $0x64] sm:$0xf]
  %v10053 = vld [vmem:[%s6 + $0x68] sm:$0xf]
  %v10054 = vld [vmem:[%s6 + $0x6c] sm:$0xf]
  %v10055 = vld [vmem:[%s6 + $0x70] sm:$0xf]
  %v10056 = vld [vmem:[%s6 + $0x74] sm:$0xf]
  %v10057 = vld [vmem:[%s6 + $0x78] sm:$0xf]
  %v10058 = vld [vmem:[%s6 + $0x7c] sm:$0xf]
  %v10059 = vld [vmem:[%s6 + $0x80] sm:$0xf]
  %v10060 = vld [vmem:[%s6 + $0x84] sm:$0xf]
  %v10061 = vld [vmem:[%s6 + $0x88] sm:$0xf]
  %v10062 = vld [vmem:[%s6 + $0x8c] sm:$0xf]
  %v10063 = vld [vmem:[%s6 + $0x90] sm:$0xf]
  %v10064 = vld [vmem:[%s6 + $0x94] sm:$0xf]
  %v10065 = vld [vmem:[%s6 + $0x98] sm:$0xf]
  %v10066 = vld [vmem:[%s6 + $0x9c] sm:$0xf]
  %v10067 = vld [vmem:[%s6 + $0xa0] sm:$0xf]
  %v10068 = vld [vmem:[%s6 + $0xa4] sm:$0xf]
  %v10069 = vld [vmem:[%s6 + $0xa8] sm:$0xf]
  %v10070 = vld [vmem:[%s6 + $0xac] sm:$0xf]
  %v10071 = vld [vmem:[%s6 + $0xb0] sm:$0xf]
  %v10072 = vld [vmem:[%s6 + $0xb4] sm:$0xf]
  %v10073 = vld [vmem:[%s6 + $0xb8] sm:$0xf]
  %v10074 = vld [vmem:[%s6 + $0xbc] sm:$0xf]
  %v10075 = vld [vmem:[%s6 + $0xc0] sm:$0xf]
  %v10076 = vld [vmem:[%s6 + $0xc4] sm:$0xf]
  %v10077 = vld [vmem:[%s6 + $0xc8] sm:$0xf]
  %v10078 = vld [vmem:[%s6 + $0xcc] sm:$0xf]
  %v10079 = vld [vmem:[%s6 + $0xd0] sm:$0xf]
  %v10080 = vld [vmem:[%s6 + $0xd4] sm:$0xf]
  %v10081 = vld [vmem:[%s6 + $0xd8] sm:$0xf]
  %v10082 = vld [vmem:[%s6 + $0xdc] sm:$0xf]
  %v10083 = vld [vmem:[%s6 + $0xe0] sm:$0xf]
  %v10084 = vld [vmem:[%s6 + $0xe4] sm:$0xf]
  %v10085 = vld [vmem:[%s6 + $0xe8] sm:$0xf]
  %v10086 = vld [vmem:[%s6 + $0xec] sm:$0xf]
  %v10087 = vld [vmem:[%s6 + $0xf0] sm:$0xf]
  %v10088 = vld [vmem:[%s6 + $0xf4] sm:$0xf]
  %v10089 = vld [vmem:[%s6 + $0xf8] sm:$0xf]
  %v10090 = vld [vmem:[%s6 + $0xfc] sm:$0xf]
  %v10091 = vld [vmem:[%s6 + $0x100] sm:$0xf]
  %v10092 = vld [vmem:[%s6 + $0x104] sm:$0xf]
  %v10093 = vld [vmem:[%s6 + $0x108] sm:$0xf]
  %v10094 = vld [vmem:[%s6 + $0x10c] sm:$0xf]
  %v10095 = vld [vmem:[%s6 + $0x110] sm:$0xf]
  %v10096 = vld [vmem:[%s6 + $0x114] sm:$0xf]
  %v10097 = vld [vmem:[%s6 + $0x118] sm:$0xf]
  %v10098 = vld [vmem:[%s6 + $0x11c] sm:$0xf]
  %v10099 = vld [vmem:[%s6 + $0x120] sm:$0xf]
  %v10100 = vld [vmem:[%s6 + $0x124] sm:$0xf]
  %v10101 = vld [vmem:[%s6 + $0x128] sm:$0xf]
  %v10102 = vld [vmem:[%s6 + $0x12c] sm:$0xf]
  %v10103 = vld [vmem:[%s6 + $0x130] sm:$0xf]
  %v10104 = vld [vmem:[%s6 + $0x134] sm:$0xf]
  %v10105 = vld [vmem:[%s6 + $0x138] sm:$0xf]
  %v10106 = vld [vmem:[%s6 + $0x13c] sm:$0xf]
  %v10107 = vld [vmem:[%s6 + $0x140] sm:$0xf]
  %v10108 = vld [vmem:[%s6 + $0x144] sm:$0xf]
  %v10109 = vld [vmem:[%s6 + $0x148] sm:$0xf]
  %v10110 = vld [vmem:[%s6 + $0x14c] sm:$0xf]
  %v10111 = vld [vmem:[%s6 + $0x150] sm:$0xf]
  %v10112 = vld [vmem:[%s6 + $0x154] sm:$0xf]
  %v10113 = vld [vmem:[%s6 + $0x158] sm:$0xf]
  %v10114 = vld [vmem:[%s6 + $0x15c] sm:$0xf]
  %v10115 = vld [vmem:[%s6 + $0x160] sm:$0xf]
  %v10116 = vld [vmem:[%s6 + $0x164] sm:$0xf]
  %v10117 = vld [vmem:[%s6 + $0x168] sm:$0xf]
  %v10118 = vld [vmem:[%s6 + $0x16c] sm:$0xf]
  %v10119 = vld [vmem:[%s6 + $0x170] sm:$0xf]
  %v10120 = vld [vmem:[%s6 + $0x174] sm:$0xf]
  %v10121 = vld [vmem:[%s6 + $0x178] sm:$0xf]
  %v10122 = vld [vmem:[%s6 + $0x17c] sm:$0xf]
  %v10123 = vld [vmem:[%s6 + $0x180] sm:$0xf]
  %v10124 = vld [vmem:[%s6 + $0x184] sm:$0xf]
  %v10125 = vld [vmem:[%s6 + $0x188] sm:$0xf]
  %v10126 = vld [vmem:[%s6 + $0x18c] sm:$0xf]
  %v10127 = vld [vmem:[%s6 + $0x190] sm:$0xf]
  %v10128 = vld [vmem:[%s6 + $0x194] sm:$0xf]
  %v10129 = vld [vmem:[%s6 + $0x198] sm:$0xf]
  %v10130 = vld [vmem:[%s6 + $0x19c] sm:$0xf]
  %v10131 = vld [vmem:[%s6 + $0x1a0] sm:$0xf]
  %v10132 = vld [vmem:[%s6 + $0x1a4] sm:$0xf]
  %v10133 = vld [vmem:[%s6 + $0x1a8] sm:$0xf]
  %v10134 = vld [vmem:[%s6 + $0x1ac] sm:$0xf]
  %v10135 = vld [vmem:[%s6 + $0x1b0] sm:$0xf]
  %v10136 = vld [vmem:[%s6 + $0x1b4] sm:$0xf]
  %v10137 = vld [vmem:[%s6 + $0x1b8] sm:$0xf]
  %v10138 = vld [vmem:[%s6 + $0x1bc] sm:$0xf]
  %v10139 = vlaneseq
  %v10140 = vshrl.u32 %v10139, 7
  %v10141 = vsub.s32 4, %v10140
  %v10142 = vrot.slane %v36, %v10141
  %v10143 = vpack.i.b16 %v10022, %v10021
  %v10144 = vpack.i.b16 %v10024, %v10023
  %v10145 = vpack.i.b16 %v10026, %v10025
  %v10146 = vcombine.low %v10143, %v10144
  %v10147 = vcombine.high %v10143, %v10144
  %v10148 = vcombine.high %v10145, %v10145
  %v10150 = vunpack.c.l.s4 1966171168
  %v10151 = vunpack.c.0.s8 %v10150
  %v10152 = vlaneseq
  %v10153 = vshrl.u32 %v10152, 7
  %v10154 = vsub.s32 %v10151, %v10153
  %v10155 = vrot.slane %v10146, %v10154
  %v10157 = vunpack.c.l.s4 1966171168
  %v10158 = vunpack.c.0.s8 %v10157
  %v10159 = vlaneseq
  %v10160 = vshrl.u32 %v10159, 7
  %v10161 = vsub.s32 %v10158, %v10160
  %v10162 = vrot.slane %v10147, %v10161
  %v10164 = vunpack.c.l.s4 1966171168
  %v10165 = vunpack.c.0.s8 %v10164
  %v10166 = vlaneseq
  %v10167 = vshrl.u32 %v10166, 7
  %v10168 = vsub.s32 %v10165, %v10167
  %v10169 = vrot.slane %v10145, %v10168
  %v10171 = vunpack.c.l.s4 1966171168
  %v10172 = vunpack.c.0.s8 %v10171
  %v10173 = vlaneseq
  %v10174 = vshrl.u32 %v10173, 7
  %v10175 = vsub.s32 %v10172, %v10174
  %v10176 = vrot.slane %v10148, %v10175
  %v10177 = vcombine.low %v10155, %v10169
  %v10178 = vcombine.high %v10155, %v10169
  %v10179 = vcombine.low %v10162, %v10176
  %v10180 = vcombine.high %v10162, %v10176
  %v10182 = vunpack.c.l.s4 1966171168
  %v10183 = vunpack.c.0.s8 %v10182
  %v10184 = vlaneseq
  %v10185 = vshrl.u32 %v10184, 7
  %v10186 = vsub.s32 %v10183, %v10185
  %v10187 = vrot.slane %v10177, %v10186
  %v10189 = vunpack.c.l.s4 1966171168
  %v10190 = vunpack.c.0.s8 %v10189
  %v10191 = vlaneseq
  %v10192 = vshrl.u32 %v10191, 7
  %v10193 = vsub.s32 %v10190, %v10192
  %v10194 = vrot.slane %v10179, %v10193
  %v10196 = vunpack.c.l.s4 1966171168
  %v10197 = vunpack.c.0.s8 %v10196
  %v10198 = vlaneseq
  %v10199 = vshrl.u32 %v10198, 7
  %v10200 = vsub.s32 %v10197, %v10199
  %v10201 = vrot.slane %v10178, %v10200
  %v10203 = vunpack.c.l.s4 1966171168
  %v10204 = vunpack.c.0.s8 %v10203
  %v10205 = vlaneseq
  %v10206 = vshrl.u32 %v10205, 7
  %v10207 = vsub.s32 %v10204, %v10206
  %v10208 = vrot.slane %v10180, %v10207
  %v10209 = vcombine.high %v10187, %v10187
  %v10210 = vcombine.high %v10194, %v10194
  %v10211 = vcombine.high %v10201, %v10201
  %v10331 = vunpack.c.l.b16 %v10027
  %v10332 = vunpack.c.l.b16 %v10028
  %v10333 = vunpack.c.l.b16 %v10029
  %v10334 = vunpack.c.l.b16 %v10030
  %v10335 = vunpack.c.l.b16 %v10031
  %v10336 = vunpack.c.l.b16 %v10032
  %v10337 = vunpack.c.l.b16 %v10033
  %v10338 = vunpack.c.l.b16 %v10034
  %v10339 = vunpack.c.l.b16 %v10035
  %v10340 = vunpack.c.l.b16 %v10036
  %v10341 = vunpack.c.l.b16 %v10037
  %v10342 = vunpack.c.l.b16 %v10038
  %v10343 = vunpack.c.l.b16 %v10039
  %v10344 = vunpack.c.l.b16 %v10040
  %v10345 = vunpack.c.l.b16 %v10041
  %v10346 = vunpack.c.l.b16 %v10042
  %v10347 = vunpack.c.l.b16 %v10043
  %v10348 = vunpack.c.l.b16 %v10044
  %v10349 = vunpack.c.l.b16 %v10045
  %v10350 = vunpack.c.l.b16 %v10046
  %v10351 = vunpack.c.l.b16 %v10047
  %v10352 = vunpack.c.l.b16 %v10048
  %v10353 = vunpack.c.l.b16 %v10049
  %v10354 = vunpack.c.l.b16 %v10050
  %v10355 = vunpack.c.l.b16 %v10051
  %v10356 = vunpack.c.l.b16 %v10052
  %v10357 = vunpack.c.l.b16 %v10053
  %v10358 = vunpack.c.l.b16 %v10054
  %v10359 = vunpack.c.l.b16 %v10055
  %v10360 = vunpack.c.l.b16 %v10056
  %v10361 = vunpack.c.l.b16 %v10057
  %v10362 = vunpack.c.l.b16 %v10058
  %v10363 = vunpack.c.l.b16 %v10059
  %v10364 = vunpack.c.l.b16 %v10060
  %v10365 = vunpack.c.l.b16 %v10061
  %v10366 = vunpack.c.l.b16 %v10062
  %v10367 = vunpack.c.l.b16 %v10063
  %v10368 = vunpack.c.l.b16 %v10064
  %v10369 = vunpack.c.l.b16 %v10065
  %v10370 = vunpack.c.l.b16 %v10066
  %v10371 = vunpack.c.l.b16 %v10067
  %v10372 = vunpack.c.l.b16 %v10068
  %v10373 = vunpack.c.l.b16 %v10069
  %v10374 = vunpack.c.l.b16 %v10070
  %v10375 = vunpack.c.l.b16 %v10071
  %v10376 = vunpack.c.l.b16 %v10072
  %v10377 = vunpack.c.l.b16 %v10073
  %v10378 = vunpack.c.l.b16 %v10074
  %v10379 = vunpack.c.l.b16 %v10075
  %v10380 = vunpack.c.l.b16 %v10076
  %v10381 = vunpack.c.l.b16 %v10077
  %v10382 = vunpack.c.l.b16 %v10078
  %v10383 = vunpack.c.l.b16 %v10079
  %v10384 = vunpack.c.l.b16 %v10080
  %v10385 = vunpack.c.l.b16 %v10081
  %v10386 = vunpack.c.l.b16 %v10082
  %v10387 = vunpack.c.l.b16 %v10083
  %v10388 = vunpack.c.l.b16 %v10084
  %v10389 = vunpack.c.l.b16 %v10085
  %v10390 = vunpack.c.l.b16 %v10086
  %v10391 = vunpack.c.l.b16 %v10087
  %v10392 = vunpack.c.l.b16 %v10088
  %v10393 = vunpack.c.l.b16 %v10089
  %v10394 = vunpack.c.l.b16 %v10090
  %v10395 = vunpack.c.l.b16 %v10091
  %v10396 = vunpack.c.l.b16 %v10092
  %v10397 = vunpack.c.l.b16 %v10093
  %v10398 = vunpack.c.l.b16 %v10094
  %v10399 = vunpack.c.l.b16 %v10095
  %v10400 = vunpack.c.l.b16 %v10096
  %v10401 = vunpack.c.l.b16 %v10097
  %v10402 = vunpack.c.l.b16 %v10098
  %v10403 = vunpack.c.l.b16 %v10099
  %v10404 = vunpack.c.l.b16 %v10100
  %v10405 = vunpack.c.l.b16 %v10101
  %v10406 = vunpack.c.l.b16 %v10102
  %v10407 = vunpack.c.l.b16 %v10103
  %v10408 = vunpack.c.l.b16 %v10104
  %v10409 = vunpack.c.l.b16 %v10105
  %v10410 = vunpack.c.l.b16 %v10106
  %v10411 = vunpack.c.l.b16 %v10107
  %v10412 = vunpack.c.l.b16 %v10108
  %v10413 = vunpack.c.l.b16 %v10109
  %v10414 = vunpack.c.l.b16 %v10110
  %v10415 = vunpack.c.l.b16 %v10111
  %v10416 = vunpack.c.l.b16 %v10112
  %v10417 = vunpack.c.l.b16 %v10113
  %v10418 = vunpack.c.l.b16 %v10114
  %v10419 = vunpack.c.l.b16 %v10115
  %v10420 = vunpack.c.l.b16 %v10116
  %v10421 = vunpack.c.l.b16 %v10117
  %v10422 = vunpack.c.l.b16 %v10118
  %v10423 = vunpack.c.l.b16 %v10119
  %v10424 = vunpack.c.l.b16 %v10120
  %v10425 = vunpack.c.l.b16 %v10121
  %v10426 = vunpack.c.l.b16 %v10122
  %v10427 = vunpack.c.l.b16 %v10123
  %v10428 = vunpack.c.l.b16 %v10124
  %v10429 = vunpack.c.l.b16 %v10125
  %v10430 = vunpack.c.l.b16 %v10126
  %v10431 = vunpack.c.l.b16 %v10127
  %v10432 = vunpack.c.l.b16 %v10128
  %v10433 = vunpack.c.l.b16 %v10129
  %v10434 = vunpack.c.l.b16 %v10130
  %v10435 = vunpack.c.l.b16 %v10131
  %v10436 = vunpack.c.l.b16 %v10132
  %v10437 = vunpack.c.l.b16 %v10133
  %v10438 = vunpack.c.l.b16 %v10134
  %v10439 = vunpack.c.l.b16 %v10135
  %v10440 = vunpack.c.l.b16 %v10136
  %v10441 = vunpack.c.l.b16 %v10137
  %v10442 = vunpack.c.l.b16 %v10138
  %v10443 = vpack.c.b16 %v10332, %v10331
  %v10444 = vpack.c.b16 %v10334, %v10333
  %v10445 = vpack.c.b16 %v10336, %v10335
  %v10446 = vpack.c.b16 %v10338, %v10337
  %v10447 = vpack.c.b16 %v10340, %v10339
  %v10448 = vpack.c.b16 %v10342, %v10341
  %v10449 = vpack.c.b16 %v10344, %v10343
  %v10450 = vpack.c.b16 %v10346, %v10345
  %v10451 = vpack.c.b16 %v10348, %v10347
  %v10452 = vpack.c.b16 %v10350, %v10349
  %v10453 = vpack.c.b16 %v10352, %v10351
  %v10454 = vpack.c.b16 %v10354, %v10353
  %v10455 = vpack.c.b16 %v10356, %v10355
  %v10456 = vpack.c.b16 %v10358, %v10357
  %v10457 = vpack.c.b16 %v10360, %v10359
  %v10458 = vpack.c.b16 %v10362, %v10361
  %v10459 = vpack.c.b16 %v10364, %v10363
  %v10460 = vpack.c.b16 %v10366, %v10365
  %v10461 = vpack.c.b16 %v10368, %v10367
  %v10462 = vpack.c.b16 %v10370, %v10369
  %v10463 = vpack.c.b16 %v10372, %v10371
  %v10464 = vpack.c.b16 %v10374, %v10373
  %v10465 = vpack.c.b16 %v10376, %v10375
  %v10466 = vpack.c.b16 %v10378, %v10377
  %v10467 = vpack.c.b16 %v10380, %v10379
  %v10468 = vpack.c.b16 %v10382, %v10381
  %v10469 = vpack.c.b16 %v10384, %v10383
  %v10470 = vpack.c.b16 %v10386, %v10385
  %v10471 = vpack.c.b16 %v10388, %v10387
  %v10472 = vpack.c.b16 %v10390, %v10389
  %v10473 = vpack.c.b16 %v10392, %v10391
  %v10474 = vpack.c.b16 %v10394, %v10393
  %v10475 = vpack.c.b16 %v10396, %v10395
  %v10476 = vpack.c.b16 %v10398, %v10397
  %v10477 = vpack.c.b16 %v10400, %v10399
  %v10478 = vpack.c.b16 %v10402, %v10401
  %v10479 = vpack.c.b16 %v10404, %v10403
  %v10480 = vpack.c.b16 %v10406, %v10405
  %v10481 = vpack.c.b16 %v10408, %v10407
  %v10482 = vpack.c.b16 %v10410, %v10409
  %v10483 = vpack.c.b16 %v10412, %v10411
  %v10484 = vpack.c.b16 %v10414, %v10413
  %v10485 = vpack.c.b16 %v10416, %v10415
  %v10486 = vpack.c.b16 %v10418, %v10417
  %v10487 = vpack.c.b16 %v10420, %v10419
  %v10488 = vpack.c.b16 %v10422, %v10421
  %v10489 = vpack.c.b16 %v10424, %v10423
  %v10490 = vpack.c.b16 %v10426, %v10425
  %v10491 = vpack.c.b16 %v10428, %v10427
  %v10492 = vpack.c.b16 %v10430, %v10429
  %v10493 = vpack.c.b16 %v10432, %v10431
  %v10494 = vpack.c.b16 %v10434, %v10433
  %v10495 = vpack.c.b16 %v10436, %v10435
  %v10496 = vpack.c.b16 %v10438, %v10437
  %v10497 = vpack.c.b16 %v10440, %v10439
  %v10498 = vpack.c.b16 %v10442, %v10441
  %10555 = vmatprep.subr.bf16.mxu0 0
  %10556 = vmatpush1.bf16.msra.mxu0 %v10443
  %10557 = vmatprep.subr.bf16.mxu0 0
  %10558 = vmatpush1.bf16.msra.mxu0 %v10444
  %10559 = vmatprep.subr.bf16.mxu0 0
  %10560 = vmatpush1.bf16.msra.mxu0 %v10445
  %10561 = vmatprep.subr.bf16.mxu0 0
  %10562 = vmatpush1.bf16.msra.mxu0 %v10446
  %10563 = vmatprep.subr.bf16.mxu0 0
  %10564 = vmatpush1.bf16.msra.mxu0 %v10447
  %10565 = vmatprep.subr.bf16.mxu0 0
  %10566 = vmatpush1.bf16.msra.mxu0 %v10448
  %10567 = vmatprep.subr.bf16.mxu0 0
  %10568 = vmatpush1.bf16.msra.mxu0 %v10449
  %10569 = vmatprep.subr.bf16.mxu0 0
  %10570 = vmatpush1.bf16.msra.mxu0 %v10450
  %10571 = vmatprep.subr.bf16.mxu0 0
  %10572 = vmatpush1.bf16.msra.mxu0 %v10451
  %10573 = vmatprep.subr.bf16.mxu0 0
  %10574 = vmatpush1.bf16.msra.mxu0 %v10452
  %10575 = vmatprep.subr.bf16.mxu0 0
  %10576 = vmatpush1.bf16.msra.mxu0 %v10453
  %10577 = vmatprep.subr.bf16.mxu0 0
  %10578 = vmatpush1.bf16.msra.mxu0 %v10454
  %10579 = vmatprep.subr.bf16.mxu0 0
  %10580 = vmatpush1.bf16.msra.mxu0 %v10455
  %10581 = vmatprep.subr.bf16.mxu0 0
  %10582 = vmatpush1.bf16.msra.mxu0 %v10456
  %10583 = vmatprep.subr.bf16.mxu0 0
  %10584 = vmatpush1.bf16.msra.mxu0 %v10457
  %10585 = vmatprep.subr.bf16.mxu0 0
  %10586 = vmatpush1.bf16.msra.mxu0 %v10458
  %10587 = vmatprep.mubr.bf16.mxu0 %v10201
  %10588 = vmatmul.mubr.bf16.gmra.mrb[0].mxu0 %v10187
  %v10589 = vpop.f32.mrb[0].mxu0
  %v10590 = vadd.f32 %v10142, %v10589
  %v10591 = vpop.f32.mrb[0].mxu0
  %v10592 = vpop.f32.mrb[0].mxu0
  %v10593 = vpop.f32.mrb[0].mxu0
  %10594 = vdwg.mxu0
  %10595 = vmatprep.subr.bf16.mxu0 0
  %10596 = vmatpush1.bf16.msra.mxu0 %v10459
  %10597 = vmatprep.subr.bf16.mxu0 0
  %10598 = vmatpush1.bf16.msra.mxu0 %v10460
  %10599 = vmatprep.subr.bf16.mxu0 0
  %10600 = vmatpush1.bf16.msra.mxu0 %v10461
  %10601 = vmatprep.subr.bf16.mxu0 0
  %10602 = vmatpush1.bf16.msra.mxu0 %v10462
  %10603 = vmatprep.subr.bf16.mxu0 0
  %10604 = vmatpush1.bf16.msra.mxu0 %v10463
  %10605 = vmatprep.subr.bf16.mxu0 0
  %10606 = vmatpush1.bf16.msra.mxu0 %v10464
  %10607 = vmatprep.subr.bf16.mxu0 0
  %10608 = vmatpush1.bf16.msra.mxu0 %v10465
  %10609 = vmatprep.subr.bf16.mxu0 0
  %10610 = vmatpush1.bf16.msra.mxu0 %v10466
  %10611 = vmatprep.subr.bf16.mxu0 0
  %10612 = vmatpush1.bf16.msra.mxu0 %v10467
  %10613 = vmatprep.subr.bf16.mxu0 0
  %10614 = vmatpush1.bf16.msra.mxu0 %v10468
  %10615 = vmatprep.subr.bf16.mxu0 0
  %10616 = vmatpush1.bf16.msra.mxu0 %v10469
  %10617 = vmatprep.subr.bf16.mxu0 0
  %10618 = vmatpush1.bf16.msra.mxu0 %v10470
  %10619 = vmatprep.subr.bf16.mxu0 0
  %10620 = vmatpush1.bf16.msra.mxu0 %v10471
  %10621 = vmatprep.subr.bf16.mxu0 0
  %10622 = vmatpush1.bf16.msra.mxu0 %v10472
  %10623 = vmatprep.subr.bf16.mxu0 0
  %10624 = vmatpush1.bf16.msra.mxu0 %v10473
  %10625 = vmatprep.subr.bf16.mxu0 0
  %10626 = vmatpush1.bf16.msra.mxu0 %v10474
  %10627 = vmatprep.mubr.bf16.mxu0 %v10211
  %10628 = vmatmul.mubr.bf16.gmra.mrb[0].mxu0 %v10209
  %v10629 = vpop.f32.mrb[0].mxu0
  %v10630 = vadd.f32 %v10590, %v10629
  %v10631 = vpop.f32.mrb[0].mxu0
  %v10632 = vpop.f32.mrb[0].mxu0
  %v10633 = vpop.f32.mrb[0].mxu0
  %10634 = vdwg.mxu0
  %10635 = vmatprep.subr.bf16.mxu0 0
  %10636 = vmatpush1.bf16.msra.mxu0 %v10475
  %10637 = vmatprep.subr.bf16.mxu0 0
  %10638 = vmatpush1.bf16.msra.mxu0 %v10476
  %10639 = vmatprep.subr.bf16.mxu0 0
  %10640 = vmatpush1.bf16.msra.mxu0 %v10477
  %10641 = vmatprep.subr.bf16.mxu0 0
  %10642 = vmatpush1.bf16.msra.mxu0 %v10478
  %10643 = vmatprep.subr.bf16.mxu0 0
  %10644 = vmatpush1.bf16.msra.mxu0 %v10479
  %10645 = vmatprep.subr.bf16.mxu0 0
  %10646 = vmatpush1.bf16.msra.mxu0 %v10480
  %10647 = vmatprep.subr.bf16.mxu0 0
  %10648 = vmatpush1.bf16.msra.mxu0 %v10481
  %10649 = vmatprep.subr.bf16.mxu0 0
  %10650 = vmatpush1.bf16.msra.mxu0 %v10482
  %10651 = vmatprep.subr.bf16.mxu0 0
  %10652 = vmatpush1.bf16.msra.mxu0 %v10483
  %10653 = vmatprep.subr.bf16.mxu0 0
  %10654 = vmatpush1.bf16.msra.mxu0 %v10484
  %10655 = vmatprep.subr.bf16.mxu0 0
  %10656 = vmatpush1.bf16.msra.mxu0 %v10485
  %10657 = vmatprep.subr.bf16.mxu0 0
  %10658 = vmatpush1.bf16.msra.mxu0 %v10486
  %10659 = vmatprep.subr.bf16.mxu0 0
  %10660 = vmatpush1.bf16.msra.mxu0 %v10487
  %10661 = vmatprep.subr.bf16.mxu0 0
  %10662 = vmatpush1.bf16.msra.mxu0 %v10488
  %10663 = vmatprep.subr.bf16.mxu0 0
  %10664 = vmatpush1.bf16.msra.mxu0 %v10489
  %10665 = vmatprep.subr.bf16.mxu0 0
  %10666 = vmatpush1.bf16.msra.mxu0 %v10490
  %10667 = vmatprep.mubr.bf16.mxu0 %v10208
  %10668 = vmatmul.mubr.bf16.gmra.mrb[0].mxu0 %v10194
  %v10669 = vpop.f32.mrb[0].mxu0
  %v10670 = vadd.f32 %v10630, %v10669
  %v10671 = vpop.f32.mrb[0].mxu0
  %v10672 = vpop.f32.mrb[0].mxu0
  %v10673 = vpop.f32.mrb[0].mxu0
  %10674 = vdwg.mxu0
  %10675 = vmatprep.subr.bf16.mxu0 0
  %10676 = vmatpush1.bf16.msra.mxu0 %v10491
  %10677 = vmatprep.subr.bf16.mxu0 0
  %10678 = vmatpush1.bf16.msra.mxu0 %v10492
  %10679 = vmatprep.subr.bf16.mxu0 0
  %10680 = vmatpush1.bf16.msra.mxu0 %v10493
  %10681 = vmatprep.subr.bf16.mxu0 0
  %10682 = vmatpush1.bf16.msra.mxu0 %v10494
  %10683 = vmatprep.subr.bf16.mxu0 0
  %10684 = vmatpush1.bf16.msra.mxu0 %v10495
  %10685 = vmatprep.subr.bf16.mxu0 0
  %10686 = vmatpush1.bf16.msra.mxu0 %v10496
  %10687 = vmatprep.subr.bf16.mxu0 0
  %10688 = vmatpush1.bf16.msra.mxu0 %v10497
  %10689 = vmatprep.subr.bf16.mxu0 0
  %10690 = vmatpush1.bf16.msra.mxu0 %v10498
  %10691 = vmatprep.subr.bf16.mxu0 0
  %10692 = vmatpush1.bf16.msra.mxu0 0
  %10693 = vmatprep.subr.bf16.mxu0 0
  %10694 = vmatpush1.bf16.msra.mxu0 0
  %10695 = vmatprep.subr.bf16.mxu0 0
  %10696 = vmatpush1.bf16.msra.mxu0 0
  %10697 = vmatprep.subr.bf16.mxu0 0
  %10698 = vmatpush1.bf16.msra.mxu0 0
  %10699 = vmatprep.subr.bf16.mxu0 0
  %10700 = vmatpush1.bf16.msra.mxu0 0
  %10701 = vmatprep.subr.bf16.mxu0 0
  %10702 = vmatpush1.bf16.msra.mxu0 0
  %10703 = vmatprep.subr.bf16.mxu0 0
  %10704 = vmatpush1.bf16.msra.mxu0 0
  %10705 = vmatprep.subr.bf16.mxu0 0
  %10706 = vmatpush1.bf16.msra.mxu0 0
  %10707 = vmatprep.mubr.bf16.mxu0 0
  %10708 = vmatmul.mubr.bf16.gmra.mrb[0].mxu0 %v10210
  %v10709 = vpop.f32.mrb[0].mxu0
  %v10710 = vadd.f32 %v10670, %v10709
  %v10711 = vpop.f32.mrb[0].mxu0
  %v10712 = vpop.f32.mrb[0].mxu0
  %v10713 = vpop.f32.mrb[0].mxu0
  %10714 = vdwg.mxu0
  %v10715 = vmax.f32 %v10710, 0.0
  %v10716 = vpack.c.bf16 %v4173, %v4173
  %v10717 = vld [vmem:[%s7] sm:$0xf]
  %v10718 = vld [vmem:[%s7 + $0x4] sm:$0xf]
  %v10719 = vld [vmem:[%s7 + $0x8] sm:$0xf]
  %v10720 = vld [vmem:[%s7 + $0xc] sm:$0xf]
  %v10721 = vld [vmem:[%s7 + $0x10] sm:$0xf]
  %v10722 = vld [vmem:[%s7 + $0x14] sm:$0xf]
  %v10723 = vld [vmem:[%s7 + $0x18] sm:$0xf]
  %v10724 = vld [vmem:[%s7 + $0x1c] sm:$0xf]
  %v10725 = vld [vmem:[%s7 + $0x20] sm:$0xf]
  %v10726 = vld [vmem:[%s7 + $0x24] sm:$0xf]
  %v10727 = vld [vmem:[%s7 + $0x28] sm:$0xf]
  %v10728 = vld [vmem:[%s7 + $0x2c] sm:$0xf]
  %v10729 = vld [vmem:[%s7 + $0x30] sm:$0xf]
  %v10730 = vld [vmem:[%s7 + $0x34] sm:$0xf]
  %v10731 = vld [vmem:[%s7 + $0x38] sm:$0xf]
  %v10732 = vld [vmem:[%s7 + $0x3c] sm:$0xf]
  %v10733 = vpack.c.bf16 %v10715, %v10715
  %v10734 = vld [vmem:[%s8] sm:$0xf]
  %v10735 = vld [vmem:[%s8 + $0x4] sm:$0xf]
  %v10736 = vld [vmem:[%s8 + $0x8] sm:$0xf]
  %v10737 = vld [vmem:[%s8 + $0xc] sm:$0xf]
  %v10738 = vld [vmem:[%s8 + $0x10] sm:$0xf]
  %v10739 = vld [vmem:[%s8 + $0x14] sm:$0xf]
  %v10740 = vld [vmem:[%s8 + $0x18] sm:$0xf]
  %v10741 = vld [vmem:[%s8 + $0x1c] sm:$0xf]
  %v10742 = vld [vmem:[%s8 + $0x20] sm:$0xf]
  %v10743 = vld [vmem:[%s8 + $0x24] sm:$0xf]
  %v10744 = vld [vmem:[%s8 + $0x28] sm:$0xf]
  %v10745 = vld [vmem:[%s8 + $0x2c] sm:$0xf]
  %v10746 = vld [vmem:[%s8 + $0x30] sm:$0xf]
  %v10747 = vld [vmem:[%s8 + $0x34] sm:$0xf]
  %v10748 = vld [vmem:[%s8 + $0x38] sm:$0xf]
  %v10749 = vld [vmem:[%s8 + $0x3c] sm:$0xf]
  %v10766 = vunpack.c.l.b16 %v10734
  %v10767 = vunpack.c.l.b16 %v10735
  %v10768 = vunpack.c.l.b16 %v10736
  %v10769 = vunpack.c.l.b16 %v10737
  %v10770 = vunpack.c.l.b16 %v10738
  %v10771 = vunpack.c.l.b16 %v10739
  %v10772 = vunpack.c.l.b16 %v10740
  %v10773 = vunpack.c.l.b16 %v10741
  %v10774 = vunpack.c.l.b16 %v10742
  %v10775 = vunpack.c.l.b16 %v10743
  %v10776 = vunpack.c.l.b16 %v10744
  %v10777 = vunpack.c.l.b16 %v10745
  %v10778 = vunpack.c.l.b16 %v10746
  %v10779 = vunpack.c.l.b16 %v10747
  %v10780 = vunpack.c.l.b16 %v10748
  %v10781 = vunpack.c.l.b16 %v10749
  %v10782 = vpack.c.b16 %v10767, %v10766
  %v10783 = vpack.c.b16 %v10769, %v10768
  %v10784 = vpack.c.b16 %v10771, %v10770
  %v10785 = vpack.c.b16 %v10773, %v10772
  %v10786 = vpack.c.b16 %v10775, %v10774
  %v10787 = vpack.c.b16 %v10777, %v10776
  %v10788 = vpack.c.b16 %v10779, %v10778
  %v10789 = vpack.c.b16 %v10781, %v10780
  %10798 = vmatprep.subr.bf16.mxu0 0
  %10799 = vmatpush1.bf16.msra.mxu0 %v10782
  %10800 = vmatprep.subr.bf16.mxu0 0
  %10801 = vmatpush1.bf16.msra.mxu0 %v10783
  %10802 = vmatprep.subr.bf16.mxu0 0
  %10803 = vmatpush1.bf16.msra.mxu0 %v10784
  %10804 = vmatprep.subr.bf16.mxu0 0
  %10805 = vmatpush1.bf16.msra.mxu0 %v10785
  %10806 = vmatprep.subr.bf16.mxu0 0
  %10807 = vmatpush1.bf16.msra.mxu0 %v10786
  %10808 = vmatprep.subr.bf16.mxu0 0
  %10809 = vmatpush1.bf16.msra.mxu0 %v10787
  %10810 = vmatprep.subr.bf16.mxu0 0
  %10811 = vmatpush1.bf16.msra.mxu0 %v10788
  %10812 = vmatprep.subr.bf16.mxu0 0
  %10813 = vmatpush1.bf16.msra.mxu0 %v10789
  %10814 = vmatprep.subr.bf16.mxu0 0
  %10815 = vmatpush1.bf16.msra.mxu0 0
  %10816 = vmatprep.subr.bf16.mxu0 0
  %10817 = vmatpush1.bf16.msra.mxu0 0
  %10818 = vmatprep.subr.bf16.mxu0 0
  %10819 = vmatpush1.bf16.msra.mxu0 0
  %10820 = vmatprep.subr.bf16.mxu0 0
  %10821 = vmatpush1.bf16.msra.mxu0 0
  %10822 = vmatprep.subr.bf16.mxu0 0
  %10823 = vmatpush1.bf16.msra.mxu0 0
  %10824 = vmatprep.subr.bf16.mxu0 0
  %10825 = vmatpush1.bf16.msra.mxu0 0
  %10826 = vmatprep.subr.bf16.mxu0 0
  %10827 = vmatpush1.bf16.msra.mxu0 0
  %10828 = vmatprep.subr.bf16.mxu0 0
  %10829 = vmatpush1.bf16.msra.mxu0 0
  %10830 = vmatprep.mubr.bf16.mxu0 0
  %10831 = vmatmul.mubr.bf16.gmra.mrb[0].mxu0 %v10733
  %v10832 = vpop.f32.mrb[0].mxu0
  %v10833 = vadd.f32 0.0, %v10832
  %v10834 = vpop.f32.mrb[0].mxu0
  %v10835 = vpop.f32.mrb[0].mxu0
  %v10836 = vpop.f32.mrb[0].mxu0
  %10837 = vdwg.mxu0
  %v10854 = vunpack.c.l.b16 %v10717
  %v10855 = vunpack.c.l.b16 %v10718
  %v10856 = vunpack.c.l.b16 %v10719
  %v10857 = vunpack.c.l.b16 %v10720
  %v10858 = vunpack.c.l.b16 %v10721
  %v10859 = vunpack.c.l.b16 %v10722
  %v10860 = vunpack.c.l.b16 %v10723
  %v10861 = vunpack.c.l.b16 %v10724
  %v10862 = vunpack.c.l.b16 %v10725
  %v10863 = vunpack.c.l.b16 %v10726
  %v10864 = vunpack.c.l.b16 %v10727
  %v10865 = vunpack.c.l.b16 %v10728
  %v10866 = vunpack.c.l.b16 %v10729
  %v10867 = vunpack.c.l.b16 %v10730
  %v10868 = vunpack.c.l.b16 %v10731
  %v10869 = vunpack.c.l.b16 %v10732
  %v10870 = vpack.c.b16 %v10855, %v10854
  %v10871 = vpack.c.b16 %v10857, %v10856
  %v10872 = vpack.c.b16 %v10859, %v10858
  %v10873 = vpack.c.b16 %v10861, %v10860
  %v10874 = vpack.c.b16 %v10863, %v10862
  %v10875 = vpack.c.b16 %v10865, %v10864
  %v10876 = vpack.c.b16 %v10867, %v10866
  %v10877 = vpack.c.b16 %v10869, %v10868
  %10886 = vmatprep.subr.bf16.mxu0 0
  %10887 = vmatpush1.bf16.msra.mxu0 %v10870
  %10888 = vmatprep.subr.bf16.mxu0 0
  %10889 = vmatpush1.bf16.msra.mxu0 %v10871
  %10890 = vmatprep.subr.bf16.mxu0 0
  %10891 = vmatpush1.bf16.msra.mxu0 %v10872
  %10892 = vmatprep.subr.bf16.mxu0 0
  %10893 = vmatpush1.bf16.msra.mxu0 %v10873
  %10894 = vmatprep.subr.bf16.mxu0 0
  %10895 = vmatpush1.bf16.msra.mxu0 %v10874
  %10896 = vmatprep.subr.bf16.mxu0 0
  %10897 = vmatpush1.bf16.msra.mxu0 %v10875
  %10898 = vmatprep.subr.bf16.mxu0 0
  %10899 = vmatpush1.bf16.msra.mxu0 %v10876
  %10900 = vmatprep.subr.bf16.mxu0 0
  %10901 = vmatpush1.bf16.msra.mxu0 %v10877
  %10902 = vmatprep.subr.bf16.mxu0 0
  %10903 = vmatpush1.bf16.msra.mxu0 0
  %10904 = vmatprep.subr.bf16.mxu0 0
  %10905 = vmatpush1.bf16.msra.mxu0 0
  %10906 = vmatprep.subr.bf16.mxu0 0
  %10907 = vmatpush1.bf16.msra.mxu0 0
  %10908 = vmatprep.subr.bf16.mxu0 0
  %10909 = vmatpush1.bf16.msra.mxu0 0
  %10910 = vmatprep.subr.bf16.mxu0 0
  %10911 = vmatpush1.bf16.msra.mxu0 0
  %10912 = vmatprep.subr.bf16.mxu0 0
  %10913 = vmatpush1.bf16.msra.mxu0 0
  %10914 = vmatprep.subr.bf16.mxu0 0
  %10915 = vmatpush1.bf16.msra.mxu0 0
  %10916 = vmatprep.subr.bf16.mxu0 0
  %10917 = vmatpush1.bf16.msra.mxu0 0
  %10918 = vmatprep.mubr.bf16.mxu0 0
  %10919 = vmatmul.mubr.bf16.gmra.mrb[0].mxu0 %v10716
  %v10920 = vpop.f32.mrb[0].mxu0
  %v10921 = vadd.f32 %v10833, %v10920
  %v10922 = vpop.f32.mrb[0].mxu0
  %v10923 = vpop.f32.mrb[0].mxu0
  %v10924 = vpop.f32.mrb[0].mxu0
  %10925 = vdwg.mxu0
  %v10926 = vlaneseq
  %v10927 = vshrl.u32 %v10926, 7
  %v10928 = vsub.s32 5, %v10927
  %v10929 = vrot.slane %v36, %v10928
  %v10930 = vadd.f32 %v10921, %v10929
  %v10931 = vmax.f32 %v10930, 0.0
  %v10933 = vcombine.high %v10931, %v10931
  %v10935 = vunpack.c.l.s4 1966171168
  %v10936 = vunpack.c.0.s8 %v10935
  %v10937 = vlaneseq
  %v10938 = vshrl.u32 %v10937, 7
  %v10939 = vsub.s32 %v10936, %v10938
  %v10940 = vrot.slane %v10931, %v10939
  %v10942 = vunpack.c.l.s4 1966171168
  %v10943 = vunpack.c.0.s8 %v10942
  %v10944 = vlaneseq
  %v10945 = vshrl.u32 %v10944, 7
  %v10946 = vsub.s32 %v10943, %v10945
  %v10947 = vrot.slane %v10933, %v10946
  %v10948 = vcombine.high %v10940, %v10940
  %v10949 = vcombine.high %v10947, %v10947
  %v10951 = vunpack.c.l.s4 1966171168
  %v10952 = vunpack.c.0.s8 %v10951
  %v10953 = vlaneseq
  %v10954 = vshrl.u32 %v10953, 7
  %v10955 = vsub.s32 %v10952, %v10954
  %v10956 = vrot.slane %v10940, %v10955
  %v10958 = vunpack.c.l.s4 1966171168
  %v10959 = vunpack.c.0.s8 %v10958
  %v10960 = vlaneseq
  %v10961 = vshrl.u32 %v10960, 7
  %v10962 = vsub.s32 %v10959, %v10961
  %v10963 = vrot.slane %v10947, %v10962
  %v10965 = vunpack.c.l.s4 1966171168
  %v10966 = vunpack.c.0.s8 %v10965
  %v10967 = vlaneseq
  %v10968 = vshrl.u32 %v10967, 7
  %v10969 = vsub.s32 %v10966, %v10968
  %v10970 = vrot.slane %v10948, %v10969
  %v10972 = vunpack.c.l.s4 1966171168
  %v10973 = vunpack.c.0.s8 %v10972
  %v10974 = vlaneseq
  %v10975 = vshrl.u32 %v10974, 7
  %v10976 = vsub.s32 %v10973, %v10975
  %v10977 = vrot.slane %v10949, %v10976
  %v10978 = vcombine.high %v10956, %v10956
  %v10979 = vcombine.high %v10970, %v10970
  %v10980 = vcombine.low %v10956, %v10970
  %v10982 = vunpack.c.l.s4 1966171168
  %v10983 = vunpack.c.0.s8 %v10982
  %v10984 = vlaneseq
  %v10985 = vshrl.u32 %v10984, 7
  %v10986 = vsub.s32 %v10983, %v10985
  %v10987 = vrot.slane %v10980, %v10986
  %v10989 = vunpack.c.l.s4 1966171168
  %v10990 = vunpack.c.0.s8 %v10989
  %v10991 = vlaneseq
  %v10992 = vshrl.u32 %v10991, 7
  %v10993 = vsub.s32 %v10990, %v10992
  %v10994 = vrot.slane %v10978, %v10993
  %v10995 = vcombine.low %v10987, %v10994
  %v10997 = vunpack.c.l.s4 1966171168
  %v10998 = vunpack.c.0.s8 %v10997
  %v10999 = vlaneseq
  %v11000 = vshrl.u32 %v10999, 7
  %v11001 = vsub.s32 %v10998, %v11000
  %v11002 = vrot.slane %v10995, %v11001
  %v11003 = vcombine.low %v10979, %v10963
  %v11005 = vunpack.c.l.s4 1966171168
  %v11006 = vunpack.c.0.s8 %v11005
  %v11007 = vlaneseq
  %v11008 = vshrl.u32 %v11007, 7
  %v11009 = vsub.s32 %v11006, %v11008
  %v11010 = vrot.slane %v11003, %v11009
  %v11012 = vunpack.c.l.s4 1966171168
  %v11013 = vunpack.c.0.s8 %v11012
  %v11014 = vlaneseq
  %v11015 = vshrl.u32 %v11014, 7
  %v11016 = vsub.s32 %v11013, %v11015
  %v11017 = vrot.slane %v10977, %v11016
  %v11018 = vcombine.low %v11010, %v11017
  %v11020 = vunpack.c.l.s4 1966171168
  %v11021 = vunpack.c.0.s8 %v11020
  %v11022 = vlaneseq
  %v11023 = vshrl.u32 %v11022, 7
  %v11024 = vsub.s32 %v11021, %v11023
  %v11025 = vrot.slane %v11018, %v11024
  %11028 = vst [vmem:[%s10] sm:$0x7] %v11002
  %11029 = vst [vmem:[%s10 + $0x4] sm:$0x7] %v11025
  // Predicated region
  $region42: #{multipath_forward.1} parent=0 // pred_check
    _
  $region43: #{multipath_forward.1} parent=0 // pred_check_branch
    %11031 = sbr.rel (0) target = $region45
  $region44: #{multipath_forward.1} parent=0 // pred_region
    _
  $region45: #{multipath_forward.1} parent=0 // pred_fallthru
    _
  // Predicated region
  $region46: #{multipath_forward.1} parent=0 // pred_check
    _
  $region47: #{multipath_forward.1} parent=0 // pred_check_branch
    %11033 = sbr.rel (0) target = $region49
  $region48: #{multipath_forward.1} parent=0 // pred_region
    _
  $region49: #{multipath_forward.1} parent=0 // pred_fallthru
    _

</llo_original>
